<compile_context>
chip_gen: v5e
topology: v5e:2x2
jax: 0.10.0
libtpu: 0.0.40
codegen_flags: <defaults>
</compile_context>

<pallas_src>
import numpy as np
import jax
import jax.numpy as jnp
from jax.experimental import pallas as pl
from jax.experimental.pallas import tpu as pltpu

# Flat-grid geometry: padded input image is 40 rows x 32 cols, row-major.
_PAD_ROWS, _PAD_COLS = 40, 32
_FLAT_IN = _PAD_ROWS * _PAD_COLS       # 1280
_GRID = 1024                           # 32x32 working grid for conv outputs


# --------------------------- fully fused LeNet kernel ------------------------

def _lenet_kernel(x_ref, w1_ref, b1_ref, w2_ref, b2_ref, sel_ref,
                  w5_ref, b5_ref, w6_ref, b6_ref, w7_ref, b7_ref, o_ref,
                  p1_ref, s1_ref, sp1_ref):
    """Per-image: conv1+sig+pool1 -> conv2+sig -> (pool2+compact) -> f5/f6/f7."""
    f32, bf16 = jnp.float32, jnp.bfloat16

    # Zero only the slack columns that shifted reads can reach (pool1 reads s1
    # up to col 1056; conv2 reads sp1 up to col 1287).  Everything else in
    # these buffers is fully rewritten below, and the selection matmul needs
    # all contracted values finite, so the slack must not hold stale VMEM.
    s1_ref[:, 1024:1152] = jnp.zeros((6, 128), f32)
    sp1_ref[:, 1024:1408] = jnp.zeros((6, 384), bf16)

    # ---- conv1 im2col: 25 shifted 1024-wide windows of the padded image ----
    for i in range(5):
        for j in range(5):
            k = i * 5 + j
            p1_ref[k:k + 1, :] = x_ref[0, 0:1, pl.ds(i * 32 + j, _GRID)]

    # conv1 + bias + sigmoid: (6,25)@(25,1024), bf16 operands, f32 accumulate.
    a1 = jnp.dot(w1_ref[...], p1_ref[...].astype(bf16),
                 preferred_element_type=f32)
    a1 = jax.nn.sigmoid(a1 + b1_ref[...])
    s1_ref[:, 0:_GRID] = a1

    # ---- pool1: 2x2/stride-2 avg as 4 shifted adds on the flat 32x32 grid ----
    p1sum = (s1_ref[:, pl.ds(0, _GRID)] + s1_ref[:, pl.ds(1, _GRID)] +
             s1_ref[:, pl.ds(32, _GRID)] + s1_ref[:, pl.ds(33, _GRID)])
    # pooled1[ci, ph, pw] lives at flat position 64*ph + 2*pw (ph, pw < 14)
    sp1_ref[:, 0:_GRID] = (0.25 * p1sum).astype(bf16)

    # ---- conv2: accumulate 25 per-tap matmuls; NO (200,1024) patch buffer ----
    a2 = jnp.zeros((16, _GRID), f32)
    for i in range(5):
        for j in range(5):
            t = i * 5 + j
            a2 = a2 + jnp.dot(w2_ref[t],
                              sp1_ref[:, pl.ds(i * 64 + j * 2, _GRID)],
                              preferred_element_type=f32)
    a2 = jax.nn.sigmoid(a2 + b2_ref[...])

    # ---- pool2 + 0.25 + flatten-compaction as ONE selection matmul (MXU) ----
    # sel[128*qh + 4*qw + d, 5*qh + qw] = 0.25 for d in {0,2,64,66}; valid
    # conv2 anchors only ever read fully-defined a2 columns, and all other a2
    # columns (finite sigmoid outputs) hit exact-zero sel entries.
    feat = jnp.dot(a2.astype(bf16), sel_ref[...],
                   preferred_element_type=f32)          # (16, 32), lanes 25: = 0

    # ---- fused FC head: f5 as 16 per-channel (1,32)@(32,120) matmuls ----
    fb = feat.astype(bf16)
    h = b5_ref[...]                                     # (1, 120) f32
    for co in range(16):
        h = h + jnp.dot(fb[co:co + 1, :], w5_ref[co],
                        preferred_element_type=f32)
    h = jnp.dot(h.astype(bf16), w6_ref[...], preferred_element_type=f32) + b6_ref[...]
    h = jnp.dot(h.astype(bf16), w7_ref[...], preferred_element_type=f32) + b7_ref[...]

    # Lane-dense (1,128) logits write; cols 10:128 are zero padding.
    o_ref[0, :, :] = h


def lenet_forward(x, params):
    """x: (B, 1, 28, 28) f32 -> (B, 10) f32 logits."""
    B = x.shape[0]
    # conv1 padding=2 plus row slack so every shifted 1024-window stays in bounds.
    xp = jnp.pad(x[:, 0], ((0, 0), (2, _PAD_ROWS - 30), (2, 2)))   # (B, 40, 32)
    xflat = xp.reshape(B, 1, _FLAT_IN)
    out = pl.pallas_call(
        _lenet_kernel,
        out_shape=jax.ShapeDtypeStruct((B, 1, 128), jnp.float32),
        grid=(B,),
        in_specs=[
            pl.BlockSpec((1, 1, _FLAT_IN), lambda b: (b, 0, 0)),   # padded image
            pl.BlockSpec((6, 25), lambda b: (0, 0)),               # conv1 w (bf16)
            pl.BlockSpec((6, 1), lambda b: (0, 0)),                # conv1 b
            pl.BlockSpec((25, 16, 6), lambda b: (0, 0, 0)),        # conv2 w, tap-major
            pl.BlockSpec((16, 1), lambda b: (0, 0)),               # conv2 b
            pl.BlockSpec((_GRID, 32), lambda b: (0, 0)),           # pool2+compact sel
            pl.BlockSpec((16, 32, 120), lambda b: (0, 0, 0)),      # f5 w, channel-major
            pl.BlockSpec((1, 120), lambda b: (0, 0)),              # f5 b
            pl.BlockSpec((120, 84), lambda b: (0, 0)),             # f6 w^T
            pl.BlockSpec((1, 84), lambda b: (0, 0)),               # f6 b
            pl.BlockSpec((84, 128), lambda b: (0, 0)),             # f7 w^T (lane-padded)
            pl.BlockSpec((1, 128), lambda b: (0, 0)),              # f7 b (lane-padded)
        ],
        out_specs=pl.BlockSpec((1, 1, 128), lambda b: (b, 0, 0)),
        scratch_shapes=[
            pltpu.VMEM((25, _GRID), jnp.float32),        # conv1 im2col patches
            pltpu.VMEM((6, _GRID + 128), jnp.float32),   # conv1+sig output (+slack)
            pltpu.VMEM((6, _GRID + 384), jnp.bfloat16),  # pooled1 flat grid (+slack)
        ],
        compiler_params=pltpu.CompilerParams(
            dimension_semantics=("parallel",)),
    )(xflat, params["w1m"], params["b1c"], params["w2p"], params["b2c"],
      params["sel"], params["w5p"], params["b5r"], params["w6t"],
      params["b6r"], params["w7p"], params["b7p"])
    return out.reshape(B, 128)[:, :10]


# ------------------------------ params & packing ------------------------------

def init_raw_params(key):
    ks = jax.random.split(key, 10)

    def w(k, shape, fan_in):
        return jax.random.normal(k, shape, jnp.float32) / jnp.sqrt(float(fan_in))

    return {
        "w1": w(ks[0], (6, 1, 5, 5), 25),   "b1": w(ks[1], (6,), 25),
        "w2": w(ks[2], (16, 6, 5, 5), 150), "b2": w(ks[3], (16,), 150),
        "w5": w(ks[4], (120, 400), 400),    "b5": w(ks[5], (120,), 400),
        "w6": w(ks[6], (84, 120), 120),     "b6": w(ks[7], (84,), 120),
        "w7": w(ks[8], (10, 84), 84),       "b7": w(ks[9], (10,), 84),
    }


def prepare_params(p):
    """One-time repack of torch-layout weights into kernel-ready layouts."""
    bf16 = jnp.bfloat16
    # conv2 weights tap-major: w2p[t=i*5+j, co, ci] = w2[co, ci, i, j]
    w2p = jnp.transpose(p["w2"], (2, 3, 0, 1)).reshape(25, 16, 6).astype(bf16)
    # pool2 + 0.25 + compaction selection matrix (conv2 anchors -> feature lanes)
    sel = np.zeros((_GRID, 32), np.float32)
    for qh in range(5):
        for qw in range(5):
            col = qh * 5 + qw
            m = 128 * qh + 4 * qw
            for d in (0, 2, 64, 66):
                sel[m + d, col] = 0.25
    # f5 weights repacked channel-major to consume the (16,32) feature block:
    # w5p[co, p, n] = w5[n, co*25 + p] (torch Flatten order), p>=25 zero.
    w5p = np.zeros((16, 32, 120), np.float32)
    w5p[:, :25, :] = np.asarray(p["w5"]).reshape(120, 16, 25).transpose(1, 2, 0)
    w7p = jnp.zeros((84, 128), jnp.float32).at[:, :10].set(p["w7"].T)
    b7p = jnp.zeros((1, 128), jnp.float32).at[0, :10].set(p["b7"])
    return {
        "w1m": p["w1"].reshape(6, 25).astype(bf16),
        "b1c": p["b1"].reshape(6, 1),
        "w2p": w2p,
        "b2c": p["b2"].reshape(16, 1),
        "sel": jnp.asarray(sel, bf16),
        "w5p": jnp.asarray(w5p, bf16),
        "b5r": p["b5"].reshape(1, 120),
        "w6t": p["w6"].T.astype(bf16),
        "b6r": p["b6"].reshape(1, 84),
        "w7p": w7p.astype(bf16),
        "b7p": b7p,
    }


# ------------------------------ pure-JAX reference ----------------------------

def lenet_reference(x, p):
    """Pure-JAX f32 reference with torch-layout params (matches the nn.Module)."""
    dn = ("NCHW", "OIHW", "NCHW")
    o = jax.lax.conv_general_dilated(x, p["w1"], (1, 1), ((2, 2), (2, 2)),
                                     dimension_numbers=dn)
    o = jax.nn.sigmoid(o + p["b1"][None, :, None, None])
    o = 0.25 * (o[:, :, 0::2, 0::2] + o[:, :, 0::2, 1::2] +
                o[:, :, 1::2, 0::2] + o[:, :, 1::2, 1::2])
    o = jax.lax.conv_general_dilated(o, p["w2"], (1, 1), ((0, 0), (0, 0)),
                                     dimension_numbers=dn)
    o = jax.nn.sigmoid(o + p["b2"][None, :, None, None])
    o = 0.25 * (o[:, :, 0::2, 0::2] + o[:, :, 0::2, 1::2] +
                o[:, :, 1::2, 0::2] + o[:, :, 1::2, 1::2])
    o = o.reshape(x.shape[0], -1)
    o = o @ p["w5"].T + p["b5"]
    o = o @ p["w6"].T + p["b6"]
    return o @ p["w7"].T + p["b7"]


if __name__ == "__main__":
    key = jax.random.PRNGKey(0)
    kx, kp = jax.random.split(key)
    # LeNet's forward implies 1x28x28 inputs (f5 in_features = 400 = 16*5*5).
    x = jax.random.normal(kx, (2, 1, 28, 28), jnp.float32)
    raw = init_raw_params(kp)
    params = prepare_params(raw)

    out = jax.block_until_ready(jax.jit(lenet_forward)(x, params))
    assert out.shape == (2, 10) and out.dtype == jnp.float32

    ref = jax.block_until_ready(jax.jit(lenet_reference)(x, raw))
    max_err = float(jnp.max(jnp.abs(out - ref)))
    # bf16 MXU operands (and XLA's own bf16-pass convs in the reference) give
    # ~1e-2-scale deviations on these logit magnitudes; 5e-2 is a safe bound.
    assert max_err < 5e-2, f"mismatch vs reference: {max_err}"
    print("KERNEL_OK")
</pallas_src>

<mosaic_0001>
module attributes {stable_mosaic.version = 11 : i64} {
  func.func @_lenet_kernel(%arg0: i32, %arg1: memref<1x1x1280xf32, #tpu.memory_space<vmem>>, %arg2: memref<6x25xbf16, #tpu.memory_space<vmem>>, %arg3: memref<6x1xf32, #tpu.memory_space<vmem>>, %arg4: memref<25x16x6xbf16, #tpu.memory_space<vmem>>, %arg5: memref<16x1xf32, #tpu.memory_space<vmem>>, %arg6: memref<1024x32xbf16, #tpu.memory_space<vmem>>, %arg7: memref<16x32x120xbf16, #tpu.memory_space<vmem>>, %arg8: memref<1x120xf32, #tpu.memory_space<vmem>>, %arg9: memref<120x84xbf16, #tpu.memory_space<vmem>>, %arg10: memref<1x84xf32, #tpu.memory_space<vmem>>, %arg11: memref<84x128xbf16, #tpu.memory_space<vmem>>, %arg12: memref<1x128xf32, #tpu.memory_space<vmem>>, %arg13: memref<1x1x128xf32, #tpu.memory_space<vmem>>, %arg14: memref<25x1024xf32, #tpu.memory_space<vmem>>, %arg15: memref<6x1152xf32, #tpu.memory_space<vmem>>, %arg16: memref<6x1408xbf16, #tpu.memory_space<vmem>>) attributes {dimension_semantics = [#tpu.dimension_semantics<parallel>], iteration_bounds = array<i64: 2>, scalar_prefetch = 0 : i64, scratch_operands = 3 : i64, tpu.core_type = #tpu.core_type<tc>, window_params = [{transform_indices = @transform_0, window_bounds = array<i64: 1, 1, 1280>}, {pipeline_mode = #tpu.pipeline_mode<synchronous>, transform_indices = @transform_1, window_bounds = array<i64: 6, 25>}, {pipeline_mode = #tpu.pipeline_mode<synchronous>, transform_indices = @transform_2, window_bounds = array<i64: 6, 1>}, {pipeline_mode = #tpu.pipeline_mode<synchronous>, transform_indices = @transform_3, window_bounds = array<i64: 25, 16, 6>}, {pipeline_mode = #tpu.pipeline_mode<synchronous>, transform_indices = @transform_4, window_bounds = array<i64: 16, 1>}, {pipeline_mode = #tpu.pipeline_mode<synchronous>, transform_indices = @transform_5, window_bounds = array<i64: 1024, 32>}, {pipeline_mode = #tpu.pipeline_mode<synchronous>, transform_indices = @transform_6, window_bounds = array<i64: 16, 32, 120>}, {pipeline_mode = #tpu.pipeline_mode<synchronous>, transform_indices = @transform_7, window_bounds = array<i64: 1, 120>}, {pipeline_mode = #tpu.pipeline_mode<synchronous>, transform_indices = @transform_8, window_bounds = array<i64: 120, 84>}, {pipeline_mode = #tpu.pipeline_mode<synchronous>, transform_indices = @transform_9, window_bounds = array<i64: 1, 84>}, {pipeline_mode = #tpu.pipeline_mode<synchronous>, transform_indices = @transform_10, window_bounds = array<i64: 84, 128>}, {pipeline_mode = #tpu.pipeline_mode<synchronous>, transform_indices = @transform_11, window_bounds = array<i64: 1, 128>}, {transform_indices = @transform_12, window_bounds = array<i64: 1, 1, 128>}]} {
    %cst = arith.constant 0.000000e+00 : f32
    %0 = vector.broadcast %cst : f32 to vector<6x128xf32>
    %c0 = arith.constant 0 : index
    %c1024 = arith.constant 1024 : index
    %1 = vector.load %arg15[%c0, %c1024] : memref<6x1152xf32, #tpu.memory_space<vmem>>, vector<6x128xf32>
    tpu.vector_store %arg15[%c0, %c1024], %0 {strides = array<i32>} : memref<6x1152xf32, #tpu.memory_space<vmem>>, vector<6x128xf32>,
    %cst_0 = arith.constant 0.000000e+00 : bf16
    %2 = vector.broadcast %cst_0 : bf16 to vector<6x384xbf16>
    %c0_1 = arith.constant 0 : index
    %c1024_2 = arith.constant 1024 : index
    %3 = vector.load %arg16[%c0_1, %c1024_2] : memref<6x1408xbf16, #tpu.memory_space<vmem>>, vector<6x384xbf16>
    tpu.vector_store %arg16[%c0_1, %c1024_2], %2 {strides = array<i32>} : memref<6x1408xbf16, #tpu.memory_space<vmem>>, vector<6x384xbf16>,
    %c0_3 = arith.constant 0 : index
    %c0_4 = arith.constant 0 : index
    %c0_5 = arith.constant 0 : index
    %4 = vector.load %arg1[%c0_3, %c0_4, %c0_5] : memref<1x1x1280xf32, #tpu.memory_space<vmem>>, vector<1x1x1024xf32>
    %5 = vector.shape_cast %4 : vector<1x1x1024xf32> to vector<1x1024xf32>
    %c0_6 = arith.constant 0 : index
    %c0_7 = arith.constant 0 : index
    %6 = vector.load %arg14[%c0_6, %c0_7] : memref<25x1024xf32, #tpu.memory_space<vmem>>, vector<1x1024xf32>
    tpu.vector_store %arg14[%c0_6, %c0_7], %5 {strides = array<i32>} : memref<25x1024xf32, #tpu.memory_space<vmem>>, vector<1x1024xf32>,
    %c0_8 = arith.constant 0 : index
    %c0_9 = arith.constant 0 : index
    %c1 = arith.constant 1 : index
    %7 = vector.load %arg1[%c0_8, %c0_9, %c1] : memref<1x1x1280xf32, #tpu.memory_space<vmem>>, vector<1x1x1024xf32>
    %8 = vector.shape_cast %7 : vector<1x1x1024xf32> to vector<1x1024xf32>
    %c1_10 = arith.constant 1 : index
    %c0_11 = arith.constant 0 : index
    %9 = vector.load %arg14[%c1_10, %c0_11] : memref<25x1024xf32, #tpu.memory_space<vmem>>, vector<1x1024xf32>
    tpu.vector_store %arg14[%c1_10, %c0_11], %8 {strides = array<i32>} : memref<25x1024xf32, #tpu.memory_space<vmem>>, vector<1x1024xf32>,
    %c0_12 = arith.constant 0 : index
    %c0_13 = arith.constant 0 : index
    %c2 = arith.constant 2 : index
    %10 = vector.load %arg1[%c0_12, %c0_13, %c2] : memref<1x1x1280xf32, #tpu.memory_space<vmem>>, vector<1x1x1024xf32>
    %11 = vector.shape_cast %10 : vector<1x1x1024xf32> to vector<1x1024xf32>
    %c2_14 = arith.constant 2 : index
    %c0_15 = arith.constant 0 : index
    %12 = vector.load %arg14[%c2_14, %c0_15] : memref<25x1024xf32, #tpu.memory_space<vmem>>, vector<1x1024xf32>
    tpu.vector_store %arg14[%c2_14, %c0_15], %11 {strides = array<i32>} : memref<25x1024xf32, #tpu.memory_space<vmem>>, vector<1x1024xf32>,
    %c0_16 = arith.constant 0 : index
    %c0_17 = arith.constant 0 : index
    %c3 = arith.constant 3 : index
    %13 = vector.load %arg1[%c0_16, %c0_17, %c3] : memref<1x1x1280xf32, #tpu.memory_space<vmem>>, vector<1x1x1024xf32>
    %14 = vector.shape_cast %13 : vector<1x1x1024xf32> to vector<1x1024xf32>
    %c3_18 = arith.constant 3 : index
    %c0_19 = arith.constant 0 : index
    %15 = vector.load %arg14[%c3_18, %c0_19] : memref<25x1024xf32, #tpu.memory_space<vmem>>, vector<1x1024xf32>
    tpu.vector_store %arg14[%c3_18, %c0_19], %14 {strides = array<i32>} : memref<25x1024xf32, #tpu.memory_space<vmem>>, vector<1x1024xf32>,
    %c0_20 = arith.constant 0 : index
    %c0_21 = arith.constant 0 : index
    %c4 = arith.constant 4 : index
    %16 = vector.load %arg1[%c0_20, %c0_21, %c4] : memref<1x1x1280xf32, #tpu.memory_space<vmem>>, vector<1x1x1024xf32>
    %17 = vector.shape_cast %16 : vector<1x1x1024xf32> to vector<1x1024xf32>
    %c4_22 = arith.constant 4 : index
    %c0_23 = arith.constant 0 : index
    %18 = vector.load %arg14[%c4_22, %c0_23] : memref<25x1024xf32, #tpu.memory_space<vmem>>, vector<1x1024xf32>
    tpu.vector_store %arg14[%c4_22, %c0_23], %17 {strides = array<i32>} : memref<25x1024xf32, #tpu.memory_space<vmem>>, vector<1x1024xf32>,
    %c0_24 = arith.constant 0 : index
    %c0_25 = arith.constant 0 : index
    %c32 = arith.constant 32 : index
    %19 = vector.load %arg1[%c0_24, %c0_25, %c32] : memref<1x1x1280xf32, #tpu.memory_space<vmem>>, vector<1x1x1024xf32>
    %20 = vector.shape_cast %19 : vector<1x1x1024xf32> to vector<1x1024xf32>
    %c5 = arith.constant 5 : index
    %c0_26 = arith.constant 0 : index
    %21 = vector.load %arg14[%c5, %c0_26] : memref<25x1024xf32, #tpu.memory_space<vmem>>, vector<1x1024xf32>
    tpu.vector_store %arg14[%c5, %c0_26], %20 {strides = array<i32>} : memref<25x1024xf32, #tpu.memory_space<vmem>>, vector<1x1024xf32>,
    %c0_27 = arith.constant 0 : index
    %c0_28 = arith.constant 0 : index
    %c33 = arith.constant 33 : index
    %22 = vector.load %arg1[%c0_27, %c0_28, %c33] : memref<1x1x1280xf32, #tpu.memory_space<vmem>>, vector<1x1x1024xf32>
    %23 = vector.shape_cast %22 : vector<1x1x1024xf32> to vector<1x1024xf32>
    %c6 = arith.constant 6 : index
    %c0_29 = arith.constant 0 : index
    %24 = vector.load %arg14[%c6, %c0_29] : memref<25x1024xf32, #tpu.memory_space<vmem>>, vector<1x1024xf32>
    tpu.vector_store %arg14[%c6, %c0_29], %23 {strides = array<i32>} : memref<25x1024xf32, #tpu.memory_space<vmem>>, vector<1x1024xf32>,
    %c0_30 = arith.constant 0 : index
    %c0_31 = arith.constant 0 : index
    %c34 = arith.constant 34 : index
    %25 = vector.load %arg1[%c0_30, %c0_31, %c34] : memref<1x1x1280xf32, #tpu.memory_space<vmem>>, vector<1x1x1024xf32>
    %26 = vector.shape_cast %25 : vector<1x1x1024xf32> to vector<1x1024xf32>
    %c7 = arith.constant 7 : index
    %c0_32 = arith.constant 0 : index
    %27 = vector.load %arg14[%c7, %c0_32] : memref<25x1024xf32, #tpu.memory_space<vmem>>, vector<1x1024xf32>
    tpu.vector_store %arg14[%c7, %c0_32], %26 {strides = array<i32>} : memref<25x1024xf32, #tpu.memory_space<vmem>>, vector<1x1024xf32>,
    %c0_33 = arith.constant 0 : index
    %c0_34 = arith.constant 0 : index
    %c35 = arith.constant 35 : index
    %28 = vector.load %arg1[%c0_33, %c0_34, %c35] : memref<1x1x1280xf32, #tpu.memory_space<vmem>>, vector<1x1x1024xf32>
    %29 = vector.shape_cast %28 : vector<1x1x1024xf32> to vector<1x1024xf32>
    %c8 = arith.constant 8 : index
    %c0_35 = arith.constant 0 : index
    %30 = vector.load %arg14[%c8, %c0_35] : memref<25x1024xf32, #tpu.memory_space<vmem>>, vector<1x1024xf32>
    tpu.vector_store %arg14[%c8, %c0_35], %29 {strides = array<i32>} : memref<25x1024xf32, #tpu.memory_space<vmem>>, vector<1x1024xf32>,
    %c0_36 = arith.constant 0 : index
    %c0_37 = arith.constant 0 : index
    %c36 = arith.constant 36 : index
    %31 = vector.load %arg1[%c0_36, %c0_37, %c36] : memref<1x1x1280xf32, #tpu.memory_space<vmem>>, vector<1x1x1024xf32>
    %32 = vector.shape_cast %31 : vector<1x1x1024xf32> to vector<1x1024xf32>
    %c9 = arith.constant 9 : index
    %c0_38 = arith.constant 0 : index
    %33 = vector.load %arg14[%c9, %c0_38] : memref<25x1024xf32, #tpu.memory_space<vmem>>, vector<1x1024xf32>
    tpu.vector_store %arg14[%c9, %c0_38], %32 {strides = array<i32>} : memref<25x1024xf32, #tpu.memory_space<vmem>>, vector<1x1024xf32>,
    %c0_39 = arith.constant 0 : index
    %c0_40 = arith.constant 0 : index
    %c64 = arith.constant 64 : index
    %34 = vector.load %arg1[%c0_39, %c0_40, %c64] : memref<1x1x1280xf32, #tpu.memory_space<vmem>>, vector<1x1x1024xf32>
    %35 = vector.shape_cast %34 : vector<1x1x1024xf32> to vector<1x1024xf32>
    %c10 = arith.constant 10 : index
    %c0_41 = arith.constant 0 : index
    %36 = vector.load %arg14[%c10, %c0_41] : memref<25x1024xf32, #tpu.memory_space<vmem>>, vector<1x1024xf32>
    tpu.vector_store %arg14[%c10, %c0_41], %35 {strides = array<i32>} : memref<25x1024xf32, #tpu.memory_space<vmem>>, vector<1x1024xf32>,
    %c0_42 = arith.constant 0 : index
    %c0_43 = arith.constant 0 : index
    %c65 = arith.constant 65 : index
    %37 = vector.load %arg1[%c0_42, %c0_43, %c65] : memref<1x1x1280xf32, #tpu.memory_space<vmem>>, vector<1x1x1024xf32>
    %38 = vector.shape_cast %37 : vector<1x1x1024xf32> to vector<1x1024xf32>
    %c11 = arith.constant 11 : index
    %c0_44 = arith.constant 0 : index
    %39 = vector.load %arg14[%c11, %c0_44] : memref<25x1024xf32, #tpu.memory_space<vmem>>, vector<1x1024xf32>
    tpu.vector_store %arg14[%c11, %c0_44], %38 {strides = array<i32>} : memref<25x1024xf32, #tpu.memory_space<vmem>>, vector<1x1024xf32>,
    %c0_45 = arith.constant 0 : index
    %c0_46 = arith.constant 0 : index
    %c66 = arith.constant 66 : index
    %40 = vector.load %arg1[%c0_45, %c0_46, %c66] : memref<1x1x1280xf32, #tpu.memory_space<vmem>>, vector<1x1x1024xf32>
    %41 = vector.shape_cast %40 : vector<1x1x1024xf32> to vector<1x1024xf32>
    %c12 = arith.constant 12 : index
    %c0_47 = arith.constant 0 : index
    %42 = vector.load %arg14[%c12, %c0_47] : memref<25x1024xf32, #tpu.memory_space<vmem>>, vector<1x1024xf32>
    tpu.vector_store %arg14[%c12, %c0_47], %41 {strides = array<i32>} : memref<25x1024xf32, #tpu.memory_space<vmem>>, vector<1x1024xf32>,
    %c0_48 = arith.constant 0 : index
    %c0_49 = arith.constant 0 : index
    %c67 = arith.constant 67 : index
    %43 = vector.load %arg1[%c0_48, %c0_49, %c67] : memref<1x1x1280xf32, #tpu.memory_space<vmem>>, vector<1x1x1024xf32>
    %44 = vector.shape_cast %43 : vector<1x1x1024xf32> to vector<1x1024xf32>
    %c13 = arith.constant 13 : index
    %c0_50 = arith.constant 0 : index
    %45 = vector.load %arg14[%c13, %c0_50] : memref<25x1024xf32, #tpu.memory_space<vmem>>, vector<1x1024xf32>
    tpu.vector_store %arg14[%c13, %c0_50], %44 {strides = array<i32>} : memref<25x1024xf32, #tpu.memory_space<vmem>>, vector<1x1024xf32>,
    %c0_51 = arith.constant 0 : index
    %c0_52 = arith.constant 0 : index
    %c68 = arith.constant 68 : index
    %46 = vector.load %arg1[%c0_51, %c0_52, %c68] : memref<1x1x1280xf32, #tpu.memory_space<vmem>>, vector<1x1x1024xf32>
    %47 = vector.shape_cast %46 : vector<1x1x1024xf32> to vector<1x1024xf32>
    %c14 = arith.constant 14 : index
    %c0_53 = arith.constant 0 : index
    %48 = vector.load %arg14[%c14, %c0_53] : memref<25x1024xf32, #tpu.memory_space<vmem>>, vector<1x1024xf32>
    tpu.vector_store %arg14[%c14, %c0_53], %47 {strides = array<i32>} : memref<25x1024xf32, #tpu.memory_space<vmem>>, vector<1x1024xf32>,
    %c0_54 = arith.constant 0 : index
    %c0_55 = arith.constant 0 : index
    %c96 = arith.constant 96 : index
    %49 = vector.load %arg1[%c0_54, %c0_55, %c96] : memref<1x1x1280xf32, #tpu.memory_space<vmem>>, vector<1x1x1024xf32>
    %50 = vector.shape_cast %49 : vector<1x1x1024xf32> to vector<1x1024xf32>
    %c15 = arith.constant 15 : index
    %c0_56 = arith.constant 0 : index
    %51 = vector.load %arg14[%c15, %c0_56] : memref<25x1024xf32, #tpu.memory_space<vmem>>, vector<1x1024xf32>
    tpu.vector_store %arg14[%c15, %c0_56], %50 {strides = array<i32>} : memref<25x1024xf32, #tpu.memory_space<vmem>>, vector<1x1024xf32>,
    %c0_57 = arith.constant 0 : index
    %c0_58 = arith.constant 0 : index
    %c97 = arith.constant 97 : index
    %52 = vector.load %arg1[%c0_57, %c0_58, %c97] : memref<1x1x1280xf32, #tpu.memory_space<vmem>>, vector<1x1x1024xf32>
    %53 = vector.shape_cast %52 : vector<1x1x1024xf32> to vector<1x1024xf32>
    %c16 = arith.constant 16 : index
    %c0_59 = arith.constant 0 : index
    %54 = vector.load %arg14[%c16, %c0_59] : memref<25x1024xf32, #tpu.memory_space<vmem>>, vector<1x1024xf32>
    tpu.vector_store %arg14[%c16, %c0_59], %53 {strides = array<i32>} : memref<25x1024xf32, #tpu.memory_space<vmem>>, vector<1x1024xf32>,
    %c0_60 = arith.constant 0 : index
    %c0_61 = arith.constant 0 : index
    %c98 = arith.constant 98 : index
    %55 = vector.load %arg1[%c0_60, %c0_61, %c98] : memref<1x1x1280xf32, #tpu.memory_space<vmem>>, vector<1x1x1024xf32>
    %56 = vector.shape_cast %55 : vector<1x1x1024xf32> to vector<1x1024xf32>
    %c17 = arith.constant 17 : index
    %c0_62 = arith.constant 0 : index
    %57 = vector.load %arg14[%c17, %c0_62] : memref<25x1024xf32, #tpu.memory_space<vmem>>, vector<1x1024xf32>
    tpu.vector_store %arg14[%c17, %c0_62], %56 {strides = array<i32>} : memref<25x1024xf32, #tpu.memory_space<vmem>>, vector<1x1024xf32>,
    %c0_63 = arith.constant 0 : index
    %c0_64 = arith.constant 0 : index
    %c99 = arith.constant 99 : index
    %58 = vector.load %arg1[%c0_63, %c0_64, %c99] : memref<1x1x1280xf32, #tpu.memory_space<vmem>>, vector<1x1x1024xf32>
    %59 = vector.shape_cast %58 : vector<1x1x1024xf32> to vector<1x1024xf32>
    %c18 = arith.constant 18 : index
    %c0_65 = arith.constant 0 : index
    %60 = vector.load %arg14[%c18, %c0_65] : memref<25x1024xf32, #tpu.memory_space<vmem>>, vector<1x1024xf32>
    tpu.vector_store %arg14[%c18, %c0_65], %59 {strides = array<i32>} : memref<25x1024xf32, #tpu.memory_space<vmem>>, vector<1x1024xf32>,
    %c0_66 = arith.constant 0 : index
    %c0_67 = arith.constant 0 : index
    %c100 = arith.constant 100 : index
    %61 = vector.load %arg1[%c0_66, %c0_67, %c100] : memref<1x1x1280xf32, #tpu.memory_space<vmem>>, vector<1x1x1024xf32>
    %62 = vector.shape_cast %61 : vector<1x1x1024xf32> to vector<1x1024xf32>
    %c19 = arith.constant 19 : index
    %c0_68 = arith.constant 0 : index
    %63 = vector.load %arg14[%c19, %c0_68] : memref<25x1024xf32, #tpu.memory_space<vmem>>, vector<1x1024xf32>
    tpu.vector_store %arg14[%c19, %c0_68], %62 {strides = array<i32>} : memref<25x1024xf32, #tpu.memory_space<vmem>>, vector<1x1024xf32>,
    %c0_69 = arith.constant 0 : index
    %c0_70 = arith.constant 0 : index
    %c128 = arith.constant 128 : index
    %64 = vector.load %arg1[%c0_69, %c0_70, %c128] : memref<1x1x1280xf32, #tpu.memory_space<vmem>>, vector<1x1x1024xf32>
    %65 = vector.shape_cast %64 : vector<1x1x1024xf32> to vector<1x1024xf32>
    %c20 = arith.constant 20 : index
    %c0_71 = arith.constant 0 : index
    %66 = vector.load %arg14[%c20, %c0_71] : memref<25x1024xf32, #tpu.memory_space<vmem>>, vector<1x1024xf32>
    tpu.vector_store %arg14[%c20, %c0_71], %65 {strides = array<i32>} : memref<25x1024xf32, #tpu.memory_space<vmem>>, vector<1x1024xf32>,
    %c0_72 = arith.constant 0 : index
    %c0_73 = arith.constant 0 : index
    %c129 = arith.constant 129 : index
    %67 = vector.load %arg1[%c0_72, %c0_73, %c129] : memref<1x1x1280xf32, #tpu.memory_space<vmem>>, vector<1x1x1024xf32>
    %68 = vector.shape_cast %67 : vector<1x1x1024xf32> to vector<1x1024xf32>
    %c21 = arith.constant 21 : index
    %c0_74 = arith.constant 0 : index
    %69 = vector.load %arg14[%c21, %c0_74] : memref<25x1024xf32, #tpu.memory_space<vmem>>, vector<1x1024xf32>
    tpu.vector_store %arg14[%c21, %c0_74], %68 {strides = array<i32>} : memref<25x1024xf32, #tpu.memory_space<vmem>>, vector<1x1024xf32>,
    %c0_75 = arith.constant 0 : index
    %c0_76 = arith.constant 0 : index
    %c130 = arith.constant 130 : index
    %70 = vector.load %arg1[%c0_75, %c0_76, %c130] : memref<1x1x1280xf32, #tpu.memory_space<vmem>>, vector<1x1x1024xf32>
    %71 = vector.shape_cast %70 : vector<1x1x1024xf32> to vector<1x1024xf32>
    %c22 = arith.constant 22 : index
    %c0_77 = arith.constant 0 : index
    %72 = vector.load %arg14[%c22, %c0_77] : memref<25x1024xf32, #tpu.memory_space<vmem>>, vector<1x1024xf32>
    tpu.vector_store %arg14[%c22, %c0_77], %71 {strides = array<i32>} : memref<25x1024xf32, #tpu.memory_space<vmem>>, vector<1x1024xf32>,
    %c0_78 = arith.constant 0 : index
    %c0_79 = arith.constant 0 : index
    %c131 = arith.constant 131 : index
    %73 = vector.load %arg1[%c0_78, %c0_79, %c131] : memref<1x1x1280xf32, #tpu.memory_space<vmem>>, vector<1x1x1024xf32>
    %74 = vector.shape_cast %73 : vector<1x1x1024xf32> to vector<1x1024xf32>
    %c23 = arith.constant 23 : index
    %c0_80 = arith.constant 0 : index
    %75 = vector.load %arg14[%c23, %c0_80] : memref<25x1024xf32, #tpu.memory_space<vmem>>, vector<1x1024xf32>
    tpu.vector_store %arg14[%c23, %c0_80], %74 {strides = array<i32>} : memref<25x1024xf32, #tpu.memory_space<vmem>>, vector<1x1024xf32>,
    %c0_81 = arith.constant 0 : index
    %c0_82 = arith.constant 0 : index
    %c132 = arith.constant 132 : index
    %76 = vector.load %arg1[%c0_81, %c0_82, %c132] : memref<1x1x1280xf32, #tpu.memory_space<vmem>>, vector<1x1x1024xf32>
    %77 = vector.shape_cast %76 : vector<1x1x1024xf32> to vector<1x1024xf32>
    %c24 = arith.constant 24 : index
    %c0_83 = arith.constant 0 : index
    %78 = vector.load %arg14[%c24, %c0_83] : memref<25x1024xf32, #tpu.memory_space<vmem>>, vector<1x1024xf32>
    tpu.vector_store %arg14[%c24, %c0_83], %77 {strides = array<i32>} : memref<25x1024xf32, #tpu.memory_space<vmem>>, vector<1x1024xf32>,
    %c0_84 = arith.constant 0 : index
    %c0_85 = arith.constant 0 : index
    %79 = vector.load %arg2[%c0_84, %c0_85] : memref<6x25xbf16, #tpu.memory_space<vmem>>, vector<6x25xbf16>
    %c0_86 = arith.constant 0 : index
    %c0_87 = arith.constant 0 : index
    %80 = vector.load %arg14[%c0_86, %c0_87] : memref<25x1024xf32, #tpu.memory_space<vmem>>, vector<25x1024xf32>
    %81 = arith.truncf %80 : vector<25x1024xf32> to vector<25x1024xbf16>
    %cst_88 = arith.constant dense<0.000000e+00> : vector<6x1024xf32>
    %82 = tpu.matmul %79, %81, %cst_88 {dimension_numbers = #tpu.dot_dimension_numbers<[1], [0], [0], [1], [0, 0, 1, 1], [], []>} : vector<6x25xbf16>, vector<25x1024xbf16>, vector<6x1024xf32> -> vector<6x1024xf32>
    %c0_89 = arith.constant 0 : index
    %c0_90 = arith.constant 0 : index
    %83 = vector.load %arg3[%c0_89, %c0_90] : memref<6x1xf32, #tpu.memory_space<vmem>>, vector<6x1xf32>
    %84 = vector.broadcast %83 : vector<6x1xf32> to vector<6x1024xf32>
    %85 = arith.addf %82, %84 : vector<6x1024xf32>
    %86 = arith.negf %85 : vector<6x1024xf32>
    %87 = math.exp %86 : vector<6x1024xf32>
    %cst_91 = arith.constant 1.000000e+00 : f32
    %88 = vector.broadcast %cst_91 : f32 to vector<6x1024xf32>
    %89 = arith.addf %88, %87 : vector<6x1024xf32>
    %90 = arith.divf %88, %89 : vector<6x1024xf32>
    %c0_92 = arith.constant 0 : index
    %c0_93 = arith.constant 0 : index
    %91 = vector.load %arg15[%c0_92, %c0_93] : memref<6x1152xf32, #tpu.memory_space<vmem>>, vector<6x1024xf32>
    tpu.vector_store %arg15[%c0_92, %c0_93], %90 {strides = array<i32>} : memref<6x1152xf32, #tpu.memory_space<vmem>>, vector<6x1024xf32>,
    %c0_94 = arith.constant 0 : index
    %c0_95 = arith.constant 0 : index
    %92 = vector.load %arg15[%c0_94, %c0_95] : memref<6x1152xf32, #tpu.memory_space<vmem>>, vector<6x1024xf32>
    %c0_96 = arith.constant 0 : index
    %c1_97 = arith.constant 1 : index
    %93 = vector.load %arg15[%c0_96, %c1_97] : memref<6x1152xf32, #tpu.memory_space<vmem>>, vector<6x1024xf32>
    %94 = arith.addf %92, %93 : vector<6x1024xf32>
    %c0_98 = arith.constant 0 : index
    %c32_99 = arith.constant 32 : index
    %95 = vector.load %arg15[%c0_98, %c32_99] : memref<6x1152xf32, #tpu.memory_space<vmem>>, vector<6x1024xf32>
    %96 = arith.addf %94, %95 : vector<6x1024xf32>
    %c0_100 = arith.constant 0 : index
    %c33_101 = arith.constant 33 : index
    %97 = vector.load %arg15[%c0_100, %c33_101] : memref<6x1152xf32, #tpu.memory_space<vmem>>, vector<6x1024xf32>
    %98 = arith.addf %96, %97 : vector<6x1024xf32>
    %cst_102 = arith.constant 2.500000e-01 : f32
    %99 = vector.broadcast %cst_102 : f32 to vector<6x1024xf32>
    %100 = arith.mulf %99, %98 : vector<6x1024xf32>
    %101 = arith.truncf %100 : vector<6x1024xf32> to vector<6x1024xbf16>
    %c0_103 = arith.constant 0 : index
    %c0_104 = arith.constant 0 : index
    %102 = vector.load %arg16[%c0_103, %c0_104] : memref<6x1408xbf16, #tpu.memory_space<vmem>>, vector<6x1024xbf16>
    tpu.vector_store %arg16[%c0_103, %c0_104], %101 {strides = array<i32>} : memref<6x1408xbf16, #tpu.memory_space<vmem>>, vector<6x1024xbf16>,
    %cst_105 = arith.constant 0.000000e+00 : f32
    %103 = vector.broadcast %cst_105 : f32 to vector<16x1024xf32>
    %c0_106 = arith.constant 0 : index
    %c0_107 = arith.constant 0 : index
    %c0_108 = arith.constant 0 : index
    %104 = vector.load %arg4[%c0_106, %c0_107, %c0_108] : memref<25x16x6xbf16, #tpu.memory_space<vmem>>, vector<1x16x6xbf16>
    %105 = vector.shape_cast %104 : vector<1x16x6xbf16> to vector<16x6xbf16>
    %c0_109 = arith.constant 0 : index
    %c0_110 = arith.constant 0 : index
    %106 = vector.load %arg16[%c0_109, %c0_110] : memref<6x1408xbf16, #tpu.memory_space<vmem>>, vector<6x1024xbf16>
    %cst_111 = arith.constant dense<0.000000e+00> : vector<16x1024xf32>
    %107 = tpu.matmul %105, %106, %cst_111 {dimension_numbers = #tpu.dot_dimension_numbers<[1], [0], [0], [1], [0, 0, 1, 1], [], []>} : vector<16x6xbf16>, vector<6x1024xbf16>, vector<16x1024xf32> -> vector<16x1024xf32>
    %108 = arith.addf %103, %107 : vector<16x1024xf32>
    %c1_112 = arith.constant 1 : index
    %c0_113 = arith.constant 0 : index
    %c0_114 = arith.constant 0 : index
    %109 = vector.load %arg4[%c1_112, %c0_113, %c0_114] : memref<25x16x6xbf16, #tpu.memory_space<vmem>>, vector<1x16x6xbf16>
    %110 = vector.shape_cast %109 : vector<1x16x6xbf16> to vector<16x6xbf16>
    %c0_115 = arith.constant 0 : index
    %c2_116 = arith.constant 2 : index
    %111 = vector.load %arg16[%c0_115, %c2_116] : memref<6x1408xbf16, #tpu.memory_space<vmem>>, vector<6x1024xbf16>
    %cst_117 = arith.constant dense<0.000000e+00> : vector<16x1024xf32>
    %112 = tpu.matmul %110, %111, %cst_117 {dimension_numbers = #tpu.dot_dimension_numbers<[1], [0], [0], [1], [0, 0, 1, 1], [], []>} : vector<16x6xbf16>, vector<6x1024xbf16>, vector<16x1024xf32> -> vector<16x1024xf32>
    %113 = arith.addf %108, %112 : vector<16x1024xf32>
    %c2_118 = arith.constant 2 : index
    %c0_119 = arith.constant 0 : index
    %c0_120 = arith.constant 0 : index
    %114 = vector.load %arg4[%c2_118, %c0_119, %c0_120] : memref<25x16x6xbf16, #tpu.memory_space<vmem>>, vector<1x16x6xbf16>
    %115 = vector.shape_cast %114 : vector<1x16x6xbf16> to vector<16x6xbf16>
    %c0_121 = arith.constant 0 : index
    %c4_122 = arith.constant 4 : index
    %116 = vector.load %arg16[%c0_121, %c4_122] : memref<6x1408xbf16, #tpu.memory_space<vmem>>, vector<6x1024xbf16>
    %cst_123 = arith.constant dense<0.000000e+00> : vector<16x1024xf32>
    %117 = tpu.matmul %115, %116, %cst_123 {dimension_numbers = #tpu.dot_dimension_numbers<[1], [0], [0], [1], [0, 0, 1, 1], [], []>} : vector<16x6xbf16>, vector<6x1024xbf16>, vector<16x1024xf32> -> vector<16x1024xf32>
    %118 = arith.addf %113, %117 : vector<16x1024xf32>
    %c3_124 = arith.constant 3 : index
    %c0_125 = arith.constant 0 : index
    %c0_126 = arith.constant 0 : index
    %119 = vector.load %arg4[%c3_124, %c0_125, %c0_126] : memref<25x16x6xbf16, #tpu.memory_space<vmem>>, vector<1x16x6xbf16>
    %120 = vector.shape_cast %119 : vector<1x16x6xbf16> to vector<16x6xbf16>
    %c0_127 = arith.constant 0 : index
    %c6_128 = arith.constant 6 : index
    %121 = vector.load %arg16[%c0_127, %c6_128] : memref<6x1408xbf16, #tpu.memory_space<vmem>>, vector<6x1024xbf16>
    %cst_129 = arith.constant dense<0.000000e+00> : vector<16x1024xf32>
    %122 = tpu.matmul %120, %121, %cst_129 {dimension_numbers = #tpu.dot_dimension_numbers<[1], [0], [0], [1], [0, 0, 1, 1], [], []>} : vector<16x6xbf16>, vector<6x1024xbf16>, vector<16x1024xf32> -> vector<16x1024xf32>
    %123 = arith.addf %118, %122 : vector<16x1024xf32>
    %c4_130 = arith.constant 4 : index
    %c0_131 = arith.constant 0 : index
    %c0_132 = arith.constant 0 : index
    %124 = vector.load %arg4[%c4_130, %c0_131, %c0_132] : memref<25x16x6xbf16, #tpu.memory_space<vmem>>, vector<1x16x6xbf16>
    %125 = vector.shape_cast %124 : vector<1x16x6xbf16> to vector<16x6xbf16>
    %c0_133 = arith.constant 0 : index
    %c8_134 = arith.constant 8 : index
    %126 = vector.load %arg16[%c0_133, %c8_134] : memref<6x1408xbf16, #tpu.memory_space<vmem>>, vector<6x1024xbf16>
    %cst_135 = arith.constant dense<0.000000e+00> : vector<16x1024xf32>
    %127 = tpu.matmul %125, %126, %cst_135 {dimension_numbers = #tpu.dot_dimension_numbers<[1], [0], [0], [1], [0, 0, 1, 1], [], []>} : vector<16x6xbf16>, vector<6x1024xbf16>, vector<16x1024xf32> -> vector<16x1024xf32>
    %128 = arith.addf %123, %127 : vector<16x1024xf32>
    %c5_136 = arith.constant 5 : index
    %c0_137 = arith.constant 0 : index
    %c0_138 = arith.constant 0 : index
    %129 = vector.load %arg4[%c5_136, %c0_137, %c0_138] : memref<25x16x6xbf16, #tpu.memory_space<vmem>>, vector<1x16x6xbf16>
    %130 = vector.shape_cast %129 : vector<1x16x6xbf16> to vector<16x6xbf16>
    %c0_139 = arith.constant 0 : index
    %c64_140 = arith.constant 64 : index
    %131 = vector.load %arg16[%c0_139, %c64_140] : memref<6x1408xbf16, #tpu.memory_space<vmem>>, vector<6x1024xbf16>
    %cst_141 = arith.constant dense<0.000000e+00> : vector<16x1024xf32>
    %132 = tpu.matmul %130, %131, %cst_141 {dimension_numbers = #tpu.dot_dimension_numbers<[1], [0], [0], [1], [0, 0, 1, 1], [], []>} : vector<16x6xbf16>, vector<6x1024xbf16>, vector<16x1024xf32> -> vector<16x1024xf32>
    %133 = arith.addf %128, %132 : vector<16x1024xf32>
    %c6_142 = arith.constant 6 : index
    %c0_143 = arith.constant 0 : index
    %c0_144 = arith.constant 0 : index
    %134 = vector.load %arg4[%c6_142, %c0_143, %c0_144] : memref<25x16x6xbf16, #tpu.memory_space<vmem>>, vector<1x16x6xbf16>
    %135 = vector.shape_cast %134 : vector<1x16x6xbf16> to vector<16x6xbf16>
    %c0_145 = arith.constant 0 : index
    %c66_146 = arith.constant 66 : index
    %136 = vector.load %arg16[%c0_145, %c66_146] : memref<6x1408xbf16, #tpu.memory_space<vmem>>, vector<6x1024xbf16>
    %cst_147 = arith.constant dense<0.000000e+00> : vector<16x1024xf32>
    %137 = tpu.matmul %135, %136, %cst_147 {dimension_numbers = #tpu.dot_dimension_numbers<[1], [0], [0], [1], [0, 0, 1, 1], [], []>} : vector<16x6xbf16>, vector<6x1024xbf16>, vector<16x1024xf32> -> vector<16x1024xf32>
    %138 = arith.addf %133, %137 : vector<16x1024xf32>
    %c7_148 = arith.constant 7 : index
    %c0_149 = arith.constant 0 : index
    %c0_150 = arith.constant 0 : index
    %139 = vector.load %arg4[%c7_148, %c0_149, %c0_150] : memref<25x16x6xbf16, #tpu.memory_space<vmem>>, vector<1x16x6xbf16>
    %140 = vector.shape_cast %139 : vector<1x16x6xbf16> to vector<16x6xbf16>
    %c0_151 = arith.constant 0 : index
    %c68_152 = arith.constant 68 : index
    %141 = vector.load %arg16[%c0_151, %c68_152] : memref<6x1408xbf16, #tpu.memory_space<vmem>>, vector<6x1024xbf16>
    %cst_153 = arith.constant dense<0.000000e+00> : vector<16x1024xf32>
    %142 = tpu.matmul %140, %141, %cst_153 {dimension_numbers = #tpu.dot_dimension_numbers<[1], [0], [0], [1], [0, 0, 1, 1], [], []>} : vector<16x6xbf16>, vector<6x1024xbf16>, vector<16x1024xf32> -> vector<16x1024xf32>
    %143 = arith.addf %138, %142 : vector<16x1024xf32>
    %c8_154 = arith.constant 8 : index
    %c0_155 = arith.constant 0 : index
    %c0_156 = arith.constant 0 : index
    %144 = vector.load %arg4[%c8_154, %c0_155, %c0_156] : memref<25x16x6xbf16, #tpu.memory_space<vmem>>, vector<1x16x6xbf16>
    %145 = vector.shape_cast %144 : vector<1x16x6xbf16> to vector<16x6xbf16>
    %c0_157 = arith.constant 0 : index
    %c70 = arith.constant 70 : index
    %146 = vector.load %arg16[%c0_157, %c70] : memref<6x1408xbf16, #tpu.memory_space<vmem>>, vector<6x1024xbf16>
    %cst_158 = arith.constant dense<0.000000e+00> : vector<16x1024xf32>
    %147 = tpu.matmul %145, %146, %cst_158 {dimension_numbers = #tpu.dot_dimension_numbers<[1], [0], [0], [1], [0, 0, 1, 1], [], []>} : vector<16x6xbf16>, vector<6x1024xbf16>, vector<16x1024xf32> -> vector<16x1024xf32>
    %148 = arith.addf %143, %147 : vector<16x1024xf32>
    %c9_159 = arith.constant 9 : index
    %c0_160 = arith.constant 0 : index
    %c0_161 = arith.constant 0 : index
    %149 = vector.load %arg4[%c9_159, %c0_160, %c0_161] : memref<25x16x6xbf16, #tpu.memory_space<vmem>>, vector<1x16x6xbf16>
    %150 = vector.shape_cast %149 : vector<1x16x6xbf16> to vector<16x6xbf16>
    %c0_162 = arith.constant 0 : index
    %c72 = arith.constant 72 : index
    %151 = vector.load %arg16[%c0_162, %c72] : memref<6x1408xbf16, #tpu.memory_space<vmem>>, vector<6x1024xbf16>
    %cst_163 = arith.constant dense<0.000000e+00> : vector<16x1024xf32>
    %152 = tpu.matmul %150, %151, %cst_163 {dimension_numbers = #tpu.dot_dimension_numbers<[1], [0], [0], [1], [0, 0, 1, 1], [], []>} : vector<16x6xbf16>, vector<6x1024xbf16>, vector<16x1024xf32> -> vector<16x1024xf32>
    %153 = arith.addf %148, %152 : vector<16x1024xf32>
    %c10_164 = arith.constant 10 : index
    %c0_165 = arith.constant 0 : index
    %c0_166 = arith.constant 0 : index
    %154 = vector.load %arg4[%c10_164, %c0_165, %c0_166] : memref<25x16x6xbf16, #tpu.memory_space<vmem>>, vector<1x16x6xbf16>
    %155 = vector.shape_cast %154 : vector<1x16x6xbf16> to vector<16x6xbf16>
    %c0_167 = arith.constant 0 : index
    %c128_168 = arith.constant 128 : index
    %156 = vector.load %arg16[%c0_167, %c128_168] : memref<6x1408xbf16, #tpu.memory_space<vmem>>, vector<6x1024xbf16>
    %cst_169 = arith.constant dense<0.000000e+00> : vector<16x1024xf32>
    %157 = tpu.matmul %155, %156, %cst_169 {dimension_numbers = #tpu.dot_dimension_numbers<[1], [0], [0], [1], [0, 0, 1, 1], [], []>} : vector<16x6xbf16>, vector<6x1024xbf16>, vector<16x1024xf32> -> vector<16x1024xf32>
    %158 = arith.addf %153, %157 : vector<16x1024xf32>
    %c11_170 = arith.constant 11 : index
    %c0_171 = arith.constant 0 : index
    %c0_172 = arith.constant 0 : index
    %159 = vector.load %arg4[%c11_170, %c0_171, %c0_172] : memref<25x16x6xbf16, #tpu.memory_space<vmem>>, vector<1x16x6xbf16>
    %160 = vector.shape_cast %159 : vector<1x16x6xbf16> to vector<16x6xbf16>
    %c0_173 = arith.constant 0 : index
    %c130_174 = arith.constant 130 : index
    %161 = vector.load %arg16[%c0_173, %c130_174] : memref<6x1408xbf16, #tpu.memory_space<vmem>>, vector<6x1024xbf16>
    %cst_175 = arith.constant dense<0.000000e+00> : vector<16x1024xf32>
    %162 = tpu.matmul %160, %161, %cst_175 {dimension_numbers = #tpu.dot_dimension_numbers<[1], [0], [0], [1], [0, 0, 1, 1], [], []>} : vector<16x6xbf16>, vector<6x1024xbf16>, vector<16x1024xf32> -> vector<16x1024xf32>
    %163 = arith.addf %158, %162 : vector<16x1024xf32>
    %c12_176 = arith.constant 12 : index
    %c0_177 = arith.constant 0 : index
    %c0_178 = arith.constant 0 : index
    %164 = vector.load %arg4[%c12_176, %c0_177, %c0_178] : memref<25x16x6xbf16, #tpu.memory_space<vmem>>, vector<1x16x6xbf16>
    %165 = vector.shape_cast %164 : vector<1x16x6xbf16> to vector<16x6xbf16>
    %c0_179 = arith.constant 0 : index
    %c132_180 = arith.constant 132 : index
    %166 = vector.load %arg16[%c0_179, %c132_180] : memref<6x1408xbf16, #tpu.memory_space<vmem>>, vector<6x1024xbf16>
    %cst_181 = arith.constant dense<0.000000e+00> : vector<16x1024xf32>
    %167 = tpu.matmul %165, %166, %cst_181 {dimension_numbers = #tpu.dot_dimension_numbers<[1], [0], [0], [1], [0, 0, 1, 1], [], []>} : vector<16x6xbf16>, vector<6x1024xbf16>, vector<16x1024xf32> -> vector<16x1024xf32>
    %168 = arith.addf %163, %167 : vector<16x1024xf32>
    %c13_182 = arith.constant 13 : index
    %c0_183 = arith.constant 0 : index
    %c0_184 = arith.constant 0 : index
    %169 = vector.load %arg4[%c13_182, %c0_183, %c0_184] : memref<25x16x6xbf16, #tpu.memory_space<vmem>>, vector<1x16x6xbf16>
    %170 = vector.shape_cast %169 : vector<1x16x6xbf16> to vector<16x6xbf16>
    %c0_185 = arith.constant 0 : index
    %c134 = arith.constant 134 : index
    %171 = vector.load %arg16[%c0_185, %c134] : memref<6x1408xbf16, #tpu.memory_space<vmem>>, vector<6x1024xbf16>
    %cst_186 = arith.constant dense<0.000000e+00> : vector<16x1024xf32>
    %172 = tpu.matmul %170, %171, %cst_186 {dimension_numbers = #tpu.dot_dimension_numbers<[1], [0], [0], [1], [0, 0, 1, 1], [], []>} : vector<16x6xbf16>, vector<6x1024xbf16>, vector<16x1024xf32> -> vector<16x1024xf32>
    %173 = arith.addf %168, %172 : vector<16x1024xf32>
    %c14_187 = arith.constant 14 : index
    %c0_188 = arith.constant 0 : index
    %c0_189 = arith.constant 0 : index
    %174 = vector.load %arg4[%c14_187, %c0_188, %c0_189] : memref<25x16x6xbf16, #tpu.memory_space<vmem>>, vector<1x16x6xbf16>
    %175 = vector.shape_cast %174 : vector<1x16x6xbf16> to vector<16x6xbf16>
    %c0_190 = arith.constant 0 : index
    %c136 = arith.constant 136 : index
    %176 = vector.load %arg16[%c0_190, %c136] : memref<6x1408xbf16, #tpu.memory_space<vmem>>, vector<6x1024xbf16>
    %cst_191 = arith.constant dense<0.000000e+00> : vector<16x1024xf32>
    %177 = tpu.matmul %175, %176, %cst_191 {dimension_numbers = #tpu.dot_dimension_numbers<[1], [0], [0], [1], [0, 0, 1, 1], [], []>} : vector<16x6xbf16>, vector<6x1024xbf16>, vector<16x1024xf32> -> vector<16x1024xf32>
    %178 = arith.addf %173, %177 : vector<16x1024xf32>
    %c15_192 = arith.constant 15 : index
    %c0_193 = arith.constant 0 : index
    %c0_194 = arith.constant 0 : index
    %179 = vector.load %arg4[%c15_192, %c0_193, %c0_194] : memref<25x16x6xbf16, #tpu.memory_space<vmem>>, vector<1x16x6xbf16>
    %180 = vector.shape_cast %179 : vector<1x16x6xbf16> to vector<16x6xbf16>
    %c0_195 = arith.constant 0 : index
    %c192 = arith.constant 192 : index
    %181 = vector.load %arg16[%c0_195, %c192] : memref<6x1408xbf16, #tpu.memory_space<vmem>>, vector<6x1024xbf16>
    %cst_196 = arith.constant dense<0.000000e+00> : vector<16x1024xf32>
    %182 = tpu.matmul %180, %181, %cst_196 {dimension_numbers = #tpu.dot_dimension_numbers<[1], [0], [0], [1], [0, 0, 1, 1], [], []>} : vector<16x6xbf16>, vector<6x1024xbf16>, vector<16x1024xf32> -> vector<16x1024xf32>
    %183 = arith.addf %178, %182 : vector<16x1024xf32>
    %c16_197 = arith.constant 16 : index
    %c0_198 = arith.constant 0 : index
    %c0_199 = arith.constant 0 : index
    %184 = vector.load %arg4[%c16_197, %c0_198, %c0_199] : memref<25x16x6xbf16, #tpu.memory_space<vmem>>, vector<1x16x6xbf16>
    %185 = vector.shape_cast %184 : vector<1x16x6xbf16> to vector<16x6xbf16>
    %c0_200 = arith.constant 0 : index
    %c194 = arith.constant 194 : index
    %186 = vector.load %arg16[%c0_200, %c194] : memref<6x1408xbf16, #tpu.memory_space<vmem>>, vector<6x1024xbf16>
    %cst_201 = arith.constant dense<0.000000e+00> : vector<16x1024xf32>
    %187 = tpu.matmul %185, %186, %cst_201 {dimension_numbers = #tpu.dot_dimension_numbers<[1], [0], [0], [1], [0, 0, 1, 1], [], []>} : vector<16x6xbf16>, vector<6x1024xbf16>, vector<16x1024xf32> -> vector<16x1024xf32>
    %188 = arith.addf %183, %187 : vector<16x1024xf32>
    %c17_202 = arith.constant 17 : index
    %c0_203 = arith.constant 0 : index
    %c0_204 = arith.constant 0 : index
    %189 = vector.load %arg4[%c17_202, %c0_203, %c0_204] : memref<25x16x6xbf16, #tpu.memory_space<vmem>>, vector<1x16x6xbf16>
    %190 = vector.shape_cast %189 : vector<1x16x6xbf16> to vector<16x6xbf16>
    %c0_205 = arith.constant 0 : index
    %c196 = arith.constant 196 : index
    %191 = vector.load %arg16[%c0_205, %c196] : memref<6x1408xbf16, #tpu.memory_space<vmem>>, vector<6x1024xbf16>
    %cst_206 = arith.constant dense<0.000000e+00> : vector<16x1024xf32>
    %192 = tpu.matmul %190, %191, %cst_206 {dimension_numbers = #tpu.dot_dimension_numbers<[1], [0], [0], [1], [0, 0, 1, 1], [], []>} : vector<16x6xbf16>, vector<6x1024xbf16>, vector<16x1024xf32> -> vector<16x1024xf32>
    %193 = arith.addf %188, %192 : vector<16x1024xf32>
    %c18_207 = arith.constant 18 : index
    %c0_208 = arith.constant 0 : index
    %c0_209 = arith.constant 0 : index
    %194 = vector.load %arg4[%c18_207, %c0_208, %c0_209] : memref<25x16x6xbf16, #tpu.memory_space<vmem>>, vector<1x16x6xbf16>
    %195 = vector.shape_cast %194 : vector<1x16x6xbf16> to vector<16x6xbf16>
    %c0_210 = arith.constant 0 : index
    %c198 = arith.constant 198 : index
    %196 = vector.load %arg16[%c0_210, %c198] : memref<6x1408xbf16, #tpu.memory_space<vmem>>, vector<6x1024xbf16>
    %cst_211 = arith.constant dense<0.000000e+00> : vector<16x1024xf32>
    %197 = tpu.matmul %195, %196, %cst_211 {dimension_numbers = #tpu.dot_dimension_numbers<[1], [0], [0], [1], [0, 0, 1, 1], [], []>} : vector<16x6xbf16>, vector<6x1024xbf16>, vector<16x1024xf32> -> vector<16x1024xf32>
    %198 = arith.addf %193, %197 : vector<16x1024xf32>
    %c19_212 = arith.constant 19 : index
    %c0_213 = arith.constant 0 : index
    %c0_214 = arith.constant 0 : index
    %199 = vector.load %arg4[%c19_212, %c0_213, %c0_214] : memref<25x16x6xbf16, #tpu.memory_space<vmem>>, vector<1x16x6xbf16>
    %200 = vector.shape_cast %199 : vector<1x16x6xbf16> to vector<16x6xbf16>
    %c0_215 = arith.constant 0 : index
    %c200 = arith.constant 200 : index
    %201 = vector.load %arg16[%c0_215, %c200] : memref<6x1408xbf16, #tpu.memory_space<vmem>>, vector<6x1024xbf16>
    %cst_216 = arith.constant dense<0.000000e+00> : vector<16x1024xf32>
    %202 = tpu.matmul %200, %201, %cst_216 {dimension_numbers = #tpu.dot_dimension_numbers<[1], [0], [0], [1], [0, 0, 1, 1], [], []>} : vector<16x6xbf16>, vector<6x1024xbf16>, vector<16x1024xf32> -> vector<16x1024xf32>
    %203 = arith.addf %198, %202 : vector<16x1024xf32>
    %c20_217 = arith.constant 20 : index
    %c0_218 = arith.constant 0 : index
    %c0_219 = arith.constant 0 : index
    %204 = vector.load %arg4[%c20_217, %c0_218, %c0_219] : memref<25x16x6xbf16, #tpu.memory_space<vmem>>, vector<1x16x6xbf16>
    %205 = vector.shape_cast %204 : vector<1x16x6xbf16> to vector<16x6xbf16>
    %c0_220 = arith.constant 0 : index
    %c256 = arith.constant 256 : index
    %206 = vector.load %arg16[%c0_220, %c256] : memref<6x1408xbf16, #tpu.memory_space<vmem>>, vector<6x1024xbf16>
    %cst_221 = arith.constant dense<0.000000e+00> : vector<16x1024xf32>
    %207 = tpu.matmul %205, %206, %cst_221 {dimension_numbers = #tpu.dot_dimension_numbers<[1], [0], [0], [1], [0, 0, 1, 1], [], []>} : vector<16x6xbf16>, vector<6x1024xbf16>, vector<16x1024xf32> -> vector<16x1024xf32>
    %208 = arith.addf %203, %207 : vector<16x1024xf32>
    %c21_222 = arith.constant 21 : index
    %c0_223 = arith.constant 0 : index
    %c0_224 = arith.constant 0 : index
    %209 = vector.load %arg4[%c21_222, %c0_223, %c0_224] : memref<25x16x6xbf16, #tpu.memory_space<vmem>>, vector<1x16x6xbf16>
    %210 = vector.shape_cast %209 : vector<1x16x6xbf16> to vector<16x6xbf16>
    %c0_225 = arith.constant 0 : index
    %c258 = arith.constant 258 : index
    %211 = vector.load %arg16[%c0_225, %c258] : memref<6x1408xbf16, #tpu.memory_space<vmem>>, vector<6x1024xbf16>
    %cst_226 = arith.constant dense<0.000000e+00> : vector<16x1024xf32>
    %212 = tpu.matmul %210, %211, %cst_226 {dimension_numbers = #tpu.dot_dimension_numbers<[1], [0], [0], [1], [0, 0, 1, 1], [], []>} : vector<16x6xbf16>, vector<6x1024xbf16>, vector<16x1024xf32> -> vector<16x1024xf32>
    %213 = arith.addf %208, %212 : vector<16x1024xf32>
    %c22_227 = arith.constant 22 : index
    %c0_228 = arith.constant 0 : index
    %c0_229 = arith.constant 0 : index
    %214 = vector.load %arg4[%c22_227, %c0_228, %c0_229] : memref<25x16x6xbf16, #tpu.memory_space<vmem>>, vector<1x16x6xbf16>
    %215 = vector.shape_cast %214 : vector<1x16x6xbf16> to vector<16x6xbf16>
    %c0_230 = arith.constant 0 : index
    %c260 = arith.constant 260 : index
    %216 = vector.load %arg16[%c0_230, %c260] : memref<6x1408xbf16, #tpu.memory_space<vmem>>, vector<6x1024xbf16>
    %cst_231 = arith.constant dense<0.000000e+00> : vector<16x1024xf32>
    %217 = tpu.matmul %215, %216, %cst_231 {dimension_numbers = #tpu.dot_dimension_numbers<[1], [0], [0], [1], [0, 0, 1, 1], [], []>} : vector<16x6xbf16>, vector<6x1024xbf16>, vector<16x1024xf32> -> vector<16x1024xf32>
    %218 = arith.addf %213, %217 : vector<16x1024xf32>
    %c23_232 = arith.constant 23 : index
    %c0_233 = arith.constant 0 : index
    %c0_234 = arith.constant 0 : index
    %219 = vector.load %arg4[%c23_232, %c0_233, %c0_234] : memref<25x16x6xbf16, #tpu.memory_space<vmem>>, vector<1x16x6xbf16>
    %220 = vector.shape_cast %219 : vector<1x16x6xbf16> to vector<16x6xbf16>
    %c0_235 = arith.constant 0 : index
    %c262 = arith.constant 262 : index
    %221 = vector.load %arg16[%c0_235, %c262] : memref<6x1408xbf16, #tpu.memory_space<vmem>>, vector<6x1024xbf16>
    %cst_236 = arith.constant dense<0.000000e+00> : vector<16x1024xf32>
    %222 = tpu.matmul %220, %221, %cst_236 {dimension_numbers = #tpu.dot_dimension_numbers<[1], [0], [0], [1], [0, 0, 1, 1], [], []>} : vector<16x6xbf16>, vector<6x1024xbf16>, vector<16x1024xf32> -> vector<16x1024xf32>
    %223 = arith.addf %218, %222 : vector<16x1024xf32>
    %c24_237 = arith.constant 24 : index
    %c0_238 = arith.constant 0 : index
    %c0_239 = arith.constant 0 : index
    %224 = vector.load %arg4[%c24_237, %c0_238, %c0_239] : memref<25x16x6xbf16, #tpu.memory_space<vmem>>, vector<1x16x6xbf16>
    %225 = vector.shape_cast %224 : vector<1x16x6xbf16> to vector<16x6xbf16>
    %c0_240 = arith.constant 0 : index
    %c264 = arith.constant 264 : index
    %226 = vector.load %arg16[%c0_240, %c264] : memref<6x1408xbf16, #tpu.memory_space<vmem>>, vector<6x1024xbf16>
    %cst_241 = arith.constant dense<0.000000e+00> : vector<16x1024xf32>
    %227 = tpu.matmul %225, %226, %cst_241 {dimension_numbers = #tpu.dot_dimension_numbers<[1], [0], [0], [1], [0, 0, 1, 1], [], []>} : vector<16x6xbf16>, vector<6x1024xbf16>, vector<16x1024xf32> -> vector<16x1024xf32>
    %228 = arith.addf %223, %227 : vector<16x1024xf32>
    %c0_242 = arith.constant 0 : index
    %c0_243 = arith.constant 0 : index
    %229 = vector.load %arg5[%c0_242, %c0_243] : memref<16x1xf32, #tpu.memory_space<vmem>>, vector<16x1xf32>
    %230 = vector.broadcast %229 : vector<16x1xf32> to vector<16x1024xf32>
    %231 = arith.addf %228, %230 : vector<16x1024xf32>
    %232 = arith.negf %231 : vector<16x1024xf32>
    %233 = math.exp %232 : vector<16x1024xf32>
    %cst_244 = arith.constant 1.000000e+00 : f32
    %234 = vector.broadcast %cst_244 : f32 to vector<16x1024xf32>
    %235 = arith.addf %234, %233 : vector<16x1024xf32>
    %236 = arith.divf %234, %235 : vector<16x1024xf32>
    %237 = arith.truncf %236 : vector<16x1024xf32> to vector<16x1024xbf16>
    %c0_245 = arith.constant 0 : index
    %c0_246 = arith.constant 0 : index
    %238 = vector.load %arg6[%c0_245, %c0_246] : memref<1024x32xbf16, #tpu.memory_space<vmem>>, vector<1024x32xbf16>
    %cst_247 = arith.constant dense<0.000000e+00> : vector<16x32xf32>
    %239 = tpu.matmul %237, %238, %cst_247 {dimension_numbers = #tpu.dot_dimension_numbers<[1], [0], [0], [1], [0, 0, 1, 1], [], []>} : vector<16x1024xbf16>, vector<1024x32xbf16>, vector<16x32xf32> -> vector<16x32xf32>
    %240 = arith.truncf %239 : vector<16x32xf32> to vector<16x32xbf16>
    %c0_248 = arith.constant 0 : index
    %c0_249 = arith.constant 0 : index
    %241 = vector.load %arg8[%c0_248, %c0_249] : memref<1x120xf32, #tpu.memory_space<vmem>>, vector<1x120xf32>
    %242 = vector.extract_strided_slice %240 {offsets = [0, 0], sizes = [1, 32], strides = [1, 1]} : vector<16x32xbf16> to vector<1x32xbf16>
    %c0_250 = arith.constant 0 : index
    %c0_251 = arith.constant 0 : index
    %c0_252 = arith.constant 0 : index
    %243 = vector.load %arg7[%c0_250, %c0_251, %c0_252] : memref<16x32x120xbf16, #tpu.memory_space<vmem>>, vector<1x32x120xbf16>
    %244 = vector.shape_cast %243 : vector<1x32x120xbf16> to vector<32x120xbf16>
    %cst_253 = arith.constant dense<0.000000e+00> : vector<1x120xf32>
    %245 = tpu.matmul %242, %244, %cst_253 {dimension_numbers = #tpu.dot_dimension_numbers<[1], [0], [0], [1], [0, 0, 1, 1], [], []>} : vector<1x32xbf16>, vector<32x120xbf16>, vector<1x120xf32> -> vector<1x120xf32>
    %246 = arith.addf %241, %245 : vector<1x120xf32>
    %247 = vector.extract_strided_slice %240 {offsets = [1, 0], sizes = [1, 32], strides = [1, 1]} : vector<16x32xbf16> to vector<1x32xbf16>
    %c1_254 = arith.constant 1 : index
    %c0_255 = arith.constant 0 : index
    %c0_256 = arith.constant 0 : index
    %248 = vector.load %arg7[%c1_254, %c0_255, %c0_256] : memref<16x32x120xbf16, #tpu.memory_space<vmem>>, vector<1x32x120xbf16>
    %249 = vector.shape_cast %248 : vector<1x32x120xbf16> to vector<32x120xbf16>
    %cst_257 = arith.constant dense<0.000000e+00> : vector<1x120xf32>
    %250 = tpu.matmul %247, %249, %cst_257 {dimension_numbers = #tpu.dot_dimension_numbers<[1], [0], [0], [1], [0, 0, 1, 1], [], []>} : vector<1x32xbf16>, vector<32x120xbf16>, vector<1x120xf32> -> vector<1x120xf32>
    %251 = arith.addf %246, %250 : vector<1x120xf32>
    %252 = vector.extract_strided_slice %240 {offsets = [2, 0], sizes = [1, 32], strides = [1, 1]} : vector<16x32xbf16> to vector<1x32xbf16>
    %c2_258 = arith.constant 2 : index
    %c0_259 = arith.constant 0 : index
    %c0_260 = arith.constant 0 : index
    %253 = vector.load %arg7[%c2_258, %c0_259, %c0_260] : memref<16x32x120xbf16, #tpu.memory_space<vmem>>, vector<1x32x120xbf16>
    %254 = vector.shape_cast %253 : vector<1x32x120xbf16> to vector<32x120xbf16>
    %cst_261 = arith.constant dense<0.000000e+00> : vector<1x120xf32>
    %255 = tpu.matmul %252, %254, %cst_261 {dimension_numbers = #tpu.dot_dimension_numbers<[1], [0], [0], [1], [0, 0, 1, 1], [], []>} : vector<1x32xbf16>, vector<32x120xbf16>, vector<1x120xf32> -> vector<1x120xf32>
    %256 = arith.addf %251, %255 : vector<1x120xf32>
    %257 = vector.extract_strided_slice %240 {offsets = [3, 0], sizes = [1, 32], strides = [1, 1]} : vector<16x32xbf16> to vector<1x32xbf16>
    %c3_262 = arith.constant 3 : index
    %c0_263 = arith.constant 0 : index
    %c0_264 = arith.constant 0 : index
    %258 = vector.load %arg7[%c3_262, %c0_263, %c0_264] : memref<16x32x120xbf16, #tpu.memory_space<vmem>>, vector<1x32x120xbf16>
    %259 = vector.shape_cast %258 : vector<1x32x120xbf16> to vector<32x120xbf16>
    %cst_265 = arith.constant dense<0.000000e+00> : vector<1x120xf32>
    %260 = tpu.matmul %257, %259, %cst_265 {dimension_numbers = #tpu.dot_dimension_numbers<[1], [0], [0], [1], [0, 0, 1, 1], [], []>} : vector<1x32xbf16>, vector<32x120xbf16>, vector<1x120xf32> -> vector<1x120xf32>
    %261 = arith.addf %256, %260 : vector<1x120xf32>
    %262 = vector.extract_strided_slice %240 {offsets = [4, 0], sizes = [1, 32], strides = [1, 1]} : vector<16x32xbf16> to vector<1x32xbf16>
    %c4_266 = arith.constant 4 : index
    %c0_267 = arith.constant 0 : index
    %c0_268 = arith.constant 0 : index
    %263 = vector.load %arg7[%c4_266, %c0_267, %c0_268] : memref<16x32x120xbf16, #tpu.memory_space<vmem>>, vector<1x32x120xbf16>
    %264 = vector.shape_cast %263 : vector<1x32x120xbf16> to vector<32x120xbf16>
    %cst_269 = arith.constant dense<0.000000e+00> : vector<1x120xf32>
    %265 = tpu.matmul %262, %264, %cst_269 {dimension_numbers = #tpu.dot_dimension_numbers<[1], [0], [0], [1], [0, 0, 1, 1], [], []>} : vector<1x32xbf16>, vector<32x120xbf16>, vector<1x120xf32> -> vector<1x120xf32>
    %266 = arith.addf %261, %265 : vector<1x120xf32>
    %267 = vector.extract_strided_slice %240 {offsets = [5, 0], sizes = [1, 32], strides = [1, 1]} : vector<16x32xbf16> to vector<1x32xbf16>
    %c5_270 = arith.constant 5 : index
    %c0_271 = arith.constant 0 : index
    %c0_272 = arith.constant 0 : index
    %268 = vector.load %arg7[%c5_270, %c0_271, %c0_272] : memref<16x32x120xbf16, #tpu.memory_space<vmem>>, vector<1x32x120xbf16>
    %269 = vector.shape_cast %268 : vector<1x32x120xbf16> to vector<32x120xbf16>
    %cst_273 = arith.constant dense<0.000000e+00> : vector<1x120xf32>
    %270 = tpu.matmul %267, %269, %cst_273 {dimension_numbers = #tpu.dot_dimension_numbers<[1], [0], [0], [1], [0, 0, 1, 1], [], []>} : vector<1x32xbf16>, vector<32x120xbf16>, vector<1x120xf32> -> vector<1x120xf32>
    %271 = arith.addf %266, %270 : vector<1x120xf32>
    %272 = vector.extract_strided_slice %240 {offsets = [6, 0], sizes = [1, 32], strides = [1, 1]} : vector<16x32xbf16> to vector<1x32xbf16>
    %c6_274 = arith.constant 6 : index
    %c0_275 = arith.constant 0 : index
    %c0_276 = arith.constant 0 : index
    %273 = vector.load %arg7[%c6_274, %c0_275, %c0_276] : memref<16x32x120xbf16, #tpu.memory_space<vmem>>, vector<1x32x120xbf16>
    %274 = vector.shape_cast %273 : vector<1x32x120xbf16> to vector<32x120xbf16>
    %cst_277 = arith.constant dense<0.000000e+00> : vector<1x120xf32>
    %275 = tpu.matmul %272, %274, %cst_277 {dimension_numbers = #tpu.dot_dimension_numbers<[1], [0], [0], [1], [0, 0, 1, 1], [], []>} : vector<1x32xbf16>, vector<32x120xbf16>, vector<1x120xf32> -> vector<1x120xf32>
    %276 = arith.addf %271, %275 : vector<1x120xf32>
    %277 = vector.extract_strided_slice %240 {offsets = [7, 0], sizes = [1, 32], strides = [1, 1]} : vector<16x32xbf16> to vector<1x32xbf16>
    %c7_278 = arith.constant 7 : index
    %c0_279 = arith.constant 0 : index
    %c0_280 = arith.constant 0 : index
    %278 = vector.load %arg7[%c7_278, %c0_279, %c0_280] : memref<16x32x120xbf16, #tpu.memory_space<vmem>>, vector<1x32x120xbf16>
    %279 = vector.shape_cast %278 : vector<1x32x120xbf16> to vector<32x120xbf16>
    %cst_281 = arith.constant dense<0.000000e+00> : vector<1x120xf32>
    %280 = tpu.matmul %277, %279, %cst_281 {dimension_numbers = #tpu.dot_dimension_numbers<[1], [0], [0], [1], [0, 0, 1, 1], [], []>} : vector<1x32xbf16>, vector<32x120xbf16>, vector<1x120xf32> -> vector<1x120xf32>
    %281 = arith.addf %276, %280 : vector<1x120xf32>
    %282 = vector.extract_strided_slice %240 {offsets = [8, 0], sizes = [1, 32], strides = [1, 1]} : vector<16x32xbf16> to vector<1x32xbf16>
    %c8_282 = arith.constant 8 : index
    %c0_283 = arith.constant 0 : index
    %c0_284 = arith.constant 0 : index
    %283 = vector.load %arg7[%c8_282, %c0_283, %c0_284] : memref<16x32x120xbf16, #tpu.memory_space<vmem>>, vector<1x32x120xbf16>
    %284 = vector.shape_cast %283 : vector<1x32x120xbf16> to vector<32x120xbf16>
    %cst_285 = arith.constant dense<0.000000e+00> : vector<1x120xf32>
    %285 = tpu.matmul %282, %284, %cst_285 {dimension_numbers = #tpu.dot_dimension_numbers<[1], [0], [0], [1], [0, 0, 1, 1], [], []>} : vector<1x32xbf16>, vector<32x120xbf16>, vector<1x120xf32> -> vector<1x120xf32>
    %286 = arith.addf %281, %285 : vector<1x120xf32>
    %287 = vector.extract_strided_slice %240 {offsets = [9, 0], sizes = [1, 32], strides = [1, 1]} : vector<16x32xbf16> to vector<1x32xbf16>
    %c9_286 = arith.constant 9 : index
    %c0_287 = arith.constant 0 : index
    %c0_288 = arith.constant 0 : index
    %288 = vector.load %arg7[%c9_286, %c0_287, %c0_288] : memref<16x32x120xbf16, #tpu.memory_space<vmem>>, vector<1x32x120xbf16>
    %289 = vector.shape_cast %288 : vector<1x32x120xbf16> to vector<32x120xbf16>
    %cst_289 = arith.constant dense<0.000000e+00> : vector<1x120xf32>
    %290 = tpu.matmul %287, %289, %cst_289 {dimension_numbers = #tpu.dot_dimension_numbers<[1], [0], [0], [1], [0, 0, 1, 1], [], []>} : vector<1x32xbf16>, vector<32x120xbf16>, vector<1x120xf32> -> vector<1x120xf32>
    %291 = arith.addf %286, %290 : vector<1x120xf32>
    %292 = vector.extract_strided_slice %240 {offsets = [10, 0], sizes = [1, 32], strides = [1, 1]} : vector<16x32xbf16> to vector<1x32xbf16>
    %c10_290 = arith.constant 10 : index
    %c0_291 = arith.constant 0 : index
    %c0_292 = arith.constant 0 : index
    %293 = vector.load %arg7[%c10_290, %c0_291, %c0_292] : memref<16x32x120xbf16, #tpu.memory_space<vmem>>, vector<1x32x120xbf16>
    %294 = vector.shape_cast %293 : vector<1x32x120xbf16> to vector<32x120xbf16>
    %cst_293 = arith.constant dense<0.000000e+00> : vector<1x120xf32>
    %295 = tpu.matmul %292, %294, %cst_293 {dimension_numbers = #tpu.dot_dimension_numbers<[1], [0], [0], [1], [0, 0, 1, 1], [], []>} : vector<1x32xbf16>, vector<32x120xbf16>, vector<1x120xf32> -> vector<1x120xf32>
    %296 = arith.addf %291, %295 : vector<1x120xf32>
    %297 = vector.extract_strided_slice %240 {offsets = [11, 0], sizes = [1, 32], strides = [1, 1]} : vector<16x32xbf16> to vector<1x32xbf16>
    %c11_294 = arith.constant 11 : index
    %c0_295 = arith.constant 0 : index
    %c0_296 = arith.constant 0 : index
    %298 = vector.load %arg7[%c11_294, %c0_295, %c0_296] : memref<16x32x120xbf16, #tpu.memory_space<vmem>>, vector<1x32x120xbf16>
    %299 = vector.shape_cast %298 : vector<1x32x120xbf16> to vector<32x120xbf16>
    %cst_297 = arith.constant dense<0.000000e+00> : vector<1x120xf32>
    %300 = tpu.matmul %297, %299, %cst_297 {dimension_numbers = #tpu.dot_dimension_numbers<[1], [0], [0], [1], [0, 0, 1, 1], [], []>} : vector<1x32xbf16>, vector<32x120xbf16>, vector<1x120xf32> -> vector<1x120xf32>
    %301 = arith.addf %296, %300 : vector<1x120xf32>
    %302 = vector.extract_strided_slice %240 {offsets = [12, 0], sizes = [1, 32], strides = [1, 1]} : vector<16x32xbf16> to vector<1x32xbf16>
    %c12_298 = arith.constant 12 : index
    %c0_299 = arith.constant 0 : index
    %c0_300 = arith.constant 0 : index
    %303 = vector.load %arg7[%c12_298, %c0_299, %c0_300] : memref<16x32x120xbf16, #tpu.memory_space<vmem>>, vector<1x32x120xbf16>
    %304 = vector.shape_cast %303 : vector<1x32x120xbf16> to vector<32x120xbf16>
    %cst_301 = arith.constant dense<0.000000e+00> : vector<1x120xf32>
    %305 = tpu.matmul %302, %304, %cst_301 {dimension_numbers = #tpu.dot_dimension_numbers<[1], [0], [0], [1], [0, 0, 1, 1], [], []>} : vector<1x32xbf16>, vector<32x120xbf16>, vector<1x120xf32> -> vector<1x120xf32>
    %306 = arith.addf %301, %305 : vector<1x120xf32>
    %307 = vector.extract_strided_slice %240 {offsets = [13, 0], sizes = [1, 32], strides = [1, 1]} : vector<16x32xbf16> to vector<1x32xbf16>
    %c13_302 = arith.constant 13 : index
    %c0_303 = arith.constant 0 : index
    %c0_304 = arith.constant 0 : index
    %308 = vector.load %arg7[%c13_302, %c0_303, %c0_304] : memref<16x32x120xbf16, #tpu.memory_space<vmem>>, vector<1x32x120xbf16>
    %309 = vector.shape_cast %308 : vector<1x32x120xbf16> to vector<32x120xbf16>
    %cst_305 = arith.constant dense<0.000000e+00> : vector<1x120xf32>
    %310 = tpu.matmul %307, %309, %cst_305 {dimension_numbers = #tpu.dot_dimension_numbers<[1], [0], [0], [1], [0, 0, 1, 1], [], []>} : vector<1x32xbf16>, vector<32x120xbf16>, vector<1x120xf32> -> vector<1x120xf32>
    %311 = arith.addf %306, %310 : vector<1x120xf32>
    %312 = vector.extract_strided_slice %240 {offsets = [14, 0], sizes = [1, 32], strides = [1, 1]} : vector<16x32xbf16> to vector<1x32xbf16>
    %c14_306 = arith.constant 14 : index
    %c0_307 = arith.constant 0 : index
    %c0_308 = arith.constant 0 : index
    %313 = vector.load %arg7[%c14_306, %c0_307, %c0_308] : memref<16x32x120xbf16, #tpu.memory_space<vmem>>, vector<1x32x120xbf16>
    %314 = vector.shape_cast %313 : vector<1x32x120xbf16> to vector<32x120xbf16>
    %cst_309 = arith.constant dense<0.000000e+00> : vector<1x120xf32>
    %315 = tpu.matmul %312, %314, %cst_309 {dimension_numbers = #tpu.dot_dimension_numbers<[1], [0], [0], [1], [0, 0, 1, 1], [], []>} : vector<1x32xbf16>, vector<32x120xbf16>, vector<1x120xf32> -> vector<1x120xf32>
    %316 = arith.addf %311, %315 : vector<1x120xf32>
    %317 = vector.extract_strided_slice %240 {offsets = [15, 0], sizes = [1, 32], strides = [1, 1]} : vector<16x32xbf16> to vector<1x32xbf16>
    %c15_310 = arith.constant 15 : index
    %c0_311 = arith.constant 0 : index
    %c0_312 = arith.constant 0 : index
    %318 = vector.load %arg7[%c15_310, %c0_311, %c0_312] : memref<16x32x120xbf16, #tpu.memory_space<vmem>>, vector<1x32x120xbf16>
    %319 = vector.shape_cast %318 : vector<1x32x120xbf16> to vector<32x120xbf16>
    %cst_313 = arith.constant dense<0.000000e+00> : vector<1x120xf32>
    %320 = tpu.matmul %317, %319, %cst_313 {dimension_numbers = #tpu.dot_dimension_numbers<[1], [0], [0], [1], [0, 0, 1, 1], [], []>} : vector<1x32xbf16>, vector<32x120xbf16>, vector<1x120xf32> -> vector<1x120xf32>
    %321 = arith.addf %316, %320 : vector<1x120xf32>
    %322 = arith.truncf %321 : vector<1x120xf32> to vector<1x120xbf16>
    %c0_314 = arith.constant 0 : index
    %c0_315 = arith.constant 0 : index
    %323 = vector.load %arg9[%c0_314, %c0_315] : memref<120x84xbf16, #tpu.memory_space<vmem>>, vector<120x84xbf16>
    %cst_316 = arith.constant dense<0.000000e+00> : vector<1x84xf32>
    %324 = tpu.matmul %322, %323, %cst_316 {dimension_numbers = #tpu.dot_dimension_numbers<[1], [0], [0], [1], [0, 0, 1, 1], [], []>} : vector<1x120xbf16>, vector<120x84xbf16>, vector<1x84xf32> -> vector<1x84xf32>
    %c0_317 = arith.constant 0 : index
    %c0_318 = arith.constant 0 : index
    %325 = vector.load %arg10[%c0_317, %c0_318] : memref<1x84xf32, #tpu.memory_space<vmem>>, vector<1x84xf32>
    %326 = arith.addf %324, %325 : vector<1x84xf32>
    %327 = arith.truncf %326 : vector<1x84xf32> to vector<1x84xbf16>
    %c0_319 = arith.constant 0 : index
    %c0_320 = arith.constant 0 : index
    %328 = vector.load %arg11[%c0_319, %c0_320] : memref<84x128xbf16, #tpu.memory_space<vmem>>, vector<84x128xbf16>
    %cst_321 = arith.constant dense<0.000000e+00> : vector<1x128xf32>
    %329 = tpu.matmul %327, %328, %cst_321 {dimension_numbers = #tpu.dot_dimension_numbers<[1], [0], [0], [1], [0, 0, 1, 1], [], []>} : vector<1x84xbf16>, vector<84x128xbf16>, vector<1x128xf32> -> vector<1x128xf32>
    %c0_322 = arith.constant 0 : index
    %c0_323 = arith.constant 0 : index
    %330 = vector.load %arg12[%c0_322, %c0_323] : memref<1x128xf32, #tpu.memory_space<vmem>>, vector<1x128xf32>
    %331 = arith.addf %329, %330 : vector<1x128xf32>
    %c0_324 = arith.constant 0 : index
    %c0_325 = arith.constant 0 : index
    %c0_326 = arith.constant 0 : index
    %332 = vector.load %arg13[%c0_324, %c0_325, %c0_326] : memref<1x1x128xf32, #tpu.memory_space<vmem>>, vector<1x1x128xf32>
    %333 = vector.shape_cast %332 : vector<1x1x128xf32> to vector<1x128xf32>
    %334 = vector.shape_cast %331 : vector<1x128xf32> to vector<1x1x128xf32>
    tpu.vector_store %arg13[%c0_324, %c0_325, %c0_326], %334 {strides = array<i32>} : memref<1x1x128xf32, #tpu.memory_space<vmem>>, vector<1x1x128xf32>,
    return
  }
  func.func @transform_0(%arg0: i32) -> (i32, i32, i32) {
    %c0_i32 = arith.constant 0 : i32
    %c0_i32_0 = arith.constant 0 : i32
    %c0_i32_1 = arith.constant 0 : i32
    return %arg0, %c0_i32, %c0_i32_0 : i32, i32, i32
  }
  func.func @transform_1(%arg0: i32) -> (i32, i32) {
    %c0_i32 = arith.constant 0 : i32
    %c0_i32_0 = arith.constant 0 : i32
    %c0_i32_1 = arith.constant 0 : i32
    return %c0_i32, %c0_i32_0 : i32, i32
  }
  func.func @transform_2(%arg0: i32) -> (i32, i32) {
    %c0_i32 = arith.constant 0 : i32
    %c0_i32_0 = arith.constant 0 : i32
    %c0_i32_1 = arith.constant 0 : i32
    return %c0_i32, %c0_i32_0 : i32, i32
  }
  func.func @transform_3(%arg0: i32) -> (i32, i32, i32) {
    %c0_i32 = arith.constant 0 : i32
    %c0_i32_0 = arith.constant 0 : i32
    %c0_i32_1 = arith.constant 0 : i32
    %c0_i32_2 = arith.constant 0 : i32
    return %c0_i32, %c0_i32_0, %c0_i32_1 : i32, i32, i32
  }
  func.func @transform_4(%arg0: i32) -> (i32, i32) {
    %c0_i32 = arith.constant 0 : i32
    %c0_i32_0 = arith.constant 0 : i32
    %c0_i32_1 = arith.constant 0 : i32
    return %c0_i32, %c0_i32_0 : i32, i32
  }
  func.func @transform_5(%arg0: i32) -> (i32, i32) {
    %c0_i32 = arith.constant 0 : i32
    %c0_i32_0 = arith.constant 0 : i32
    %c0_i32_1 = arith.constant 0 : i32
    return %c0_i32, %c0_i32_0 : i32, i32
  }
  func.func @transform_6(%arg0: i32) -> (i32, i32, i32) {
    %c0_i32 = arith.constant 0 : i32
    %c0_i32_0 = arith.constant 0 : i32
    %c0_i32_1 = arith.constant 0 : i32
    %c0_i32_2 = arith.constant 0 : i32
    return %c0_i32, %c0_i32_0, %c0_i32_1 : i32, i32, i32
  }
  func.func @transform_7(%arg0: i32) -> (i32, i32) {
    %c0_i32 = arith.constant 0 : i32
    %c0_i32_0 = arith.constant 0 : i32
    %c0_i32_1 = arith.constant 0 : i32
    return %c0_i32, %c0_i32_0 : i32, i32
  }
  func.func @transform_8(%arg0: i32) -> (i32, i32) {
    %c0_i32 = arith.constant 0 : i32
    %c0_i32_0 = arith.constant 0 : i32
    %c0_i32_1 = arith.constant 0 : i32
    return %c0_i32, %c0_i32_0 : i32, i32
  }
  func.func @transform_9(%arg0: i32) -> (i32, i32) {
    %c0_i32 = arith.constant 0 : i32
    %c0_i32_0 = arith.constant 0 : i32
    %c0_i32_1 = arith.constant 0 : i32
    return %c0_i32, %c0_i32_0 : i32, i32
  }
  func.func @transform_10(%arg0: i32) -> (i32, i32) {
    %c0_i32 = arith.constant 0 : i32
    %c0_i32_0 = arith.constant 0 : i32
    %c0_i32_1 = arith.constant 0 : i32
    return %c0_i32, %c0_i32_0 : i32, i32
  }
  func.func @transform_11(%arg0: i32) -> (i32, i32) {
    %c0_i32 = arith.constant 0 : i32
    %c0_i32_0 = arith.constant 0 : i32
    %c0_i32_1 = arith.constant 0 : i32
    return %c0_i32, %c0_i32_0 : i32, i32
  }
  func.func @transform_12(%arg0: i32) -> (i32, i32, i32) {
    %c0_i32 = arith.constant 0 : i32
    %c0_i32_0 = arith.constant 0 : i32
    %c0_i32_1 = arith.constant 0 : i32
    return %arg0, %c0_i32, %c0_i32_0 : i32, i32, i32
  }
}

</mosaic_0001>

<llo_original>
// kernel: lenet_forward.1
$region0: #{lenet_forward.1}
  #allocation0 [shape = 'u32[]', space=smem, size = 0x4, offset = 0x4, fixed_abs, tag = 'smem constant byte address 0x4 - core index']
  #allocation1 [shape = 'u32[72,128]{1,0:T(1,128)}', space=vmem, size = 0x9000, scoped, tag = 'internal scratch']
  #allocation2 [shape = 'f32[25,1024]{1,0:T(8,128)}', space=vmem, size = 0x20000, scoped, tag = 'scratch operand']
  #allocation3 [shape = 'f32[6,1152]{1,0:T(8,128)}', space=vmem, size = 0x9000, scoped, tag = 'scratch operand']
  #allocation4 [shape = 'bf16[6,1408]{1,0:T(8,128)(2,1)}', space=vmem, size = 0x5800, scoped, tag = 'scratch operand']
  %s0 = inlined_call_operand.vmem [shape: f32[2,1,1280], index: 0, kind: input, shape index: {}]
  %s1 = inlined_call_operand.vmem [shape: bf16[6,25], index: 1, kind: input, shape index: {}]
  %s2 = inlined_call_operand.vmem [shape: f32[6,1], index: 2, kind: input, shape index: {}]
  %s3 = inlined_call_operand.vmem [shape: bf16[25,16,6], index: 3, kind: input, shape index: {}]
  %s4 = inlined_call_operand.vmem [shape: f32[16,1], index: 4, kind: input, shape index: {}]
  %s5 = inlined_call_operand.vmem [shape: bf16[1024,32], index: 5, kind: input, shape index: {}]
  %s6 = inlined_call_operand.vmem [shape: bf16[16,32,120], index: 6, kind: input, shape index: {}]
  %s7 = inlined_call_operand.vmem [shape: f32[1,120], index: 7, kind: input, shape index: {}]
  %s8 = inlined_call_operand.vmem [shape: bf16[120,84], index: 8, kind: input, shape index: {}]
  %s9 = inlined_call_operand.vmem [shape: f32[1,84], index: 9, kind: input, shape index: {}]
  %s10 = inlined_call_operand.vmem [shape: bf16[84,128], index: 10, kind: input, shape index: {}]
  %s11 = inlined_call_operand.vmem [shape: f32[1,128], index: 11, kind: input, shape index: {}]
  %s12 = inlined_call_operand.hbm [shape: f32[2,1,128], index: 12, kind: output, shape index: {}]
  %s13 = sld [smem:[#allocation0]]
  $region81: #{lenet_forward.1} parent=0
    _
  %s15 = ssub.s32 1, %s13
  %s16 = scalar_select 0, %s15, %s13
  $region1: #{lenet_forward.1} parent=0
    #allocation5 [shape = 'u8[1024]{0}', space=vmem, size = 0x400, scoped, tag = 'output window, operand 0']
    #allocation6 [shape = 's32[2]{0}', space=sflag, size = 0x8, scoped, tag = 'scoped memory for lenet_forward.1']
    %17 = vsyncpa [#allocation6], 0
    %s18 = scalar_lea.sflag [#allocation6], 1
    %19 = vsyncpa %s18, 0
    loop: start=0, step=1, limit=4
    $region2: #{lenet_forward.1} parent=1 // loop_pre_header
      _
    $region3: #{lenet_forward.1} parent=1 // loop_header
      %s21 = sphi 0, %s25
      %p22 = scmp.ge.s32.totalorder %s21, 4
      %s31 = sphi 0, %s33
      %s34 = sphi 0, %s31
      %s35 = sphi 0, %s34
      %s51 = sphi 0, %s35
      %s55 = sphi 0, %s55
      %s57 = sphi 0, %s55
      %s58 = sphi 0, %s57
      %s72 = sphi 0, %s58
      %s76 = sphi 0, %s76
      %s78 = sphi 0, %s76
      %s79 = sphi 0, %s78
      %s93 = sphi 0, %s79
      %s97 = sphi 0, %s97
      %s99 = sphi 0, %s97
      %s100 = sphi 0, %s99
      %s114 = sphi 0, %s100
      %s118 = sphi 0, %s118
      %s120 = sphi 0, %s118
      %s121 = sphi 0, %s120
      %s135 = sphi 0, %s121
      %s139 = sphi 0, %s139
      %s141 = sphi 0, %s139
      %s142 = sphi 0, %s141
      %s156 = sphi 0, %s142
      %s160 = sphi 0, %s160
      %s162 = sphi 0, %s160
      %s163 = sphi 0, %s162
      %s177 = sphi 0, %s163
      %s181 = sphi 0, %s181
      %s183 = sphi 0, %s181
      %s184 = sphi 0, %s183
      %s198 = sphi 0, %s184
      %s202 = sphi 0, %s202
      %s204 = sphi 0, %s202
      %s205 = sphi 0, %s204
      %s219 = sphi 0, %s205
      %s223 = sphi 0, %s223
      %s225 = sphi 0, %s223
      %s226 = sphi 0, %s225
      %s240 = sphi 0, %s226
      %s244 = sphi 0, %s244
      %s246 = sphi 0, %s244
      %s247 = sphi 0, %s246
      %s261 = sphi 0, %s247
      %s265 = sphi 0, %s265
      %s267 = sphi 0, %s265
      %s268 = sphi 0, %s267
      %s282 = sphi 0, %s268
      %s288 = sphi 0, %s290
      %s291 = sphi 0, %s288
      %s292 = sphi 0, %s291
      %s308 = sphi 0, %s292
    $region4: #{lenet_forward.1} parent=1 // loop_header_branch
      %24 = sbr.rel (%p22) target = $region8
    $region5: #{lenet_forward.1} parent=1 // loop_body
      %s26 = ssub.s32 %s21, 1
      %s27 = ssub.s32 %s21, 2
      %s28 = sadd.s32 %s21, 1
      %s29 = ssub.s32 %s21, %s28
      %p30 = scmp.eq.s32.totalorder %s29, 0
      %s32 = sadd.s32 %s31, 1
      %s33 = scalar_select %p30, %s31, %s32
      %p36 = pneg %p30
      %p37 = scmp.eq.s32.totalorder %s21, 1
      %p38 = por %p36, %p37
      %p39 = scmp.ne.s32.totalorder %s31, %s34
      %p40 = scmp.eq.s32.totalorder %s21, 0
      %p41 = por %p39, %p40
      %p42 = scmp.ne.s32.totalorder %s31, %s34
      %p43 = scmp.eq.s32.totalorder %s26, 1
      %p44 = por %p42, %p43
      %p45 = scmp.ne.s32.totalorder %s34, %s35
      %p46 = scmp.eq.s32.totalorder %s26, 0
      %p47 = por %p45, %p46
      %p48 = scmp.ne.s32.totalorder %s34, %s35
      %p49 = scmp.eq.s32.totalorder %s27, 1
      %p50 = por %p48, %p49
      %p52 = scmp.ne.s32.totalorder %s35, %s51
      %p53 = scmp.eq.s32.totalorder %s27, 0
      %p54 = por %p52, %p53
      %s56 = sadd.s32 %s55, 1
      %p59 = scmp.eq.s32.totalorder %s21, 1
      %p60 = scmp.ne.s32.totalorder %s55, %s57
      %p61 = scmp.eq.s32.totalorder %s21, 0
      %p62 = por %p60, %p61
      %p63 = scmp.ne.s32.totalorder %s55, %s57
      %p64 = scmp.eq.s32.totalorder %s26, 1
      %p65 = por %p63, %p64
      %p66 = scmp.ne.s32.totalorder %s57, %s58
      %p67 = scmp.eq.s32.totalorder %s26, 0
      %p68 = por %p66, %p67
      %p69 = scmp.ne.s32.totalorder %s57, %s58
      %p70 = scmp.eq.s32.totalorder %s27, 1
      %p71 = por %p69, %p70
      %p73 = scmp.ne.s32.totalorder %s58, %s72
      %p74 = scmp.eq.s32.totalorder %s27, 0
      %p75 = por %p73, %p74
      %s77 = sadd.s32 %s76, 1
      %p80 = scmp.eq.s32.totalorder %s21, 1
      %p81 = scmp.ne.s32.totalorder %s76, %s78
      %p82 = scmp.eq.s32.totalorder %s21, 0
      %p83 = por %p81, %p82
      %p84 = scmp.ne.s32.totalorder %s76, %s78
      %p85 = scmp.eq.s32.totalorder %s26, 1
      %p86 = por %p84, %p85
      %p87 = scmp.ne.s32.totalorder %s78, %s79
      %p88 = scmp.eq.s32.totalorder %s26, 0
      %p89 = por %p87, %p88
      %p90 = scmp.ne.s32.totalorder %s78, %s79
      %p91 = scmp.eq.s32.totalorder %s27, 1
      %p92 = por %p90, %p91
      %p94 = scmp.ne.s32.totalorder %s79, %s93
      %p95 = scmp.eq.s32.totalorder %s27, 0
      %p96 = por %p94, %p95
      %s98 = sadd.s32 %s97, 1
      %p101 = scmp.eq.s32.totalorder %s21, 1
      %p102 = scmp.ne.s32.totalorder %s97, %s99
      %p103 = scmp.eq.s32.totalorder %s21, 0
      %p104 = por %p102, %p103
      %p105 = scmp.ne.s32.totalorder %s97, %s99
      %p106 = scmp.eq.s32.totalorder %s26, 1
      %p107 = por %p105, %p106
      %p108 = scmp.ne.s32.totalorder %s99, %s100
      %p109 = scmp.eq.s32.totalorder %s26, 0
      %p110 = por %p108, %p109
      %p111 = scmp.ne.s32.totalorder %s99, %s100
      %p112 = scmp.eq.s32.totalorder %s27, 1
      %p113 = por %p111, %p112
      %p115 = scmp.ne.s32.totalorder %s100, %s114
      %p116 = scmp.eq.s32.totalorder %s27, 0
      %p117 = por %p115, %p116
      %s119 = sadd.s32 %s118, 1
      %p122 = scmp.eq.s32.totalorder %s21, 1
      %p123 = scmp.ne.s32.totalorder %s118, %s120
      %p124 = scmp.eq.s32.totalorder %s21, 0
      %p125 = por %p123, %p124
      %p126 = scmp.ne.s32.totalorder %s118, %s120
      %p127 = scmp.eq.s32.totalorder %s26, 1
      %p128 = por %p126, %p127
      %p129 = scmp.ne.s32.totalorder %s120, %s121
      %p130 = scmp.eq.s32.totalorder %s26, 0
      %p131 = por %p129, %p130
      %p132 = scmp.ne.s32.totalorder %s120, %s121
      %p133 = scmp.eq.s32.totalorder %s27, 1
      %p134 = por %p132, %p133
      %p136 = scmp.ne.s32.totalorder %s121, %s135
      %p137 = scmp.eq.s32.totalorder %s27, 0
      %p138 = por %p136, %p137
      %s140 = sadd.s32 %s139, 1
      %p143 = scmp.eq.s32.totalorder %s21, 1
      %p144 = scmp.ne.s32.totalorder %s139, %s141
      %p145 = scmp.eq.s32.totalorder %s21, 0
      %p146 = por %p144, %p145
      %p147 = scmp.ne.s32.totalorder %s139, %s141
      %p148 = scmp.eq.s32.totalorder %s26, 1
      %p149 = por %p147, %p148
      %p150 = scmp.ne.s32.totalorder %s141, %s142
      %p151 = scmp.eq.s32.totalorder %s26, 0
      %p152 = por %p150, %p151
      %p153 = scmp.ne.s32.totalorder %s141, %s142
      %p154 = scmp.eq.s32.totalorder %s27, 1
      %p155 = por %p153, %p154
      %p157 = scmp.ne.s32.totalorder %s142, %s156
      %p158 = scmp.eq.s32.totalorder %s27, 0
      %p159 = por %p157, %p158
      %s161 = sadd.s32 %s160, 1
      %p164 = scmp.eq.s32.totalorder %s21, 1
      %p165 = scmp.ne.s32.totalorder %s160, %s162
      %p166 = scmp.eq.s32.totalorder %s21, 0
      %p167 = por %p165, %p166
      %p168 = scmp.ne.s32.totalorder %s160, %s162
      %p169 = scmp.eq.s32.totalorder %s26, 1
      %p170 = por %p168, %p169
      %p171 = scmp.ne.s32.totalorder %s162, %s163
      %p172 = scmp.eq.s32.totalorder %s26, 0
      %p173 = por %p171, %p172
      %p174 = scmp.ne.s32.totalorder %s162, %s163
      %p175 = scmp.eq.s32.totalorder %s27, 1
      %p176 = por %p174, %p175
      %p178 = scmp.ne.s32.totalorder %s163, %s177
      %p179 = scmp.eq.s32.totalorder %s27, 0
      %p180 = por %p178, %p179
      %s182 = sadd.s32 %s181, 1
      %p185 = scmp.eq.s32.totalorder %s21, 1
      %p186 = scmp.ne.s32.totalorder %s181, %s183
      %p187 = scmp.eq.s32.totalorder %s21, 0
      %p188 = por %p186, %p187
      %p189 = scmp.ne.s32.totalorder %s181, %s183
      %p190 = scmp.eq.s32.totalorder %s26, 1
      %p191 = por %p189, %p190
      %p192 = scmp.ne.s32.totalorder %s183, %s184
      %p193 = scmp.eq.s32.totalorder %s26, 0
      %p194 = por %p192, %p193
      %p195 = scmp.ne.s32.totalorder %s183, %s184
      %p196 = scmp.eq.s32.totalorder %s27, 1
      %p197 = por %p195, %p196
      %p199 = scmp.ne.s32.totalorder %s184, %s198
      %p200 = scmp.eq.s32.totalorder %s27, 0
      %p201 = por %p199, %p200
      %s203 = sadd.s32 %s202, 1
      %p206 = scmp.eq.s32.totalorder %s21, 1
      %p207 = scmp.ne.s32.totalorder %s202, %s204
      %p208 = scmp.eq.s32.totalorder %s21, 0
      %p209 = por %p207, %p208
      %p210 = scmp.ne.s32.totalorder %s202, %s204
      %p211 = scmp.eq.s32.totalorder %s26, 1
      %p212 = por %p210, %p211
      %p213 = scmp.ne.s32.totalorder %s204, %s205
      %p214 = scmp.eq.s32.totalorder %s26, 0
      %p215 = por %p213, %p214
      %p216 = scmp.ne.s32.totalorder %s204, %s205
      %p217 = scmp.eq.s32.totalorder %s27, 1
      %p218 = por %p216, %p217
      %p220 = scmp.ne.s32.totalorder %s205, %s219
      %p221 = scmp.eq.s32.totalorder %s27, 0
      %p222 = por %p220, %p221
      %s224 = sadd.s32 %s223, 1
      %p227 = scmp.eq.s32.totalorder %s21, 1
      %p228 = scmp.ne.s32.totalorder %s223, %s225
      %p229 = scmp.eq.s32.totalorder %s21, 0
      %p230 = por %p228, %p229
      %p231 = scmp.ne.s32.totalorder %s223, %s225
      %p232 = scmp.eq.s32.totalorder %s26, 1
      %p233 = por %p231, %p232
      %p234 = scmp.ne.s32.totalorder %s225, %s226
      %p235 = scmp.eq.s32.totalorder %s26, 0
      %p236 = por %p234, %p235
      %p237 = scmp.ne.s32.totalorder %s225, %s226
      %p238 = scmp.eq.s32.totalorder %s27, 1
      %p239 = por %p237, %p238
      %p241 = scmp.ne.s32.totalorder %s226, %s240
      %p242 = scmp.eq.s32.totalorder %s27, 0
      %p243 = por %p241, %p242
      %s245 = sadd.s32 %s244, 1
      %p248 = scmp.eq.s32.totalorder %s21, 1
      %p249 = scmp.ne.s32.totalorder %s244, %s246
      %p250 = scmp.eq.s32.totalorder %s21, 0
      %p251 = por %p249, %p250
      %p252 = scmp.ne.s32.totalorder %s244, %s246
      %p253 = scmp.eq.s32.totalorder %s26, 1
      %p254 = por %p252, %p253
      %p255 = scmp.ne.s32.totalorder %s246, %s247
      %p256 = scmp.eq.s32.totalorder %s26, 0
      %p257 = por %p255, %p256
      %p258 = scmp.ne.s32.totalorder %s246, %s247
      %p259 = scmp.eq.s32.totalorder %s27, 1
      %p260 = por %p258, %p259
      %p262 = scmp.ne.s32.totalorder %s247, %s261
      %p263 = scmp.eq.s32.totalorder %s27, 0
      %p264 = por %p262, %p263
      %s266 = sadd.s32 %s265, 1
      %p269 = scmp.eq.s32.totalorder %s21, 1
      %p270 = scmp.ne.s32.totalorder %s265, %s267
      %p271 = scmp.eq.s32.totalorder %s21, 0
      %p272 = por %p270, %p271
      %p273 = scmp.ne.s32.totalorder %s265, %s267
      %p274 = scmp.eq.s32.totalorder %s26, 1
      %p275 = por %p273, %p274
      %p276 = scmp.ne.s32.totalorder %s267, %s268
      %p277 = scmp.eq.s32.totalorder %s26, 0
      %p278 = por %p276, %p277
      %p279 = scmp.ne.s32.totalorder %s267, %s268
      %p280 = scmp.eq.s32.totalorder %s27, 1
      %p281 = por %p279, %p280
      %p283 = scmp.ne.s32.totalorder %s268, %s282
      %p284 = scmp.eq.s32.totalorder %s27, 0
      %p285 = por %p283, %p284
      %s286 = ssub.s32 %s21, %s28
      %p287 = scmp.eq.s32.totalorder %s286, 0
      %s289 = sadd.s32 %s288, 1
      %s290 = scalar_select %p287, %s288, %s289
      %p293 = pneg %p287
      %p294 = scmp.eq.s32.totalorder %s21, 1
      %p295 = por %p293, %p294
      %p296 = scmp.ne.s32.totalorder %s288, %s291
      %p297 = scmp.eq.s32.totalorder %s21, 0
      %p298 = por %p296, %p297
      %p299 = scmp.ne.s32.totalorder %s288, %s291
      %p300 = scmp.eq.s32.totalorder %s26, 1
      %p301 = por %p299, %p300
      %p302 = scmp.ne.s32.totalorder %s291, %s292
      %p303 = scmp.eq.s32.totalorder %s26, 0
      %p304 = por %p302, %p303
      %p305 = scmp.ne.s32.totalorder %s291, %s292
      %p306 = scmp.eq.s32.totalorder %s27, 1
      %p307 = por %p305, %p306
      %p309 = scmp.ne.s32.totalorder %s292, %s308
      %p310 = scmp.eq.s32.totalorder %s27, 0
      %p311 = por %p309, %p310
      %p312 = scmp.le.s32.totalorder 1, %s21
      %p313 = scmp.lt.s32.totalorder %s21, 3
      %p314 = pnand %p312, %p313
      %p315 = pneg %p314
      // Predicated region
      $region9: #{lenet_forward.1} parent=5 // pred_check
        _
      $region10: #{lenet_forward.1} parent=5 // pred_check_branch
        %317 = sbr.rel (%p314) target = $region12
      $region11: #{lenet_forward.1} parent=5 // pred_region
        %s318 = ssub.s32 %s21, 1
        // Predicated region
        $region13: #{lenet_forward.1} parent=11 // pred_check
          %p319 = pneg %p68
        $region14: #{lenet_forward.1} parent=11 // pred_check_branch
          %321 = sbr.rel (%p319) target = $region16
        $region15: #{lenet_forward.1} parent=11 // pred_region
          _
        $region16: #{lenet_forward.1} parent=11 // pred_fallthru
          _
        // Predicated region
        $region17: #{lenet_forward.1} parent=11 // pred_check
          %p322 = pneg %p89
        $region18: #{lenet_forward.1} parent=11 // pred_check_branch
          %324 = sbr.rel (%p322) target = $region20
        $region19: #{lenet_forward.1} parent=11 // pred_region
          _
        $region20: #{lenet_forward.1} parent=11 // pred_fallthru
          _
        // Predicated region
        $region21: #{lenet_forward.1} parent=11 // pred_check
          %p325 = pneg %p110
        $region22: #{lenet_forward.1} parent=11 // pred_check_branch
          %327 = sbr.rel (%p325) target = $region24
        $region23: #{lenet_forward.1} parent=11 // pred_region
          _
        $region24: #{lenet_forward.1} parent=11 // pred_fallthru
          _
        // Predicated region
        $region25: #{lenet_forward.1} parent=11 // pred_check
          %p328 = pneg %p131
        $region26: #{lenet_forward.1} parent=11 // pred_check_branch
          %330 = sbr.rel (%p328) target = $region28
        $region27: #{lenet_forward.1} parent=11 // pred_region
          _
        $region28: #{lenet_forward.1} parent=11 // pred_fallthru
          _
        // Predicated region
        $region29: #{lenet_forward.1} parent=11 // pred_check
          %p331 = pneg %p152
        $region30: #{lenet_forward.1} parent=11 // pred_check_branch
          %333 = sbr.rel (%p331) target = $region32
        $region31: #{lenet_forward.1} parent=11 // pred_region
          _
        $region32: #{lenet_forward.1} parent=11 // pred_fallthru
          _
        // Predicated region
        $region33: #{lenet_forward.1} parent=11 // pred_check
          %p334 = pneg %p173
        $region34: #{lenet_forward.1} parent=11 // pred_check_branch
          %336 = sbr.rel (%p334) target = $region36
        $region35: #{lenet_forward.1} parent=11 // pred_region
          _
        $region36: #{lenet_forward.1} parent=11 // pred_fallthru
          _
        // Predicated region
        $region37: #{lenet_forward.1} parent=11 // pred_check
          %p337 = pneg %p194
        $region38: #{lenet_forward.1} parent=11 // pred_check_branch
          %339 = sbr.rel (%p337) target = $region40
        $region39: #{lenet_forward.1} parent=11 // pred_region
          _
        $region40: #{lenet_forward.1} parent=11 // pred_fallthru
          _
        // Predicated region
        $region41: #{lenet_forward.1} parent=11 // pred_check
          %p340 = pneg %p215
        $region42: #{lenet_forward.1} parent=11 // pred_check_branch
          %342 = sbr.rel (%p340) target = $region44
        $region43: #{lenet_forward.1} parent=11 // pred_region
          _
        $region44: #{lenet_forward.1} parent=11 // pred_fallthru
          _
        // Predicated region
        $region45: #{lenet_forward.1} parent=11 // pred_check
          %p343 = pneg %p236
        $region46: #{lenet_forward.1} parent=11 // pred_check_branch
          %345 = sbr.rel (%p343) target = $region48
        $region47: #{lenet_forward.1} parent=11 // pred_region
          _
        $region48: #{lenet_forward.1} parent=11 // pred_fallthru
          _
        // Predicated region
        $region49: #{lenet_forward.1} parent=11 // pred_check
          %p346 = pneg %p257
        $region50: #{lenet_forward.1} parent=11 // pred_check_branch
          %348 = sbr.rel (%p346) target = $region52
        $region51: #{lenet_forward.1} parent=11 // pred_region
          _
        $region52: #{lenet_forward.1} parent=11 // pred_fallthru
          _
        // Predicated region
        $region53: #{lenet_forward.1} parent=11 // pred_check
          %p349 = pneg %p278
        $region54: #{lenet_forward.1} parent=11 // pred_check_branch
          %351 = sbr.rel (%p349) target = $region56
        $region55: #{lenet_forward.1} parent=11 // pred_region
          _
        $region56: #{lenet_forward.1} parent=11 // pred_fallthru
          _
      $region12: #{lenet_forward.1} parent=5 // pred_fallthru
        _
      %p352 = scmp.lt.s32.totalorder %s21, 2
      // Predicated region
      $region57: #{lenet_forward.1} parent=5 // pred_check
        %p353 = pneg %p352
      $region58: #{lenet_forward.1} parent=5 // pred_check_branch
        %355 = sbr.rel (%p353) target = $region60
      $region59: #{lenet_forward.1} parent=5 // pred_region
        // Predicated region
        $region61: #{lenet_forward.1} parent=59 // pred_check
          %p356 = pneg %p41
        $region62: #{lenet_forward.1} parent=59 // pred_check_branch
          %358 = sbr.rel (%p356) target = $region64
        $region63: #{lenet_forward.1} parent=59 // pred_region
          %p359 = scmp.lt.s32.totalorder %s21, 1
          %s360 = scalar_select %p359, %s21, 1
          %s361 = smul.addr %s360, 10
          %s362 = scalar_lea.vmem %s0, %s361
        $region64: #{lenet_forward.1} parent=59 // pred_fallthru
          _
      $region60: #{lenet_forward.1} parent=5 // pred_fallthru
        _
      %p363 = scmp.le.s32.totalorder 1, %s21
      %p364 = scmp.lt.s32.totalorder %s21, 3
      %p365 = pnand %p363, %p364
      %p366 = pneg %p365
      // Predicated region
      $region65: #{lenet_forward.1} parent=5 // pred_check
        _
      $region66: #{lenet_forward.1} parent=5 // pred_check_branch
        %368 = sbr.rel (%p365) target = $region68
      $region67: #{lenet_forward.1} parent=5 // pred_region
        %s369 = ssub.s32 %s21, 1
        %p370 = scmp.lt.s32.totalorder %s26, 1
        %s371 = scalar_select %p370, %s26, 1
        %s372 = smul.addr %s371, 10
        %s373 = scalar_lea.vmem %s0, %s372
        %p374 = pneg %p47
        %p375 = pneg %p44
        %p376 = pneg %p68
        %p377 = pneg %p65
        %p378 = pneg %p89
        %p379 = pneg %p86
        %p380 = pneg %p110
        %p381 = pneg %p107
        %p382 = pneg %p131
        %p383 = pneg %p128
        %p384 = pneg %p152
        %p385 = pneg %p149
        %p386 = pneg %p173
        %p387 = pneg %p170
        %p388 = pneg %p194
        %p389 = pneg %p191
        %p390 = pneg %p215
        %p391 = pneg %p212
        %p392 = pneg %p236
        %p393 = pneg %p233
        %p394 = pneg %p257
        %p395 = pneg %p254
        %p396 = pneg %p278
        %p397 = pneg %p275
        %p398 = pneg %p304
        %p399 = pneg %p301
        %s400 = sand.u32 %s291, 1
        %s401 = scalar_lea.sflag [#allocation6], %s400
        %s402 = sand.u32 %s291, 1
        %s403 = scalar_lea.vmem [#allocation5], %s402
        %p404 = scmp.lt.s32.totalorder %s26, 1
        %s405 = scalar_select %p404, %s26, 1
        %s406 = smul.addr %s405, 10
        %s407 = scalar_lea.vmem %s0, %s406
        %409 = vst [vmem:[#allocation3 + $0x40] sm:$0x3f] 0.0
        %410 = vst [vmem:[#allocation4 + $0x20] sm:$0x77] 0
        %411 = vst [vmem:[#allocation4 + $0x28] sm:$0x7] 0
        %v412 = vld [vmem:[%s407] sm:$0xff]
        %413 = vst [vmem:[#allocation2] ss:$8 sm:$0xf] %v412
        %414 = vst [vmem:[#allocation2] ss:$8 sm:$0xf0] %v412
        %v415 = vld [vmem:[%s407] sm:$0xff]
        %v416 = vld [vmem:[%s407 + $0x8] sm:$0x1]
        %419 = vrot.lane.b32.xlu0 %v415, 127
        %v420 = vpop.permute.xlu0 %419
        %421 = vrot.lane.b32.xlu0 %v416, 127
        %v422 = vpop.permute.xlu0 %421
        %v423 = vrot.slane %v420, 1
        %v424 = vrot.slane %v422, 1
        %vm425 = vcmask 1046528
        %v426 = vsel %vm425, %v423, %v424
        %vm427 = vcmask 1039360
        %v428 = vsel %vm427, %v420, %v426
        %s430 = scalar_lea.vmem [#allocation2], 1
        %431 = vst [vmem:[%s430] ss:$8 sm:$0xf] %v428
        %432 = vst [vmem:[%s430] ss:$8 sm:$0xf0] %v428
        %v433 = vld [vmem:[%s407] sm:$0xff]
        %v434 = vld [vmem:[%s407 + $0x8] sm:$0x1]
        %437 = vrot.lane.b32.xlu0 %v433, 126
        %v438 = vpop.permute.xlu0 %437
        %439 = vrot.lane.b32.xlu0 %v434, 126
        %v440 = vpop.permute.xlu0 %439
        %v441 = vrot.slane %v438, 1
        %v442 = vrot.slane %v440, 1
        %v443 = vsel %vm425, %v441, %v442
        %vm444 = vcmask 1031168
        %v445 = vsel %vm444, %v438, %v443
        %s447 = scalar_lea.vmem [#allocation2], 2
        %448 = vst [vmem:[%s447] ss:$8 sm:$0xf] %v445
        %449 = vst [vmem:[%s447] ss:$8 sm:$0xf0] %v445
        %v450 = vld [vmem:[%s407] sm:$0xff]
        %v451 = vld [vmem:[%s407 + $0x8] sm:$0x1]
        %454 = vrot.lane.b32.xlu0 %v450, 125
        %v455 = vpop.permute.xlu0 %454
        %456 = vrot.lane.b32.xlu0 %v451, 125
        %v457 = vpop.permute.xlu0 %456
        %v458 = vrot.slane %v455, 1
        %v459 = vrot.slane %v457, 1
        %v460 = vsel %vm425, %v458, %v459
        %vm461 = vcmask 1022976
        %v462 = vsel %vm461, %v455, %v460
        %s464 = scalar_lea.vmem [#allocation2], 3
        %465 = vst [vmem:[%s464] ss:$8 sm:$0xf] %v462
        %466 = vst [vmem:[%s464] ss:$8 sm:$0xf0] %v462
        %v467 = vld [vmem:[%s407] sm:$0xff]
        %v468 = vld [vmem:[%s407 + $0x8] sm:$0x1]
        %471 = vrot.lane.b32.xlu0 %v467, 124
        %v472 = vpop.permute.xlu0 %471
        %473 = vrot.lane.b32.xlu0 %v468, 124
        %v474 = vpop.permute.xlu0 %473
        %v475 = vrot.slane %v472, 1
        %v476 = vrot.slane %v474, 1
        %v477 = vsel %vm425, %v475, %v476
        %vm478 = vcmask 1014784
        %v479 = vsel %vm478, %v472, %v477
        %s481 = scalar_lea.vmem [#allocation2], 4
        %482 = vst [vmem:[%s481] ss:$8 sm:$0xf] %v479
        %483 = vst [vmem:[%s481] ss:$8 sm:$0xf0] %v479
        %v484 = vld [vmem:[%s407] sm:$0xff]
        %v485 = vld [vmem:[%s407 + $0x8] sm:$0x1]
        %488 = vrot.lane.b32.xlu0 %v484, 96
        %v489 = vpop.permute.xlu0 %488
        %490 = vrot.lane.b32.xlu0 %v485, 96
        %v491 = vpop.permute.xlu0 %490
        %v492 = vrot.slane %v489, 1
        %v493 = vrot.slane %v491, 1
        %v494 = vsel %vm425, %v492, %v493
        %vm495 = vcmask 785408
        %v496 = vsel %vm495, %v489, %v494
        %s498 = scalar_lea.vmem [#allocation2], 5
        %499 = vst [vmem:[%s498] ss:$8 sm:$0xf] %v496
        %500 = vst [vmem:[%s498] ss:$8 sm:$0xf0] %v496
        %v501 = vld [vmem:[%s407] sm:$0xff]
        %v502 = vld [vmem:[%s407 + $0x8] sm:$0x1]
        %505 = vrot.lane.b32.xlu0 %v501, 95
        %v506 = vpop.permute.xlu0 %505
        %507 = vrot.lane.b32.xlu0 %v502, 95
        %v508 = vpop.permute.xlu0 %507
        %v509 = vrot.slane %v506, 1
        %v510 = vrot.slane %v508, 1
        %v511 = vsel %vm425, %v509, %v510
        %vm512 = vcmask 777216
        %v513 = vsel %vm512, %v506, %v511
        %s515 = scalar_lea.vmem [#allocation2], 6
        %516 = vst [vmem:[%s515] ss:$8 sm:$0xf] %v513
        %517 = vst [vmem:[%s515] ss:$8 sm:$0xf0] %v513
        %v518 = vld [vmem:[%s407] sm:$0xff]
        %v519 = vld [vmem:[%s407 + $0x8] sm:$0x1]
        %522 = vrot.lane.b32.xlu0 %v518, 94
        %v523 = vpop.permute.xlu0 %522
        %524 = vrot.lane.b32.xlu0 %v519, 94
        %v525 = vpop.permute.xlu0 %524
        %v526 = vrot.slane %v523, 1
        %v527 = vrot.slane %v525, 1
        %v528 = vsel %vm425, %v526, %v527
        %vm529 = vcmask 769024
        %v530 = vsel %vm529, %v523, %v528
        %s532 = scalar_lea.vmem [#allocation2], 7
        %533 = vst [vmem:[%s532] ss:$8 sm:$0xf] %v530
        %534 = vst [vmem:[%s532] ss:$8 sm:$0xf0] %v530
        %v535 = vld [vmem:[%s407] sm:$0xff]
        %v536 = vld [vmem:[%s407 + $0x8] sm:$0x1]
        %539 = vrot.lane.b32.xlu0 %v535, 93
        %v540 = vpop.permute.xlu0 %539
        %541 = vrot.lane.b32.xlu0 %v536, 93
        %v542 = vpop.permute.xlu0 %541
        %v543 = vrot.slane %v540, 1
        %v544 = vrot.slane %v542, 1
        %v545 = vsel %vm425, %v543, %v544
        %vm546 = vcmask 760832
        %v547 = vsel %vm546, %v540, %v545
        %s549 = scalar_lea.vmem [#allocation2], 64
        %550 = vst [vmem:[%s549] ss:$8 sm:$0xf] %v547
        %551 = vst [vmem:[%s549] ss:$8 sm:$0xf0] %v547
        %v552 = vld [vmem:[%s407] sm:$0xff]
        %v553 = vld [vmem:[%s407 + $0x8] sm:$0x1]
        %556 = vrot.lane.b32.xlu0 %v552, 92
        %v557 = vpop.permute.xlu0 %556
        %558 = vrot.lane.b32.xlu0 %v553, 92
        %v559 = vpop.permute.xlu0 %558
        %v560 = vrot.slane %v557, 1
        %v561 = vrot.slane %v559, 1
        %v562 = vsel %vm425, %v560, %v561
        %vm563 = vcmask 752640
        %v564 = vsel %vm563, %v557, %v562
        %s566 = scalar_lea.vmem [#allocation2], 65
        %567 = vst [vmem:[%s566] ss:$8 sm:$0xf] %v564
        %568 = vst [vmem:[%s566] ss:$8 sm:$0xf0] %v564
        %v569 = vld [vmem:[%s407] sm:$0xff]
        %v570 = vld [vmem:[%s407 + $0x8] sm:$0x1]
        %573 = vrot.lane.b32.xlu0 %v569, 64
        %v574 = vpop.permute.xlu0 %573
        %575 = vrot.lane.b32.xlu0 %v570, 64
        %v576 = vpop.permute.xlu0 %575
        %v577 = vrot.slane %v574, 1
        %v578 = vrot.slane %v576, 1
        %v579 = vsel %vm425, %v577, %v578
        %vm580 = vcmask 523264
        %v581 = vsel %vm580, %v574, %v579
        %s583 = scalar_lea.vmem [#allocation2], 66
        %584 = vst [vmem:[%s583] ss:$8 sm:$0xf] %v581
        %585 = vst [vmem:[%s583] ss:$8 sm:$0xf0] %v581
        %v586 = vld [vmem:[%s407] sm:$0xff]
        %v587 = vld [vmem:[%s407 + $0x8] sm:$0x1]
        %590 = vrot.lane.b32.xlu0 %v586, 63
        %v591 = vpop.permute.xlu0 %590
        %592 = vrot.lane.b32.xlu0 %v587, 63
        %v593 = vpop.permute.xlu0 %592
        %v594 = vrot.slane %v591, 1
        %v595 = vrot.slane %v593, 1
        %v596 = vsel %vm425, %v594, %v595
        %vm597 = vcmask 515072
        %v598 = vsel %vm597, %v591, %v596
        %s600 = scalar_lea.vmem [#allocation2], 67
        %601 = vst [vmem:[%s600] ss:$8 sm:$0xf] %v598
        %602 = vst [vmem:[%s600] ss:$8 sm:$0xf0] %v598
        %v603 = vld [vmem:[%s407] sm:$0xff]
        %v604 = vld [vmem:[%s407 + $0x8] sm:$0x1]
        %607 = vrot.lane.b32.xlu0 %v603, 62
        %v608 = vpop.permute.xlu0 %607
        %609 = vrot.lane.b32.xlu0 %v604, 62
        %v610 = vpop.permute.xlu0 %609
        %v611 = vrot.slane %v608, 1
        %v612 = vrot.slane %v610, 1
        %v613 = vsel %vm425, %v611, %v612
        %vm614 = vcmask 506880
        %v615 = vsel %vm614, %v608, %v613
        %s617 = scalar_lea.vmem [#allocation2], 68
        %618 = vst [vmem:[%s617] ss:$8 sm:$0xf] %v615
        %619 = vst [vmem:[%s617] ss:$8 sm:$0xf0] %v615
        %v620 = vld [vmem:[%s407] sm:$0xff]
        %v621 = vld [vmem:[%s407 + $0x8] sm:$0x1]
        %624 = vrot.lane.b32.xlu0 %v620, 61
        %v625 = vpop.permute.xlu0 %624
        %626 = vrot.lane.b32.xlu0 %v621, 61
        %v627 = vpop.permute.xlu0 %626
        %v628 = vrot.slane %v625, 1
        %v629 = vrot.slane %v627, 1
        %v630 = vsel %vm425, %v628, %v629
        %vm631 = vcmask 498688
        %v632 = vsel %vm631, %v625, %v630
        %s634 = scalar_lea.vmem [#allocation2], 69
        %635 = vst [vmem:[%s634] ss:$8 sm:$0xf] %v632
        %636 = vst [vmem:[%s634] ss:$8 sm:$0xf0] %v632
        %v637 = vld [vmem:[%s407] sm:$0xff]
        %v638 = vld [vmem:[%s407 + $0x8] sm:$0x1]
        %641 = vrot.lane.b32.xlu0 %v637, 60
        %v642 = vpop.permute.xlu0 %641
        %643 = vrot.lane.b32.xlu0 %v638, 60
        %v644 = vpop.permute.xlu0 %643
        %v645 = vrot.slane %v642, 1
        %v646 = vrot.slane %v644, 1
        %v647 = vsel %vm425, %v645, %v646
        %vm648 = vcmask 490496
        %v649 = vsel %vm648, %v642, %v647
        %s651 = scalar_lea.vmem [#allocation2], 70
        %652 = vst [vmem:[%s651] ss:$8 sm:$0xf] %v649
        %653 = vst [vmem:[%s651] ss:$8 sm:$0xf0] %v649
        %v654 = vld [vmem:[%s407] sm:$0xff]
        %v655 = vld [vmem:[%s407 + $0x8] sm:$0x1]
        %658 = vrot.lane.b32.xlu0 %v654, 32
        %v659 = vpop.permute.xlu0 %658
        %660 = vrot.lane.b32.xlu0 %v655, 32
        %v661 = vpop.permute.xlu0 %660
        %v662 = vrot.slane %v659, 1
        %v663 = vrot.slane %v661, 1
        %v664 = vsel %vm425, %v662, %v663
        %vm665 = vcmask 261120
        %v666 = vsel %vm665, %v659, %v664
        %s668 = scalar_lea.vmem [#allocation2], 71
        %669 = vst [vmem:[%s668] ss:$8 sm:$0xf] %v666
        %670 = vst [vmem:[%s668] ss:$8 sm:$0xf0] %v666
        %v671 = vld [vmem:[%s407] sm:$0xff]
        %v672 = vld [vmem:[%s407 + $0x8] sm:$0x1]
        %675 = vrot.lane.b32.xlu0 %v671, 31
        %v676 = vpop.permute.xlu0 %675
        %677 = vrot.lane.b32.xlu0 %v672, 31
        %v678 = vpop.permute.xlu0 %677
        %v679 = vrot.slane %v676, 1
        %v680 = vrot.slane %v678, 1
        %v681 = vsel %vm425, %v679, %v680
        %vm682 = vcmask 252928
        %v683 = vsel %vm682, %v676, %v681
        %s685 = scalar_lea.vmem [#allocation2], 128
        %686 = vst [vmem:[%s685] ss:$8 sm:$0xf] %v683
        %687 = vst [vmem:[%s685] ss:$8 sm:$0xf0] %v683
        %v688 = vld [vmem:[%s407] sm:$0xff]
        %v689 = vld [vmem:[%s407 + $0x8] sm:$0x1]
        %692 = vrot.lane.b32.xlu0 %v688, 30
        %v693 = vpop.permute.xlu0 %692
        %694 = vrot.lane.b32.xlu0 %v689, 30
        %v695 = vpop.permute.xlu0 %694
        %v696 = vrot.slane %v693, 1
        %v697 = vrot.slane %v695, 1
        %v698 = vsel %vm425, %v696, %v697
        %vm699 = vcmask 244736
        %v700 = vsel %vm699, %v693, %v698
        %s702 = scalar_lea.vmem [#allocation2], 129
        %703 = vst [vmem:[%s702] ss:$8 sm:$0xf] %v700
        %704 = vst [vmem:[%s702] ss:$8 sm:$0xf0] %v700
        %v705 = vld [vmem:[%s407] sm:$0xff]
        %v706 = vld [vmem:[%s407 + $0x8] sm:$0x1]
        %709 = vrot.lane.b32.xlu0 %v705, 29
        %v710 = vpop.permute.xlu0 %709
        %711 = vrot.lane.b32.xlu0 %v706, 29
        %v712 = vpop.permute.xlu0 %711
        %v713 = vrot.slane %v710, 1
        %v714 = vrot.slane %v712, 1
        %v715 = vsel %vm425, %v713, %v714
        %vm716 = vcmask 236544
        %v717 = vsel %vm716, %v710, %v715
        %s719 = scalar_lea.vmem [#allocation2], 130
        %720 = vst [vmem:[%s719] ss:$8 sm:$0xf] %v717
        %721 = vst [vmem:[%s719] ss:$8 sm:$0xf0] %v717
        %v722 = vld [vmem:[%s407] sm:$0xff]
        %v723 = vld [vmem:[%s407 + $0x8] sm:$0x1]
        %726 = vrot.lane.b32.xlu0 %v722, 28
        %v727 = vpop.permute.xlu0 %726
        %728 = vrot.lane.b32.xlu0 %v723, 28
        %v729 = vpop.permute.xlu0 %728
        %v730 = vrot.slane %v727, 1
        %v731 = vrot.slane %v729, 1
        %v732 = vsel %vm425, %v730, %v731
        %vm733 = vcmask 228352
        %v734 = vsel %vm733, %v727, %v732
        %s736 = scalar_lea.vmem [#allocation2], 131
        %737 = vst [vmem:[%s736] ss:$8 sm:$0xf] %v734
        %738 = vst [vmem:[%s736] ss:$8 sm:$0xf0] %v734
        %v739 = vld [vmem:[%s407 + $0x1] sm:$0xff]
        %s740 = scalar_lea.vmem [#allocation2], 132
        %741 = vst [vmem:[%s740] ss:$8 sm:$0xf] %v739
        %742 = vst [vmem:[%s740] ss:$8 sm:$0xf0] %v739
        %v743 = vld [vmem:[%s407 + $0x1] sm:$0xff]
        %v744 = vld [vmem:[%s407 + $0x9] sm:$0x1]
        %747 = vrot.lane.b32.xlu0 %v743, 127
        %v748 = vpop.permute.xlu0 %747
        %749 = vrot.lane.b32.xlu0 %v744, 127
        %v750 = vpop.permute.xlu0 %749
        %v751 = vrot.slane %v748, 1
        %v752 = vrot.slane %v750, 1
        %v753 = vsel %vm425, %v751, %v752
        %v754 = vsel %vm427, %v748, %v753
        %s756 = scalar_lea.vmem [#allocation2], 133
        %757 = vst [vmem:[%s756] ss:$8 sm:$0xf] %v754
        %758 = vst [vmem:[%s756] ss:$8 sm:$0xf0] %v754
        %v759 = vld [vmem:[%s407 + $0x1] sm:$0xff]
        %v760 = vld [vmem:[%s407 + $0x9] sm:$0x1]
        %763 = vrot.lane.b32.xlu0 %v759, 126
        %v764 = vpop.permute.xlu0 %763
        %765 = vrot.lane.b32.xlu0 %v760, 126
        %v766 = vpop.permute.xlu0 %765
        %v767 = vrot.slane %v764, 1
        %v768 = vrot.slane %v766, 1
        %v769 = vsel %vm425, %v767, %v768
        %v770 = vsel %vm444, %v764, %v769
        %s772 = scalar_lea.vmem [#allocation2], 134
        %773 = vst [vmem:[%s772] ss:$8 sm:$0xf] %v770
        %774 = vst [vmem:[%s772] ss:$8 sm:$0xf0] %v770
        %v775 = vld [vmem:[%s407 + $0x1] sm:$0xff]
        %v776 = vld [vmem:[%s407 + $0x9] sm:$0x1]
        %779 = vrot.lane.b32.xlu0 %v775, 125
        %v780 = vpop.permute.xlu0 %779
        %781 = vrot.lane.b32.xlu0 %v776, 125
        %v782 = vpop.permute.xlu0 %781
        %v783 = vrot.slane %v780, 1
        %v784 = vrot.slane %v782, 1
        %v785 = vsel %vm425, %v783, %v784
        %v786 = vsel %vm461, %v780, %v785
        %s788 = scalar_lea.vmem [#allocation2], 135
        %789 = vst [vmem:[%s788] ss:$8 sm:$0xf] %v786
        %790 = vst [vmem:[%s788] ss:$8 sm:$0xf0] %v786
        %v791 = vld [vmem:[%s407 + $0x1] sm:$0xff]
        %v792 = vld [vmem:[%s407 + $0x9] sm:$0x1]
        %795 = vrot.lane.b32.xlu0 %v791, 124
        %v796 = vpop.permute.xlu0 %795
        %797 = vrot.lane.b32.xlu0 %v792, 124
        %v798 = vpop.permute.xlu0 %797
        %v799 = vrot.slane %v796, 1
        %v800 = vrot.slane %v798, 1
        %v801 = vsel %vm425, %v799, %v800
        %v802 = vsel %vm478, %v796, %v801
        %s804 = scalar_lea.vmem [#allocation2], 192
        %805 = vst [vmem:[%s804] ss:$8 sm:$0xf] %v802
        %806 = vst [vmem:[%s804] ss:$8 sm:$0xf0] %v802
        %v807 = vld [vmem:[%s1] sm:$0x7]
        %v808 = vld [vmem:[#allocation2] sm:$0xff]
        %v809 = vld [vmem:[#allocation2 + $0x8] sm:$0xff]
        %v810 = vld [vmem:[#allocation2 + $0x10] sm:$0xff]
        %v811 = vld [vmem:[#allocation2 + $0x18] sm:$0xff]
        %v812 = vld [vmem:[#allocation2 + $0x20] sm:$0xff]
        %v813 = vld [vmem:[#allocation2 + $0x28] sm:$0xff]
        %v814 = vld [vmem:[#allocation2 + $0x30] sm:$0xff]
        %v815 = vld [vmem:[#allocation2 + $0x38] sm:$0xff]
        %v816 = vld [vmem:[#allocation2 + $0x40] sm:$0xff]
        %v817 = vld [vmem:[#allocation2 + $0x48] sm:$0xff]
        %v818 = vld [vmem:[#allocation2 + $0x50] sm:$0xff]
        %v819 = vld [vmem:[#allocation2 + $0x58] sm:$0xff]
        %v820 = vld [vmem:[#allocation2 + $0x60] sm:$0xff]
        %v821 = vld [vmem:[#allocation2 + $0x68] sm:$0xff]
        %v822 = vld [vmem:[#allocation2 + $0x70] sm:$0xff]
        %v823 = vld [vmem:[#allocation2 + $0x78] sm:$0xff]
        %v824 = vld [vmem:[#allocation2 + $0x80] sm:$0xff]
        %v825 = vld [vmem:[#allocation2 + $0x88] sm:$0xff]
        %v826 = vld [vmem:[#allocation2 + $0x90] sm:$0xff]
        %v827 = vld [vmem:[#allocation2 + $0x98] sm:$0xff]
        %v828 = vld [vmem:[#allocation2 + $0xa0] sm:$0xff]
        %v829 = vld [vmem:[#allocation2 + $0xa8] sm:$0xff]
        %v830 = vld [vmem:[#allocation2 + $0xb0] sm:$0xff]
        %v831 = vld [vmem:[#allocation2 + $0xb8] sm:$0xff]
        %v832 = vld [vmem:[#allocation2 + $0xc0] sm:$0x1]
        %v833 = vld [vmem:[#allocation2 + $0xc8] sm:$0x1]
        %v834 = vld [vmem:[#allocation2 + $0xd0] sm:$0x1]
        %v835 = vld [vmem:[#allocation2 + $0xd8] sm:$0x1]
        %v836 = vld [vmem:[#allocation2 + $0xe0] sm:$0x1]
        %v837 = vld [vmem:[#allocation2 + $0xe8] sm:$0x1]
        %v838 = vld [vmem:[#allocation2 + $0xf0] sm:$0x1]
        %v839 = vld [vmem:[#allocation2 + $0xf8] sm:$0x1]
        %v840 = vpack.c.bf16 %v816, %v808
        %v841 = vpack.c.bf16 %v817, %v809
        %v842 = vpack.c.bf16 %v818, %v810
        %v843 = vpack.c.bf16 %v819, %v811
        %v844 = vpack.c.bf16 %v820, %v812
        %v845 = vpack.c.bf16 %v821, %v813
        %v846 = vpack.c.bf16 %v822, %v814
        %v847 = vpack.c.bf16 %v823, %v815
        %v848 = vpack.c.bf16 %v832, %v824
        %v849 = vpack.c.bf16 %v833, %v825
        %v850 = vpack.c.bf16 %v834, %v826
        %v851 = vpack.c.bf16 %v835, %v827
        %v852 = vpack.c.bf16 %v836, %v828
        %v853 = vpack.c.bf16 %v837, %v829
        %v854 = vpack.c.bf16 %v838, %v830
        %v855 = vpack.c.bf16 %v839, %v831
        %v856 = vld [vmem:[%s2] sm:$0x3f]
        %858 = vset.pattern.permute.xlu0 0
        %859 = vperm.xlu0 %858, %v856
        %v860 = vpop.permute.xlu0 %859
        %vm862 = vcmask 203776
        %v864 = vsel %vm862, %v807, 0
        %vm866 = vcmask 1043456
        %vm867 = vcmask 1044480
        %v868 = vsel %vm866, 4294967295, 65535
        %v869 = vsel %vm867, %v868, 0
        %v871 = vand.u32 %v848, %v869
        %v874 = vand.u32 %v849, %v869
        %v877 = vand.u32 %v850, %v869
        %v880 = vand.u32 %v851, %v869
        %v883 = vand.u32 %v852, %v869
        %v886 = vand.u32 %v853, %v869
        %v889 = vand.u32 %v854, %v869
        %v892 = vand.u32 %v855, %v869
        %894 = vmatpush.bf16.msra.mxu0 0
        %895 = vmatpush.bf16.msra.mxu0 0
        %896 = vmatpush.bf16.msra.mxu0 0
        %897 = vmatpush.bf16.msra.mxu0 0
        %898 = vmatpush.bf16.msra.mxu0 0
        %899 = vmatpush.bf16.msra.mxu0 0
        %900 = vmatpush.bf16.msra.mxu0 %v871
        %901 = vmatpush.bf16.msra.mxu0 %v840
        %902 = vmatmul.bf16.gmra.mxu0 %v864
        %v903 = vpop.f32.mrf.mxu0
        %v904 = vadd.f32 %v860, %v903
        %v905 = vpop.f32.mrf.mxu0
        %906 = vdwg.mxu0
        %907 = vmatpush.bf16.msra.mxu0 0
        %908 = vmatpush.bf16.msra.mxu0 0
        %909 = vmatpush.bf16.msra.mxu0 0
        %910 = vmatpush.bf16.msra.mxu0 0
        %911 = vmatpush.bf16.msra.mxu0 0
        %912 = vmatpush.bf16.msra.mxu0 0
        %913 = vmatpush.bf16.msra.mxu0 %v874
        %914 = vmatpush.bf16.msra.mxu0 %v841
        %915 = vmatmul.bf16.gmra.mxu0 %v864
        %v916 = vpop.f32.mrf.mxu0
        %v917 = vadd.f32 %v860, %v916
        %v918 = vpop.f32.mrf.mxu0
        %919 = vdwg.mxu0
        %920 = vmatpush.bf16.msra.mxu0 0
        %921 = vmatpush.bf16.msra.mxu0 0
        %922 = vmatpush.bf16.msra.mxu0 0
        %923 = vmatpush.bf16.msra.mxu0 0
        %924 = vmatpush.bf16.msra.mxu0 0
        %925 = vmatpush.bf16.msra.mxu0 0
        %926 = vmatpush.bf16.msra.mxu0 %v877
        %927 = vmatpush.bf16.msra.mxu0 %v842
        %928 = vmatmul.bf16.gmra.mxu0 %v864
        %v929 = vpop.f32.mrf.mxu0
        %v930 = vadd.f32 %v860, %v929
        %v931 = vpop.f32.mrf.mxu0
        %932 = vdwg.mxu0
        %933 = vmatpush.bf16.msra.mxu0 0
        %934 = vmatpush.bf16.msra.mxu0 0
        %935 = vmatpush.bf16.msra.mxu0 0
        %936 = vmatpush.bf16.msra.mxu0 0
        %937 = vmatpush.bf16.msra.mxu0 0
        %938 = vmatpush.bf16.msra.mxu0 0
        %939 = vmatpush.bf16.msra.mxu0 %v880
        %940 = vmatpush.bf16.msra.mxu0 %v843
        %941 = vmatmul.bf16.gmra.mxu0 %v864
        %v942 = vpop.f32.mrf.mxu0
        %v943 = vadd.f32 %v860, %v942
        %v944 = vpop.f32.mrf.mxu0
        %945 = vdwg.mxu0
        %946 = vmatpush.bf16.msra.mxu0 0
        %947 = vmatpush.bf16.msra.mxu0 0
        %948 = vmatpush.bf16.msra.mxu0 0
        %949 = vmatpush.bf16.msra.mxu0 0
        %950 = vmatpush.bf16.msra.mxu0 0
        %951 = vmatpush.bf16.msra.mxu0 0
        %952 = vmatpush.bf16.msra.mxu0 %v883
        %953 = vmatpush.bf16.msra.mxu0 %v844
        %954 = vmatmul.bf16.gmra.mxu0 %v864
        %v955 = vpop.f32.mrf.mxu0
        %v956 = vadd.f32 %v860, %v955
        %v957 = vpop.f32.mrf.mxu0
        %958 = vdwg.mxu0
        %959 = vmatpush.bf16.msra.mxu0 0
        %960 = vmatpush.bf16.msra.mxu0 0
        %961 = vmatpush.bf16.msra.mxu0 0
        %962 = vmatpush.bf16.msra.mxu0 0
        %963 = vmatpush.bf16.msra.mxu0 0
        %964 = vmatpush.bf16.msra.mxu0 0
        %965 = vmatpush.bf16.msra.mxu0 %v886
        %966 = vmatpush.bf16.msra.mxu0 %v845
        %967 = vmatmul.bf16.gmra.mxu0 %v864
        %v968 = vpop.f32.mrf.mxu0
        %v969 = vadd.f32 %v860, %v968
        %v970 = vpop.f32.mrf.mxu0
        %971 = vdwg.mxu0
        %972 = vmatpush.bf16.msra.mxu0 0
        %973 = vmatpush.bf16.msra.mxu0 0
        %974 = vmatpush.bf16.msra.mxu0 0
        %975 = vmatpush.bf16.msra.mxu0 0
        %976 = vmatpush.bf16.msra.mxu0 0
        %977 = vmatpush.bf16.msra.mxu0 0
        %978 = vmatpush.bf16.msra.mxu0 %v889
        %979 = vmatpush.bf16.msra.mxu0 %v846
        %980 = vmatmul.bf16.gmra.mxu0 %v864
        %v981 = vpop.f32.mrf.mxu0
        %v982 = vadd.f32 %v860, %v981
        %v983 = vpop.f32.mrf.mxu0
        %984 = vdwg.mxu0
        %985 = vmatpush.bf16.msra.mxu0 0
        %986 = vmatpush.bf16.msra.mxu0 0
        %987 = vmatpush.bf16.msra.mxu0 0
        %988 = vmatpush.bf16.msra.mxu0 0
        %989 = vmatpush.bf16.msra.mxu0 0
        %990 = vmatpush.bf16.msra.mxu0 0
        %991 = vmatpush.bf16.msra.mxu0 %v892
        %992 = vmatpush.bf16.msra.mxu0 %v847
        %993 = vmatmul.bf16.gmra.mxu0 %v864
        %v994 = vpop.f32.mrf.mxu0
        %v995 = vadd.f32 %v860, %v994
        %v996 = vpop.f32.mrf.mxu0
        %997 = vdwg.mxu0
        %v998 = vxor.u32 %v904, 2147483648
        %v999 = vxor.u32 %v917, 2147483648
        %v1000 = vxor.u32 %v930, 2147483648
        %v1001 = vxor.u32 %v943, 2147483648
        %v1002 = vxor.u32 %v956, 2147483648
        %v1003 = vxor.u32 %v969, 2147483648
        %v1004 = vxor.u32 %v982, 2147483648
        %v1005 = vxor.u32 %v995, 2147483648
        %v1006 = vmul.f32 %v998, 1.442695
        %v1007 = vpow.pop %v1006
        %v1008 = vmul.f32 %v999, 1.442695
        %v1009 = vpow.pop %v1008
        %v1010 = vmul.f32 %v1000, 1.442695
        %v1011 = vpow.pop %v1010
        %v1012 = vmul.f32 %v1001, 1.442695
        %v1013 = vpow.pop %v1012
        %v1014 = vmul.f32 %v1002, 1.442695
        %v1015 = vpow.pop %v1014
        %v1016 = vmul.f32 %v1003, 1.442695
        %v1017 = vpow.pop %v1016
        %v1018 = vmul.f32 %v1004, 1.442695
        %v1019 = vpow.pop %v1018
        %v1020 = vmul.f32 %v1005, 1.442695
        %v1021 = vpow.pop %v1020
        %v1022 = vadd.f32 %v1007, 1.0
        %v1023 = vadd.f32 %v1009, 1.0
        %v1024 = vadd.f32 %v1011, 1.0
        %v1025 = vadd.f32 %v1013, 1.0
        %v1026 = vadd.f32 %v1015, 1.0
        %v1027 = vadd.f32 %v1017, 1.0
        %v1028 = vadd.f32 %v1019, 1.0
        %v1029 = vadd.f32 %v1021, 1.0
        %v1030 = vrcp.pop %v1022
        %v1031 = vmul.f32 %v1022, %v1030
        %v1032 = vsub.f32 1.0, %v1031
        %v1033 = vmul.f32 %v1030, %v1032
        %v1034 = vadd.f32 %v1030, %v1033
        %vm1035 = vweird.f32 %v1022
        %vm1036 = vweird.f32 %v1030
        %vm1037 = vmor %vm1035, %vm1036
        %v1038 = vsel %vm1037, %v1030, %v1034
        %v1039 = vand.u32 2147483647, %v1022
        %vm1040 = vcmp.eq.f32.partialorder %v1039, 8.507059e+37
        %v1041 = vand.u32 %v1022, 2147483648
        %v1042 = vor.u32 1.1754944e-38, %v1041
        %v1043 = vsel %vm1040, %v1042, %v1038
        %v1044 = vmul.f32 1.0, %v1043
        %v1045 = vrcp.pop %v1023
        %v1046 = vmul.f32 %v1023, %v1045
        %v1047 = vsub.f32 1.0, %v1046
        %v1048 = vmul.f32 %v1045, %v1047
        %v1049 = vadd.f32 %v1045, %v1048
        %vm1050 = vweird.f32 %v1023
        %vm1051 = vweird.f32 %v1045
        %vm1052 = vmor %vm1050, %vm1051
        %v1053 = vsel %vm1052, %v1045, %v1049
        %v1054 = vand.u32 2147483647, %v1023
        %vm1055 = vcmp.eq.f32.partialorder %v1054, 8.507059e+37
        %v1056 = vand.u32 %v1023, 2147483648
        %v1057 = vor.u32 1.1754944e-38, %v1056
        %v1058 = vsel %vm1055, %v1057, %v1053
        %v1059 = vmul.f32 1.0, %v1058
        %v1060 = vrcp.pop %v1024
        %v1061 = vmul.f32 %v1024, %v1060
        %v1062 = vsub.f32 1.0, %v1061
        %v1063 = vmul.f32 %v1060, %v1062
        %v1064 = vadd.f32 %v1060, %v1063
        %vm1065 = vweird.f32 %v1024
        %vm1066 = vweird.f32 %v1060
        %vm1067 = vmor %vm1065, %vm1066
        %v1068 = vsel %vm1067, %v1060, %v1064
        %v1069 = vand.u32 2147483647, %v1024
        %vm1070 = vcmp.eq.f32.partialorder %v1069, 8.507059e+37
        %v1071 = vand.u32 %v1024, 2147483648
        %v1072 = vor.u32 1.1754944e-38, %v1071
        %v1073 = vsel %vm1070, %v1072, %v1068
        %v1074 = vmul.f32 1.0, %v1073
        %v1075 = vrcp.pop %v1025
        %v1076 = vmul.f32 %v1025, %v1075
        %v1077 = vsub.f32 1.0, %v1076
        %v1078 = vmul.f32 %v1075, %v1077
        %v1079 = vadd.f32 %v1075, %v1078
        %vm1080 = vweird.f32 %v1025
        %vm1081 = vweird.f32 %v1075
        %vm1082 = vmor %vm1080, %vm1081
        %v1083 = vsel %vm1082, %v1075, %v1079
        %v1084 = vand.u32 2147483647, %v1025
        %vm1085 = vcmp.eq.f32.partialorder %v1084, 8.507059e+37
        %v1086 = vand.u32 %v1025, 2147483648
        %v1087 = vor.u32 1.1754944e-38, %v1086
        %v1088 = vsel %vm1085, %v1087, %v1083
        %v1089 = vmul.f32 1.0, %v1088
        %v1090 = vrcp.pop %v1026
        %v1091 = vmul.f32 %v1026, %v1090
        %v1092 = vsub.f32 1.0, %v1091
        %v1093 = vmul.f32 %v1090, %v1092
        %v1094 = vadd.f32 %v1090, %v1093
        %vm1095 = vweird.f32 %v1026
        %vm1096 = vweird.f32 %v1090
        %vm1097 = vmor %vm1095, %vm1096
        %v1098 = vsel %vm1097, %v1090, %v1094
        %v1099 = vand.u32 2147483647, %v1026
        %vm1100 = vcmp.eq.f32.partialorder %v1099, 8.507059e+37
        %v1101 = vand.u32 %v1026, 2147483648
        %v1102 = vor.u32 1.1754944e-38, %v1101
        %v1103 = vsel %vm1100, %v1102, %v1098
        %v1104 = vmul.f32 1.0, %v1103
        %v1105 = vrcp.pop %v1027
        %v1106 = vmul.f32 %v1027, %v1105
        %v1107 = vsub.f32 1.0, %v1106
        %v1108 = vmul.f32 %v1105, %v1107
        %v1109 = vadd.f32 %v1105, %v1108
        %vm1110 = vweird.f32 %v1027
        %vm1111 = vweird.f32 %v1105
        %vm1112 = vmor %vm1110, %vm1111
        %v1113 = vsel %vm1112, %v1105, %v1109
        %v1114 = vand.u32 2147483647, %v1027
        %vm1115 = vcmp.eq.f32.partialorder %v1114, 8.507059e+37
        %v1116 = vand.u32 %v1027, 2147483648
        %v1117 = vor.u32 1.1754944e-38, %v1116
        %v1118 = vsel %vm1115, %v1117, %v1113
        %v1119 = vmul.f32 1.0, %v1118
        %v1120 = vrcp.pop %v1028
        %v1121 = vmul.f32 %v1028, %v1120
        %v1122 = vsub.f32 1.0, %v1121
        %v1123 = vmul.f32 %v1120, %v1122
        %v1124 = vadd.f32 %v1120, %v1123
        %vm1125 = vweird.f32 %v1028
        %vm1126 = vweird.f32 %v1120
        %vm1127 = vmor %vm1125, %vm1126
        %v1128 = vsel %vm1127, %v1120, %v1124
        %v1129 = vand.u32 2147483647, %v1028
        %vm1130 = vcmp.eq.f32.partialorder %v1129, 8.507059e+37
        %v1131 = vand.u32 %v1028, 2147483648
        %v1132 = vor.u32 1.1754944e-38, %v1131
        %v1133 = vsel %vm1130, %v1132, %v1128
        %v1134 = vmul.f32 1.0, %v1133
        %v1135 = vrcp.pop %v1029
        %v1136 = vmul.f32 %v1029, %v1135
        %v1137 = vsub.f32 1.0, %v1136
        %v1138 = vmul.f32 %v1135, %v1137
        %v1139 = vadd.f32 %v1135, %v1138
        %vm1140 = vweird.f32 %v1029
        %vm1141 = vweird.f32 %v1135
        %vm1142 = vmor %vm1140, %vm1141
        %v1143 = vsel %vm1142, %v1135, %v1139
        %v1144 = vand.u32 2147483647, %v1029
        %vm1145 = vcmp.eq.f32.partialorder %v1144, 8.507059e+37
        %v1146 = vand.u32 %v1029, 2147483648
        %v1147 = vor.u32 1.1754944e-38, %v1146
        %v1148 = vsel %vm1145, %v1147, %v1143
        %v1149 = vmul.f32 1.0, %v1148
        %1150 = vst [vmem:[#allocation3] sm:$0x3f] %v1044
        %1151 = vst [vmem:[#allocation3 + $0x8] sm:$0x3f] %v1059
        %1152 = vst [vmem:[#allocation3 + $0x10] sm:$0x3f] %v1074
        %1153 = vst [vmem:[#allocation3 + $0x18] sm:$0x3f] %v1089
        %1154 = vst [vmem:[#allocation3 + $0x20] sm:$0x3f] %v1104
        %1155 = vst [vmem:[#allocation3 + $0x28] sm:$0x3f] %v1119
        %1156 = vst [vmem:[#allocation3 + $0x30] sm:$0x3f] %v1134
        %1157 = vst [vmem:[#allocation3 + $0x38] sm:$0x3f] %v1149
        %v1158 = vld [vmem:[#allocation3] sm:$0x3f]
        %v1159 = vld [vmem:[#allocation3 + $0x8] sm:$0x3f]
        %v1160 = vld [vmem:[#allocation3 + $0x10] sm:$0x3f]
        %v1161 = vld [vmem:[#allocation3 + $0x18] sm:$0x3f]
        %v1162 = vld [vmem:[#allocation3 + $0x20] sm:$0x3f]
        %v1163 = vld [vmem:[#allocation3 + $0x28] sm:$0x3f]
        %v1164 = vld [vmem:[#allocation3 + $0x30] sm:$0x3f]
        %v1165 = vld [vmem:[#allocation3 + $0x38] sm:$0x3f]
        %v1166 = vld [vmem:[#allocation3 + $0x40] sm:$0x3f]
        %1176 = vrot.lane.b32.xlu0 %v1158, 127
        %v1177 = vpop.permute.xlu0 %1176
        %1178 = vrot.lane.b32.xlu0 %v1159, 127
        %v1179 = vpop.permute.xlu0 %1178
        %1180 = vrot.lane.b32.xlu0 %v1160, 127
        %v1181 = vpop.permute.xlu0 %1180
        %1182 = vrot.lane.b32.xlu0 %v1161, 127
        %v1183 = vpop.permute.xlu0 %1182
        %1184 = vrot.lane.b32.xlu0 %v1162, 127
        %v1185 = vpop.permute.xlu0 %1184
        %1186 = vrot.lane.b32.xlu0 %v1163, 127
        %v1187 = vpop.permute.xlu0 %1186
        %1188 = vrot.lane.b32.xlu0 %v1164, 127
        %v1189 = vpop.permute.xlu0 %1188
        %1190 = vrot.lane.b32.xlu0 %v1165, 127
        %v1191 = vpop.permute.xlu0 %1190
        %1192 = vrot.lane.b32.xlu0 %v1166, 127
        %v1193 = vpop.permute.xlu0 %1192
        %v1194 = vsel %vm427, %v1177, %v1179
        %v1195 = vsel %vm427, %v1179, %v1181
        %v1196 = vsel %vm427, %v1181, %v1183
        %v1197 = vsel %vm427, %v1183, %v1185
        %v1198 = vsel %vm427, %v1185, %v1187
        %v1199 = vsel %vm427, %v1187, %v1189
        %v1200 = vsel %vm427, %v1189, %v1191
        %v1201 = vsel %vm427, %v1191, %v1193
        %v1210 = vadd.f32 %v1158, %v1194
        %v1211 = vadd.f32 %v1159, %v1195
        %v1212 = vadd.f32 %v1160, %v1196
        %v1213 = vadd.f32 %v1161, %v1197
        %v1214 = vadd.f32 %v1162, %v1198
        %v1215 = vadd.f32 %v1163, %v1199
        %v1216 = vadd.f32 %v1164, %v1200
        %v1217 = vadd.f32 %v1165, %v1201
        %1218 = vrot.lane.b32.xlu0 %v1158, 96
        %v1219 = vpop.permute.xlu0 %1218
        %1220 = vrot.lane.b32.xlu0 %v1159, 96
        %v1221 = vpop.permute.xlu0 %1220
        %1222 = vrot.lane.b32.xlu0 %v1160, 96
        %v1223 = vpop.permute.xlu0 %1222
        %1224 = vrot.lane.b32.xlu0 %v1161, 96
        %v1225 = vpop.permute.xlu0 %1224
        %1226 = vrot.lane.b32.xlu0 %v1162, 96
        %v1227 = vpop.permute.xlu0 %1226
        %1228 = vrot.lane.b32.xlu0 %v1163, 96
        %v1229 = vpop.permute.xlu0 %1228
        %1230 = vrot.lane.b32.xlu0 %v1164, 96
        %v1231 = vpop.permute.xlu0 %1230
        %1232 = vrot.lane.b32.xlu0 %v1165, 96
        %v1233 = vpop.permute.xlu0 %1232
        %1234 = vrot.lane.b32.xlu0 %v1166, 96
        %v1235 = vpop.permute.xlu0 %1234
        %v1236 = vsel %vm495, %v1219, %v1221
        %v1237 = vsel %vm495, %v1221, %v1223
        %v1238 = vsel %vm495, %v1223, %v1225
        %v1239 = vsel %vm495, %v1225, %v1227
        %v1240 = vsel %vm495, %v1227, %v1229
        %v1241 = vsel %vm495, %v1229, %v1231
        %v1242 = vsel %vm495, %v1231, %v1233
        %v1243 = vsel %vm495, %v1233, %v1235
        %v1252 = vadd.f32 %v1210, %v1236
        %v1253 = vadd.f32 %v1211, %v1237
        %v1254 = vadd.f32 %v1212, %v1238
        %v1255 = vadd.f32 %v1213, %v1239
        %v1256 = vadd.f32 %v1214, %v1240
        %v1257 = vadd.f32 %v1215, %v1241
        %v1258 = vadd.f32 %v1216, %v1242
        %v1259 = vadd.f32 %v1217, %v1243
        %1260 = vrot.lane.b32.xlu0 %v1158, 95
        %v1261 = vpop.permute.xlu0 %1260
        %1262 = vrot.lane.b32.xlu0 %v1159, 95
        %v1263 = vpop.permute.xlu0 %1262
        %1264 = vrot.lane.b32.xlu0 %v1160, 95
        %v1265 = vpop.permute.xlu0 %1264
        %1266 = vrot.lane.b32.xlu0 %v1161, 95
        %v1267 = vpop.permute.xlu0 %1266
        %1268 = vrot.lane.b32.xlu0 %v1162, 95
        %v1269 = vpop.permute.xlu0 %1268
        %1270 = vrot.lane.b32.xlu0 %v1163, 95
        %v1271 = vpop.permute.xlu0 %1270
        %1272 = vrot.lane.b32.xlu0 %v1164, 95
        %v1273 = vpop.permute.xlu0 %1272
        %1274 = vrot.lane.b32.xlu0 %v1165, 95
        %v1275 = vpop.permute.xlu0 %1274
        %1276 = vrot.lane.b32.xlu0 %v1166, 95
        %v1277 = vpop.permute.xlu0 %1276
        %v1278 = vsel %vm512, %v1261, %v1263
        %v1279 = vsel %vm512, %v1263, %v1265
        %v1280 = vsel %vm512, %v1265, %v1267
        %v1281 = vsel %vm512, %v1267, %v1269
        %v1282 = vsel %vm512, %v1269, %v1271
        %v1283 = vsel %vm512, %v1271, %v1273
        %v1284 = vsel %vm512, %v1273, %v1275
        %v1285 = vsel %vm512, %v1275, %v1277
        %v1294 = vadd.f32 %v1252, %v1278
        %v1295 = vadd.f32 %v1253, %v1279
        %v1296 = vadd.f32 %v1254, %v1280
        %v1297 = vadd.f32 %v1255, %v1281
        %v1298 = vadd.f32 %v1256, %v1282
        %v1299 = vadd.f32 %v1257, %v1283
        %v1300 = vadd.f32 %v1258, %v1284
        %v1301 = vadd.f32 %v1259, %v1285
        %v1302 = vmul.f32 %v1294, 0.25
        %v1303 = vmul.f32 %v1295, 0.25
        %v1304 = vmul.f32 %v1296, 0.25
        %v1305 = vmul.f32 %v1297, 0.25
        %v1306 = vmul.f32 %v1298, 0.25
        %v1307 = vmul.f32 %v1299, 0.25
        %v1308 = vmul.f32 %v1300, 0.25
        %v1309 = vmul.f32 %v1301, 0.25
        %v1310 = vpack.c.bf16 %v1303, %v1302
        %v1311 = vpack.c.bf16 %v1305, %v1304
        %v1312 = vpack.c.bf16 %v1307, %v1306
        %v1313 = vpack.c.bf16 %v1309, %v1308
        %1314 = vst [vmem:[#allocation4] sm:$0x77] %v1310
        %1315 = vst [vmem:[#allocation4 + $0x8] sm:$0x77] %v1311
        %1316 = vst [vmem:[#allocation4 + $0x10] sm:$0x77] %v1312
        %1317 = vst [vmem:[#allocation4 + $0x18] sm:$0x77] %v1313
        %v1318 = vld [vmem:[%s3] sm:$0xf]
        %v1319 = vld [vmem:[%s3 + $0x4] sm:$0xf]
        %v1320 = vld [vmem:[#allocation4] sm:$0x77]
        %v1321 = vld [vmem:[#allocation4 + $0x8] sm:$0x77]
        %v1322 = vld [vmem:[#allocation4 + $0x10] sm:$0x77]
        %v1323 = vld [vmem:[#allocation4 + $0x18] sm:$0x77]
        %s1324 = scalar_lea.vmem %s3, 8
        %v1325 = vld [vmem:[%s1324] sm:$0xf]
        %v1326 = vld [vmem:[%s1324 + $0x4] sm:$0xf]
        %v1327 = vld [vmem:[#allocation4 + $0x20] sm:$0x7]
        %v1330 = vunpack.c.l.b16 %v1325
        %v1331 = vunpack.c.l.b16 %v1326
        %v1332 = vpack.c.b16 %v1331, %v1330
        %v1338 = vunpack.c.l.b16 %v1320
        %v1339 = vunpack.c.h.b16 %v1320
        %v1340 = vunpack.c.l.b16 %v1321
        %v1341 = vunpack.c.h.b16 %v1321
        %v1342 = vunpack.c.l.b16 %v1322
        %v1343 = vunpack.c.h.b16 %v1322
        %v1344 = vunpack.c.l.b16 %v1323
        %v1345 = vunpack.c.h.b16 %v1323
        %v1346 = vunpack.c.l.b16 %v1327
        %v1347 = vpack.c.b16 %v1338, %v1338
        %v1348 = vpack.c.b16 %v1339, %v1339
        %v1349 = vpack.c.b16 %v1340, %v1340
        %v1350 = vpack.c.b16 %v1341, %v1341
        %v1351 = vpack.c.b16 %v1342, %v1342
        %v1352 = vpack.c.b16 %v1343, %v1343
        %v1353 = vpack.c.b16 %v1344, %v1344
        %v1354 = vpack.c.b16 %v1345, %v1345
        %v1355 = vpack.c.b16 %v1346, %v1346
        %1356 = vrot.lane.b32.xlu0 %v1347, 126
        %v1357 = vpop.permute.xlu0 %1356
        %1358 = vrot.lane.b32.xlu0 %v1348, 126
        %v1359 = vpop.permute.xlu0 %1358
        %1360 = vrot.lane.b32.xlu0 %v1349, 126
        %v1361 = vpop.permute.xlu0 %1360
        %1362 = vrot.lane.b32.xlu0 %v1350, 126
        %v1363 = vpop.permute.xlu0 %1362
        %1364 = vrot.lane.b32.xlu0 %v1351, 126
        %v1365 = vpop.permute.xlu0 %1364
        %1366 = vrot.lane.b32.xlu0 %v1352, 126
        %v1367 = vpop.permute.xlu0 %1366
        %1368 = vrot.lane.b32.xlu0 %v1353, 126
        %v1369 = vpop.permute.xlu0 %1368
        %1370 = vrot.lane.b32.xlu0 %v1354, 126
        %v1371 = vpop.permute.xlu0 %1370
        %1372 = vrot.lane.b32.xlu0 %v1355, 126
        %v1373 = vpop.permute.xlu0 %1372
        %vm1374 = vcmask 1031168
        %v1375 = vsel %vm1374, %v1357, %v1359
        %v1376 = vsel %vm1374, %v1359, %v1361
        %v1377 = vsel %vm1374, %v1361, %v1363
        %v1378 = vsel %vm1374, %v1363, %v1365
        %v1379 = vsel %vm1374, %v1365, %v1367
        %v1380 = vsel %vm1374, %v1367, %v1369
        %v1381 = vsel %vm1374, %v1369, %v1371
        %v1382 = vsel %vm1374, %v1371, %v1373
        %vm1383 = vcmask 48128
        %v1385 = vsel %vm1383, %v1332, 0
        %vm1387 = vcmask 1042432
        %v1389 = vsel %vm1387, %v1375, 0
        %v1392 = vsel %vm1387, %v1376, 0
        %v1395 = vsel %vm1387, %v1377, 0
        %v1398 = vsel %vm1387, %v1378, 0
        %v1401 = vsel %vm1387, %v1379, 0
        %v1404 = vsel %vm1387, %v1380, 0
        %v1407 = vsel %vm1387, %v1381, 0
        %v1410 = vsel %vm1387, %v1382, 0
        %1412 = vmatpush.bf16.msra.mxu0 0
        %1413 = vmatpush.bf16.msra.mxu0 0
        %1414 = vmatpush.bf16.msra.mxu0 0
        %1415 = vmatpush.bf16.msra.mxu0 0
        %1416 = vmatpush.bf16.msra.mxu0 0
        %1417 = vmatpush.bf16.msra.mxu0 0
        %1418 = vmatpush.bf16.msra.mxu0 0
        %1419 = vmatpush.bf16.msra.mxu0 %v1389
        %1420 = vmatmul.bf16.gmra.mxu0 %v1385
        %v1421 = vpop.f32.mrf.mxu0
        %v1422 = vadd.f32 0.0, %v1421
        %v1423 = vpop.f32.mrf.mxu0
        %v1424 = vadd.f32 0.0, %v1423
        %1425 = vdwg.mxu0
        %1426 = vmatpush.bf16.msra.mxu0 0
        %1427 = vmatpush.bf16.msra.mxu0 0
        %1428 = vmatpush.bf16.msra.mxu0 0
        %1429 = vmatpush.bf16.msra.mxu0 0
        %1430 = vmatpush.bf16.msra.mxu0 0
        %1431 = vmatpush.bf16.msra.mxu0 0
        %1432 = vmatpush.bf16.msra.mxu0 0
        %1433 = vmatpush.bf16.msra.mxu0 %v1392
        %1434 = vmatmul.bf16.gmra.mxu0 %v1385
        %v1435 = vpop.f32.mrf.mxu0
        %v1436 = vadd.f32 0.0, %v1435
        %v1437 = vpop.f32.mrf.mxu0
        %v1438 = vadd.f32 0.0, %v1437
        %1439 = vdwg.mxu0
        %1440 = vmatpush.bf16.msra.mxu0 0
        %1441 = vmatpush.bf16.msra.mxu0 0
        %1442 = vmatpush.bf16.msra.mxu0 0
        %1443 = vmatpush.bf16.msra.mxu0 0
        %1444 = vmatpush.bf16.msra.mxu0 0
        %1445 = vmatpush.bf16.msra.mxu0 0
        %1446 = vmatpush.bf16.msra.mxu0 0
        %1447 = vmatpush.bf16.msra.mxu0 %v1395
        %1448 = vmatmul.bf16.gmra.mxu0 %v1385
        %v1449 = vpop.f32.mrf.mxu0
        %v1450 = vadd.f32 0.0, %v1449
        %v1451 = vpop.f32.mrf.mxu0
        %v1452 = vadd.f32 0.0, %v1451
        %1453 = vdwg.mxu0
        %1454 = vmatpush.bf16.msra.mxu0 0
        %1455 = vmatpush.bf16.msra.mxu0 0
        %1456 = vmatpush.bf16.msra.mxu0 0
        %1457 = vmatpush.bf16.msra.mxu0 0
        %1458 = vmatpush.bf16.msra.mxu0 0
        %1459 = vmatpush.bf16.msra.mxu0 0
        %1460 = vmatpush.bf16.msra.mxu0 0
        %1461 = vmatpush.bf16.msra.mxu0 %v1398
        %1462 = vmatmul.bf16.gmra.mxu0 %v1385
        %v1463 = vpop.f32.mrf.mxu0
        %v1464 = vadd.f32 0.0, %v1463
        %v1465 = vpop.f32.mrf.mxu0
        %v1466 = vadd.f32 0.0, %v1465
        %1467 = vdwg.mxu0
        %1468 = vmatpush.bf16.msra.mxu0 0
        %1469 = vmatpush.bf16.msra.mxu0 0
        %1470 = vmatpush.bf16.msra.mxu0 0
        %1471 = vmatpush.bf16.msra.mxu0 0
        %1472 = vmatpush.bf16.msra.mxu0 0
        %1473 = vmatpush.bf16.msra.mxu0 0
        %1474 = vmatpush.bf16.msra.mxu0 0
        %1475 = vmatpush.bf16.msra.mxu0 %v1401
        %1476 = vmatmul.bf16.gmra.mxu0 %v1385
        %v1477 = vpop.f32.mrf.mxu0
        %v1478 = vadd.f32 0.0, %v1477
        %v1479 = vpop.f32.mrf.mxu0
        %v1480 = vadd.f32 0.0, %v1479
        %1481 = vdwg.mxu0
        %1482 = vmatpush.bf16.msra.mxu0 0
        %1483 = vmatpush.bf16.msra.mxu0 0
        %1484 = vmatpush.bf16.msra.mxu0 0
        %1485 = vmatpush.bf16.msra.mxu0 0
        %1486 = vmatpush.bf16.msra.mxu0 0
        %1487 = vmatpush.bf16.msra.mxu0 0
        %1488 = vmatpush.bf16.msra.mxu0 0
        %1489 = vmatpush.bf16.msra.mxu0 %v1404
        %1490 = vmatmul.bf16.gmra.mxu0 %v1385
        %v1491 = vpop.f32.mrf.mxu0
        %v1492 = vadd.f32 0.0, %v1491
        %v1493 = vpop.f32.mrf.mxu0
        %v1494 = vadd.f32 0.0, %v1493
        %1495 = vdwg.mxu0
        %1496 = vmatpush.bf16.msra.mxu0 0
        %1497 = vmatpush.bf16.msra.mxu0 0
        %1498 = vmatpush.bf16.msra.mxu0 0
        %1499 = vmatpush.bf16.msra.mxu0 0
        %1500 = vmatpush.bf16.msra.mxu0 0
        %1501 = vmatpush.bf16.msra.mxu0 0
        %1502 = vmatpush.bf16.msra.mxu0 0
        %1503 = vmatpush.bf16.msra.mxu0 %v1407
        %1504 = vmatmul.bf16.gmra.mxu0 %v1385
        %v1505 = vpop.f32.mrf.mxu0
        %v1506 = vadd.f32 0.0, %v1505
        %v1507 = vpop.f32.mrf.mxu0
        %v1508 = vadd.f32 0.0, %v1507
        %1509 = vdwg.mxu0
        %1510 = vmatpush.bf16.msra.mxu0 0
        %1511 = vmatpush.bf16.msra.mxu0 0
        %1512 = vmatpush.bf16.msra.mxu0 0
        %1513 = vmatpush.bf16.msra.mxu0 0
        %1514 = vmatpush.bf16.msra.mxu0 0
        %1515 = vmatpush.bf16.msra.mxu0 0
        %1516 = vmatpush.bf16.msra.mxu0 0
        %1517 = vmatpush.bf16.msra.mxu0 %v1410
        %1518 = vmatmul.bf16.gmra.mxu0 %v1385
        %v1519 = vpop.f32.mrf.mxu0
        %v1520 = vadd.f32 0.0, %v1519
        %v1521 = vpop.f32.mrf.mxu0
        %v1522 = vadd.f32 0.0, %v1521
        %1523 = vdwg.mxu0
        %v1526 = vunpack.c.l.b16 %v1318
        %v1527 = vunpack.c.l.b16 %v1319
        %v1528 = vpack.c.b16 %v1527, %v1526
        %v1530 = vsel %vm1383, %v1528, 0
        %v1533 = vsel %vm1387, %v1347, 0
        %v1536 = vsel %vm1387, %v1348, 0
        %v1539 = vsel %vm1387, %v1349, 0
        %v1542 = vsel %vm1387, %v1350, 0
        %v1545 = vsel %vm1387, %v1351, 0
        %v1548 = vsel %vm1387, %v1352, 0
        %v1551 = vsel %vm1387, %v1353, 0
        %v1554 = vsel %vm1387, %v1354, 0
        %1556 = vmatpush.bf16.msra.mxu0 0
        %1557 = vmatpush.bf16.msra.mxu0 0
        %1558 = vmatpush.bf16.msra.mxu0 0
        %1559 = vmatpush.bf16.msra.mxu0 0
        %1560 = vmatpush.bf16.msra.mxu0 0
        %1561 = vmatpush.bf16.msra.mxu0 0
        %1562 = vmatpush.bf16.msra.mxu0 0
        %1563 = vmatpush.bf16.msra.mxu0 %v1533
        %1564 = vmatmul.bf16.gmra.mxu0 %v1530
        %v1565 = vpop.f32.mrf.mxu0
        %v1566 = vadd.f32 %v1422, %v1565
        %v1567 = vpop.f32.mrf.mxu0
        %v1568 = vadd.f32 %v1424, %v1567
        %1569 = vdwg.mxu0
        %1570 = vmatpush.bf16.msra.mxu0 0
        %1571 = vmatpush.bf16.msra.mxu0 0
        %1572 = vmatpush.bf16.msra.mxu0 0
        %1573 = vmatpush.bf16.msra.mxu0 0
        %1574 = vmatpush.bf16.msra.mxu0 0
        %1575 = vmatpush.bf16.msra.mxu0 0
        %1576 = vmatpush.bf16.msra.mxu0 0
        %1577 = vmatpush.bf16.msra.mxu0 %v1536
        %1578 = vmatmul.bf16.gmra.mxu0 %v1530
        %v1579 = vpop.f32.mrf.mxu0
        %v1580 = vadd.f32 %v1436, %v1579
        %v1581 = vpop.f32.mrf.mxu0
        %v1582 = vadd.f32 %v1438, %v1581
        %1583 = vdwg.mxu0
        %1584 = vmatpush.bf16.msra.mxu0 0
        %1585 = vmatpush.bf16.msra.mxu0 0
        %1586 = vmatpush.bf16.msra.mxu0 0
        %1587 = vmatpush.bf16.msra.mxu0 0
        %1588 = vmatpush.bf16.msra.mxu0 0
        %1589 = vmatpush.bf16.msra.mxu0 0
        %1590 = vmatpush.bf16.msra.mxu0 0
        %1591 = vmatpush.bf16.msra.mxu0 %v1539
        %1592 = vmatmul.bf16.gmra.mxu0 %v1530
        %v1593 = vpop.f32.mrf.mxu0
        %v1594 = vadd.f32 %v1450, %v1593
        %v1595 = vpop.f32.mrf.mxu0
        %v1596 = vadd.f32 %v1452, %v1595
        %1597 = vdwg.mxu0
        %1598 = vmatpush.bf16.msra.mxu0 0
        %1599 = vmatpush.bf16.msra.mxu0 0
        %1600 = vmatpush.bf16.msra.mxu0 0
        %1601 = vmatpush.bf16.msra.mxu0 0
        %1602 = vmatpush.bf16.msra.mxu0 0
        %1603 = vmatpush.bf16.msra.mxu0 0
        %1604 = vmatpush.bf16.msra.mxu0 0
        %1605 = vmatpush.bf16.msra.mxu0 %v1542
        %1606 = vmatmul.bf16.gmra.mxu0 %v1530
        %v1607 = vpop.f32.mrf.mxu0
        %v1608 = vadd.f32 %v1464, %v1607
        %v1609 = vpop.f32.mrf.mxu0
        %v1610 = vadd.f32 %v1466, %v1609
        %1611 = vdwg.mxu0
        %1612 = vmatpush.bf16.msra.mxu0 0
        %1613 = vmatpush.bf16.msra.mxu0 0
        %1614 = vmatpush.bf16.msra.mxu0 0
        %1615 = vmatpush.bf16.msra.mxu0 0
        %1616 = vmatpush.bf16.msra.mxu0 0
        %1617 = vmatpush.bf16.msra.mxu0 0
        %1618 = vmatpush.bf16.msra.mxu0 0
        %1619 = vmatpush.bf16.msra.mxu0 %v1545
        %1620 = vmatmul.bf16.gmra.mxu0 %v1530
        %v1621 = vpop.f32.mrf.mxu0
        %v1622 = vadd.f32 %v1478, %v1621
        %v1623 = vpop.f32.mrf.mxu0
        %v1624 = vadd.f32 %v1480, %v1623
        %1625 = vdwg.mxu0
        %1626 = vmatpush.bf16.msra.mxu0 0
        %1627 = vmatpush.bf16.msra.mxu0 0
        %1628 = vmatpush.bf16.msra.mxu0 0
        %1629 = vmatpush.bf16.msra.mxu0 0
        %1630 = vmatpush.bf16.msra.mxu0 0
        %1631 = vmatpush.bf16.msra.mxu0 0
        %1632 = vmatpush.bf16.msra.mxu0 0
        %1633 = vmatpush.bf16.msra.mxu0 %v1548
        %1634 = vmatmul.bf16.gmra.mxu0 %v1530
        %v1635 = vpop.f32.mrf.mxu0
        %v1636 = vadd.f32 %v1492, %v1635
        %v1637 = vpop.f32.mrf.mxu0
        %v1638 = vadd.f32 %v1494, %v1637
        %1639 = vdwg.mxu0
        %1640 = vmatpush.bf16.msra.mxu0 0
        %1641 = vmatpush.bf16.msra.mxu0 0
        %1642 = vmatpush.bf16.msra.mxu0 0
        %1643 = vmatpush.bf16.msra.mxu0 0
        %1644 = vmatpush.bf16.msra.mxu0 0
        %1645 = vmatpush.bf16.msra.mxu0 0
        %1646 = vmatpush.bf16.msra.mxu0 0
        %1647 = vmatpush.bf16.msra.mxu0 %v1551
        %1648 = vmatmul.bf16.gmra.mxu0 %v1530
        %v1649 = vpop.f32.mrf.mxu0
        %v1650 = vadd.f32 %v1506, %v1649
        %v1651 = vpop.f32.mrf.mxu0
        %v1652 = vadd.f32 %v1508, %v1651
        %1653 = vdwg.mxu0
        %1654 = vmatpush.bf16.msra.mxu0 0
        %1655 = vmatpush.bf16.msra.mxu0 0
        %1656 = vmatpush.bf16.msra.mxu0 0
        %1657 = vmatpush.bf16.msra.mxu0 0
        %1658 = vmatpush.bf16.msra.mxu0 0
        %1659 = vmatpush.bf16.msra.mxu0 0
        %1660 = vmatpush.bf16.msra.mxu0 0
        %1661 = vmatpush.bf16.msra.mxu0 %v1554
        %1662 = vmatmul.bf16.gmra.mxu0 %v1530
        %v1663 = vpop.f32.mrf.mxu0
        %v1664 = vadd.f32 %v1520, %v1663
        %v1665 = vpop.f32.mrf.mxu0
        %v1666 = vadd.f32 %v1522, %v1665
        %1667 = vdwg.mxu0
        %s1668 = scalar_lea.vmem %s3, 16
        %v1669 = vld [vmem:[%s1668] sm:$0xf]
        %v1670 = vld [vmem:[%s1668 + $0x4] sm:$0xf]
        %v1673 = vunpack.c.l.b16 %v1669
        %v1674 = vunpack.c.l.b16 %v1670
        %v1675 = vpack.c.b16 %v1674, %v1673
        %1676 = vrot.lane.b32.xlu0 %v1347, 124
        %v1677 = vpop.permute.xlu0 %1676
        %1678 = vrot.lane.b32.xlu0 %v1348, 124
        %v1679 = vpop.permute.xlu0 %1678
        %1680 = vrot.lane.b32.xlu0 %v1349, 124
        %v1681 = vpop.permute.xlu0 %1680
        %1682 = vrot.lane.b32.xlu0 %v1350, 124
        %v1683 = vpop.permute.xlu0 %1682
        %1684 = vrot.lane.b32.xlu0 %v1351, 124
        %v1685 = vpop.permute.xlu0 %1684
        %1686 = vrot.lane.b32.xlu0 %v1352, 124
        %v1687 = vpop.permute.xlu0 %1686
        %1688 = vrot.lane.b32.xlu0 %v1353, 124
        %v1689 = vpop.permute.xlu0 %1688
        %1690 = vrot.lane.b32.xlu0 %v1354, 124
        %v1691 = vpop.permute.xlu0 %1690
        %1692 = vrot.lane.b32.xlu0 %v1355, 124
        %v1693 = vpop.permute.xlu0 %1692
        %vm1694 = vcmask 1014784
        %v1695 = vsel %vm1694, %v1677, %v1679
        %v1696 = vsel %vm1694, %v1679, %v1681
        %v1697 = vsel %vm1694, %v1681, %v1683
        %v1698 = vsel %vm1694, %v1683, %v1685
        %v1699 = vsel %vm1694, %v1685, %v1687
        %v1700 = vsel %vm1694, %v1687, %v1689
        %v1701 = vsel %vm1694, %v1689, %v1691
        %v1702 = vsel %vm1694, %v1691, %v1693
        %v1704 = vsel %vm1383, %v1675, 0
        %v1707 = vsel %vm1387, %v1695, 0
        %v1710 = vsel %vm1387, %v1696, 0
        %v1713 = vsel %vm1387, %v1697, 0
        %v1716 = vsel %vm1387, %v1698, 0
        %v1719 = vsel %vm1387, %v1699, 0
        %v1722 = vsel %vm1387, %v1700, 0
        %v1725 = vsel %vm1387, %v1701, 0
        %v1728 = vsel %vm1387, %v1702, 0
        %1730 = vmatpush.bf16.msra.mxu0 0
        %1731 = vmatpush.bf16.msra.mxu0 0
        %1732 = vmatpush.bf16.msra.mxu0 0
        %1733 = vmatpush.bf16.msra.mxu0 0
        %1734 = vmatpush.bf16.msra.mxu0 0
        %1735 = vmatpush.bf16.msra.mxu0 0
        %1736 = vmatpush.bf16.msra.mxu0 0
        %1737 = vmatpush.bf16.msra.mxu0 %v1707
        %1738 = vmatmul.bf16.gmra.mxu0 %v1704
        %v1739 = vpop.f32.mrf.mxu0
        %v1740 = vadd.f32 0.0, %v1739
        %v1741 = vpop.f32.mrf.mxu0
        %v1742 = vadd.f32 0.0, %v1741
        %1743 = vdwg.mxu0
        %1744 = vmatpush.bf16.msra.mxu0 0
        %1745 = vmatpush.bf16.msra.mxu0 0
        %1746 = vmatpush.bf16.msra.mxu0 0
        %1747 = vmatpush.bf16.msra.mxu0 0
        %1748 = vmatpush.bf16.msra.mxu0 0
        %1749 = vmatpush.bf16.msra.mxu0 0
        %1750 = vmatpush.bf16.msra.mxu0 0
        %1751 = vmatpush.bf16.msra.mxu0 %v1710
        %1752 = vmatmul.bf16.gmra.mxu0 %v1704
        %v1753 = vpop.f32.mrf.mxu0
        %v1754 = vadd.f32 0.0, %v1753
        %v1755 = vpop.f32.mrf.mxu0
        %v1756 = vadd.f32 0.0, %v1755
        %1757 = vdwg.mxu0
        %1758 = vmatpush.bf16.msra.mxu0 0
        %1759 = vmatpush.bf16.msra.mxu0 0
        %1760 = vmatpush.bf16.msra.mxu0 0
        %1761 = vmatpush.bf16.msra.mxu0 0
        %1762 = vmatpush.bf16.msra.mxu0 0
        %1763 = vmatpush.bf16.msra.mxu0 0
        %1764 = vmatpush.bf16.msra.mxu0 0
        %1765 = vmatpush.bf16.msra.mxu0 %v1713
        %1766 = vmatmul.bf16.gmra.mxu0 %v1704
        %v1767 = vpop.f32.mrf.mxu0
        %v1768 = vadd.f32 0.0, %v1767
        %v1769 = vpop.f32.mrf.mxu0
        %v1770 = vadd.f32 0.0, %v1769
        %1771 = vdwg.mxu0
        %1772 = vmatpush.bf16.msra.mxu0 0
        %1773 = vmatpush.bf16.msra.mxu0 0
        %1774 = vmatpush.bf16.msra.mxu0 0
        %1775 = vmatpush.bf16.msra.mxu0 0
        %1776 = vmatpush.bf16.msra.mxu0 0
        %1777 = vmatpush.bf16.msra.mxu0 0
        %1778 = vmatpush.bf16.msra.mxu0 0
        %1779 = vmatpush.bf16.msra.mxu0 %v1716
        %1780 = vmatmul.bf16.gmra.mxu0 %v1704
        %v1781 = vpop.f32.mrf.mxu0
        %v1782 = vadd.f32 0.0, %v1781
        %v1783 = vpop.f32.mrf.mxu0
        %v1784 = vadd.f32 0.0, %v1783
        %1785 = vdwg.mxu0
        %1786 = vmatpush.bf16.msra.mxu0 0
        %1787 = vmatpush.bf16.msra.mxu0 0
        %1788 = vmatpush.bf16.msra.mxu0 0
        %1789 = vmatpush.bf16.msra.mxu0 0
        %1790 = vmatpush.bf16.msra.mxu0 0
        %1791 = vmatpush.bf16.msra.mxu0 0
        %1792 = vmatpush.bf16.msra.mxu0 0
        %1793 = vmatpush.bf16.msra.mxu0 %v1719
        %1794 = vmatmul.bf16.gmra.mxu0 %v1704
        %v1795 = vpop.f32.mrf.mxu0
        %v1796 = vadd.f32 0.0, %v1795
        %v1797 = vpop.f32.mrf.mxu0
        %v1798 = vadd.f32 0.0, %v1797
        %1799 = vdwg.mxu0
        %1800 = vmatpush.bf16.msra.mxu0 0
        %1801 = vmatpush.bf16.msra.mxu0 0
        %1802 = vmatpush.bf16.msra.mxu0 0
        %1803 = vmatpush.bf16.msra.mxu0 0
        %1804 = vmatpush.bf16.msra.mxu0 0
        %1805 = vmatpush.bf16.msra.mxu0 0
        %1806 = vmatpush.bf16.msra.mxu0 0
        %1807 = vmatpush.bf16.msra.mxu0 %v1722
        %1808 = vmatmul.bf16.gmra.mxu0 %v1704
        %v1809 = vpop.f32.mrf.mxu0
        %v1810 = vadd.f32 0.0, %v1809
        %v1811 = vpop.f32.mrf.mxu0
        %v1812 = vadd.f32 0.0, %v1811
        %1813 = vdwg.mxu0
        %1814 = vmatpush.bf16.msra.mxu0 0
        %1815 = vmatpush.bf16.msra.mxu0 0
        %1816 = vmatpush.bf16.msra.mxu0 0
        %1817 = vmatpush.bf16.msra.mxu0 0
        %1818 = vmatpush.bf16.msra.mxu0 0
        %1819 = vmatpush.bf16.msra.mxu0 0
        %1820 = vmatpush.bf16.msra.mxu0 0
        %1821 = vmatpush.bf16.msra.mxu0 %v1725
        %1822 = vmatmul.bf16.gmra.mxu0 %v1704
        %v1823 = vpop.f32.mrf.mxu0
        %v1824 = vadd.f32 0.0, %v1823
        %v1825 = vpop.f32.mrf.mxu0
        %v1826 = vadd.f32 0.0, %v1825
        %1827 = vdwg.mxu0
        %1828 = vmatpush.bf16.msra.mxu0 0
        %1829 = vmatpush.bf16.msra.mxu0 0
        %1830 = vmatpush.bf16.msra.mxu0 0
        %1831 = vmatpush.bf16.msra.mxu0 0
        %1832 = vmatpush.bf16.msra.mxu0 0
        %1833 = vmatpush.bf16.msra.mxu0 0
        %1834 = vmatpush.bf16.msra.mxu0 0
        %1835 = vmatpush.bf16.msra.mxu0 %v1728
        %1836 = vmatmul.bf16.gmra.mxu0 %v1704
        %v1837 = vpop.f32.mrf.mxu0
        %v1838 = vadd.f32 0.0, %v1837
        %v1839 = vpop.f32.mrf.mxu0
        %v1840 = vadd.f32 0.0, %v1839
        %1841 = vdwg.mxu0
        %v1842 = vadd.f32 %v1566, %v1740
        %v1843 = vadd.f32 %v1580, %v1754
        %v1844 = vadd.f32 %v1594, %v1768
        %v1845 = vadd.f32 %v1608, %v1782
        %v1846 = vadd.f32 %v1622, %v1796
        %v1847 = vadd.f32 %v1636, %v1810
        %v1848 = vadd.f32 %v1650, %v1824
        %v1849 = vadd.f32 %v1664, %v1838
        %v1850 = vadd.f32 %v1568, %v1742
        %v1851 = vadd.f32 %v1582, %v1756
        %v1852 = vadd.f32 %v1596, %v1770
        %v1853 = vadd.f32 %v1610, %v1784
        %v1854 = vadd.f32 %v1624, %v1798
        %v1855 = vadd.f32 %v1638, %v1812
        %v1856 = vadd.f32 %v1652, %v1826
        %v1857 = vadd.f32 %v1666, %v1840
        %s1858 = scalar_lea.vmem %s3, 24
        %v1859 = vld [vmem:[%s1858] sm:$0xf]
        %v1860 = vld [vmem:[%s1858 + $0x4] sm:$0xf]
        %v1863 = vunpack.c.l.b16 %v1859
        %v1864 = vunpack.c.l.b16 %v1860
        %v1865 = vpack.c.b16 %v1864, %v1863
        %1866 = vrot.lane.b32.xlu0 %v1347, 122
        %v1867 = vpop.permute.xlu0 %1866
        %1868 = vrot.lane.b32.xlu0 %v1348, 122
        %v1869 = vpop.permute.xlu0 %1868
        %1870 = vrot.lane.b32.xlu0 %v1349, 122
        %v1871 = vpop.permute.xlu0 %1870
        %1872 = vrot.lane.b32.xlu0 %v1350, 122
        %v1873 = vpop.permute.xlu0 %1872
        %1874 = vrot.lane.b32.xlu0 %v1351, 122
        %v1875 = vpop.permute.xlu0 %1874
        %1876 = vrot.lane.b32.xlu0 %v1352, 122
        %v1877 = vpop.permute.xlu0 %1876
        %1878 = vrot.lane.b32.xlu0 %v1353, 122
        %v1879 = vpop.permute.xlu0 %1878
        %1880 = vrot.lane.b32.xlu0 %v1354, 122
        %v1881 = vpop.permute.xlu0 %1880
        %1882 = vrot.lane.b32.xlu0 %v1355, 122
        %v1883 = vpop.permute.xlu0 %1882
        %vm1884 = vcmask 998400
        %v1885 = vsel %vm1884, %v1867, %v1869
        %v1886 = vsel %vm1884, %v1869, %v1871
        %v1887 = vsel %vm1884, %v1871, %v1873
        %v1888 = vsel %vm1884, %v1873, %v1875
        %v1889 = vsel %vm1884, %v1875, %v1877
        %v1890 = vsel %vm1884, %v1877, %v1879
        %v1891 = vsel %vm1884, %v1879, %v1881
        %v1892 = vsel %vm1884, %v1881, %v1883
        %v1894 = vsel %vm1383, %v1865, 0
        %v1897 = vsel %vm1387, %v1885, 0
        %v1900 = vsel %vm1387, %v1886, 0
        %v1903 = vsel %vm1387, %v1887, 0
        %v1906 = vsel %vm1387, %v1888, 0
        %v1909 = vsel %vm1387, %v1889, 0
        %v1912 = vsel %vm1387, %v1890, 0
        %v1915 = vsel %vm1387, %v1891, 0
        %v1918 = vsel %vm1387, %v1892, 0
        %1920 = vmatpush.bf16.msra.mxu0 0
        %1921 = vmatpush.bf16.msra.mxu0 0
        %1922 = vmatpush.bf16.msra.mxu0 0
        %1923 = vmatpush.bf16.msra.mxu0 0
        %1924 = vmatpush.bf16.msra.mxu0 0
        %1925 = vmatpush.bf16.msra.mxu0 0
        %1926 = vmatpush.bf16.msra.mxu0 0
        %1927 = vmatpush.bf16.msra.mxu0 %v1897
        %1928 = vmatmul.bf16.gmra.mxu0 %v1894
        %v1929 = vpop.f32.mrf.mxu0
        %v1930 = vadd.f32 0.0, %v1929
        %v1931 = vpop.f32.mrf.mxu0
        %v1932 = vadd.f32 0.0, %v1931
        %1933 = vdwg.mxu0
        %1934 = vmatpush.bf16.msra.mxu0 0
        %1935 = vmatpush.bf16.msra.mxu0 0
        %1936 = vmatpush.bf16.msra.mxu0 0
        %1937 = vmatpush.bf16.msra.mxu0 0
        %1938 = vmatpush.bf16.msra.mxu0 0
        %1939 = vmatpush.bf16.msra.mxu0 0
        %1940 = vmatpush.bf16.msra.mxu0 0
        %1941 = vmatpush.bf16.msra.mxu0 %v1900
        %1942 = vmatmul.bf16.gmra.mxu0 %v1894
        %v1943 = vpop.f32.mrf.mxu0
        %v1944 = vadd.f32 0.0, %v1943
        %v1945 = vpop.f32.mrf.mxu0
        %v1946 = vadd.f32 0.0, %v1945
        %1947 = vdwg.mxu0
        %1948 = vmatpush.bf16.msra.mxu0 0
        %1949 = vmatpush.bf16.msra.mxu0 0
        %1950 = vmatpush.bf16.msra.mxu0 0
        %1951 = vmatpush.bf16.msra.mxu0 0
        %1952 = vmatpush.bf16.msra.mxu0 0
        %1953 = vmatpush.bf16.msra.mxu0 0
        %1954 = vmatpush.bf16.msra.mxu0 0
        %1955 = vmatpush.bf16.msra.mxu0 %v1903
        %1956 = vmatmul.bf16.gmra.mxu0 %v1894
        %v1957 = vpop.f32.mrf.mxu0
        %v1958 = vadd.f32 0.0, %v1957
        %v1959 = vpop.f32.mrf.mxu0
        %v1960 = vadd.f32 0.0, %v1959
        %1961 = vdwg.mxu0
        %1962 = vmatpush.bf16.msra.mxu0 0
        %1963 = vmatpush.bf16.msra.mxu0 0
        %1964 = vmatpush.bf16.msra.mxu0 0
        %1965 = vmatpush.bf16.msra.mxu0 0
        %1966 = vmatpush.bf16.msra.mxu0 0
        %1967 = vmatpush.bf16.msra.mxu0 0
        %1968 = vmatpush.bf16.msra.mxu0 0
        %1969 = vmatpush.bf16.msra.mxu0 %v1906
        %1970 = vmatmul.bf16.gmra.mxu0 %v1894
        %v1971 = vpop.f32.mrf.mxu0
        %v1972 = vadd.f32 0.0, %v1971
        %v1973 = vpop.f32.mrf.mxu0
        %v1974 = vadd.f32 0.0, %v1973
        %1975 = vdwg.mxu0
        %1976 = vmatpush.bf16.msra.mxu0 0
        %1977 = vmatpush.bf16.msra.mxu0 0
        %1978 = vmatpush.bf16.msra.mxu0 0
        %1979 = vmatpush.bf16.msra.mxu0 0
        %1980 = vmatpush.bf16.msra.mxu0 0
        %1981 = vmatpush.bf16.msra.mxu0 0
        %1982 = vmatpush.bf16.msra.mxu0 0
        %1983 = vmatpush.bf16.msra.mxu0 %v1909
        %1984 = vmatmul.bf16.gmra.mxu0 %v1894
        %v1985 = vpop.f32.mrf.mxu0
        %v1986 = vadd.f32 0.0, %v1985
        %v1987 = vpop.f32.mrf.mxu0
        %v1988 = vadd.f32 0.0, %v1987
        %1989 = vdwg.mxu0
        %1990 = vmatpush.bf16.msra.mxu0 0
        %1991 = vmatpush.bf16.msra.mxu0 0
        %1992 = vmatpush.bf16.msra.mxu0 0
        %1993 = vmatpush.bf16.msra.mxu0 0
        %1994 = vmatpush.bf16.msra.mxu0 0
        %1995 = vmatpush.bf16.msra.mxu0 0
        %1996 = vmatpush.bf16.msra.mxu0 0
        %1997 = vmatpush.bf16.msra.mxu0 %v1912
        %1998 = vmatmul.bf16.gmra.mxu0 %v1894
        %v1999 = vpop.f32.mrf.mxu0
        %v2000 = vadd.f32 0.0, %v1999
        %v2001 = vpop.f32.mrf.mxu0
        %v2002 = vadd.f32 0.0, %v2001
        %2003 = vdwg.mxu0
        %2004 = vmatpush.bf16.msra.mxu0 0
        %2005 = vmatpush.bf16.msra.mxu0 0
        %2006 = vmatpush.bf16.msra.mxu0 0
        %2007 = vmatpush.bf16.msra.mxu0 0
        %2008 = vmatpush.bf16.msra.mxu0 0
        %2009 = vmatpush.bf16.msra.mxu0 0
        %2010 = vmatpush.bf16.msra.mxu0 0
        %2011 = vmatpush.bf16.msra.mxu0 %v1915
        %2012 = vmatmul.bf16.gmra.mxu0 %v1894
        %v2013 = vpop.f32.mrf.mxu0
        %v2014 = vadd.f32 0.0, %v2013
        %v2015 = vpop.f32.mrf.mxu0
        %v2016 = vadd.f32 0.0, %v2015
        %2017 = vdwg.mxu0
        %2018 = vmatpush.bf16.msra.mxu0 0
        %2019 = vmatpush.bf16.msra.mxu0 0
        %2020 = vmatpush.bf16.msra.mxu0 0
        %2021 = vmatpush.bf16.msra.mxu0 0
        %2022 = vmatpush.bf16.msra.mxu0 0
        %2023 = vmatpush.bf16.msra.mxu0 0
        %2024 = vmatpush.bf16.msra.mxu0 0
        %2025 = vmatpush.bf16.msra.mxu0 %v1918
        %2026 = vmatmul.bf16.gmra.mxu0 %v1894
        %v2027 = vpop.f32.mrf.mxu0
        %v2028 = vadd.f32 0.0, %v2027
        %v2029 = vpop.f32.mrf.mxu0
        %v2030 = vadd.f32 0.0, %v2029
        %2031 = vdwg.mxu0
        %v2032 = vadd.f32 %v1842, %v1930
        %v2033 = vadd.f32 %v1843, %v1944
        %v2034 = vadd.f32 %v1844, %v1958
        %v2035 = vadd.f32 %v1845, %v1972
        %v2036 = vadd.f32 %v1846, %v1986
        %v2037 = vadd.f32 %v1847, %v2000
        %v2038 = vadd.f32 %v1848, %v2014
        %v2039 = vadd.f32 %v1849, %v2028
        %v2040 = vadd.f32 %v1850, %v1932
        %v2041 = vadd.f32 %v1851, %v1946
        %v2042 = vadd.f32 %v1852, %v1960
        %v2043 = vadd.f32 %v1853, %v1974
        %v2044 = vadd.f32 %v1854, %v1988
        %v2045 = vadd.f32 %v1855, %v2002
        %v2046 = vadd.f32 %v1856, %v2016
        %v2047 = vadd.f32 %v1857, %v2030
        %s2048 = scalar_lea.vmem %s3, 32
        %v2049 = vld [vmem:[%s2048] sm:$0xf]
        %v2050 = vld [vmem:[%s2048 + $0x4] sm:$0xf]
        %v2053 = vunpack.c.l.b16 %v2049
        %v2054 = vunpack.c.l.b16 %v2050
        %v2055 = vpack.c.b16 %v2054, %v2053
        %2056 = vrot.lane.b32.xlu0 %v1347, 120
        %v2057 = vpop.permute.xlu0 %2056
        %2058 = vrot.lane.b32.xlu0 %v1348, 120
        %v2059 = vpop.permute.xlu0 %2058
        %2060 = vrot.lane.b32.xlu0 %v1349, 120
        %v2061 = vpop.permute.xlu0 %2060
        %2062 = vrot.lane.b32.xlu0 %v1350, 120
        %v2063 = vpop.permute.xlu0 %2062
        %2064 = vrot.lane.b32.xlu0 %v1351, 120
        %v2065 = vpop.permute.xlu0 %2064
        %2066 = vrot.lane.b32.xlu0 %v1352, 120
        %v2067 = vpop.permute.xlu0 %2066
        %2068 = vrot.lane.b32.xlu0 %v1353, 120
        %v2069 = vpop.permute.xlu0 %2068
        %2070 = vrot.lane.b32.xlu0 %v1354, 120
        %v2071 = vpop.permute.xlu0 %2070
        %2072 = vrot.lane.b32.xlu0 %v1355, 120
        %v2073 = vpop.permute.xlu0 %2072
        %vm2074 = vcmask 982016
        %v2075 = vsel %vm2074, %v2057, %v2059
        %v2076 = vsel %vm2074, %v2059, %v2061
        %v2077 = vsel %vm2074, %v2061, %v2063
        %v2078 = vsel %vm2074, %v2063, %v2065
        %v2079 = vsel %vm2074, %v2065, %v2067
        %v2080 = vsel %vm2074, %v2067, %v2069
        %v2081 = vsel %vm2074, %v2069, %v2071
        %v2082 = vsel %vm2074, %v2071, %v2073
        %v2084 = vsel %vm1383, %v2055, 0
        %v2087 = vsel %vm1387, %v2075, 0
        %v2090 = vsel %vm1387, %v2076, 0
        %v2093 = vsel %vm1387, %v2077, 0
        %v2096 = vsel %vm1387, %v2078, 0
        %v2099 = vsel %vm1387, %v2079, 0
        %v2102 = vsel %vm1387, %v2080, 0
        %v2105 = vsel %vm1387, %v2081, 0
        %v2108 = vsel %vm1387, %v2082, 0
        %2110 = vmatpush.bf16.msra.mxu0 0
        %2111 = vmatpush.bf16.msra.mxu0 0
        %2112 = vmatpush.bf16.msra.mxu0 0
        %2113 = vmatpush.bf16.msra.mxu0 0
        %2114 = vmatpush.bf16.msra.mxu0 0
        %2115 = vmatpush.bf16.msra.mxu0 0
        %2116 = vmatpush.bf16.msra.mxu0 0
        %2117 = vmatpush.bf16.msra.mxu0 %v2087
        %2118 = vmatmul.bf16.gmra.mxu0 %v2084
        %v2119 = vpop.f32.mrf.mxu0
        %v2120 = vadd.f32 0.0, %v2119
        %v2121 = vpop.f32.mrf.mxu0
        %v2122 = vadd.f32 0.0, %v2121
        %2123 = vdwg.mxu0
        %2124 = vmatpush.bf16.msra.mxu0 0
        %2125 = vmatpush.bf16.msra.mxu0 0
        %2126 = vmatpush.bf16.msra.mxu0 0
        %2127 = vmatpush.bf16.msra.mxu0 0
        %2128 = vmatpush.bf16.msra.mxu0 0
        %2129 = vmatpush.bf16.msra.mxu0 0
        %2130 = vmatpush.bf16.msra.mxu0 0
        %2131 = vmatpush.bf16.msra.mxu0 %v2090
        %2132 = vmatmul.bf16.gmra.mxu0 %v2084
        %v2133 = vpop.f32.mrf.mxu0
        %v2134 = vadd.f32 0.0, %v2133
        %v2135 = vpop.f32.mrf.mxu0
        %v2136 = vadd.f32 0.0, %v2135
        %2137 = vdwg.mxu0
        %2138 = vmatpush.bf16.msra.mxu0 0
        %2139 = vmatpush.bf16.msra.mxu0 0
        %2140 = vmatpush.bf16.msra.mxu0 0
        %2141 = vmatpush.bf16.msra.mxu0 0
        %2142 = vmatpush.bf16.msra.mxu0 0
        %2143 = vmatpush.bf16.msra.mxu0 0
        %2144 = vmatpush.bf16.msra.mxu0 0
        %2145 = vmatpush.bf16.msra.mxu0 %v2093
        %2146 = vmatmul.bf16.gmra.mxu0 %v2084
        %v2147 = vpop.f32.mrf.mxu0
        %v2148 = vadd.f32 0.0, %v2147
        %v2149 = vpop.f32.mrf.mxu0
        %v2150 = vadd.f32 0.0, %v2149
        %2151 = vdwg.mxu0
        %2152 = vmatpush.bf16.msra.mxu0 0
        %2153 = vmatpush.bf16.msra.mxu0 0
        %2154 = vmatpush.bf16.msra.mxu0 0
        %2155 = vmatpush.bf16.msra.mxu0 0
        %2156 = vmatpush.bf16.msra.mxu0 0
        %2157 = vmatpush.bf16.msra.mxu0 0
        %2158 = vmatpush.bf16.msra.mxu0 0
        %2159 = vmatpush.bf16.msra.mxu0 %v2096
        %2160 = vmatmul.bf16.gmra.mxu0 %v2084
        %v2161 = vpop.f32.mrf.mxu0
        %v2162 = vadd.f32 0.0, %v2161
        %v2163 = vpop.f32.mrf.mxu0
        %v2164 = vadd.f32 0.0, %v2163
        %2165 = vdwg.mxu0
        %2166 = vmatpush.bf16.msra.mxu0 0
        %2167 = vmatpush.bf16.msra.mxu0 0
        %2168 = vmatpush.bf16.msra.mxu0 0
        %2169 = vmatpush.bf16.msra.mxu0 0
        %2170 = vmatpush.bf16.msra.mxu0 0
        %2171 = vmatpush.bf16.msra.mxu0 0
        %2172 = vmatpush.bf16.msra.mxu0 0
        %2173 = vmatpush.bf16.msra.mxu0 %v2099
        %2174 = vmatmul.bf16.gmra.mxu0 %v2084
        %v2175 = vpop.f32.mrf.mxu0
        %v2176 = vadd.f32 0.0, %v2175
        %v2177 = vpop.f32.mrf.mxu0
        %v2178 = vadd.f32 0.0, %v2177
        %2179 = vdwg.mxu0
        %2180 = vmatpush.bf16.msra.mxu0 0
        %2181 = vmatpush.bf16.msra.mxu0 0
        %2182 = vmatpush.bf16.msra.mxu0 0
        %2183 = vmatpush.bf16.msra.mxu0 0
        %2184 = vmatpush.bf16.msra.mxu0 0
        %2185 = vmatpush.bf16.msra.mxu0 0
        %2186 = vmatpush.bf16.msra.mxu0 0
        %2187 = vmatpush.bf16.msra.mxu0 %v2102
        %2188 = vmatmul.bf16.gmra.mxu0 %v2084
        %v2189 = vpop.f32.mrf.mxu0
        %v2190 = vadd.f32 0.0, %v2189
        %v2191 = vpop.f32.mrf.mxu0
        %v2192 = vadd.f32 0.0, %v2191
        %2193 = vdwg.mxu0
        %2194 = vmatpush.bf16.msra.mxu0 0
        %2195 = vmatpush.bf16.msra.mxu0 0
        %2196 = vmatpush.bf16.msra.mxu0 0
        %2197 = vmatpush.bf16.msra.mxu0 0
        %2198 = vmatpush.bf16.msra.mxu0 0
        %2199 = vmatpush.bf16.msra.mxu0 0
        %2200 = vmatpush.bf16.msra.mxu0 0
        %2201 = vmatpush.bf16.msra.mxu0 %v2105
        %2202 = vmatmul.bf16.gmra.mxu0 %v2084
        %v2203 = vpop.f32.mrf.mxu0
        %v2204 = vadd.f32 0.0, %v2203
        %v2205 = vpop.f32.mrf.mxu0
        %v2206 = vadd.f32 0.0, %v2205
        %2207 = vdwg.mxu0
        %2208 = vmatpush.bf16.msra.mxu0 0
        %2209 = vmatpush.bf16.msra.mxu0 0
        %2210 = vmatpush.bf16.msra.mxu0 0
        %2211 = vmatpush.bf16.msra.mxu0 0
        %2212 = vmatpush.bf16.msra.mxu0 0
        %2213 = vmatpush.bf16.msra.mxu0 0
        %2214 = vmatpush.bf16.msra.mxu0 0
        %2215 = vmatpush.bf16.msra.mxu0 %v2108
        %2216 = vmatmul.bf16.gmra.mxu0 %v2084
        %v2217 = vpop.f32.mrf.mxu0
        %v2218 = vadd.f32 0.0, %v2217
        %v2219 = vpop.f32.mrf.mxu0
        %v2220 = vadd.f32 0.0, %v2219
        %2221 = vdwg.mxu0
        %v2222 = vadd.f32 %v2032, %v2120
        %v2223 = vadd.f32 %v2033, %v2134
        %v2224 = vadd.f32 %v2034, %v2148
        %v2225 = vadd.f32 %v2035, %v2162
        %v2226 = vadd.f32 %v2036, %v2176
        %v2227 = vadd.f32 %v2037, %v2190
        %v2228 = vadd.f32 %v2038, %v2204
        %v2229 = vadd.f32 %v2039, %v2218
        %v2230 = vadd.f32 %v2040, %v2122
        %v2231 = vadd.f32 %v2041, %v2136
        %v2232 = vadd.f32 %v2042, %v2150
        %v2233 = vadd.f32 %v2043, %v2164
        %v2234 = vadd.f32 %v2044, %v2178
        %v2235 = vadd.f32 %v2045, %v2192
        %v2236 = vadd.f32 %v2046, %v2206
        %v2237 = vadd.f32 %v2047, %v2220
        %s2238 = scalar_lea.vmem %s3, 40
        %v2239 = vld [vmem:[%s2238] sm:$0xf]
        %v2240 = vld [vmem:[%s2238 + $0x4] sm:$0xf]
        %v2243 = vunpack.c.l.b16 %v2239
        %v2244 = vunpack.c.l.b16 %v2240
        %v2245 = vpack.c.b16 %v2244, %v2243
        %2246 = vrot.lane.b32.xlu0 %v1347, 64
        %v2247 = vpop.permute.xlu0 %2246
        %2248 = vrot.lane.b32.xlu0 %v1348, 64
        %v2249 = vpop.permute.xlu0 %2248
        %2250 = vrot.lane.b32.xlu0 %v1349, 64
        %v2251 = vpop.permute.xlu0 %2250
        %2252 = vrot.lane.b32.xlu0 %v1350, 64
        %v2253 = vpop.permute.xlu0 %2252
        %2254 = vrot.lane.b32.xlu0 %v1351, 64
        %v2255 = vpop.permute.xlu0 %2254
        %2256 = vrot.lane.b32.xlu0 %v1352, 64
        %v2257 = vpop.permute.xlu0 %2256
        %2258 = vrot.lane.b32.xlu0 %v1353, 64
        %v2259 = vpop.permute.xlu0 %2258
        %2260 = vrot.lane.b32.xlu0 %v1354, 64
        %v2261 = vpop.permute.xlu0 %2260
        %2262 = vrot.lane.b32.xlu0 %v1355, 64
        %v2263 = vpop.permute.xlu0 %2262
        %vm2264 = vcmask 523264
        %v2265 = vsel %vm2264, %v2247, %v2249
        %v2266 = vsel %vm2264, %v2249, %v2251
        %v2267 = vsel %vm2264, %v2251, %v2253
        %v2268 = vsel %vm2264, %v2253, %v2255
        %v2269 = vsel %vm2264, %v2255, %v2257
        %v2270 = vsel %vm2264, %v2257, %v2259
        %v2271 = vsel %vm2264, %v2259, %v2261
        %v2272 = vsel %vm2264, %v2261, %v2263
        %v2274 = vsel %vm1383, %v2245, 0
        %v2277 = vsel %vm1387, %v2265, 0
        %v2280 = vsel %vm1387, %v2266, 0
        %v2283 = vsel %vm1387, %v2267, 0
        %v2286 = vsel %vm1387, %v2268, 0
        %v2289 = vsel %vm1387, %v2269, 0
        %v2292 = vsel %vm1387, %v2270, 0
        %v2295 = vsel %vm1387, %v2271, 0
        %v2298 = vsel %vm1387, %v2272, 0
        %2300 = vmatpush.bf16.msra.mxu0 0
        %2301 = vmatpush.bf16.msra.mxu0 0
        %2302 = vmatpush.bf16.msra.mxu0 0
        %2303 = vmatpush.bf16.msra.mxu0 0
        %2304 = vmatpush.bf16.msra.mxu0 0
        %2305 = vmatpush.bf16.msra.mxu0 0
        %2306 = vmatpush.bf16.msra.mxu0 0
        %2307 = vmatpush.bf16.msra.mxu0 %v2277
        %2308 = vmatmul.bf16.gmra.mxu0 %v2274
        %v2309 = vpop.f32.mrf.mxu0
        %v2310 = vadd.f32 0.0, %v2309
        %v2311 = vpop.f32.mrf.mxu0
        %v2312 = vadd.f32 0.0, %v2311
        %2313 = vdwg.mxu0
        %2314 = vmatpush.bf16.msra.mxu0 0
        %2315 = vmatpush.bf16.msra.mxu0 0
        %2316 = vmatpush.bf16.msra.mxu0 0
        %2317 = vmatpush.bf16.msra.mxu0 0
        %2318 = vmatpush.bf16.msra.mxu0 0
        %2319 = vmatpush.bf16.msra.mxu0 0
        %2320 = vmatpush.bf16.msra.mxu0 0
        %2321 = vmatpush.bf16.msra.mxu0 %v2280
        %2322 = vmatmul.bf16.gmra.mxu0 %v2274
        %v2323 = vpop.f32.mrf.mxu0
        %v2324 = vadd.f32 0.0, %v2323
        %v2325 = vpop.f32.mrf.mxu0
        %v2326 = vadd.f32 0.0, %v2325
        %2327 = vdwg.mxu0
        %2328 = vmatpush.bf16.msra.mxu0 0
        %2329 = vmatpush.bf16.msra.mxu0 0
        %2330 = vmatpush.bf16.msra.mxu0 0
        %2331 = vmatpush.bf16.msra.mxu0 0
        %2332 = vmatpush.bf16.msra.mxu0 0
        %2333 = vmatpush.bf16.msra.mxu0 0
        %2334 = vmatpush.bf16.msra.mxu0 0
        %2335 = vmatpush.bf16.msra.mxu0 %v2283
        %2336 = vmatmul.bf16.gmra.mxu0 %v2274
        %v2337 = vpop.f32.mrf.mxu0
        %v2338 = vadd.f32 0.0, %v2337
        %v2339 = vpop.f32.mrf.mxu0
        %v2340 = vadd.f32 0.0, %v2339
        %2341 = vdwg.mxu0
        %2342 = vmatpush.bf16.msra.mxu0 0
        %2343 = vmatpush.bf16.msra.mxu0 0
        %2344 = vmatpush.bf16.msra.mxu0 0
        %2345 = vmatpush.bf16.msra.mxu0 0
        %2346 = vmatpush.bf16.msra.mxu0 0
        %2347 = vmatpush.bf16.msra.mxu0 0
        %2348 = vmatpush.bf16.msra.mxu0 0
        %2349 = vmatpush.bf16.msra.mxu0 %v2286
        %2350 = vmatmul.bf16.gmra.mxu0 %v2274
        %v2351 = vpop.f32.mrf.mxu0
        %v2352 = vadd.f32 0.0, %v2351
        %v2353 = vpop.f32.mrf.mxu0
        %v2354 = vadd.f32 0.0, %v2353
        %2355 = vdwg.mxu0
        %2356 = vmatpush.bf16.msra.mxu0 0
        %2357 = vmatpush.bf16.msra.mxu0 0
        %2358 = vmatpush.bf16.msra.mxu0 0
        %2359 = vmatpush.bf16.msra.mxu0 0
        %2360 = vmatpush.bf16.msra.mxu0 0
        %2361 = vmatpush.bf16.msra.mxu0 0
        %2362 = vmatpush.bf16.msra.mxu0 0
        %2363 = vmatpush.bf16.msra.mxu0 %v2289
        %2364 = vmatmul.bf16.gmra.mxu0 %v2274
        %v2365 = vpop.f32.mrf.mxu0
        %v2366 = vadd.f32 0.0, %v2365
        %v2367 = vpop.f32.mrf.mxu0
        %v2368 = vadd.f32 0.0, %v2367
        %2369 = vdwg.mxu0
        %2370 = vmatpush.bf16.msra.mxu0 0
        %2371 = vmatpush.bf16.msra.mxu0 0
        %2372 = vmatpush.bf16.msra.mxu0 0
        %2373 = vmatpush.bf16.msra.mxu0 0
        %2374 = vmatpush.bf16.msra.mxu0 0
        %2375 = vmatpush.bf16.msra.mxu0 0
        %2376 = vmatpush.bf16.msra.mxu0 0
        %2377 = vmatpush.bf16.msra.mxu0 %v2292
        %2378 = vmatmul.bf16.gmra.mxu0 %v2274
        %v2379 = vpop.f32.mrf.mxu0
        %v2380 = vadd.f32 0.0, %v2379
        %v2381 = vpop.f32.mrf.mxu0
        %v2382 = vadd.f32 0.0, %v2381
        %2383 = vdwg.mxu0
        %2384 = vmatpush.bf16.msra.mxu0 0
        %2385 = vmatpush.bf16.msra.mxu0 0
        %2386 = vmatpush.bf16.msra.mxu0 0
        %2387 = vmatpush.bf16.msra.mxu0 0
        %2388 = vmatpush.bf16.msra.mxu0 0
        %2389 = vmatpush.bf16.msra.mxu0 0
        %2390 = vmatpush.bf16.msra.mxu0 0
        %2391 = vmatpush.bf16.msra.mxu0 %v2295
        %2392 = vmatmul.bf16.gmra.mxu0 %v2274
        %v2393 = vpop.f32.mrf.mxu0
        %v2394 = vadd.f32 0.0, %v2393
        %v2395 = vpop.f32.mrf.mxu0
        %v2396 = vadd.f32 0.0, %v2395
        %2397 = vdwg.mxu0
        %2398 = vmatpush.bf16.msra.mxu0 0
        %2399 = vmatpush.bf16.msra.mxu0 0
        %2400 = vmatpush.bf16.msra.mxu0 0
        %2401 = vmatpush.bf16.msra.mxu0 0
        %2402 = vmatpush.bf16.msra.mxu0 0
        %2403 = vmatpush.bf16.msra.mxu0 0
        %2404 = vmatpush.bf16.msra.mxu0 0
        %2405 = vmatpush.bf16.msra.mxu0 %v2298
        %2406 = vmatmul.bf16.gmra.mxu0 %v2274
        %v2407 = vpop.f32.mrf.mxu0
        %v2408 = vadd.f32 0.0, %v2407
        %v2409 = vpop.f32.mrf.mxu0
        %v2410 = vadd.f32 0.0, %v2409
        %2411 = vdwg.mxu0
        %v2412 = vadd.f32 %v2222, %v2310
        %v2413 = vadd.f32 %v2223, %v2324
        %v2414 = vadd.f32 %v2224, %v2338
        %v2415 = vadd.f32 %v2225, %v2352
        %v2416 = vadd.f32 %v2226, %v2366
        %v2417 = vadd.f32 %v2227, %v2380
        %v2418 = vadd.f32 %v2228, %v2394
        %v2419 = vadd.f32 %v2229, %v2408
        %v2420 = vadd.f32 %v2230, %v2312
        %v2421 = vadd.f32 %v2231, %v2326
        %v2422 = vadd.f32 %v2232, %v2340
        %v2423 = vadd.f32 %v2233, %v2354
        %v2424 = vadd.f32 %v2234, %v2368
        %v2425 = vadd.f32 %v2235, %v2382
        %v2426 = vadd.f32 %v2236, %v2396
        %v2427 = vadd.f32 %v2237, %v2410
        %s2428 = scalar_lea.vmem %s3, 48
        %v2429 = vld [vmem:[%s2428] sm:$0xf]
        %v2430 = vld [vmem:[%s2428 + $0x4] sm:$0xf]
        %v2433 = vunpack.c.l.b16 %v2429
        %v2434 = vunpack.c.l.b16 %v2430
        %v2435 = vpack.c.b16 %v2434, %v2433
        %2436 = vrot.lane.b32.xlu0 %v1347, 62
        %v2437 = vpop.permute.xlu0 %2436
        %2438 = vrot.lane.b32.xlu0 %v1348, 62
        %v2439 = vpop.permute.xlu0 %2438
        %2440 = vrot.lane.b32.xlu0 %v1349, 62
        %v2441 = vpop.permute.xlu0 %2440
        %2442 = vrot.lane.b32.xlu0 %v1350, 62
        %v2443 = vpop.permute.xlu0 %2442
        %2444 = vrot.lane.b32.xlu0 %v1351, 62
        %v2445 = vpop.permute.xlu0 %2444
        %2446 = vrot.lane.b32.xlu0 %v1352, 62
        %v2447 = vpop.permute.xlu0 %2446
        %2448 = vrot.lane.b32.xlu0 %v1353, 62
        %v2449 = vpop.permute.xlu0 %2448
        %2450 = vrot.lane.b32.xlu0 %v1354, 62
        %v2451 = vpop.permute.xlu0 %2450
        %2452 = vrot.lane.b32.xlu0 %v1355, 62
        %v2453 = vpop.permute.xlu0 %2452
        %vm2454 = vcmask 506880
        %v2455 = vsel %vm2454, %v2437, %v2439
        %v2456 = vsel %vm2454, %v2439, %v2441
        %v2457 = vsel %vm2454, %v2441, %v2443
        %v2458 = vsel %vm2454, %v2443, %v2445
        %v2459 = vsel %vm2454, %v2445, %v2447
        %v2460 = vsel %vm2454, %v2447, %v2449
        %v2461 = vsel %vm2454, %v2449, %v2451
        %v2462 = vsel %vm2454, %v2451, %v2453
        %v2464 = vsel %vm1383, %v2435, 0
        %v2467 = vsel %vm1387, %v2455, 0
        %v2470 = vsel %vm1387, %v2456, 0
        %v2473 = vsel %vm1387, %v2457, 0
        %v2476 = vsel %vm1387, %v2458, 0
        %v2479 = vsel %vm1387, %v2459, 0
        %v2482 = vsel %vm1387, %v2460, 0
        %v2485 = vsel %vm1387, %v2461, 0
        %v2488 = vsel %vm1387, %v2462, 0
        %2490 = vmatpush.bf16.msra.mxu0 0
        %2491 = vmatpush.bf16.msra.mxu0 0
        %2492 = vmatpush.bf16.msra.mxu0 0
        %2493 = vmatpush.bf16.msra.mxu0 0
        %2494 = vmatpush.bf16.msra.mxu0 0
        %2495 = vmatpush.bf16.msra.mxu0 0
        %2496 = vmatpush.bf16.msra.mxu0 0
        %2497 = vmatpush.bf16.msra.mxu0 %v2467
        %2498 = vmatmul.bf16.gmra.mxu0 %v2464
        %v2499 = vpop.f32.mrf.mxu0
        %v2500 = vadd.f32 0.0, %v2499
        %v2501 = vpop.f32.mrf.mxu0
        %v2502 = vadd.f32 0.0, %v2501
        %2503 = vdwg.mxu0
        %2504 = vmatpush.bf16.msra.mxu0 0
        %2505 = vmatpush.bf16.msra.mxu0 0
        %2506 = vmatpush.bf16.msra.mxu0 0
        %2507 = vmatpush.bf16.msra.mxu0 0
        %2508 = vmatpush.bf16.msra.mxu0 0
        %2509 = vmatpush.bf16.msra.mxu0 0
        %2510 = vmatpush.bf16.msra.mxu0 0
        %2511 = vmatpush.bf16.msra.mxu0 %v2470
        %2512 = vmatmul.bf16.gmra.mxu0 %v2464
        %v2513 = vpop.f32.mrf.mxu0
        %v2514 = vadd.f32 0.0, %v2513
        %v2515 = vpop.f32.mrf.mxu0
        %v2516 = vadd.f32 0.0, %v2515
        %2517 = vdwg.mxu0
        %2518 = vmatpush.bf16.msra.mxu0 0
        %2519 = vmatpush.bf16.msra.mxu0 0
        %2520 = vmatpush.bf16.msra.mxu0 0
        %2521 = vmatpush.bf16.msra.mxu0 0
        %2522 = vmatpush.bf16.msra.mxu0 0
        %2523 = vmatpush.bf16.msra.mxu0 0
        %2524 = vmatpush.bf16.msra.mxu0 0
        %2525 = vmatpush.bf16.msra.mxu0 %v2473
        %2526 = vmatmul.bf16.gmra.mxu0 %v2464
        %v2527 = vpop.f32.mrf.mxu0
        %v2528 = vadd.f32 0.0, %v2527
        %v2529 = vpop.f32.mrf.mxu0
        %v2530 = vadd.f32 0.0, %v2529
        %2531 = vdwg.mxu0
        %2532 = vmatpush.bf16.msra.mxu0 0
        %2533 = vmatpush.bf16.msra.mxu0 0
        %2534 = vmatpush.bf16.msra.mxu0 0
        %2535 = vmatpush.bf16.msra.mxu0 0
        %2536 = vmatpush.bf16.msra.mxu0 0
        %2537 = vmatpush.bf16.msra.mxu0 0
        %2538 = vmatpush.bf16.msra.mxu0 0
        %2539 = vmatpush.bf16.msra.mxu0 %v2476
        %2540 = vmatmul.bf16.gmra.mxu0 %v2464
        %v2541 = vpop.f32.mrf.mxu0
        %v2542 = vadd.f32 0.0, %v2541
        %v2543 = vpop.f32.mrf.mxu0
        %v2544 = vadd.f32 0.0, %v2543
        %2545 = vdwg.mxu0
        %2546 = vmatpush.bf16.msra.mxu0 0
        %2547 = vmatpush.bf16.msra.mxu0 0
        %2548 = vmatpush.bf16.msra.mxu0 0
        %2549 = vmatpush.bf16.msra.mxu0 0
        %2550 = vmatpush.bf16.msra.mxu0 0
        %2551 = vmatpush.bf16.msra.mxu0 0
        %2552 = vmatpush.bf16.msra.mxu0 0
        %2553 = vmatpush.bf16.msra.mxu0 %v2479
        %2554 = vmatmul.bf16.gmra.mxu0 %v2464
        %v2555 = vpop.f32.mrf.mxu0
        %v2556 = vadd.f32 0.0, %v2555
        %v2557 = vpop.f32.mrf.mxu0
        %v2558 = vadd.f32 0.0, %v2557
        %2559 = vdwg.mxu0
        %2560 = vmatpush.bf16.msra.mxu0 0
        %2561 = vmatpush.bf16.msra.mxu0 0
        %2562 = vmatpush.bf16.msra.mxu0 0
        %2563 = vmatpush.bf16.msra.mxu0 0
        %2564 = vmatpush.bf16.msra.mxu0 0
        %2565 = vmatpush.bf16.msra.mxu0 0
        %2566 = vmatpush.bf16.msra.mxu0 0
        %2567 = vmatpush.bf16.msra.mxu0 %v2482
        %2568 = vmatmul.bf16.gmra.mxu0 %v2464
        %v2569 = vpop.f32.mrf.mxu0
        %v2570 = vadd.f32 0.0, %v2569
        %v2571 = vpop.f32.mrf.mxu0
        %v2572 = vadd.f32 0.0, %v2571
        %2573 = vdwg.mxu0
        %2574 = vmatpush.bf16.msra.mxu0 0
        %2575 = vmatpush.bf16.msra.mxu0 0
        %2576 = vmatpush.bf16.msra.mxu0 0
        %2577 = vmatpush.bf16.msra.mxu0 0
        %2578 = vmatpush.bf16.msra.mxu0 0
        %2579 = vmatpush.bf16.msra.mxu0 0
        %2580 = vmatpush.bf16.msra.mxu0 0
        %2581 = vmatpush.bf16.msra.mxu0 %v2485
        %2582 = vmatmul.bf16.gmra.mxu0 %v2464
        %v2583 = vpop.f32.mrf.mxu0
        %v2584 = vadd.f32 0.0, %v2583
        %v2585 = vpop.f32.mrf.mxu0
        %v2586 = vadd.f32 0.0, %v2585
        %2587 = vdwg.mxu0
        %2588 = vmatpush.bf16.msra.mxu0 0
        %2589 = vmatpush.bf16.msra.mxu0 0
        %2590 = vmatpush.bf16.msra.mxu0 0
        %2591 = vmatpush.bf16.msra.mxu0 0
        %2592 = vmatpush.bf16.msra.mxu0 0
        %2593 = vmatpush.bf16.msra.mxu0 0
        %2594 = vmatpush.bf16.msra.mxu0 0
        %2595 = vmatpush.bf16.msra.mxu0 %v2488
        %2596 = vmatmul.bf16.gmra.mxu0 %v2464
        %v2597 = vpop.f32.mrf.mxu0
        %v2598 = vadd.f32 0.0, %v2597
        %v2599 = vpop.f32.mrf.mxu0
        %v2600 = vadd.f32 0.0, %v2599
        %2601 = vdwg.mxu0
        %v2602 = vadd.f32 %v2412, %v2500
        %v2603 = vadd.f32 %v2413, %v2514
        %v2604 = vadd.f32 %v2414, %v2528
        %v2605 = vadd.f32 %v2415, %v2542
        %v2606 = vadd.f32 %v2416, %v2556
        %v2607 = vadd.f32 %v2417, %v2570
        %v2608 = vadd.f32 %v2418, %v2584
        %v2609 = vadd.f32 %v2419, %v2598
        %v2610 = vadd.f32 %v2420, %v2502
        %v2611 = vadd.f32 %v2421, %v2516
        %v2612 = vadd.f32 %v2422, %v2530
        %v2613 = vadd.f32 %v2423, %v2544
        %v2614 = vadd.f32 %v2424, %v2558
        %v2615 = vadd.f32 %v2425, %v2572
        %v2616 = vadd.f32 %v2426, %v2586
        %v2617 = vadd.f32 %v2427, %v2600
        %s2618 = scalar_lea.vmem %s3, 56
        %v2619 = vld [vmem:[%s2618] sm:$0xf]
        %v2620 = vld [vmem:[%s2618 + $0x4] sm:$0xf]
        %v2623 = vunpack.c.l.b16 %v2619
        %v2624 = vunpack.c.l.b16 %v2620
        %v2625 = vpack.c.b16 %v2624, %v2623
        %2626 = vrot.lane.b32.xlu0 %v1347, 60
        %v2627 = vpop.permute.xlu0 %2626
        %2628 = vrot.lane.b32.xlu0 %v1348, 60
        %v2629 = vpop.permute.xlu0 %2628
        %2630 = vrot.lane.b32.xlu0 %v1349, 60
        %v2631 = vpop.permute.xlu0 %2630
        %2632 = vrot.lane.b32.xlu0 %v1350, 60
        %v2633 = vpop.permute.xlu0 %2632
        %2634 = vrot.lane.b32.xlu0 %v1351, 60
        %v2635 = vpop.permute.xlu0 %2634
        %2636 = vrot.lane.b32.xlu0 %v1352, 60
        %v2637 = vpop.permute.xlu0 %2636
        %2638 = vrot.lane.b32.xlu0 %v1353, 60
        %v2639 = vpop.permute.xlu0 %2638
        %2640 = vrot.lane.b32.xlu0 %v1354, 60
        %v2641 = vpop.permute.xlu0 %2640
        %2642 = vrot.lane.b32.xlu0 %v1355, 60
        %v2643 = vpop.permute.xlu0 %2642
        %vm2644 = vcmask 490496
        %v2645 = vsel %vm2644, %v2627, %v2629
        %v2646 = vsel %vm2644, %v2629, %v2631
        %v2647 = vsel %vm2644, %v2631, %v2633
        %v2648 = vsel %vm2644, %v2633, %v2635
        %v2649 = vsel %vm2644, %v2635, %v2637
        %v2650 = vsel %vm2644, %v2637, %v2639
        %v2651 = vsel %vm2644, %v2639, %v2641
        %v2652 = vsel %vm2644, %v2641, %v2643
        %v2654 = vsel %vm1383, %v2625, 0
        %v2657 = vsel %vm1387, %v2645, 0
        %v2660 = vsel %vm1387, %v2646, 0
        %v2663 = vsel %vm1387, %v2647, 0
        %v2666 = vsel %vm1387, %v2648, 0
        %v2669 = vsel %vm1387, %v2649, 0
        %v2672 = vsel %vm1387, %v2650, 0
        %v2675 = vsel %vm1387, %v2651, 0
        %v2678 = vsel %vm1387, %v2652, 0
        %2680 = vmatpush.bf16.msra.mxu0 0
        %2681 = vmatpush.bf16.msra.mxu0 0
        %2682 = vmatpush.bf16.msra.mxu0 0
        %2683 = vmatpush.bf16.msra.mxu0 0
        %2684 = vmatpush.bf16.msra.mxu0 0
        %2685 = vmatpush.bf16.msra.mxu0 0
        %2686 = vmatpush.bf16.msra.mxu0 0
        %2687 = vmatpush.bf16.msra.mxu0 %v2657
        %2688 = vmatmul.bf16.gmra.mxu0 %v2654
        %v2689 = vpop.f32.mrf.mxu0
        %v2690 = vadd.f32 0.0, %v2689
        %v2691 = vpop.f32.mrf.mxu0
        %v2692 = vadd.f32 0.0, %v2691
        %2693 = vdwg.mxu0
        %2694 = vmatpush.bf16.msra.mxu0 0
        %2695 = vmatpush.bf16.msra.mxu0 0
        %2696 = vmatpush.bf16.msra.mxu0 0
        %2697 = vmatpush.bf16.msra.mxu0 0
        %2698 = vmatpush.bf16.msra.mxu0 0
        %2699 = vmatpush.bf16.msra.mxu0 0
        %2700 = vmatpush.bf16.msra.mxu0 0
        %2701 = vmatpush.bf16.msra.mxu0 %v2660
        %2702 = vmatmul.bf16.gmra.mxu0 %v2654
        %v2703 = vpop.f32.mrf.mxu0
        %v2704 = vadd.f32 0.0, %v2703
        %v2705 = vpop.f32.mrf.mxu0
        %v2706 = vadd.f32 0.0, %v2705
        %2707 = vdwg.mxu0
        %2708 = vmatpush.bf16.msra.mxu0 0
        %2709 = vmatpush.bf16.msra.mxu0 0
        %2710 = vmatpush.bf16.msra.mxu0 0
        %2711 = vmatpush.bf16.msra.mxu0 0
        %2712 = vmatpush.bf16.msra.mxu0 0
        %2713 = vmatpush.bf16.msra.mxu0 0
        %2714 = vmatpush.bf16.msra.mxu0 0
        %2715 = vmatpush.bf16.msra.mxu0 %v2663
        %2716 = vmatmul.bf16.gmra.mxu0 %v2654
        %v2717 = vpop.f32.mrf.mxu0
        %v2718 = vadd.f32 0.0, %v2717
        %v2719 = vpop.f32.mrf.mxu0
        %v2720 = vadd.f32 0.0, %v2719
        %2721 = vdwg.mxu0
        %2722 = vmatpush.bf16.msra.mxu0 0
        %2723 = vmatpush.bf16.msra.mxu0 0
        %2724 = vmatpush.bf16.msra.mxu0 0
        %2725 = vmatpush.bf16.msra.mxu0 0
        %2726 = vmatpush.bf16.msra.mxu0 0
        %2727 = vmatpush.bf16.msra.mxu0 0
        %2728 = vmatpush.bf16.msra.mxu0 0
        %2729 = vmatpush.bf16.msra.mxu0 %v2666
        %2730 = vmatmul.bf16.gmra.mxu0 %v2654
        %v2731 = vpop.f32.mrf.mxu0
        %v2732 = vadd.f32 0.0, %v2731
        %v2733 = vpop.f32.mrf.mxu0
        %v2734 = vadd.f32 0.0, %v2733
        %2735 = vdwg.mxu0
        %2736 = vmatpush.bf16.msra.mxu0 0
        %2737 = vmatpush.bf16.msra.mxu0 0
        %2738 = vmatpush.bf16.msra.mxu0 0
        %2739 = vmatpush.bf16.msra.mxu0 0
        %2740 = vmatpush.bf16.msra.mxu0 0
        %2741 = vmatpush.bf16.msra.mxu0 0
        %2742 = vmatpush.bf16.msra.mxu0 0
        %2743 = vmatpush.bf16.msra.mxu0 %v2669
        %2744 = vmatmul.bf16.gmra.mxu0 %v2654
        %v2745 = vpop.f32.mrf.mxu0
        %v2746 = vadd.f32 0.0, %v2745
        %v2747 = vpop.f32.mrf.mxu0
        %v2748 = vadd.f32 0.0, %v2747
        %2749 = vdwg.mxu0
        %2750 = vmatpush.bf16.msra.mxu0 0
        %2751 = vmatpush.bf16.msra.mxu0 0
        %2752 = vmatpush.bf16.msra.mxu0 0
        %2753 = vmatpush.bf16.msra.mxu0 0
        %2754 = vmatpush.bf16.msra.mxu0 0
        %2755 = vmatpush.bf16.msra.mxu0 0
        %2756 = vmatpush.bf16.msra.mxu0 0
        %2757 = vmatpush.bf16.msra.mxu0 %v2672
        %2758 = vmatmul.bf16.gmra.mxu0 %v2654
        %v2759 = vpop.f32.mrf.mxu0
        %v2760 = vadd.f32 0.0, %v2759
        %v2761 = vpop.f32.mrf.mxu0
        %v2762 = vadd.f32 0.0, %v2761
        %2763 = vdwg.mxu0
        %2764 = vmatpush.bf16.msra.mxu0 0
        %2765 = vmatpush.bf16.msra.mxu0 0
        %2766 = vmatpush.bf16.msra.mxu0 0
        %2767 = vmatpush.bf16.msra.mxu0 0
        %2768 = vmatpush.bf16.msra.mxu0 0
        %2769 = vmatpush.bf16.msra.mxu0 0
        %2770 = vmatpush.bf16.msra.mxu0 0
        %2771 = vmatpush.bf16.msra.mxu0 %v2675
        %2772 = vmatmul.bf16.gmra.mxu0 %v2654
        %v2773 = vpop.f32.mrf.mxu0
        %v2774 = vadd.f32 0.0, %v2773
        %v2775 = vpop.f32.mrf.mxu0
        %v2776 = vadd.f32 0.0, %v2775
        %2777 = vdwg.mxu0
        %2778 = vmatpush.bf16.msra.mxu0 0
        %2779 = vmatpush.bf16.msra.mxu0 0
        %2780 = vmatpush.bf16.msra.mxu0 0
        %2781 = vmatpush.bf16.msra.mxu0 0
        %2782 = vmatpush.bf16.msra.mxu0 0
        %2783 = vmatpush.bf16.msra.mxu0 0
        %2784 = vmatpush.bf16.msra.mxu0 0
        %2785 = vmatpush.bf16.msra.mxu0 %v2678
        %2786 = vmatmul.bf16.gmra.mxu0 %v2654
        %v2787 = vpop.f32.mrf.mxu0
        %v2788 = vadd.f32 0.0, %v2787
        %v2789 = vpop.f32.mrf.mxu0
        %v2790 = vadd.f32 0.0, %v2789
        %2791 = vdwg.mxu0
        %v2792 = vadd.f32 %v2602, %v2690
        %v2793 = vadd.f32 %v2603, %v2704
        %v2794 = vadd.f32 %v2604, %v2718
        %v2795 = vadd.f32 %v2605, %v2732
        %v2796 = vadd.f32 %v2606, %v2746
        %v2797 = vadd.f32 %v2607, %v2760
        %v2798 = vadd.f32 %v2608, %v2774
        %v2799 = vadd.f32 %v2609, %v2788
        %v2800 = vadd.f32 %v2610, %v2692
        %v2801 = vadd.f32 %v2611, %v2706
        %v2802 = vadd.f32 %v2612, %v2720
        %v2803 = vadd.f32 %v2613, %v2734
        %v2804 = vadd.f32 %v2614, %v2748
        %v2805 = vadd.f32 %v2615, %v2762
        %v2806 = vadd.f32 %v2616, %v2776
        %v2807 = vadd.f32 %v2617, %v2790
        %s2808 = scalar_lea.vmem %s3, 64
        %v2809 = vld [vmem:[%s2808] sm:$0xf]
        %v2810 = vld [vmem:[%s2808 + $0x4] sm:$0xf]
        %v2813 = vunpack.c.l.b16 %v2809
        %v2814 = vunpack.c.l.b16 %v2810
        %v2815 = vpack.c.b16 %v2814, %v2813
        %2816 = vrot.lane.b32.xlu0 %v1347, 58
        %v2817 = vpop.permute.xlu0 %2816
        %2818 = vrot.lane.b32.xlu0 %v1348, 58
        %v2819 = vpop.permute.xlu0 %2818
        %2820 = vrot.lane.b32.xlu0 %v1349, 58
        %v2821 = vpop.permute.xlu0 %2820
        %2822 = vrot.lane.b32.xlu0 %v1350, 58
        %v2823 = vpop.permute.xlu0 %2822
        %2824 = vrot.lane.b32.xlu0 %v1351, 58
        %v2825 = vpop.permute.xlu0 %2824
        %2826 = vrot.lane.b32.xlu0 %v1352, 58
        %v2827 = vpop.permute.xlu0 %2826
        %2828 = vrot.lane.b32.xlu0 %v1353, 58
        %v2829 = vpop.permute.xlu0 %2828
        %2830 = vrot.lane.b32.xlu0 %v1354, 58
        %v2831 = vpop.permute.xlu0 %2830
        %2832 = vrot.lane.b32.xlu0 %v1355, 58
        %v2833 = vpop.permute.xlu0 %2832
        %vm2834 = vcmask 474112
        %v2835 = vsel %vm2834, %v2817, %v2819
        %v2836 = vsel %vm2834, %v2819, %v2821
        %v2837 = vsel %vm2834, %v2821, %v2823
        %v2838 = vsel %vm2834, %v2823, %v2825
        %v2839 = vsel %vm2834, %v2825, %v2827
        %v2840 = vsel %vm2834, %v2827, %v2829
        %v2841 = vsel %vm2834, %v2829, %v2831
        %v2842 = vsel %vm2834, %v2831, %v2833
        %v2844 = vsel %vm1383, %v2815, 0
        %v2847 = vsel %vm1387, %v2835, 0
        %v2850 = vsel %vm1387, %v2836, 0
        %v2853 = vsel %vm1387, %v2837, 0
        %v2856 = vsel %vm1387, %v2838, 0
        %v2859 = vsel %vm1387, %v2839, 0
        %v2862 = vsel %vm1387, %v2840, 0
        %v2865 = vsel %vm1387, %v2841, 0
        %v2868 = vsel %vm1387, %v2842, 0
        %2870 = vmatpush.bf16.msra.mxu0 0
        %2871 = vmatpush.bf16.msra.mxu0 0
        %2872 = vmatpush.bf16.msra.mxu0 0
        %2873 = vmatpush.bf16.msra.mxu0 0
        %2874 = vmatpush.bf16.msra.mxu0 0
        %2875 = vmatpush.bf16.msra.mxu0 0
        %2876 = vmatpush.bf16.msra.mxu0 0
        %2877 = vmatpush.bf16.msra.mxu0 %v2847
        %2878 = vmatmul.bf16.gmra.mxu0 %v2844
        %v2879 = vpop.f32.mrf.mxu0
        %v2880 = vadd.f32 0.0, %v2879
        %v2881 = vpop.f32.mrf.mxu0
        %v2882 = vadd.f32 0.0, %v2881
        %2883 = vdwg.mxu0
        %2884 = vmatpush.bf16.msra.mxu0 0
        %2885 = vmatpush.bf16.msra.mxu0 0
        %2886 = vmatpush.bf16.msra.mxu0 0
        %2887 = vmatpush.bf16.msra.mxu0 0
        %2888 = vmatpush.bf16.msra.mxu0 0
        %2889 = vmatpush.bf16.msra.mxu0 0
        %2890 = vmatpush.bf16.msra.mxu0 0
        %2891 = vmatpush.bf16.msra.mxu0 %v2850
        %2892 = vmatmul.bf16.gmra.mxu0 %v2844
        %v2893 = vpop.f32.mrf.mxu0
        %v2894 = vadd.f32 0.0, %v2893
        %v2895 = vpop.f32.mrf.mxu0
        %v2896 = vadd.f32 0.0, %v2895
        %2897 = vdwg.mxu0
        %2898 = vmatpush.bf16.msra.mxu0 0
        %2899 = vmatpush.bf16.msra.mxu0 0
        %2900 = vmatpush.bf16.msra.mxu0 0
        %2901 = vmatpush.bf16.msra.mxu0 0
        %2902 = vmatpush.bf16.msra.mxu0 0
        %2903 = vmatpush.bf16.msra.mxu0 0
        %2904 = vmatpush.bf16.msra.mxu0 0
        %2905 = vmatpush.bf16.msra.mxu0 %v2853
        %2906 = vmatmul.bf16.gmra.mxu0 %v2844
        %v2907 = vpop.f32.mrf.mxu0
        %v2908 = vadd.f32 0.0, %v2907
        %v2909 = vpop.f32.mrf.mxu0
        %v2910 = vadd.f32 0.0, %v2909
        %2911 = vdwg.mxu0
        %2912 = vmatpush.bf16.msra.mxu0 0
        %2913 = vmatpush.bf16.msra.mxu0 0
        %2914 = vmatpush.bf16.msra.mxu0 0
        %2915 = vmatpush.bf16.msra.mxu0 0
        %2916 = vmatpush.bf16.msra.mxu0 0
        %2917 = vmatpush.bf16.msra.mxu0 0
        %2918 = vmatpush.bf16.msra.mxu0 0
        %2919 = vmatpush.bf16.msra.mxu0 %v2856
        %2920 = vmatmul.bf16.gmra.mxu0 %v2844
        %v2921 = vpop.f32.mrf.mxu0
        %v2922 = vadd.f32 0.0, %v2921
        %v2923 = vpop.f32.mrf.mxu0
        %v2924 = vadd.f32 0.0, %v2923
        %2925 = vdwg.mxu0
        %2926 = vmatpush.bf16.msra.mxu0 0
        %2927 = vmatpush.bf16.msra.mxu0 0
        %2928 = vmatpush.bf16.msra.mxu0 0
        %2929 = vmatpush.bf16.msra.mxu0 0
        %2930 = vmatpush.bf16.msra.mxu0 0
        %2931 = vmatpush.bf16.msra.mxu0 0
        %2932 = vmatpush.bf16.msra.mxu0 0
        %2933 = vmatpush.bf16.msra.mxu0 %v2859
        %2934 = vmatmul.bf16.gmra.mxu0 %v2844
        %v2935 = vpop.f32.mrf.mxu0
        %v2936 = vadd.f32 0.0, %v2935
        %v2937 = vpop.f32.mrf.mxu0
        %v2938 = vadd.f32 0.0, %v2937
        %2939 = vdwg.mxu0
        %2940 = vmatpush.bf16.msra.mxu0 0
        %2941 = vmatpush.bf16.msra.mxu0 0
        %2942 = vmatpush.bf16.msra.mxu0 0
        %2943 = vmatpush.bf16.msra.mxu0 0
        %2944 = vmatpush.bf16.msra.mxu0 0
        %2945 = vmatpush.bf16.msra.mxu0 0
        %2946 = vmatpush.bf16.msra.mxu0 0
        %2947 = vmatpush.bf16.msra.mxu0 %v2862
        %2948 = vmatmul.bf16.gmra.mxu0 %v2844
        %v2949 = vpop.f32.mrf.mxu0
        %v2950 = vadd.f32 0.0, %v2949
        %v2951 = vpop.f32.mrf.mxu0
        %v2952 = vadd.f32 0.0, %v2951
        %2953 = vdwg.mxu0
        %2954 = vmatpush.bf16.msra.mxu0 0
        %2955 = vmatpush.bf16.msra.mxu0 0
        %2956 = vmatpush.bf16.msra.mxu0 0
        %2957 = vmatpush.bf16.msra.mxu0 0
        %2958 = vmatpush.bf16.msra.mxu0 0
        %2959 = vmatpush.bf16.msra.mxu0 0
        %2960 = vmatpush.bf16.msra.mxu0 0
        %2961 = vmatpush.bf16.msra.mxu0 %v2865
        %2962 = vmatmul.bf16.gmra.mxu0 %v2844
        %v2963 = vpop.f32.mrf.mxu0
        %v2964 = vadd.f32 0.0, %v2963
        %v2965 = vpop.f32.mrf.mxu0
        %v2966 = vadd.f32 0.0, %v2965
        %2967 = vdwg.mxu0
        %2968 = vmatpush.bf16.msra.mxu0 0
        %2969 = vmatpush.bf16.msra.mxu0 0
        %2970 = vmatpush.bf16.msra.mxu0 0
        %2971 = vmatpush.bf16.msra.mxu0 0
        %2972 = vmatpush.bf16.msra.mxu0 0
        %2973 = vmatpush.bf16.msra.mxu0 0
        %2974 = vmatpush.bf16.msra.mxu0 0
        %2975 = vmatpush.bf16.msra.mxu0 %v2868
        %2976 = vmatmul.bf16.gmra.mxu0 %v2844
        %v2977 = vpop.f32.mrf.mxu0
        %v2978 = vadd.f32 0.0, %v2977
        %v2979 = vpop.f32.mrf.mxu0
        %v2980 = vadd.f32 0.0, %v2979
        %2981 = vdwg.mxu0
        %v2982 = vadd.f32 %v2792, %v2880
        %v2983 = vadd.f32 %v2793, %v2894
        %v2984 = vadd.f32 %v2794, %v2908
        %v2985 = vadd.f32 %v2795, %v2922
        %v2986 = vadd.f32 %v2796, %v2936
        %v2987 = vadd.f32 %v2797, %v2950
        %v2988 = vadd.f32 %v2798, %v2964
        %v2989 = vadd.f32 %v2799, %v2978
        %v2990 = vadd.f32 %v2800, %v2882
        %v2991 = vadd.f32 %v2801, %v2896
        %v2992 = vadd.f32 %v2802, %v2910
        %v2993 = vadd.f32 %v2803, %v2924
        %v2994 = vadd.f32 %v2804, %v2938
        %v2995 = vadd.f32 %v2805, %v2952
        %v2996 = vadd.f32 %v2806, %v2966
        %v2997 = vadd.f32 %v2807, %v2980
        %s2998 = scalar_lea.vmem %s3, 72
        %v2999 = vld [vmem:[%s2998] sm:$0xf]
        %v3000 = vld [vmem:[%s2998 + $0x4] sm:$0xf]
        %v3003 = vunpack.c.l.b16 %v2999
        %v3004 = vunpack.c.l.b16 %v3000
        %v3005 = vpack.c.b16 %v3004, %v3003
        %3006 = vrot.lane.b32.xlu0 %v1347, 56
        %v3007 = vpop.permute.xlu0 %3006
        %3008 = vrot.lane.b32.xlu0 %v1348, 56
        %v3009 = vpop.permute.xlu0 %3008
        %3010 = vrot.lane.b32.xlu0 %v1349, 56
        %v3011 = vpop.permute.xlu0 %3010
        %3012 = vrot.lane.b32.xlu0 %v1350, 56
        %v3013 = vpop.permute.xlu0 %3012
        %3014 = vrot.lane.b32.xlu0 %v1351, 56
        %v3015 = vpop.permute.xlu0 %3014
        %3016 = vrot.lane.b32.xlu0 %v1352, 56
        %v3017 = vpop.permute.xlu0 %3016
        %3018 = vrot.lane.b32.xlu0 %v1353, 56
        %v3019 = vpop.permute.xlu0 %3018
        %3020 = vrot.lane.b32.xlu0 %v1354, 56
        %v3021 = vpop.permute.xlu0 %3020
        %3022 = vrot.lane.b32.xlu0 %v1355, 56
        %v3023 = vpop.permute.xlu0 %3022
        %vm3024 = vcmask 457728
        %v3025 = vsel %vm3024, %v3007, %v3009
        %v3026 = vsel %vm3024, %v3009, %v3011
        %v3027 = vsel %vm3024, %v3011, %v3013
        %v3028 = vsel %vm3024, %v3013, %v3015
        %v3029 = vsel %vm3024, %v3015, %v3017
        %v3030 = vsel %vm3024, %v3017, %v3019
        %v3031 = vsel %vm3024, %v3019, %v3021
        %v3032 = vsel %vm3024, %v3021, %v3023
        %v3034 = vsel %vm1383, %v3005, 0
        %v3037 = vsel %vm1387, %v3025, 0
        %v3040 = vsel %vm1387, %v3026, 0
        %v3043 = vsel %vm1387, %v3027, 0
        %v3046 = vsel %vm1387, %v3028, 0
        %v3049 = vsel %vm1387, %v3029, 0
        %v3052 = vsel %vm1387, %v3030, 0
        %v3055 = vsel %vm1387, %v3031, 0
        %v3058 = vsel %vm1387, %v3032, 0
        %3060 = vmatpush.bf16.msra.mxu0 0
        %3061 = vmatpush.bf16.msra.mxu0 0
        %3062 = vmatpush.bf16.msra.mxu0 0
        %3063 = vmatpush.bf16.msra.mxu0 0
        %3064 = vmatpush.bf16.msra.mxu0 0
        %3065 = vmatpush.bf16.msra.mxu0 0
        %3066 = vmatpush.bf16.msra.mxu0 0
        %3067 = vmatpush.bf16.msra.mxu0 %v3037
        %3068 = vmatmul.bf16.gmra.mxu0 %v3034
        %v3069 = vpop.f32.mrf.mxu0
        %v3070 = vadd.f32 0.0, %v3069
        %v3071 = vpop.f32.mrf.mxu0
        %v3072 = vadd.f32 0.0, %v3071
        %3073 = vdwg.mxu0
        %3074 = vmatpush.bf16.msra.mxu0 0
        %3075 = vmatpush.bf16.msra.mxu0 0
        %3076 = vmatpush.bf16.msra.mxu0 0
        %3077 = vmatpush.bf16.msra.mxu0 0
        %3078 = vmatpush.bf16.msra.mxu0 0
        %3079 = vmatpush.bf16.msra.mxu0 0
        %3080 = vmatpush.bf16.msra.mxu0 0
        %3081 = vmatpush.bf16.msra.mxu0 %v3040
        %3082 = vmatmul.bf16.gmra.mxu0 %v3034
        %v3083 = vpop.f32.mrf.mxu0
        %v3084 = vadd.f32 0.0, %v3083
        %v3085 = vpop.f32.mrf.mxu0
        %v3086 = vadd.f32 0.0, %v3085
        %3087 = vdwg.mxu0
        %3088 = vmatpush.bf16.msra.mxu0 0
        %3089 = vmatpush.bf16.msra.mxu0 0
        %3090 = vmatpush.bf16.msra.mxu0 0
        %3091 = vmatpush.bf16.msra.mxu0 0
        %3092 = vmatpush.bf16.msra.mxu0 0
        %3093 = vmatpush.bf16.msra.mxu0 0
        %3094 = vmatpush.bf16.msra.mxu0 0
        %3095 = vmatpush.bf16.msra.mxu0 %v3043
        %3096 = vmatmul.bf16.gmra.mxu0 %v3034
        %v3097 = vpop.f32.mrf.mxu0
        %v3098 = vadd.f32 0.0, %v3097
        %v3099 = vpop.f32.mrf.mxu0
        %v3100 = vadd.f32 0.0, %v3099
        %3101 = vdwg.mxu0
        %3102 = vmatpush.bf16.msra.mxu0 0
        %3103 = vmatpush.bf16.msra.mxu0 0
        %3104 = vmatpush.bf16.msra.mxu0 0
        %3105 = vmatpush.bf16.msra.mxu0 0
        %3106 = vmatpush.bf16.msra.mxu0 0
        %3107 = vmatpush.bf16.msra.mxu0 0
        %3108 = vmatpush.bf16.msra.mxu0 0
        %3109 = vmatpush.bf16.msra.mxu0 %v3046
        %3110 = vmatmul.bf16.gmra.mxu0 %v3034
        %v3111 = vpop.f32.mrf.mxu0
        %v3112 = vadd.f32 0.0, %v3111
        %v3113 = vpop.f32.mrf.mxu0
        %v3114 = vadd.f32 0.0, %v3113
        %3115 = vdwg.mxu0
        %3116 = vmatpush.bf16.msra.mxu0 0
        %3117 = vmatpush.bf16.msra.mxu0 0
        %3118 = vmatpush.bf16.msra.mxu0 0
        %3119 = vmatpush.bf16.msra.mxu0 0
        %3120 = vmatpush.bf16.msra.mxu0 0
        %3121 = vmatpush.bf16.msra.mxu0 0
        %3122 = vmatpush.bf16.msra.mxu0 0
        %3123 = vmatpush.bf16.msra.mxu0 %v3049
        %3124 = vmatmul.bf16.gmra.mxu0 %v3034
        %v3125 = vpop.f32.mrf.mxu0
        %v3126 = vadd.f32 0.0, %v3125
        %v3127 = vpop.f32.mrf.mxu0
        %v3128 = vadd.f32 0.0, %v3127
        %3129 = vdwg.mxu0
        %3130 = vmatpush.bf16.msra.mxu0 0
        %3131 = vmatpush.bf16.msra.mxu0 0
        %3132 = vmatpush.bf16.msra.mxu0 0
        %3133 = vmatpush.bf16.msra.mxu0 0
        %3134 = vmatpush.bf16.msra.mxu0 0
        %3135 = vmatpush.bf16.msra.mxu0 0
        %3136 = vmatpush.bf16.msra.mxu0 0
        %3137 = vmatpush.bf16.msra.mxu0 %v3052
        %3138 = vmatmul.bf16.gmra.mxu0 %v3034
        %v3139 = vpop.f32.mrf.mxu0
        %v3140 = vadd.f32 0.0, %v3139
        %v3141 = vpop.f32.mrf.mxu0
        %v3142 = vadd.f32 0.0, %v3141
        %3143 = vdwg.mxu0
        %3144 = vmatpush.bf16.msra.mxu0 0
        %3145 = vmatpush.bf16.msra.mxu0 0
        %3146 = vmatpush.bf16.msra.mxu0 0
        %3147 = vmatpush.bf16.msra.mxu0 0
        %3148 = vmatpush.bf16.msra.mxu0 0
        %3149 = vmatpush.bf16.msra.mxu0 0
        %3150 = vmatpush.bf16.msra.mxu0 0
        %3151 = vmatpush.bf16.msra.mxu0 %v3055
        %3152 = vmatmul.bf16.gmra.mxu0 %v3034
        %v3153 = vpop.f32.mrf.mxu0
        %v3154 = vadd.f32 0.0, %v3153
        %v3155 = vpop.f32.mrf.mxu0
        %v3156 = vadd.f32 0.0, %v3155
        %3157 = vdwg.mxu0
        %3158 = vmatpush.bf16.msra.mxu0 0
        %3159 = vmatpush.bf16.msra.mxu0 0
        %3160 = vmatpush.bf16.msra.mxu0 0
        %3161 = vmatpush.bf16.msra.mxu0 0
        %3162 = vmatpush.bf16.msra.mxu0 0
        %3163 = vmatpush.bf16.msra.mxu0 0
        %3164 = vmatpush.bf16.msra.mxu0 0
        %3165 = vmatpush.bf16.msra.mxu0 %v3058
        %3166 = vmatmul.bf16.gmra.mxu0 %v3034
        %v3167 = vpop.f32.mrf.mxu0
        %v3168 = vadd.f32 0.0, %v3167
        %v3169 = vpop.f32.mrf.mxu0
        %v3170 = vadd.f32 0.0, %v3169
        %3171 = vdwg.mxu0
        %v3172 = vadd.f32 %v2982, %v3070
        %v3173 = vadd.f32 %v2983, %v3084
        %v3174 = vadd.f32 %v2984, %v3098
        %v3175 = vadd.f32 %v2985, %v3112
        %v3176 = vadd.f32 %v2986, %v3126
        %v3177 = vadd.f32 %v2987, %v3140
        %v3178 = vadd.f32 %v2988, %v3154
        %v3179 = vadd.f32 %v2989, %v3168
        %v3180 = vadd.f32 %v2990, %v3072
        %v3181 = vadd.f32 %v2991, %v3086
        %v3182 = vadd.f32 %v2992, %v3100
        %v3183 = vadd.f32 %v2993, %v3114
        %v3184 = vadd.f32 %v2994, %v3128
        %v3185 = vadd.f32 %v2995, %v3142
        %v3186 = vadd.f32 %v2996, %v3156
        %v3187 = vadd.f32 %v2997, %v3170
        %s3188 = scalar_lea.vmem %s3, 80
        %v3189 = vld [vmem:[%s3188] sm:$0xf]
        %v3190 = vld [vmem:[%s3188 + $0x4] sm:$0xf]
        %v3191 = vld [vmem:[#allocation4 + $0x4] sm:$0x77]
        %v3192 = vld [vmem:[#allocation4 + $0xc] sm:$0x77]
        %v3193 = vld [vmem:[#allocation4 + $0x14] sm:$0x77]
        %v3194 = vld [vmem:[#allocation4 + $0x1c] sm:$0x77]
        %v3197 = vunpack.c.l.b16 %v3189
        %v3198 = vunpack.c.l.b16 %v3190
        %v3199 = vpack.c.b16 %v3198, %v3197
        %v3204 = vunpack.c.l.b16 %v3191
        %v3205 = vunpack.c.h.b16 %v3191
        %v3206 = vunpack.c.l.b16 %v3192
        %v3207 = vunpack.c.h.b16 %v3192
        %v3208 = vunpack.c.l.b16 %v3193
        %v3209 = vunpack.c.h.b16 %v3193
        %v3210 = vunpack.c.l.b16 %v3194
        %v3211 = vunpack.c.h.b16 %v3194
        %v3212 = vpack.c.b16 %v3204, %v3204
        %v3213 = vpack.c.b16 %v3205, %v3205
        %v3214 = vpack.c.b16 %v3206, %v3206
        %v3215 = vpack.c.b16 %v3207, %v3207
        %v3216 = vpack.c.b16 %v3208, %v3208
        %v3217 = vpack.c.b16 %v3209, %v3209
        %v3218 = vpack.c.b16 %v3210, %v3210
        %v3219 = vpack.c.b16 %v3211, %v3211
        %v3221 = vsel %vm1383, %v3199, 0
        %v3224 = vsel %vm1387, %v3212, 0
        %v3227 = vsel %vm1387, %v3213, 0
        %v3230 = vsel %vm1387, %v3214, 0
        %v3233 = vsel %vm1387, %v3215, 0
        %v3236 = vsel %vm1387, %v3216, 0
        %v3239 = vsel %vm1387, %v3217, 0
        %v3242 = vsel %vm1387, %v3218, 0
        %v3245 = vsel %vm1387, %v3219, 0
        %3247 = vmatpush.bf16.msra.mxu0 0
        %3248 = vmatpush.bf16.msra.mxu0 0
        %3249 = vmatpush.bf16.msra.mxu0 0
        %3250 = vmatpush.bf16.msra.mxu0 0
        %3251 = vmatpush.bf16.msra.mxu0 0
        %3252 = vmatpush.bf16.msra.mxu0 0
        %3253 = vmatpush.bf16.msra.mxu0 0
        %3254 = vmatpush.bf16.msra.mxu0 %v3224
        %3255 = vmatmul.bf16.gmra.mxu0 %v3221
        %v3256 = vpop.f32.mrf.mxu0
        %v3257 = vadd.f32 0.0, %v3256
        %v3258 = vpop.f32.mrf.mxu0
        %v3259 = vadd.f32 0.0, %v3258
        %3260 = vdwg.mxu0
        %3261 = vmatpush.bf16.msra.mxu0 0
        %3262 = vmatpush.bf16.msra.mxu0 0
        %3263 = vmatpush.bf16.msra.mxu0 0
        %3264 = vmatpush.bf16.msra.mxu0 0
        %3265 = vmatpush.bf16.msra.mxu0 0
        %3266 = vmatpush.bf16.msra.mxu0 0
        %3267 = vmatpush.bf16.msra.mxu0 0
        %3268 = vmatpush.bf16.msra.mxu0 %v3227
        %3269 = vmatmul.bf16.gmra.mxu0 %v3221
        %v3270 = vpop.f32.mrf.mxu0
        %v3271 = vadd.f32 0.0, %v3270
        %v3272 = vpop.f32.mrf.mxu0
        %v3273 = vadd.f32 0.0, %v3272
        %3274 = vdwg.mxu0
        %3275 = vmatpush.bf16.msra.mxu0 0
        %3276 = vmatpush.bf16.msra.mxu0 0
        %3277 = vmatpush.bf16.msra.mxu0 0
        %3278 = vmatpush.bf16.msra.mxu0 0
        %3279 = vmatpush.bf16.msra.mxu0 0
        %3280 = vmatpush.bf16.msra.mxu0 0
        %3281 = vmatpush.bf16.msra.mxu0 0
        %3282 = vmatpush.bf16.msra.mxu0 %v3230
        %3283 = vmatmul.bf16.gmra.mxu0 %v3221
        %v3284 = vpop.f32.mrf.mxu0
        %v3285 = vadd.f32 0.0, %v3284
        %v3286 = vpop.f32.mrf.mxu0
        %v3287 = vadd.f32 0.0, %v3286
        %3288 = vdwg.mxu0
        %3289 = vmatpush.bf16.msra.mxu0 0
        %3290 = vmatpush.bf16.msra.mxu0 0
        %3291 = vmatpush.bf16.msra.mxu0 0
        %3292 = vmatpush.bf16.msra.mxu0 0
        %3293 = vmatpush.bf16.msra.mxu0 0
        %3294 = vmatpush.bf16.msra.mxu0 0
        %3295 = vmatpush.bf16.msra.mxu0 0
        %3296 = vmatpush.bf16.msra.mxu0 %v3233
        %3297 = vmatmul.bf16.gmra.mxu0 %v3221
        %v3298 = vpop.f32.mrf.mxu0
        %v3299 = vadd.f32 0.0, %v3298
        %v3300 = vpop.f32.mrf.mxu0
        %v3301 = vadd.f32 0.0, %v3300
        %3302 = vdwg.mxu0
        %3303 = vmatpush.bf16.msra.mxu0 0
        %3304 = vmatpush.bf16.msra.mxu0 0
        %3305 = vmatpush.bf16.msra.mxu0 0
        %3306 = vmatpush.bf16.msra.mxu0 0
        %3307 = vmatpush.bf16.msra.mxu0 0
        %3308 = vmatpush.bf16.msra.mxu0 0
        %3309 = vmatpush.bf16.msra.mxu0 0
        %3310 = vmatpush.bf16.msra.mxu0 %v3236
        %3311 = vmatmul.bf16.gmra.mxu0 %v3221
        %v3312 = vpop.f32.mrf.mxu0
        %v3313 = vadd.f32 0.0, %v3312
        %v3314 = vpop.f32.mrf.mxu0
        %v3315 = vadd.f32 0.0, %v3314
        %3316 = vdwg.mxu0
        %3317 = vmatpush.bf16.msra.mxu0 0
        %3318 = vmatpush.bf16.msra.mxu0 0
        %3319 = vmatpush.bf16.msra.mxu0 0
        %3320 = vmatpush.bf16.msra.mxu0 0
        %3321 = vmatpush.bf16.msra.mxu0 0
        %3322 = vmatpush.bf16.msra.mxu0 0
        %3323 = vmatpush.bf16.msra.mxu0 0
        %3324 = vmatpush.bf16.msra.mxu0 %v3239
        %3325 = vmatmul.bf16.gmra.mxu0 %v3221
        %v3326 = vpop.f32.mrf.mxu0
        %v3327 = vadd.f32 0.0, %v3326
        %v3328 = vpop.f32.mrf.mxu0
        %v3329 = vadd.f32 0.0, %v3328
        %3330 = vdwg.mxu0
        %3331 = vmatpush.bf16.msra.mxu0 0
        %3332 = vmatpush.bf16.msra.mxu0 0
        %3333 = vmatpush.bf16.msra.mxu0 0
        %3334 = vmatpush.bf16.msra.mxu0 0
        %3335 = vmatpush.bf16.msra.mxu0 0
        %3336 = vmatpush.bf16.msra.mxu0 0
        %3337 = vmatpush.bf16.msra.mxu0 0
        %3338 = vmatpush.bf16.msra.mxu0 %v3242
        %3339 = vmatmul.bf16.gmra.mxu0 %v3221
        %v3340 = vpop.f32.mrf.mxu0
        %v3341 = vadd.f32 0.0, %v3340
        %v3342 = vpop.f32.mrf.mxu0
        %v3343 = vadd.f32 0.0, %v3342
        %3344 = vdwg.mxu0
        %3345 = vmatpush.bf16.msra.mxu0 0
        %3346 = vmatpush.bf16.msra.mxu0 0
        %3347 = vmatpush.bf16.msra.mxu0 0
        %3348 = vmatpush.bf16.msra.mxu0 0
        %3349 = vmatpush.bf16.msra.mxu0 0
        %3350 = vmatpush.bf16.msra.mxu0 0
        %3351 = vmatpush.bf16.msra.mxu0 0
        %3352 = vmatpush.bf16.msra.mxu0 %v3245
        %3353 = vmatmul.bf16.gmra.mxu0 %v3221
        %v3354 = vpop.f32.mrf.mxu0
        %v3355 = vadd.f32 0.0, %v3354
        %v3356 = vpop.f32.mrf.mxu0
        %v3357 = vadd.f32 0.0, %v3356
        %3358 = vdwg.mxu0
        %v3359 = vadd.f32 %v3172, %v3257
        %v3360 = vadd.f32 %v3173, %v3271
        %v3361 = vadd.f32 %v3174, %v3285
        %v3362 = vadd.f32 %v3175, %v3299
        %v3363 = vadd.f32 %v3176, %v3313
        %v3364 = vadd.f32 %v3177, %v3327
        %v3365 = vadd.f32 %v3178, %v3341
        %v3366 = vadd.f32 %v3179, %v3355
        %v3367 = vadd.f32 %v3180, %v3259
        %v3368 = vadd.f32 %v3181, %v3273
        %v3369 = vadd.f32 %v3182, %v3287
        %v3370 = vadd.f32 %v3183, %v3301
        %v3371 = vadd.f32 %v3184, %v3315
        %v3372 = vadd.f32 %v3185, %v3329
        %v3373 = vadd.f32 %v3186, %v3343
        %v3374 = vadd.f32 %v3187, %v3357
        %s3375 = scalar_lea.vmem %s3, 88
        %v3376 = vld [vmem:[%s3375] sm:$0xf]
        %v3377 = vld [vmem:[%s3375 + $0x4] sm:$0xf]
        %v3378 = vld [vmem:[#allocation4 + $0x4] sm:$0x77]
        %v3379 = vld [vmem:[#allocation4 + $0xc] sm:$0x77]
        %v3380 = vld [vmem:[#allocation4 + $0x14] sm:$0x77]
        %v3381 = vld [vmem:[#allocation4 + $0x1c] sm:$0x77]
        %v3382 = vld [vmem:[#allocation4 + $0x24] sm:$0x7]
        %v3385 = vunpack.c.l.b16 %v3376
        %v3386 = vunpack.c.l.b16 %v3377
        %v3387 = vpack.c.b16 %v3386, %v3385
        %v3393 = vunpack.c.l.b16 %v3378
        %v3394 = vunpack.c.h.b16 %v3378
        %v3395 = vunpack.c.l.b16 %v3379
        %v3396 = vunpack.c.h.b16 %v3379
        %v3397 = vunpack.c.l.b16 %v3380
        %v3398 = vunpack.c.h.b16 %v3380
        %v3399 = vunpack.c.l.b16 %v3381
        %v3400 = vunpack.c.h.b16 %v3381
        %v3401 = vunpack.c.l.b16 %v3382
        %v3402 = vpack.c.b16 %v3393, %v3393
        %v3403 = vpack.c.b16 %v3394, %v3394
        %v3404 = vpack.c.b16 %v3395, %v3395
        %v3405 = vpack.c.b16 %v3396, %v3396
        %v3406 = vpack.c.b16 %v3397, %v3397
        %v3407 = vpack.c.b16 %v3398, %v3398
        %v3408 = vpack.c.b16 %v3399, %v3399
        %v3409 = vpack.c.b16 %v3400, %v3400
        %v3410 = vpack.c.b16 %v3401, %v3401
        %3411 = vrot.lane.b32.xlu0 %v3402, 126
        %v3412 = vpop.permute.xlu0 %3411
        %3413 = vrot.lane.b32.xlu0 %v3403, 126
        %v3414 = vpop.permute.xlu0 %3413
        %3415 = vrot.lane.b32.xlu0 %v3404, 126
        %v3416 = vpop.permute.xlu0 %3415
        %3417 = vrot.lane.b32.xlu0 %v3405, 126
        %v3418 = vpop.permute.xlu0 %3417
        %3419 = vrot.lane.b32.xlu0 %v3406, 126
        %v3420 = vpop.permute.xlu0 %3419
        %3421 = vrot.lane.b32.xlu0 %v3407, 126
        %v3422 = vpop.permute.xlu0 %3421
        %3423 = vrot.lane.b32.xlu0 %v3408, 126
        %v3424 = vpop.permute.xlu0 %3423
        %3425 = vrot.lane.b32.xlu0 %v3409, 126
        %v3426 = vpop.permute.xlu0 %3425
        %3427 = vrot.lane.b32.xlu0 %v3410, 126
        %v3428 = vpop.permute.xlu0 %3427
        %v3429 = vsel %vm1374, %v3412, %v3414
        %v3430 = vsel %vm1374, %v3414, %v3416
        %v3431 = vsel %vm1374, %v3416, %v3418
        %v3432 = vsel %vm1374, %v3418, %v3420
        %v3433 = vsel %vm1374, %v3420, %v3422
        %v3434 = vsel %vm1374, %v3422, %v3424
        %v3435 = vsel %vm1374, %v3424, %v3426
        %v3436 = vsel %vm1374, %v3426, %v3428
        %v3438 = vsel %vm1383, %v3387, 0
        %v3441 = vsel %vm1387, %v3429, 0
        %v3444 = vsel %vm1387, %v3430, 0
        %v3447 = vsel %vm1387, %v3431, 0
        %v3450 = vsel %vm1387, %v3432, 0
        %v3453 = vsel %vm1387, %v3433, 0
        %v3456 = vsel %vm1387, %v3434, 0
        %v3459 = vsel %vm1387, %v3435, 0
        %v3462 = vsel %vm1387, %v3436, 0
        %3464 = vmatpush.bf16.msra.mxu0 0
        %3465 = vmatpush.bf16.msra.mxu0 0
        %3466 = vmatpush.bf16.msra.mxu0 0
        %3467 = vmatpush.bf16.msra.mxu0 0
        %3468 = vmatpush.bf16.msra.mxu0 0
        %3469 = vmatpush.bf16.msra.mxu0 0
        %3470 = vmatpush.bf16.msra.mxu0 0
        %3471 = vmatpush.bf16.msra.mxu0 %v3441
        %3472 = vmatmul.bf16.gmra.mxu0 %v3438
        %v3473 = vpop.f32.mrf.mxu0
        %v3474 = vadd.f32 0.0, %v3473
        %v3475 = vpop.f32.mrf.mxu0
        %v3476 = vadd.f32 0.0, %v3475
        %3477 = vdwg.mxu0
        %3478 = vmatpush.bf16.msra.mxu0 0
        %3479 = vmatpush.bf16.msra.mxu0 0
        %3480 = vmatpush.bf16.msra.mxu0 0
        %3481 = vmatpush.bf16.msra.mxu0 0
        %3482 = vmatpush.bf16.msra.mxu0 0
        %3483 = vmatpush.bf16.msra.mxu0 0
        %3484 = vmatpush.bf16.msra.mxu0 0
        %3485 = vmatpush.bf16.msra.mxu0 %v3444
        %3486 = vmatmul.bf16.gmra.mxu0 %v3438
        %v3487 = vpop.f32.mrf.mxu0
        %v3488 = vadd.f32 0.0, %v3487
        %v3489 = vpop.f32.mrf.mxu0
        %v3490 = vadd.f32 0.0, %v3489
        %3491 = vdwg.mxu0
        %3492 = vmatpush.bf16.msra.mxu0 0
        %3493 = vmatpush.bf16.msra.mxu0 0
        %3494 = vmatpush.bf16.msra.mxu0 0
        %3495 = vmatpush.bf16.msra.mxu0 0
        %3496 = vmatpush.bf16.msra.mxu0 0
        %3497 = vmatpush.bf16.msra.mxu0 0
        %3498 = vmatpush.bf16.msra.mxu0 0
        %3499 = vmatpush.bf16.msra.mxu0 %v3447
        %3500 = vmatmul.bf16.gmra.mxu0 %v3438
        %v3501 = vpop.f32.mrf.mxu0
        %v3502 = vadd.f32 0.0, %v3501
        %v3503 = vpop.f32.mrf.mxu0
        %v3504 = vadd.f32 0.0, %v3503
        %3505 = vdwg.mxu0
        %3506 = vmatpush.bf16.msra.mxu0 0
        %3507 = vmatpush.bf16.msra.mxu0 0
        %3508 = vmatpush.bf16.msra.mxu0 0
        %3509 = vmatpush.bf16.msra.mxu0 0
        %3510 = vmatpush.bf16.msra.mxu0 0
        %3511 = vmatpush.bf16.msra.mxu0 0
        %3512 = vmatpush.bf16.msra.mxu0 0
        %3513 = vmatpush.bf16.msra.mxu0 %v3450
        %3514 = vmatmul.bf16.gmra.mxu0 %v3438
        %v3515 = vpop.f32.mrf.mxu0
        %v3516 = vadd.f32 0.0, %v3515
        %v3517 = vpop.f32.mrf.mxu0
        %v3518 = vadd.f32 0.0, %v3517
        %3519 = vdwg.mxu0
        %3520 = vmatpush.bf16.msra.mxu0 0
        %3521 = vmatpush.bf16.msra.mxu0 0
        %3522 = vmatpush.bf16.msra.mxu0 0
        %3523 = vmatpush.bf16.msra.mxu0 0
        %3524 = vmatpush.bf16.msra.mxu0 0
        %3525 = vmatpush.bf16.msra.mxu0 0
        %3526 = vmatpush.bf16.msra.mxu0 0
        %3527 = vmatpush.bf16.msra.mxu0 %v3453
        %3528 = vmatmul.bf16.gmra.mxu0 %v3438
        %v3529 = vpop.f32.mrf.mxu0
        %v3530 = vadd.f32 0.0, %v3529
        %v3531 = vpop.f32.mrf.mxu0
        %v3532 = vadd.f32 0.0, %v3531
        %3533 = vdwg.mxu0
        %3534 = vmatpush.bf16.msra.mxu0 0
        %3535 = vmatpush.bf16.msra.mxu0 0
        %3536 = vmatpush.bf16.msra.mxu0 0
        %3537 = vmatpush.bf16.msra.mxu0 0
        %3538 = vmatpush.bf16.msra.mxu0 0
        %3539 = vmatpush.bf16.msra.mxu0 0
        %3540 = vmatpush.bf16.msra.mxu0 0
        %3541 = vmatpush.bf16.msra.mxu0 %v3456
        %3542 = vmatmul.bf16.gmra.mxu0 %v3438
        %v3543 = vpop.f32.mrf.mxu0
        %v3544 = vadd.f32 0.0, %v3543
        %v3545 = vpop.f32.mrf.mxu0
        %v3546 = vadd.f32 0.0, %v3545
        %3547 = vdwg.mxu0
        %3548 = vmatpush.bf16.msra.mxu0 0
        %3549 = vmatpush.bf16.msra.mxu0 0
        %3550 = vmatpush.bf16.msra.mxu0 0
        %3551 = vmatpush.bf16.msra.mxu0 0
        %3552 = vmatpush.bf16.msra.mxu0 0
        %3553 = vmatpush.bf16.msra.mxu0 0
        %3554 = vmatpush.bf16.msra.mxu0 0
        %3555 = vmatpush.bf16.msra.mxu0 %v3459
        %3556 = vmatmul.bf16.gmra.mxu0 %v3438
        %v3557 = vpop.f32.mrf.mxu0
        %v3558 = vadd.f32 0.0, %v3557
        %v3559 = vpop.f32.mrf.mxu0
        %v3560 = vadd.f32 0.0, %v3559
        %3561 = vdwg.mxu0
        %3562 = vmatpush.bf16.msra.mxu0 0
        %3563 = vmatpush.bf16.msra.mxu0 0
        %3564 = vmatpush.bf16.msra.mxu0 0
        %3565 = vmatpush.bf16.msra.mxu0 0
        %3566 = vmatpush.bf16.msra.mxu0 0
        %3567 = vmatpush.bf16.msra.mxu0 0
        %3568 = vmatpush.bf16.msra.mxu0 0
        %3569 = vmatpush.bf16.msra.mxu0 %v3462
        %3570 = vmatmul.bf16.gmra.mxu0 %v3438
        %v3571 = vpop.f32.mrf.mxu0
        %v3572 = vadd.f32 0.0, %v3571
        %v3573 = vpop.f32.mrf.mxu0
        %v3574 = vadd.f32 0.0, %v3573
        %3575 = vdwg.mxu0
        %v3576 = vadd.f32 %v3359, %v3474
        %v3577 = vadd.f32 %v3360, %v3488
        %v3578 = vadd.f32 %v3361, %v3502
        %v3579 = vadd.f32 %v3362, %v3516
        %v3580 = vadd.f32 %v3363, %v3530
        %v3581 = vadd.f32 %v3364, %v3544
        %v3582 = vadd.f32 %v3365, %v3558
        %v3583 = vadd.f32 %v3366, %v3572
        %v3584 = vadd.f32 %v3367, %v3476
        %v3585 = vadd.f32 %v3368, %v3490
        %v3586 = vadd.f32 %v3369, %v3504
        %v3587 = vadd.f32 %v3370, %v3518
        %v3588 = vadd.f32 %v3371, %v3532
        %v3589 = vadd.f32 %v3372, %v3546
        %v3590 = vadd.f32 %v3373, %v3560
        %v3591 = vadd.f32 %v3374, %v3574
        %s3592 = scalar_lea.vmem %s3, 96
        %v3593 = vld [vmem:[%s3592] sm:$0xf]
        %v3594 = vld [vmem:[%s3592 + $0x4] sm:$0xf]
        %v3597 = vunpack.c.l.b16 %v3593
        %v3598 = vunpack.c.l.b16 %v3594
        %v3599 = vpack.c.b16 %v3598, %v3597
        %3600 = vrot.lane.b32.xlu0 %v3402, 124
        %v3601 = vpop.permute.xlu0 %3600
        %3602 = vrot.lane.b32.xlu0 %v3403, 124
        %v3603 = vpop.permute.xlu0 %3602
        %3604 = vrot.lane.b32.xlu0 %v3404, 124
        %v3605 = vpop.permute.xlu0 %3604
        %3606 = vrot.lane.b32.xlu0 %v3405, 124
        %v3607 = vpop.permute.xlu0 %3606
        %3608 = vrot.lane.b32.xlu0 %v3406, 124
        %v3609 = vpop.permute.xlu0 %3608
        %3610 = vrot.lane.b32.xlu0 %v3407, 124
        %v3611 = vpop.permute.xlu0 %3610
        %3612 = vrot.lane.b32.xlu0 %v3408, 124
        %v3613 = vpop.permute.xlu0 %3612
        %3614 = vrot.lane.b32.xlu0 %v3409, 124
        %v3615 = vpop.permute.xlu0 %3614
        %3616 = vrot.lane.b32.xlu0 %v3410, 124
        %v3617 = vpop.permute.xlu0 %3616
        %v3618 = vsel %vm1694, %v3601, %v3603
        %v3619 = vsel %vm1694, %v3603, %v3605
        %v3620 = vsel %vm1694, %v3605, %v3607
        %v3621 = vsel %vm1694, %v3607, %v3609
        %v3622 = vsel %vm1694, %v3609, %v3611
        %v3623 = vsel %vm1694, %v3611, %v3613
        %v3624 = vsel %vm1694, %v3613, %v3615
        %v3625 = vsel %vm1694, %v3615, %v3617
        %v3627 = vsel %vm1383, %v3599, 0
        %v3630 = vsel %vm1387, %v3618, 0
        %v3633 = vsel %vm1387, %v3619, 0
        %v3636 = vsel %vm1387, %v3620, 0
        %v3639 = vsel %vm1387, %v3621, 0
        %v3642 = vsel %vm1387, %v3622, 0
        %v3645 = vsel %vm1387, %v3623, 0
        %v3648 = vsel %vm1387, %v3624, 0
        %v3651 = vsel %vm1387, %v3625, 0
        %3653 = vmatpush.bf16.msra.mxu0 0
        %3654 = vmatpush.bf16.msra.mxu0 0
        %3655 = vmatpush.bf16.msra.mxu0 0
        %3656 = vmatpush.bf16.msra.mxu0 0
        %3657 = vmatpush.bf16.msra.mxu0 0
        %3658 = vmatpush.bf16.msra.mxu0 0
        %3659 = vmatpush.bf16.msra.mxu0 0
        %3660 = vmatpush.bf16.msra.mxu0 %v3630
        %3661 = vmatmul.bf16.gmra.mxu0 %v3627
        %v3662 = vpop.f32.mrf.mxu0
        %v3663 = vadd.f32 0.0, %v3662
        %v3664 = vpop.f32.mrf.mxu0
        %v3665 = vadd.f32 0.0, %v3664
        %3666 = vdwg.mxu0
        %3667 = vmatpush.bf16.msra.mxu0 0
        %3668 = vmatpush.bf16.msra.mxu0 0
        %3669 = vmatpush.bf16.msra.mxu0 0
        %3670 = vmatpush.bf16.msra.mxu0 0
        %3671 = vmatpush.bf16.msra.mxu0 0
        %3672 = vmatpush.bf16.msra.mxu0 0
        %3673 = vmatpush.bf16.msra.mxu0 0
        %3674 = vmatpush.bf16.msra.mxu0 %v3633
        %3675 = vmatmul.bf16.gmra.mxu0 %v3627
        %v3676 = vpop.f32.mrf.mxu0
        %v3677 = vadd.f32 0.0, %v3676
        %v3678 = vpop.f32.mrf.mxu0
        %v3679 = vadd.f32 0.0, %v3678
        %3680 = vdwg.mxu0
        %3681 = vmatpush.bf16.msra.mxu0 0
        %3682 = vmatpush.bf16.msra.mxu0 0
        %3683 = vmatpush.bf16.msra.mxu0 0
        %3684 = vmatpush.bf16.msra.mxu0 0
        %3685 = vmatpush.bf16.msra.mxu0 0
        %3686 = vmatpush.bf16.msra.mxu0 0
        %3687 = vmatpush.bf16.msra.mxu0 0
        %3688 = vmatpush.bf16.msra.mxu0 %v3636
        %3689 = vmatmul.bf16.gmra.mxu0 %v3627
        %v3690 = vpop.f32.mrf.mxu0
        %v3691 = vadd.f32 0.0, %v3690
        %v3692 = vpop.f32.mrf.mxu0
        %v3693 = vadd.f32 0.0, %v3692
        %3694 = vdwg.mxu0
        %3695 = vmatpush.bf16.msra.mxu0 0
        %3696 = vmatpush.bf16.msra.mxu0 0
        %3697 = vmatpush.bf16.msra.mxu0 0
        %3698 = vmatpush.bf16.msra.mxu0 0
        %3699 = vmatpush.bf16.msra.mxu0 0
        %3700 = vmatpush.bf16.msra.mxu0 0
        %3701 = vmatpush.bf16.msra.mxu0 0
        %3702 = vmatpush.bf16.msra.mxu0 %v3639
        %3703 = vmatmul.bf16.gmra.mxu0 %v3627
        %v3704 = vpop.f32.mrf.mxu0
        %v3705 = vadd.f32 0.0, %v3704
        %v3706 = vpop.f32.mrf.mxu0
        %v3707 = vadd.f32 0.0, %v3706
        %3708 = vdwg.mxu0
        %3709 = vmatpush.bf16.msra.mxu0 0
        %3710 = vmatpush.bf16.msra.mxu0 0
        %3711 = vmatpush.bf16.msra.mxu0 0
        %3712 = vmatpush.bf16.msra.mxu0 0
        %3713 = vmatpush.bf16.msra.mxu0 0
        %3714 = vmatpush.bf16.msra.mxu0 0
        %3715 = vmatpush.bf16.msra.mxu0 0
        %3716 = vmatpush.bf16.msra.mxu0 %v3642
        %3717 = vmatmul.bf16.gmra.mxu0 %v3627
        %v3718 = vpop.f32.mrf.mxu0
        %v3719 = vadd.f32 0.0, %v3718
        %v3720 = vpop.f32.mrf.mxu0
        %v3721 = vadd.f32 0.0, %v3720
        %3722 = vdwg.mxu0
        %3723 = vmatpush.bf16.msra.mxu0 0
        %3724 = vmatpush.bf16.msra.mxu0 0
        %3725 = vmatpush.bf16.msra.mxu0 0
        %3726 = vmatpush.bf16.msra.mxu0 0
        %3727 = vmatpush.bf16.msra.mxu0 0
        %3728 = vmatpush.bf16.msra.mxu0 0
        %3729 = vmatpush.bf16.msra.mxu0 0
        %3730 = vmatpush.bf16.msra.mxu0 %v3645
        %3731 = vmatmul.bf16.gmra.mxu0 %v3627
        %v3732 = vpop.f32.mrf.mxu0
        %v3733 = vadd.f32 0.0, %v3732
        %v3734 = vpop.f32.mrf.mxu0
        %v3735 = vadd.f32 0.0, %v3734
        %3736 = vdwg.mxu0
        %3737 = vmatpush.bf16.msra.mxu0 0
        %3738 = vmatpush.bf16.msra.mxu0 0
        %3739 = vmatpush.bf16.msra.mxu0 0
        %3740 = vmatpush.bf16.msra.mxu0 0
        %3741 = vmatpush.bf16.msra.mxu0 0
        %3742 = vmatpush.bf16.msra.mxu0 0
        %3743 = vmatpush.bf16.msra.mxu0 0
        %3744 = vmatpush.bf16.msra.mxu0 %v3648
        %3745 = vmatmul.bf16.gmra.mxu0 %v3627
        %v3746 = vpop.f32.mrf.mxu0
        %v3747 = vadd.f32 0.0, %v3746
        %v3748 = vpop.f32.mrf.mxu0
        %v3749 = vadd.f32 0.0, %v3748
        %3750 = vdwg.mxu0
        %3751 = vmatpush.bf16.msra.mxu0 0
        %3752 = vmatpush.bf16.msra.mxu0 0
        %3753 = vmatpush.bf16.msra.mxu0 0
        %3754 = vmatpush.bf16.msra.mxu0 0
        %3755 = vmatpush.bf16.msra.mxu0 0
        %3756 = vmatpush.bf16.msra.mxu0 0
        %3757 = vmatpush.bf16.msra.mxu0 0
        %3758 = vmatpush.bf16.msra.mxu0 %v3651
        %3759 = vmatmul.bf16.gmra.mxu0 %v3627
        %v3760 = vpop.f32.mrf.mxu0
        %v3761 = vadd.f32 0.0, %v3760
        %v3762 = vpop.f32.mrf.mxu0
        %v3763 = vadd.f32 0.0, %v3762
        %3764 = vdwg.mxu0
        %v3765 = vadd.f32 %v3576, %v3663
        %v3766 = vadd.f32 %v3577, %v3677
        %v3767 = vadd.f32 %v3578, %v3691
        %v3768 = vadd.f32 %v3579, %v3705
        %v3769 = vadd.f32 %v3580, %v3719
        %v3770 = vadd.f32 %v3581, %v3733
        %v3771 = vadd.f32 %v3582, %v3747
        %v3772 = vadd.f32 %v3583, %v3761
        %v3773 = vadd.f32 %v3584, %v3665
        %v3774 = vadd.f32 %v3585, %v3679
        %v3775 = vadd.f32 %v3586, %v3693
        %v3776 = vadd.f32 %v3587, %v3707
        %v3777 = vadd.f32 %v3588, %v3721
        %v3778 = vadd.f32 %v3589, %v3735
        %v3779 = vadd.f32 %v3590, %v3749
        %v3780 = vadd.f32 %v3591, %v3763
        %s3781 = scalar_lea.vmem %s3, 104
        %v3782 = vld [vmem:[%s3781] sm:$0xf]
        %v3783 = vld [vmem:[%s3781 + $0x4] sm:$0xf]
        %v3786 = vunpack.c.l.b16 %v3782
        %v3787 = vunpack.c.l.b16 %v3783
        %v3788 = vpack.c.b16 %v3787, %v3786
        %3789 = vrot.lane.b32.xlu0 %v3402, 122
        %v3790 = vpop.permute.xlu0 %3789
        %3791 = vrot.lane.b32.xlu0 %v3403, 122
        %v3792 = vpop.permute.xlu0 %3791
        %3793 = vrot.lane.b32.xlu0 %v3404, 122
        %v3794 = vpop.permute.xlu0 %3793
        %3795 = vrot.lane.b32.xlu0 %v3405, 122
        %v3796 = vpop.permute.xlu0 %3795
        %3797 = vrot.lane.b32.xlu0 %v3406, 122
        %v3798 = vpop.permute.xlu0 %3797
        %3799 = vrot.lane.b32.xlu0 %v3407, 122
        %v3800 = vpop.permute.xlu0 %3799
        %3801 = vrot.lane.b32.xlu0 %v3408, 122
        %v3802 = vpop.permute.xlu0 %3801
        %3803 = vrot.lane.b32.xlu0 %v3409, 122
        %v3804 = vpop.permute.xlu0 %3803
        %3805 = vrot.lane.b32.xlu0 %v3410, 122
        %v3806 = vpop.permute.xlu0 %3805
        %v3807 = vsel %vm1884, %v3790, %v3792
        %v3808 = vsel %vm1884, %v3792, %v3794
        %v3809 = vsel %vm1884, %v3794, %v3796
        %v3810 = vsel %vm1884, %v3796, %v3798
        %v3811 = vsel %vm1884, %v3798, %v3800
        %v3812 = vsel %vm1884, %v3800, %v3802
        %v3813 = vsel %vm1884, %v3802, %v3804
        %v3814 = vsel %vm1884, %v3804, %v3806
        %v3816 = vsel %vm1383, %v3788, 0
        %v3819 = vsel %vm1387, %v3807, 0
        %v3822 = vsel %vm1387, %v3808, 0
        %v3825 = vsel %vm1387, %v3809, 0
        %v3828 = vsel %vm1387, %v3810, 0
        %v3831 = vsel %vm1387, %v3811, 0
        %v3834 = vsel %vm1387, %v3812, 0
        %v3837 = vsel %vm1387, %v3813, 0
        %v3840 = vsel %vm1387, %v3814, 0
        %3842 = vmatpush.bf16.msra.mxu0 0
        %3843 = vmatpush.bf16.msra.mxu0 0
        %3844 = vmatpush.bf16.msra.mxu0 0
        %3845 = vmatpush.bf16.msra.mxu0 0
        %3846 = vmatpush.bf16.msra.mxu0 0
        %3847 = vmatpush.bf16.msra.mxu0 0
        %3848 = vmatpush.bf16.msra.mxu0 0
        %3849 = vmatpush.bf16.msra.mxu0 %v3819
        %3850 = vmatmul.bf16.gmra.mxu0 %v3816
        %v3851 = vpop.f32.mrf.mxu0
        %v3852 = vadd.f32 0.0, %v3851
        %v3853 = vpop.f32.mrf.mxu0
        %v3854 = vadd.f32 0.0, %v3853
        %3855 = vdwg.mxu0
        %3856 = vmatpush.bf16.msra.mxu0 0
        %3857 = vmatpush.bf16.msra.mxu0 0
        %3858 = vmatpush.bf16.msra.mxu0 0
        %3859 = vmatpush.bf16.msra.mxu0 0
        %3860 = vmatpush.bf16.msra.mxu0 0
        %3861 = vmatpush.bf16.msra.mxu0 0
        %3862 = vmatpush.bf16.msra.mxu0 0
        %3863 = vmatpush.bf16.msra.mxu0 %v3822
        %3864 = vmatmul.bf16.gmra.mxu0 %v3816
        %v3865 = vpop.f32.mrf.mxu0
        %v3866 = vadd.f32 0.0, %v3865
        %v3867 = vpop.f32.mrf.mxu0
        %v3868 = vadd.f32 0.0, %v3867
        %3869 = vdwg.mxu0
        %3870 = vmatpush.bf16.msra.mxu0 0
        %3871 = vmatpush.bf16.msra.mxu0 0
        %3872 = vmatpush.bf16.msra.mxu0 0
        %3873 = vmatpush.bf16.msra.mxu0 0
        %3874 = vmatpush.bf16.msra.mxu0 0
        %3875 = vmatpush.bf16.msra.mxu0 0
        %3876 = vmatpush.bf16.msra.mxu0 0
        %3877 = vmatpush.bf16.msra.mxu0 %v3825
        %3878 = vmatmul.bf16.gmra.mxu0 %v3816
        %v3879 = vpop.f32.mrf.mxu0
        %v3880 = vadd.f32 0.0, %v3879
        %v3881 = vpop.f32.mrf.mxu0
        %v3882 = vadd.f32 0.0, %v3881
        %3883 = vdwg.mxu0
        %3884 = vmatpush.bf16.msra.mxu0 0
        %3885 = vmatpush.bf16.msra.mxu0 0
        %3886 = vmatpush.bf16.msra.mxu0 0
        %3887 = vmatpush.bf16.msra.mxu0 0
        %3888 = vmatpush.bf16.msra.mxu0 0
        %3889 = vmatpush.bf16.msra.mxu0 0
        %3890 = vmatpush.bf16.msra.mxu0 0
        %3891 = vmatpush.bf16.msra.mxu0 %v3828
        %3892 = vmatmul.bf16.gmra.mxu0 %v3816
        %v3893 = vpop.f32.mrf.mxu0
        %v3894 = vadd.f32 0.0, %v3893
        %v3895 = vpop.f32.mrf.mxu0
        %v3896 = vadd.f32 0.0, %v3895
        %3897 = vdwg.mxu0
        %3898 = vmatpush.bf16.msra.mxu0 0
        %3899 = vmatpush.bf16.msra.mxu0 0
        %3900 = vmatpush.bf16.msra.mxu0 0
        %3901 = vmatpush.bf16.msra.mxu0 0
        %3902 = vmatpush.bf16.msra.mxu0 0
        %3903 = vmatpush.bf16.msra.mxu0 0
        %3904 = vmatpush.bf16.msra.mxu0 0
        %3905 = vmatpush.bf16.msra.mxu0 %v3831
        %3906 = vmatmul.bf16.gmra.mxu0 %v3816
        %v3907 = vpop.f32.mrf.mxu0
        %v3908 = vadd.f32 0.0, %v3907
        %v3909 = vpop.f32.mrf.mxu0
        %v3910 = vadd.f32 0.0, %v3909
        %3911 = vdwg.mxu0
        %3912 = vmatpush.bf16.msra.mxu0 0
        %3913 = vmatpush.bf16.msra.mxu0 0
        %3914 = vmatpush.bf16.msra.mxu0 0
        %3915 = vmatpush.bf16.msra.mxu0 0
        %3916 = vmatpush.bf16.msra.mxu0 0
        %3917 = vmatpush.bf16.msra.mxu0 0
        %3918 = vmatpush.bf16.msra.mxu0 0
        %3919 = vmatpush.bf16.msra.mxu0 %v3834
        %3920 = vmatmul.bf16.gmra.mxu0 %v3816
        %v3921 = vpop.f32.mrf.mxu0
        %v3922 = vadd.f32 0.0, %v3921
        %v3923 = vpop.f32.mrf.mxu0
        %v3924 = vadd.f32 0.0, %v3923
        %3925 = vdwg.mxu0
        %3926 = vmatpush.bf16.msra.mxu0 0
        %3927 = vmatpush.bf16.msra.mxu0 0
        %3928 = vmatpush.bf16.msra.mxu0 0
        %3929 = vmatpush.bf16.msra.mxu0 0
        %3930 = vmatpush.bf16.msra.mxu0 0
        %3931 = vmatpush.bf16.msra.mxu0 0
        %3932 = vmatpush.bf16.msra.mxu0 0
        %3933 = vmatpush.bf16.msra.mxu0 %v3837
        %3934 = vmatmul.bf16.gmra.mxu0 %v3816
        %v3935 = vpop.f32.mrf.mxu0
        %v3936 = vadd.f32 0.0, %v3935
        %v3937 = vpop.f32.mrf.mxu0
        %v3938 = vadd.f32 0.0, %v3937
        %3939 = vdwg.mxu0
        %3940 = vmatpush.bf16.msra.mxu0 0
        %3941 = vmatpush.bf16.msra.mxu0 0
        %3942 = vmatpush.bf16.msra.mxu0 0
        %3943 = vmatpush.bf16.msra.mxu0 0
        %3944 = vmatpush.bf16.msra.mxu0 0
        %3945 = vmatpush.bf16.msra.mxu0 0
        %3946 = vmatpush.bf16.msra.mxu0 0
        %3947 = vmatpush.bf16.msra.mxu0 %v3840
        %3948 = vmatmul.bf16.gmra.mxu0 %v3816
        %v3949 = vpop.f32.mrf.mxu0
        %v3950 = vadd.f32 0.0, %v3949
        %v3951 = vpop.f32.mrf.mxu0
        %v3952 = vadd.f32 0.0, %v3951
        %3953 = vdwg.mxu0
        %v3954 = vadd.f32 %v3765, %v3852
        %v3955 = vadd.f32 %v3766, %v3866
        %v3956 = vadd.f32 %v3767, %v3880
        %v3957 = vadd.f32 %v3768, %v3894
        %v3958 = vadd.f32 %v3769, %v3908
        %v3959 = vadd.f32 %v3770, %v3922
        %v3960 = vadd.f32 %v3771, %v3936
        %v3961 = vadd.f32 %v3772, %v3950
        %v3962 = vadd.f32 %v3773, %v3854
        %v3963 = vadd.f32 %v3774, %v3868
        %v3964 = vadd.f32 %v3775, %v3882
        %v3965 = vadd.f32 %v3776, %v3896
        %v3966 = vadd.f32 %v3777, %v3910
        %v3967 = vadd.f32 %v3778, %v3924
        %v3968 = vadd.f32 %v3779, %v3938
        %v3969 = vadd.f32 %v3780, %v3952
        %s3970 = scalar_lea.vmem %s3, 112
        %v3971 = vld [vmem:[%s3970] sm:$0xf]
        %v3972 = vld [vmem:[%s3970 + $0x4] sm:$0xf]
        %v3975 = vunpack.c.l.b16 %v3971
        %v3976 = vunpack.c.l.b16 %v3972
        %v3977 = vpack.c.b16 %v3976, %v3975
        %3978 = vrot.lane.b32.xlu0 %v3402, 120
        %v3979 = vpop.permute.xlu0 %3978
        %3980 = vrot.lane.b32.xlu0 %v3403, 120
        %v3981 = vpop.permute.xlu0 %3980
        %3982 = vrot.lane.b32.xlu0 %v3404, 120
        %v3983 = vpop.permute.xlu0 %3982
        %3984 = vrot.lane.b32.xlu0 %v3405, 120
        %v3985 = vpop.permute.xlu0 %3984
        %3986 = vrot.lane.b32.xlu0 %v3406, 120
        %v3987 = vpop.permute.xlu0 %3986
        %3988 = vrot.lane.b32.xlu0 %v3407, 120
        %v3989 = vpop.permute.xlu0 %3988
        %3990 = vrot.lane.b32.xlu0 %v3408, 120
        %v3991 = vpop.permute.xlu0 %3990
        %3992 = vrot.lane.b32.xlu0 %v3409, 120
        %v3993 = vpop.permute.xlu0 %3992
        %3994 = vrot.lane.b32.xlu0 %v3410, 120
        %v3995 = vpop.permute.xlu0 %3994
        %v3996 = vsel %vm2074, %v3979, %v3981
        %v3997 = vsel %vm2074, %v3981, %v3983
        %v3998 = vsel %vm2074, %v3983, %v3985
        %v3999 = vsel %vm2074, %v3985, %v3987
        %v4000 = vsel %vm2074, %v3987, %v3989
        %v4001 = vsel %vm2074, %v3989, %v3991
        %v4002 = vsel %vm2074, %v3991, %v3993
        %v4003 = vsel %vm2074, %v3993, %v3995
        %v4005 = vsel %vm1383, %v3977, 0
        %v4008 = vsel %vm1387, %v3996, 0
        %v4011 = vsel %vm1387, %v3997, 0
        %v4014 = vsel %vm1387, %v3998, 0
        %v4017 = vsel %vm1387, %v3999, 0
        %v4020 = vsel %vm1387, %v4000, 0
        %v4023 = vsel %vm1387, %v4001, 0
        %v4026 = vsel %vm1387, %v4002, 0
        %v4029 = vsel %vm1387, %v4003, 0
        %4031 = vmatpush.bf16.msra.mxu0 0
        %4032 = vmatpush.bf16.msra.mxu0 0
        %4033 = vmatpush.bf16.msra.mxu0 0
        %4034 = vmatpush.bf16.msra.mxu0 0
        %4035 = vmatpush.bf16.msra.mxu0 0
        %4036 = vmatpush.bf16.msra.mxu0 0
        %4037 = vmatpush.bf16.msra.mxu0 0
        %4038 = vmatpush.bf16.msra.mxu0 %v4008
        %4039 = vmatmul.bf16.gmra.mxu0 %v4005
        %v4040 = vpop.f32.mrf.mxu0
        %v4041 = vadd.f32 0.0, %v4040
        %v4042 = vpop.f32.mrf.mxu0
        %v4043 = vadd.f32 0.0, %v4042
        %4044 = vdwg.mxu0
        %4045 = vmatpush.bf16.msra.mxu0 0
        %4046 = vmatpush.bf16.msra.mxu0 0
        %4047 = vmatpush.bf16.msra.mxu0 0
        %4048 = vmatpush.bf16.msra.mxu0 0
        %4049 = vmatpush.bf16.msra.mxu0 0
        %4050 = vmatpush.bf16.msra.mxu0 0
        %4051 = vmatpush.bf16.msra.mxu0 0
        %4052 = vmatpush.bf16.msra.mxu0 %v4011
        %4053 = vmatmul.bf16.gmra.mxu0 %v4005
        %v4054 = vpop.f32.mrf.mxu0
        %v4055 = vadd.f32 0.0, %v4054
        %v4056 = vpop.f32.mrf.mxu0
        %v4057 = vadd.f32 0.0, %v4056
        %4058 = vdwg.mxu0
        %4059 = vmatpush.bf16.msra.mxu0 0
        %4060 = vmatpush.bf16.msra.mxu0 0
        %4061 = vmatpush.bf16.msra.mxu0 0
        %4062 = vmatpush.bf16.msra.mxu0 0
        %4063 = vmatpush.bf16.msra.mxu0 0
        %4064 = vmatpush.bf16.msra.mxu0 0
        %4065 = vmatpush.bf16.msra.mxu0 0
        %4066 = vmatpush.bf16.msra.mxu0 %v4014
        %4067 = vmatmul.bf16.gmra.mxu0 %v4005
        %v4068 = vpop.f32.mrf.mxu0
        %v4069 = vadd.f32 0.0, %v4068
        %v4070 = vpop.f32.mrf.mxu0
        %v4071 = vadd.f32 0.0, %v4070
        %4072 = vdwg.mxu0
        %4073 = vmatpush.bf16.msra.mxu0 0
        %4074 = vmatpush.bf16.msra.mxu0 0
        %4075 = vmatpush.bf16.msra.mxu0 0
        %4076 = vmatpush.bf16.msra.mxu0 0
        %4077 = vmatpush.bf16.msra.mxu0 0
        %4078 = vmatpush.bf16.msra.mxu0 0
        %4079 = vmatpush.bf16.msra.mxu0 0
        %4080 = vmatpush.bf16.msra.mxu0 %v4017
        %4081 = vmatmul.bf16.gmra.mxu0 %v4005
        %v4082 = vpop.f32.mrf.mxu0
        %v4083 = vadd.f32 0.0, %v4082
        %v4084 = vpop.f32.mrf.mxu0
        %v4085 = vadd.f32 0.0, %v4084
        %4086 = vdwg.mxu0
        %4087 = vmatpush.bf16.msra.mxu0 0
        %4088 = vmatpush.bf16.msra.mxu0 0
        %4089 = vmatpush.bf16.msra.mxu0 0
        %4090 = vmatpush.bf16.msra.mxu0 0
        %4091 = vmatpush.bf16.msra.mxu0 0
        %4092 = vmatpush.bf16.msra.mxu0 0
        %4093 = vmatpush.bf16.msra.mxu0 0
        %4094 = vmatpush.bf16.msra.mxu0 %v4020
        %4095 = vmatmul.bf16.gmra.mxu0 %v4005
        %v4096 = vpop.f32.mrf.mxu0
        %v4097 = vadd.f32 0.0, %v4096
        %v4098 = vpop.f32.mrf.mxu0
        %v4099 = vadd.f32 0.0, %v4098
        %4100 = vdwg.mxu0
        %4101 = vmatpush.bf16.msra.mxu0 0
        %4102 = vmatpush.bf16.msra.mxu0 0
        %4103 = vmatpush.bf16.msra.mxu0 0
        %4104 = vmatpush.bf16.msra.mxu0 0
        %4105 = vmatpush.bf16.msra.mxu0 0
        %4106 = vmatpush.bf16.msra.mxu0 0
        %4107 = vmatpush.bf16.msra.mxu0 0
        %4108 = vmatpush.bf16.msra.mxu0 %v4023
        %4109 = vmatmul.bf16.gmra.mxu0 %v4005
        %v4110 = vpop.f32.mrf.mxu0
        %v4111 = vadd.f32 0.0, %v4110
        %v4112 = vpop.f32.mrf.mxu0
        %v4113 = vadd.f32 0.0, %v4112
        %4114 = vdwg.mxu0
        %4115 = vmatpush.bf16.msra.mxu0 0
        %4116 = vmatpush.bf16.msra.mxu0 0
        %4117 = vmatpush.bf16.msra.mxu0 0
        %4118 = vmatpush.bf16.msra.mxu0 0
        %4119 = vmatpush.bf16.msra.mxu0 0
        %4120 = vmatpush.bf16.msra.mxu0 0
        %4121 = vmatpush.bf16.msra.mxu0 0
        %4122 = vmatpush.bf16.msra.mxu0 %v4026
        %4123 = vmatmul.bf16.gmra.mxu0 %v4005
        %v4124 = vpop.f32.mrf.mxu0
        %v4125 = vadd.f32 0.0, %v4124
        %v4126 = vpop.f32.mrf.mxu0
        %v4127 = vadd.f32 0.0, %v4126
        %4128 = vdwg.mxu0
        %4129 = vmatpush.bf16.msra.mxu0 0
        %4130 = vmatpush.bf16.msra.mxu0 0
        %4131 = vmatpush.bf16.msra.mxu0 0
        %4132 = vmatpush.bf16.msra.mxu0 0
        %4133 = vmatpush.bf16.msra.mxu0 0
        %4134 = vmatpush.bf16.msra.mxu0 0
        %4135 = vmatpush.bf16.msra.mxu0 0
        %4136 = vmatpush.bf16.msra.mxu0 %v4029
        %4137 = vmatmul.bf16.gmra.mxu0 %v4005
        %v4138 = vpop.f32.mrf.mxu0
        %v4139 = vadd.f32 0.0, %v4138
        %v4140 = vpop.f32.mrf.mxu0
        %v4141 = vadd.f32 0.0, %v4140
        %4142 = vdwg.mxu0
        %v4143 = vadd.f32 %v3954, %v4041
        %v4144 = vadd.f32 %v3955, %v4055
        %v4145 = vadd.f32 %v3956, %v4069
        %v4146 = vadd.f32 %v3957, %v4083
        %v4147 = vadd.f32 %v3958, %v4097
        %v4148 = vadd.f32 %v3959, %v4111
        %v4149 = vadd.f32 %v3960, %v4125
        %v4150 = vadd.f32 %v3961, %v4139
        %v4151 = vadd.f32 %v3962, %v4043
        %v4152 = vadd.f32 %v3963, %v4057
        %v4153 = vadd.f32 %v3964, %v4071
        %v4154 = vadd.f32 %v3965, %v4085
        %v4155 = vadd.f32 %v3966, %v4099
        %v4156 = vadd.f32 %v3967, %v4113
        %v4157 = vadd.f32 %v3968, %v4127
        %v4158 = vadd.f32 %v3969, %v4141
        %s4159 = scalar_lea.vmem %s3, 120
        %v4160 = vld [vmem:[%s4159] sm:$0xf]
        %v4161 = vld [vmem:[%s4159 + $0x4] sm:$0xf]
        %v4164 = vunpack.c.l.b16 %v4160
        %v4165 = vunpack.c.l.b16 %v4161
        %v4166 = vpack.c.b16 %v4165, %v4164
        %4167 = vrot.lane.b32.xlu0 %v3402, 64
        %v4168 = vpop.permute.xlu0 %4167
        %4169 = vrot.lane.b32.xlu0 %v3403, 64
        %v4170 = vpop.permute.xlu0 %4169
        %4171 = vrot.lane.b32.xlu0 %v3404, 64
        %v4172 = vpop.permute.xlu0 %4171
        %4173 = vrot.lane.b32.xlu0 %v3405, 64
        %v4174 = vpop.permute.xlu0 %4173
        %4175 = vrot.lane.b32.xlu0 %v3406, 64
        %v4176 = vpop.permute.xlu0 %4175
        %4177 = vrot.lane.b32.xlu0 %v3407, 64
        %v4178 = vpop.permute.xlu0 %4177
        %4179 = vrot.lane.b32.xlu0 %v3408, 64
        %v4180 = vpop.permute.xlu0 %4179
        %4181 = vrot.lane.b32.xlu0 %v3409, 64
        %v4182 = vpop.permute.xlu0 %4181
        %4183 = vrot.lane.b32.xlu0 %v3410, 64
        %v4184 = vpop.permute.xlu0 %4183
        %v4185 = vsel %vm2264, %v4168, %v4170
        %v4186 = vsel %vm2264, %v4170, %v4172
        %v4187 = vsel %vm2264, %v4172, %v4174
        %v4188 = vsel %vm2264, %v4174, %v4176
        %v4189 = vsel %vm2264, %v4176, %v4178
        %v4190 = vsel %vm2264, %v4178, %v4180
        %v4191 = vsel %vm2264, %v4180, %v4182
        %v4192 = vsel %vm2264, %v4182, %v4184
        %v4194 = vsel %vm1383, %v4166, 0
        %v4197 = vsel %vm1387, %v4185, 0
        %v4200 = vsel %vm1387, %v4186, 0
        %v4203 = vsel %vm1387, %v4187, 0
        %v4206 = vsel %vm1387, %v4188, 0
        %v4209 = vsel %vm1387, %v4189, 0
        %v4212 = vsel %vm1387, %v4190, 0
        %v4215 = vsel %vm1387, %v4191, 0
        %v4218 = vsel %vm1387, %v4192, 0
        %4220 = vmatpush.bf16.msra.mxu0 0
        %4221 = vmatpush.bf16.msra.mxu0 0
        %4222 = vmatpush.bf16.msra.mxu0 0
        %4223 = vmatpush.bf16.msra.mxu0 0
        %4224 = vmatpush.bf16.msra.mxu0 0
        %4225 = vmatpush.bf16.msra.mxu0 0
        %4226 = vmatpush.bf16.msra.mxu0 0
        %4227 = vmatpush.bf16.msra.mxu0 %v4197
        %4228 = vmatmul.bf16.gmra.mxu0 %v4194
        %v4229 = vpop.f32.mrf.mxu0
        %v4230 = vadd.f32 0.0, %v4229
        %v4231 = vpop.f32.mrf.mxu0
        %v4232 = vadd.f32 0.0, %v4231
        %4233 = vdwg.mxu0
        %4234 = vmatpush.bf16.msra.mxu0 0
        %4235 = vmatpush.bf16.msra.mxu0 0
        %4236 = vmatpush.bf16.msra.mxu0 0
        %4237 = vmatpush.bf16.msra.mxu0 0
        %4238 = vmatpush.bf16.msra.mxu0 0
        %4239 = vmatpush.bf16.msra.mxu0 0
        %4240 = vmatpush.bf16.msra.mxu0 0
        %4241 = vmatpush.bf16.msra.mxu0 %v4200
        %4242 = vmatmul.bf16.gmra.mxu0 %v4194
        %v4243 = vpop.f32.mrf.mxu0
        %v4244 = vadd.f32 0.0, %v4243
        %v4245 = vpop.f32.mrf.mxu0
        %v4246 = vadd.f32 0.0, %v4245
        %4247 = vdwg.mxu0
        %4248 = vmatpush.bf16.msra.mxu0 0
        %4249 = vmatpush.bf16.msra.mxu0 0
        %4250 = vmatpush.bf16.msra.mxu0 0
        %4251 = vmatpush.bf16.msra.mxu0 0
        %4252 = vmatpush.bf16.msra.mxu0 0
        %4253 = vmatpush.bf16.msra.mxu0 0
        %4254 = vmatpush.bf16.msra.mxu0 0
        %4255 = vmatpush.bf16.msra.mxu0 %v4203
        %4256 = vmatmul.bf16.gmra.mxu0 %v4194
        %v4257 = vpop.f32.mrf.mxu0
        %v4258 = vadd.f32 0.0, %v4257
        %v4259 = vpop.f32.mrf.mxu0
        %v4260 = vadd.f32 0.0, %v4259
        %4261 = vdwg.mxu0
        %4262 = vmatpush.bf16.msra.mxu0 0
        %4263 = vmatpush.bf16.msra.mxu0 0
        %4264 = vmatpush.bf16.msra.mxu0 0
        %4265 = vmatpush.bf16.msra.mxu0 0
        %4266 = vmatpush.bf16.msra.mxu0 0
        %4267 = vmatpush.bf16.msra.mxu0 0
        %4268 = vmatpush.bf16.msra.mxu0 0
        %4269 = vmatpush.bf16.msra.mxu0 %v4206
        %4270 = vmatmul.bf16.gmra.mxu0 %v4194
        %v4271 = vpop.f32.mrf.mxu0
        %v4272 = vadd.f32 0.0, %v4271
        %v4273 = vpop.f32.mrf.mxu0
        %v4274 = vadd.f32 0.0, %v4273
        %4275 = vdwg.mxu0
        %4276 = vmatpush.bf16.msra.mxu0 0
        %4277 = vmatpush.bf16.msra.mxu0 0
        %4278 = vmatpush.bf16.msra.mxu0 0
        %4279 = vmatpush.bf16.msra.mxu0 0
        %4280 = vmatpush.bf16.msra.mxu0 0
        %4281 = vmatpush.bf16.msra.mxu0 0
        %4282 = vmatpush.bf16.msra.mxu0 0
        %4283 = vmatpush.bf16.msra.mxu0 %v4209
        %4284 = vmatmul.bf16.gmra.mxu0 %v4194
        %v4285 = vpop.f32.mrf.mxu0
        %v4286 = vadd.f32 0.0, %v4285
        %v4287 = vpop.f32.mrf.mxu0
        %v4288 = vadd.f32 0.0, %v4287
        %4289 = vdwg.mxu0
        %4290 = vmatpush.bf16.msra.mxu0 0
        %4291 = vmatpush.bf16.msra.mxu0 0
        %4292 = vmatpush.bf16.msra.mxu0 0
        %4293 = vmatpush.bf16.msra.mxu0 0
        %4294 = vmatpush.bf16.msra.mxu0 0
        %4295 = vmatpush.bf16.msra.mxu0 0
        %4296 = vmatpush.bf16.msra.mxu0 0
        %4297 = vmatpush.bf16.msra.mxu0 %v4212
        %4298 = vmatmul.bf16.gmra.mxu0 %v4194
        %v4299 = vpop.f32.mrf.mxu0
        %v4300 = vadd.f32 0.0, %v4299
        %v4301 = vpop.f32.mrf.mxu0
        %v4302 = vadd.f32 0.0, %v4301
        %4303 = vdwg.mxu0
        %4304 = vmatpush.bf16.msra.mxu0 0
        %4305 = vmatpush.bf16.msra.mxu0 0
        %4306 = vmatpush.bf16.msra.mxu0 0
        %4307 = vmatpush.bf16.msra.mxu0 0
        %4308 = vmatpush.bf16.msra.mxu0 0
        %4309 = vmatpush.bf16.msra.mxu0 0
        %4310 = vmatpush.bf16.msra.mxu0 0
        %4311 = vmatpush.bf16.msra.mxu0 %v4215
        %4312 = vmatmul.bf16.gmra.mxu0 %v4194
        %v4313 = vpop.f32.mrf.mxu0
        %v4314 = vadd.f32 0.0, %v4313
        %v4315 = vpop.f32.mrf.mxu0
        %v4316 = vadd.f32 0.0, %v4315
        %4317 = vdwg.mxu0
        %4318 = vmatpush.bf16.msra.mxu0 0
        %4319 = vmatpush.bf16.msra.mxu0 0
        %4320 = vmatpush.bf16.msra.mxu0 0
        %4321 = vmatpush.bf16.msra.mxu0 0
        %4322 = vmatpush.bf16.msra.mxu0 0
        %4323 = vmatpush.bf16.msra.mxu0 0
        %4324 = vmatpush.bf16.msra.mxu0 0
        %4325 = vmatpush.bf16.msra.mxu0 %v4218
        %4326 = vmatmul.bf16.gmra.mxu0 %v4194
        %v4327 = vpop.f32.mrf.mxu0
        %v4328 = vadd.f32 0.0, %v4327
        %v4329 = vpop.f32.mrf.mxu0
        %v4330 = vadd.f32 0.0, %v4329
        %4331 = vdwg.mxu0
        %v4332 = vadd.f32 %v4143, %v4230
        %v4333 = vadd.f32 %v4144, %v4244
        %v4334 = vadd.f32 %v4145, %v4258
        %v4335 = vadd.f32 %v4146, %v4272
        %v4336 = vadd.f32 %v4147, %v4286
        %v4337 = vadd.f32 %v4148, %v4300
        %v4338 = vadd.f32 %v4149, %v4314
        %v4339 = vadd.f32 %v4150, %v4328
        %v4340 = vadd.f32 %v4151, %v4232
        %v4341 = vadd.f32 %v4152, %v4246
        %v4342 = vadd.f32 %v4153, %v4260
        %v4343 = vadd.f32 %v4154, %v4274
        %v4344 = vadd.f32 %v4155, %v4288
        %v4345 = vadd.f32 %v4156, %v4302
        %v4346 = vadd.f32 %v4157, %v4316
        %v4347 = vadd.f32 %v4158, %v4330
        %s4348 = scalar_lea.vmem %s3, 128
        %v4349 = vld [vmem:[%s4348] sm:$0xf]
        %v4350 = vld [vmem:[%s4348 + $0x4] sm:$0xf]
        %v4353 = vunpack.c.l.b16 %v4349
        %v4354 = vunpack.c.l.b16 %v4350
        %v4355 = vpack.c.b16 %v4354, %v4353
        %4356 = vrot.lane.b32.xlu0 %v3402, 62
        %v4357 = vpop.permute.xlu0 %4356
        %4358 = vrot.lane.b32.xlu0 %v3403, 62
        %v4359 = vpop.permute.xlu0 %4358
        %4360 = vrot.lane.b32.xlu0 %v3404, 62
        %v4361 = vpop.permute.xlu0 %4360
        %4362 = vrot.lane.b32.xlu0 %v3405, 62
        %v4363 = vpop.permute.xlu0 %4362
        %4364 = vrot.lane.b32.xlu0 %v3406, 62
        %v4365 = vpop.permute.xlu0 %4364
        %4366 = vrot.lane.b32.xlu0 %v3407, 62
        %v4367 = vpop.permute.xlu0 %4366
        %4368 = vrot.lane.b32.xlu0 %v3408, 62
        %v4369 = vpop.permute.xlu0 %4368
        %4370 = vrot.lane.b32.xlu0 %v3409, 62
        %v4371 = vpop.permute.xlu0 %4370
        %4372 = vrot.lane.b32.xlu0 %v3410, 62
        %v4373 = vpop.permute.xlu0 %4372
        %v4374 = vsel %vm2454, %v4357, %v4359
        %v4375 = vsel %vm2454, %v4359, %v4361
        %v4376 = vsel %vm2454, %v4361, %v4363
        %v4377 = vsel %vm2454, %v4363, %v4365
        %v4378 = vsel %vm2454, %v4365, %v4367
        %v4379 = vsel %vm2454, %v4367, %v4369
        %v4380 = vsel %vm2454, %v4369, %v4371
        %v4381 = vsel %vm2454, %v4371, %v4373
        %v4383 = vsel %vm1383, %v4355, 0
        %v4386 = vsel %vm1387, %v4374, 0
        %v4389 = vsel %vm1387, %v4375, 0
        %v4392 = vsel %vm1387, %v4376, 0
        %v4395 = vsel %vm1387, %v4377, 0
        %v4398 = vsel %vm1387, %v4378, 0
        %v4401 = vsel %vm1387, %v4379, 0
        %v4404 = vsel %vm1387, %v4380, 0
        %v4407 = vsel %vm1387, %v4381, 0
        %4409 = vmatpush.bf16.msra.mxu0 0
        %4410 = vmatpush.bf16.msra.mxu0 0
        %4411 = vmatpush.bf16.msra.mxu0 0
        %4412 = vmatpush.bf16.msra.mxu0 0
        %4413 = vmatpush.bf16.msra.mxu0 0
        %4414 = vmatpush.bf16.msra.mxu0 0
        %4415 = vmatpush.bf16.msra.mxu0 0
        %4416 = vmatpush.bf16.msra.mxu0 %v4386
        %4417 = vmatmul.bf16.gmra.mxu0 %v4383
        %v4418 = vpop.f32.mrf.mxu0
        %v4419 = vadd.f32 0.0, %v4418
        %v4420 = vpop.f32.mrf.mxu0
        %v4421 = vadd.f32 0.0, %v4420
        %4422 = vdwg.mxu0
        %4423 = vmatpush.bf16.msra.mxu0 0
        %4424 = vmatpush.bf16.msra.mxu0 0
        %4425 = vmatpush.bf16.msra.mxu0 0
        %4426 = vmatpush.bf16.msra.mxu0 0
        %4427 = vmatpush.bf16.msra.mxu0 0
        %4428 = vmatpush.bf16.msra.mxu0 0
        %4429 = vmatpush.bf16.msra.mxu0 0
        %4430 = vmatpush.bf16.msra.mxu0 %v4389
        %4431 = vmatmul.bf16.gmra.mxu0 %v4383
        %v4432 = vpop.f32.mrf.mxu0
        %v4433 = vadd.f32 0.0, %v4432
        %v4434 = vpop.f32.mrf.mxu0
        %v4435 = vadd.f32 0.0, %v4434
        %4436 = vdwg.mxu0
        %4437 = vmatpush.bf16.msra.mxu0 0
        %4438 = vmatpush.bf16.msra.mxu0 0
        %4439 = vmatpush.bf16.msra.mxu0 0
        %4440 = vmatpush.bf16.msra.mxu0 0
        %4441 = vmatpush.bf16.msra.mxu0 0
        %4442 = vmatpush.bf16.msra.mxu0 0
        %4443 = vmatpush.bf16.msra.mxu0 0
        %4444 = vmatpush.bf16.msra.mxu0 %v4392
        %4445 = vmatmul.bf16.gmra.mxu0 %v4383
        %v4446 = vpop.f32.mrf.mxu0
        %v4447 = vadd.f32 0.0, %v4446
        %v4448 = vpop.f32.mrf.mxu0
        %v4449 = vadd.f32 0.0, %v4448
        %4450 = vdwg.mxu0
        %4451 = vmatpush.bf16.msra.mxu0 0
        %4452 = vmatpush.bf16.msra.mxu0 0
        %4453 = vmatpush.bf16.msra.mxu0 0
        %4454 = vmatpush.bf16.msra.mxu0 0
        %4455 = vmatpush.bf16.msra.mxu0 0
        %4456 = vmatpush.bf16.msra.mxu0 0
        %4457 = vmatpush.bf16.msra.mxu0 0
        %4458 = vmatpush.bf16.msra.mxu0 %v4395
        %4459 = vmatmul.bf16.gmra.mxu0 %v4383
        %v4460 = vpop.f32.mrf.mxu0
        %v4461 = vadd.f32 0.0, %v4460
        %v4462 = vpop.f32.mrf.mxu0
        %v4463 = vadd.f32 0.0, %v4462
        %4464 = vdwg.mxu0
        %4465 = vmatpush.bf16.msra.mxu0 0
        %4466 = vmatpush.bf16.msra.mxu0 0
        %4467 = vmatpush.bf16.msra.mxu0 0
        %4468 = vmatpush.bf16.msra.mxu0 0
        %4469 = vmatpush.bf16.msra.mxu0 0
        %4470 = vmatpush.bf16.msra.mxu0 0
        %4471 = vmatpush.bf16.msra.mxu0 0
        %4472 = vmatpush.bf16.msra.mxu0 %v4398
        %4473 = vmatmul.bf16.gmra.mxu0 %v4383
        %v4474 = vpop.f32.mrf.mxu0
        %v4475 = vadd.f32 0.0, %v4474
        %v4476 = vpop.f32.mrf.mxu0
        %v4477 = vadd.f32 0.0, %v4476
        %4478 = vdwg.mxu0
        %4479 = vmatpush.bf16.msra.mxu0 0
        %4480 = vmatpush.bf16.msra.mxu0 0
        %4481 = vmatpush.bf16.msra.mxu0 0
        %4482 = vmatpush.bf16.msra.mxu0 0
        %4483 = vmatpush.bf16.msra.mxu0 0
        %4484 = vmatpush.bf16.msra.mxu0 0
        %4485 = vmatpush.bf16.msra.mxu0 0
        %4486 = vmatpush.bf16.msra.mxu0 %v4401
        %4487 = vmatmul.bf16.gmra.mxu0 %v4383
        %v4488 = vpop.f32.mrf.mxu0
        %v4489 = vadd.f32 0.0, %v4488
        %v4490 = vpop.f32.mrf.mxu0
        %v4491 = vadd.f32 0.0, %v4490
        %4492 = vdwg.mxu0
        %4493 = vmatpush.bf16.msra.mxu0 0
        %4494 = vmatpush.bf16.msra.mxu0 0
        %4495 = vmatpush.bf16.msra.mxu0 0
        %4496 = vmatpush.bf16.msra.mxu0 0
        %4497 = vmatpush.bf16.msra.mxu0 0
        %4498 = vmatpush.bf16.msra.mxu0 0
        %4499 = vmatpush.bf16.msra.mxu0 0
        %4500 = vmatpush.bf16.msra.mxu0 %v4404
        %4501 = vmatmul.bf16.gmra.mxu0 %v4383
        %v4502 = vpop.f32.mrf.mxu0
        %v4503 = vadd.f32 0.0, %v4502
        %v4504 = vpop.f32.mrf.mxu0
        %v4505 = vadd.f32 0.0, %v4504
        %4506 = vdwg.mxu0
        %4507 = vmatpush.bf16.msra.mxu0 0
        %4508 = vmatpush.bf16.msra.mxu0 0
        %4509 = vmatpush.bf16.msra.mxu0 0
        %4510 = vmatpush.bf16.msra.mxu0 0
        %4511 = vmatpush.bf16.msra.mxu0 0
        %4512 = vmatpush.bf16.msra.mxu0 0
        %4513 = vmatpush.bf16.msra.mxu0 0
        %4514 = vmatpush.bf16.msra.mxu0 %v4407
        %4515 = vmatmul.bf16.gmra.mxu0 %v4383
        %v4516 = vpop.f32.mrf.mxu0
        %v4517 = vadd.f32 0.0, %v4516
        %v4518 = vpop.f32.mrf.mxu0
        %v4519 = vadd.f32 0.0, %v4518
        %4520 = vdwg.mxu0
        %v4521 = vadd.f32 %v4332, %v4419
        %v4522 = vadd.f32 %v4333, %v4433
        %v4523 = vadd.f32 %v4334, %v4447
        %v4524 = vadd.f32 %v4335, %v4461
        %v4525 = vadd.f32 %v4336, %v4475
        %v4526 = vadd.f32 %v4337, %v4489
        %v4527 = vadd.f32 %v4338, %v4503
        %v4528 = vadd.f32 %v4339, %v4517
        %v4529 = vadd.f32 %v4340, %v4421
        %v4530 = vadd.f32 %v4341, %v4435
        %v4531 = vadd.f32 %v4342, %v4449
        %v4532 = vadd.f32 %v4343, %v4463
        %v4533 = vadd.f32 %v4344, %v4477
        %v4534 = vadd.f32 %v4345, %v4491
        %v4535 = vadd.f32 %v4346, %v4505
        %v4536 = vadd.f32 %v4347, %v4519
        %s4537 = scalar_lea.vmem %s3, 136
        %v4538 = vld [vmem:[%s4537] sm:$0xf]
        %v4539 = vld [vmem:[%s4537 + $0x4] sm:$0xf]
        %v4542 = vunpack.c.l.b16 %v4538
        %v4543 = vunpack.c.l.b16 %v4539
        %v4544 = vpack.c.b16 %v4543, %v4542
        %4545 = vrot.lane.b32.xlu0 %v3402, 60
        %v4546 = vpop.permute.xlu0 %4545
        %4547 = vrot.lane.b32.xlu0 %v3403, 60
        %v4548 = vpop.permute.xlu0 %4547
        %4549 = vrot.lane.b32.xlu0 %v3404, 60
        %v4550 = vpop.permute.xlu0 %4549
        %4551 = vrot.lane.b32.xlu0 %v3405, 60
        %v4552 = vpop.permute.xlu0 %4551
        %4553 = vrot.lane.b32.xlu0 %v3406, 60
        %v4554 = vpop.permute.xlu0 %4553
        %4555 = vrot.lane.b32.xlu0 %v3407, 60
        %v4556 = vpop.permute.xlu0 %4555
        %4557 = vrot.lane.b32.xlu0 %v3408, 60
        %v4558 = vpop.permute.xlu0 %4557
        %4559 = vrot.lane.b32.xlu0 %v3409, 60
        %v4560 = vpop.permute.xlu0 %4559
        %4561 = vrot.lane.b32.xlu0 %v3410, 60
        %v4562 = vpop.permute.xlu0 %4561
        %v4563 = vsel %vm2644, %v4546, %v4548
        %v4564 = vsel %vm2644, %v4548, %v4550
        %v4565 = vsel %vm2644, %v4550, %v4552
        %v4566 = vsel %vm2644, %v4552, %v4554
        %v4567 = vsel %vm2644, %v4554, %v4556
        %v4568 = vsel %vm2644, %v4556, %v4558
        %v4569 = vsel %vm2644, %v4558, %v4560
        %v4570 = vsel %vm2644, %v4560, %v4562
        %v4572 = vsel %vm1383, %v4544, 0
        %v4575 = vsel %vm1387, %v4563, 0
        %v4578 = vsel %vm1387, %v4564, 0
        %v4581 = vsel %vm1387, %v4565, 0
        %v4584 = vsel %vm1387, %v4566, 0
        %v4587 = vsel %vm1387, %v4567, 0
        %v4590 = vsel %vm1387, %v4568, 0
        %v4593 = vsel %vm1387, %v4569, 0
        %v4596 = vsel %vm1387, %v4570, 0
        %4598 = vmatpush.bf16.msra.mxu0 0
        %4599 = vmatpush.bf16.msra.mxu0 0
        %4600 = vmatpush.bf16.msra.mxu0 0
        %4601 = vmatpush.bf16.msra.mxu0 0
        %4602 = vmatpush.bf16.msra.mxu0 0
        %4603 = vmatpush.bf16.msra.mxu0 0
        %4604 = vmatpush.bf16.msra.mxu0 0
        %4605 = vmatpush.bf16.msra.mxu0 %v4575
        %4606 = vmatmul.bf16.gmra.mxu0 %v4572
        %v4607 = vpop.f32.mrf.mxu0
        %v4608 = vadd.f32 0.0, %v4607
        %v4609 = vpop.f32.mrf.mxu0
        %v4610 = vadd.f32 0.0, %v4609
        %4611 = vdwg.mxu0
        %4612 = vmatpush.bf16.msra.mxu0 0
        %4613 = vmatpush.bf16.msra.mxu0 0
        %4614 = vmatpush.bf16.msra.mxu0 0
        %4615 = vmatpush.bf16.msra.mxu0 0
        %4616 = vmatpush.bf16.msra.mxu0 0
        %4617 = vmatpush.bf16.msra.mxu0 0
        %4618 = vmatpush.bf16.msra.mxu0 0
        %4619 = vmatpush.bf16.msra.mxu0 %v4578
        %4620 = vmatmul.bf16.gmra.mxu0 %v4572
        %v4621 = vpop.f32.mrf.mxu0
        %v4622 = vadd.f32 0.0, %v4621
        %v4623 = vpop.f32.mrf.mxu0
        %v4624 = vadd.f32 0.0, %v4623
        %4625 = vdwg.mxu0
        %4626 = vmatpush.bf16.msra.mxu0 0
        %4627 = vmatpush.bf16.msra.mxu0 0
        %4628 = vmatpush.bf16.msra.mxu0 0
        %4629 = vmatpush.bf16.msra.mxu0 0
        %4630 = vmatpush.bf16.msra.mxu0 0
        %4631 = vmatpush.bf16.msra.mxu0 0
        %4632 = vmatpush.bf16.msra.mxu0 0
        %4633 = vmatpush.bf16.msra.mxu0 %v4581
        %4634 = vmatmul.bf16.gmra.mxu0 %v4572
        %v4635 = vpop.f32.mrf.mxu0
        %v4636 = vadd.f32 0.0, %v4635
        %v4637 = vpop.f32.mrf.mxu0
        %v4638 = vadd.f32 0.0, %v4637
        %4639 = vdwg.mxu0
        %4640 = vmatpush.bf16.msra.mxu0 0
        %4641 = vmatpush.bf16.msra.mxu0 0
        %4642 = vmatpush.bf16.msra.mxu0 0
        %4643 = vmatpush.bf16.msra.mxu0 0
        %4644 = vmatpush.bf16.msra.mxu0 0
        %4645 = vmatpush.bf16.msra.mxu0 0
        %4646 = vmatpush.bf16.msra.mxu0 0
        %4647 = vmatpush.bf16.msra.mxu0 %v4584
        %4648 = vmatmul.bf16.gmra.mxu0 %v4572
        %v4649 = vpop.f32.mrf.mxu0
        %v4650 = vadd.f32 0.0, %v4649
        %v4651 = vpop.f32.mrf.mxu0
        %v4652 = vadd.f32 0.0, %v4651
        %4653 = vdwg.mxu0
        %4654 = vmatpush.bf16.msra.mxu0 0
        %4655 = vmatpush.bf16.msra.mxu0 0
        %4656 = vmatpush.bf16.msra.mxu0 0
        %4657 = vmatpush.bf16.msra.mxu0 0
        %4658 = vmatpush.bf16.msra.mxu0 0
        %4659 = vmatpush.bf16.msra.mxu0 0
        %4660 = vmatpush.bf16.msra.mxu0 0
        %4661 = vmatpush.bf16.msra.mxu0 %v4587
        %4662 = vmatmul.bf16.gmra.mxu0 %v4572
        %v4663 = vpop.f32.mrf.mxu0
        %v4664 = vadd.f32 0.0, %v4663
        %v4665 = vpop.f32.mrf.mxu0
        %v4666 = vadd.f32 0.0, %v4665
        %4667 = vdwg.mxu0
        %4668 = vmatpush.bf16.msra.mxu0 0
        %4669 = vmatpush.bf16.msra.mxu0 0
        %4670 = vmatpush.bf16.msra.mxu0 0
        %4671 = vmatpush.bf16.msra.mxu0 0
        %4672 = vmatpush.bf16.msra.mxu0 0
        %4673 = vmatpush.bf16.msra.mxu0 0
        %4674 = vmatpush.bf16.msra.mxu0 0
        %4675 = vmatpush.bf16.msra.mxu0 %v4590
        %4676 = vmatmul.bf16.gmra.mxu0 %v4572
        %v4677 = vpop.f32.mrf.mxu0
        %v4678 = vadd.f32 0.0, %v4677
        %v4679 = vpop.f32.mrf.mxu0
        %v4680 = vadd.f32 0.0, %v4679
        %4681 = vdwg.mxu0
        %4682 = vmatpush.bf16.msra.mxu0 0
        %4683 = vmatpush.bf16.msra.mxu0 0
        %4684 = vmatpush.bf16.msra.mxu0 0
        %4685 = vmatpush.bf16.msra.mxu0 0
        %4686 = vmatpush.bf16.msra.mxu0 0
        %4687 = vmatpush.bf16.msra.mxu0 0
        %4688 = vmatpush.bf16.msra.mxu0 0
        %4689 = vmatpush.bf16.msra.mxu0 %v4593
        %4690 = vmatmul.bf16.gmra.mxu0 %v4572
        %v4691 = vpop.f32.mrf.mxu0
        %v4692 = vadd.f32 0.0, %v4691
        %v4693 = vpop.f32.mrf.mxu0
        %v4694 = vadd.f32 0.0, %v4693
        %4695 = vdwg.mxu0
        %4696 = vmatpush.bf16.msra.mxu0 0
        %4697 = vmatpush.bf16.msra.mxu0 0
        %4698 = vmatpush.bf16.msra.mxu0 0
        %4699 = vmatpush.bf16.msra.mxu0 0
        %4700 = vmatpush.bf16.msra.mxu0 0
        %4701 = vmatpush.bf16.msra.mxu0 0
        %4702 = vmatpush.bf16.msra.mxu0 0
        %4703 = vmatpush.bf16.msra.mxu0 %v4596
        %4704 = vmatmul.bf16.gmra.mxu0 %v4572
        %v4705 = vpop.f32.mrf.mxu0
        %v4706 = vadd.f32 0.0, %v4705
        %v4707 = vpop.f32.mrf.mxu0
        %v4708 = vadd.f32 0.0, %v4707
        %4709 = vdwg.mxu0
        %v4710 = vadd.f32 %v4521, %v4608
        %v4711 = vadd.f32 %v4522, %v4622
        %v4712 = vadd.f32 %v4523, %v4636
        %v4713 = vadd.f32 %v4524, %v4650
        %v4714 = vadd.f32 %v4525, %v4664
        %v4715 = vadd.f32 %v4526, %v4678
        %v4716 = vadd.f32 %v4527, %v4692
        %v4717 = vadd.f32 %v4528, %v4706
        %v4718 = vadd.f32 %v4529, %v4610
        %v4719 = vadd.f32 %v4530, %v4624
        %v4720 = vadd.f32 %v4531, %v4638
        %v4721 = vadd.f32 %v4532, %v4652
        %v4722 = vadd.f32 %v4533, %v4666
        %v4723 = vadd.f32 %v4534, %v4680
        %v4724 = vadd.f32 %v4535, %v4694
        %v4725 = vadd.f32 %v4536, %v4708
        %s4726 = scalar_lea.vmem %s3, 144
        %v4727 = vld [vmem:[%s4726] sm:$0xf]
        %v4728 = vld [vmem:[%s4726 + $0x4] sm:$0xf]
        %v4731 = vunpack.c.l.b16 %v4727
        %v4732 = vunpack.c.l.b16 %v4728
        %v4733 = vpack.c.b16 %v4732, %v4731
        %4734 = vrot.lane.b32.xlu0 %v3402, 58
        %v4735 = vpop.permute.xlu0 %4734
        %4736 = vrot.lane.b32.xlu0 %v3403, 58
        %v4737 = vpop.permute.xlu0 %4736
        %4738 = vrot.lane.b32.xlu0 %v3404, 58
        %v4739 = vpop.permute.xlu0 %4738
        %4740 = vrot.lane.b32.xlu0 %v3405, 58
        %v4741 = vpop.permute.xlu0 %4740
        %4742 = vrot.lane.b32.xlu0 %v3406, 58
        %v4743 = vpop.permute.xlu0 %4742
        %4744 = vrot.lane.b32.xlu0 %v3407, 58
        %v4745 = vpop.permute.xlu0 %4744
        %4746 = vrot.lane.b32.xlu0 %v3408, 58
        %v4747 = vpop.permute.xlu0 %4746
        %4748 = vrot.lane.b32.xlu0 %v3409, 58
        %v4749 = vpop.permute.xlu0 %4748
        %4750 = vrot.lane.b32.xlu0 %v3410, 58
        %v4751 = vpop.permute.xlu0 %4750
        %v4752 = vsel %vm2834, %v4735, %v4737
        %v4753 = vsel %vm2834, %v4737, %v4739
        %v4754 = vsel %vm2834, %v4739, %v4741
        %v4755 = vsel %vm2834, %v4741, %v4743
        %v4756 = vsel %vm2834, %v4743, %v4745
        %v4757 = vsel %vm2834, %v4745, %v4747
        %v4758 = vsel %vm2834, %v4747, %v4749
        %v4759 = vsel %vm2834, %v4749, %v4751
        %v4761 = vsel %vm1383, %v4733, 0
        %v4764 = vsel %vm1387, %v4752, 0
        %v4767 = vsel %vm1387, %v4753, 0
        %v4770 = vsel %vm1387, %v4754, 0
        %v4773 = vsel %vm1387, %v4755, 0
        %v4776 = vsel %vm1387, %v4756, 0
        %v4779 = vsel %vm1387, %v4757, 0
        %v4782 = vsel %vm1387, %v4758, 0
        %v4785 = vsel %vm1387, %v4759, 0
        %4787 = vmatpush.bf16.msra.mxu0 0
        %4788 = vmatpush.bf16.msra.mxu0 0
        %4789 = vmatpush.bf16.msra.mxu0 0
        %4790 = vmatpush.bf16.msra.mxu0 0
        %4791 = vmatpush.bf16.msra.mxu0 0
        %4792 = vmatpush.bf16.msra.mxu0 0
        %4793 = vmatpush.bf16.msra.mxu0 0
        %4794 = vmatpush.bf16.msra.mxu0 %v4764
        %4795 = vmatmul.bf16.gmra.mxu0 %v4761
        %v4796 = vpop.f32.mrf.mxu0
        %v4797 = vadd.f32 0.0, %v4796
        %v4798 = vpop.f32.mrf.mxu0
        %v4799 = vadd.f32 0.0, %v4798
        %4800 = vdwg.mxu0
        %4801 = vmatpush.bf16.msra.mxu0 0
        %4802 = vmatpush.bf16.msra.mxu0 0
        %4803 = vmatpush.bf16.msra.mxu0 0
        %4804 = vmatpush.bf16.msra.mxu0 0
        %4805 = vmatpush.bf16.msra.mxu0 0
        %4806 = vmatpush.bf16.msra.mxu0 0
        %4807 = vmatpush.bf16.msra.mxu0 0
        %4808 = vmatpush.bf16.msra.mxu0 %v4767
        %4809 = vmatmul.bf16.gmra.mxu0 %v4761
        %v4810 = vpop.f32.mrf.mxu0
        %v4811 = vadd.f32 0.0, %v4810
        %v4812 = vpop.f32.mrf.mxu0
        %v4813 = vadd.f32 0.0, %v4812
        %4814 = vdwg.mxu0
        %4815 = vmatpush.bf16.msra.mxu0 0
        %4816 = vmatpush.bf16.msra.mxu0 0
        %4817 = vmatpush.bf16.msra.mxu0 0
        %4818 = vmatpush.bf16.msra.mxu0 0
        %4819 = vmatpush.bf16.msra.mxu0 0
        %4820 = vmatpush.bf16.msra.mxu0 0
        %4821 = vmatpush.bf16.msra.mxu0 0
        %4822 = vmatpush.bf16.msra.mxu0 %v4770
        %4823 = vmatmul.bf16.gmra.mxu0 %v4761
        %v4824 = vpop.f32.mrf.mxu0
        %v4825 = vadd.f32 0.0, %v4824
        %v4826 = vpop.f32.mrf.mxu0
        %v4827 = vadd.f32 0.0, %v4826
        %4828 = vdwg.mxu0
        %4829 = vmatpush.bf16.msra.mxu0 0
        %4830 = vmatpush.bf16.msra.mxu0 0
        %4831 = vmatpush.bf16.msra.mxu0 0
        %4832 = vmatpush.bf16.msra.mxu0 0
        %4833 = vmatpush.bf16.msra.mxu0 0
        %4834 = vmatpush.bf16.msra.mxu0 0
        %4835 = vmatpush.bf16.msra.mxu0 0
        %4836 = vmatpush.bf16.msra.mxu0 %v4773
        %4837 = vmatmul.bf16.gmra.mxu0 %v4761
        %v4838 = vpop.f32.mrf.mxu0
        %v4839 = vadd.f32 0.0, %v4838
        %v4840 = vpop.f32.mrf.mxu0
        %v4841 = vadd.f32 0.0, %v4840
        %4842 = vdwg.mxu0
        %4843 = vmatpush.bf16.msra.mxu0 0
        %4844 = vmatpush.bf16.msra.mxu0 0
        %4845 = vmatpush.bf16.msra.mxu0 0
        %4846 = vmatpush.bf16.msra.mxu0 0
        %4847 = vmatpush.bf16.msra.mxu0 0
        %4848 = vmatpush.bf16.msra.mxu0 0
        %4849 = vmatpush.bf16.msra.mxu0 0
        %4850 = vmatpush.bf16.msra.mxu0 %v4776
        %4851 = vmatmul.bf16.gmra.mxu0 %v4761
        %v4852 = vpop.f32.mrf.mxu0
        %v4853 = vadd.f32 0.0, %v4852
        %v4854 = vpop.f32.mrf.mxu0
        %v4855 = vadd.f32 0.0, %v4854
        %4856 = vdwg.mxu0
        %4857 = vmatpush.bf16.msra.mxu0 0
        %4858 = vmatpush.bf16.msra.mxu0 0
        %4859 = vmatpush.bf16.msra.mxu0 0
        %4860 = vmatpush.bf16.msra.mxu0 0
        %4861 = vmatpush.bf16.msra.mxu0 0
        %4862 = vmatpush.bf16.msra.mxu0 0
        %4863 = vmatpush.bf16.msra.mxu0 0
        %4864 = vmatpush.bf16.msra.mxu0 %v4779
        %4865 = vmatmul.bf16.gmra.mxu0 %v4761
        %v4866 = vpop.f32.mrf.mxu0
        %v4867 = vadd.f32 0.0, %v4866
        %v4868 = vpop.f32.mrf.mxu0
        %v4869 = vadd.f32 0.0, %v4868
        %4870 = vdwg.mxu0
        %4871 = vmatpush.bf16.msra.mxu0 0
        %4872 = vmatpush.bf16.msra.mxu0 0
        %4873 = vmatpush.bf16.msra.mxu0 0
        %4874 = vmatpush.bf16.msra.mxu0 0
        %4875 = vmatpush.bf16.msra.mxu0 0
        %4876 = vmatpush.bf16.msra.mxu0 0
        %4877 = vmatpush.bf16.msra.mxu0 0
        %4878 = vmatpush.bf16.msra.mxu0 %v4782
        %4879 = vmatmul.bf16.gmra.mxu0 %v4761
        %v4880 = vpop.f32.mrf.mxu0
        %v4881 = vadd.f32 0.0, %v4880
        %v4882 = vpop.f32.mrf.mxu0
        %v4883 = vadd.f32 0.0, %v4882
        %4884 = vdwg.mxu0
        %4885 = vmatpush.bf16.msra.mxu0 0
        %4886 = vmatpush.bf16.msra.mxu0 0
        %4887 = vmatpush.bf16.msra.mxu0 0
        %4888 = vmatpush.bf16.msra.mxu0 0
        %4889 = vmatpush.bf16.msra.mxu0 0
        %4890 = vmatpush.bf16.msra.mxu0 0
        %4891 = vmatpush.bf16.msra.mxu0 0
        %4892 = vmatpush.bf16.msra.mxu0 %v4785
        %4893 = vmatmul.bf16.gmra.mxu0 %v4761
        %v4894 = vpop.f32.mrf.mxu0
        %v4895 = vadd.f32 0.0, %v4894
        %v4896 = vpop.f32.mrf.mxu0
        %v4897 = vadd.f32 0.0, %v4896
        %4898 = vdwg.mxu0
        %v4899 = vadd.f32 %v4710, %v4797
        %v4900 = vadd.f32 %v4711, %v4811
        %v4901 = vadd.f32 %v4712, %v4825
        %v4902 = vadd.f32 %v4713, %v4839
        %v4903 = vadd.f32 %v4714, %v4853
        %v4904 = vadd.f32 %v4715, %v4867
        %v4905 = vadd.f32 %v4716, %v4881
        %v4906 = vadd.f32 %v4717, %v4895
        %v4907 = vadd.f32 %v4718, %v4799
        %v4908 = vadd.f32 %v4719, %v4813
        %v4909 = vadd.f32 %v4720, %v4827
        %v4910 = vadd.f32 %v4721, %v4841
        %v4911 = vadd.f32 %v4722, %v4855
        %v4912 = vadd.f32 %v4723, %v4869
        %v4913 = vadd.f32 %v4724, %v4883
        %v4914 = vadd.f32 %v4725, %v4897
        %s4915 = scalar_lea.vmem %s3, 152
        %v4916 = vld [vmem:[%s4915] sm:$0xf]
        %v4917 = vld [vmem:[%s4915 + $0x4] sm:$0xf]
        %v4920 = vunpack.c.l.b16 %v4916
        %v4921 = vunpack.c.l.b16 %v4917
        %v4922 = vpack.c.b16 %v4921, %v4920
        %4923 = vrot.lane.b32.xlu0 %v3402, 56
        %v4924 = vpop.permute.xlu0 %4923
        %4925 = vrot.lane.b32.xlu0 %v3403, 56
        %v4926 = vpop.permute.xlu0 %4925
        %4927 = vrot.lane.b32.xlu0 %v3404, 56
        %v4928 = vpop.permute.xlu0 %4927
        %4929 = vrot.lane.b32.xlu0 %v3405, 56
        %v4930 = vpop.permute.xlu0 %4929
        %4931 = vrot.lane.b32.xlu0 %v3406, 56
        %v4932 = vpop.permute.xlu0 %4931
        %4933 = vrot.lane.b32.xlu0 %v3407, 56
        %v4934 = vpop.permute.xlu0 %4933
        %4935 = vrot.lane.b32.xlu0 %v3408, 56
        %v4936 = vpop.permute.xlu0 %4935
        %4937 = vrot.lane.b32.xlu0 %v3409, 56
        %v4938 = vpop.permute.xlu0 %4937
        %4939 = vrot.lane.b32.xlu0 %v3410, 56
        %v4940 = vpop.permute.xlu0 %4939
        %v4941 = vsel %vm3024, %v4924, %v4926
        %v4942 = vsel %vm3024, %v4926, %v4928
        %v4943 = vsel %vm3024, %v4928, %v4930
        %v4944 = vsel %vm3024, %v4930, %v4932
        %v4945 = vsel %vm3024, %v4932, %v4934
        %v4946 = vsel %vm3024, %v4934, %v4936
        %v4947 = vsel %vm3024, %v4936, %v4938
        %v4948 = vsel %vm3024, %v4938, %v4940
        %v4950 = vsel %vm1383, %v4922, 0
        %v4953 = vsel %vm1387, %v4941, 0
        %v4956 = vsel %vm1387, %v4942, 0
        %v4959 = vsel %vm1387, %v4943, 0
        %v4962 = vsel %vm1387, %v4944, 0
        %v4965 = vsel %vm1387, %v4945, 0
        %v4968 = vsel %vm1387, %v4946, 0
        %v4971 = vsel %vm1387, %v4947, 0
        %v4974 = vsel %vm1387, %v4948, 0
        %4976 = vmatpush.bf16.msra.mxu0 0
        %4977 = vmatpush.bf16.msra.mxu0 0
        %4978 = vmatpush.bf16.msra.mxu0 0
        %4979 = vmatpush.bf16.msra.mxu0 0
        %4980 = vmatpush.bf16.msra.mxu0 0
        %4981 = vmatpush.bf16.msra.mxu0 0
        %4982 = vmatpush.bf16.msra.mxu0 0
        %4983 = vmatpush.bf16.msra.mxu0 %v4953
        %4984 = vmatmul.bf16.gmra.mxu0 %v4950
        %v4985 = vpop.f32.mrf.mxu0
        %v4986 = vadd.f32 0.0, %v4985
        %v4987 = vpop.f32.mrf.mxu0
        %v4988 = vadd.f32 0.0, %v4987
        %4989 = vdwg.mxu0
        %4990 = vmatpush.bf16.msra.mxu0 0
        %4991 = vmatpush.bf16.msra.mxu0 0
        %4992 = vmatpush.bf16.msra.mxu0 0
        %4993 = vmatpush.bf16.msra.mxu0 0
        %4994 = vmatpush.bf16.msra.mxu0 0
        %4995 = vmatpush.bf16.msra.mxu0 0
        %4996 = vmatpush.bf16.msra.mxu0 0
        %4997 = vmatpush.bf16.msra.mxu0 %v4956
        %4998 = vmatmul.bf16.gmra.mxu0 %v4950
        %v4999 = vpop.f32.mrf.mxu0
        %v5000 = vadd.f32 0.0, %v4999
        %v5001 = vpop.f32.mrf.mxu0
        %v5002 = vadd.f32 0.0, %v5001
        %5003 = vdwg.mxu0
        %5004 = vmatpush.bf16.msra.mxu0 0
        %5005 = vmatpush.bf16.msra.mxu0 0
        %5006 = vmatpush.bf16.msra.mxu0 0
        %5007 = vmatpush.bf16.msra.mxu0 0
        %5008 = vmatpush.bf16.msra.mxu0 0
        %5009 = vmatpush.bf16.msra.mxu0 0
        %5010 = vmatpush.bf16.msra.mxu0 0
        %5011 = vmatpush.bf16.msra.mxu0 %v4959
        %5012 = vmatmul.bf16.gmra.mxu0 %v4950
        %v5013 = vpop.f32.mrf.mxu0
        %v5014 = vadd.f32 0.0, %v5013
        %v5015 = vpop.f32.mrf.mxu0
        %v5016 = vadd.f32 0.0, %v5015
        %5017 = vdwg.mxu0
        %5018 = vmatpush.bf16.msra.mxu0 0
        %5019 = vmatpush.bf16.msra.mxu0 0
        %5020 = vmatpush.bf16.msra.mxu0 0
        %5021 = vmatpush.bf16.msra.mxu0 0
        %5022 = vmatpush.bf16.msra.mxu0 0
        %5023 = vmatpush.bf16.msra.mxu0 0
        %5024 = vmatpush.bf16.msra.mxu0 0
        %5025 = vmatpush.bf16.msra.mxu0 %v4962
        %5026 = vmatmul.bf16.gmra.mxu0 %v4950
        %v5027 = vpop.f32.mrf.mxu0
        %v5028 = vadd.f32 0.0, %v5027
        %v5029 = vpop.f32.mrf.mxu0
        %v5030 = vadd.f32 0.0, %v5029
        %5031 = vdwg.mxu0
        %5032 = vmatpush.bf16.msra.mxu0 0
        %5033 = vmatpush.bf16.msra.mxu0 0
        %5034 = vmatpush.bf16.msra.mxu0 0
        %5035 = vmatpush.bf16.msra.mxu0 0
        %5036 = vmatpush.bf16.msra.mxu0 0
        %5037 = vmatpush.bf16.msra.mxu0 0
        %5038 = vmatpush.bf16.msra.mxu0 0
        %5039 = vmatpush.bf16.msra.mxu0 %v4965
        %5040 = vmatmul.bf16.gmra.mxu0 %v4950
        %v5041 = vpop.f32.mrf.mxu0
        %v5042 = vadd.f32 0.0, %v5041
        %v5043 = vpop.f32.mrf.mxu0
        %v5044 = vadd.f32 0.0, %v5043
        %5045 = vdwg.mxu0
        %5046 = vmatpush.bf16.msra.mxu0 0
        %5047 = vmatpush.bf16.msra.mxu0 0
        %5048 = vmatpush.bf16.msra.mxu0 0
        %5049 = vmatpush.bf16.msra.mxu0 0
        %5050 = vmatpush.bf16.msra.mxu0 0
        %5051 = vmatpush.bf16.msra.mxu0 0
        %5052 = vmatpush.bf16.msra.mxu0 0
        %5053 = vmatpush.bf16.msra.mxu0 %v4968
        %5054 = vmatmul.bf16.gmra.mxu0 %v4950
        %v5055 = vpop.f32.mrf.mxu0
        %v5056 = vadd.f32 0.0, %v5055
        %v5057 = vpop.f32.mrf.mxu0
        %v5058 = vadd.f32 0.0, %v5057
        %5059 = vdwg.mxu0
        %5060 = vmatpush.bf16.msra.mxu0 0
        %5061 = vmatpush.bf16.msra.mxu0 0
        %5062 = vmatpush.bf16.msra.mxu0 0
        %5063 = vmatpush.bf16.msra.mxu0 0
        %5064 = vmatpush.bf16.msra.mxu0 0
        %5065 = vmatpush.bf16.msra.mxu0 0
        %5066 = vmatpush.bf16.msra.mxu0 0
        %5067 = vmatpush.bf16.msra.mxu0 %v4971
        %5068 = vmatmul.bf16.gmra.mxu0 %v4950
        %v5069 = vpop.f32.mrf.mxu0
        %v5070 = vadd.f32 0.0, %v5069
        %v5071 = vpop.f32.mrf.mxu0
        %v5072 = vadd.f32 0.0, %v5071
        %5073 = vdwg.mxu0
        %5074 = vmatpush.bf16.msra.mxu0 0
        %5075 = vmatpush.bf16.msra.mxu0 0
        %5076 = vmatpush.bf16.msra.mxu0 0
        %5077 = vmatpush.bf16.msra.mxu0 0
        %5078 = vmatpush.bf16.msra.mxu0 0
        %5079 = vmatpush.bf16.msra.mxu0 0
        %5080 = vmatpush.bf16.msra.mxu0 0
        %5081 = vmatpush.bf16.msra.mxu0 %v4974
        %5082 = vmatmul.bf16.gmra.mxu0 %v4950
        %v5083 = vpop.f32.mrf.mxu0
        %v5084 = vadd.f32 0.0, %v5083
        %v5085 = vpop.f32.mrf.mxu0
        %v5086 = vadd.f32 0.0, %v5085
        %5087 = vdwg.mxu0
        %v5088 = vadd.f32 %v4899, %v4986
        %v5089 = vadd.f32 %v4900, %v5000
        %v5090 = vadd.f32 %v4901, %v5014
        %v5091 = vadd.f32 %v4902, %v5028
        %v5092 = vadd.f32 %v4903, %v5042
        %v5093 = vadd.f32 %v4904, %v5056
        %v5094 = vadd.f32 %v4905, %v5070
        %v5095 = vadd.f32 %v4906, %v5084
        %v5096 = vadd.f32 %v4907, %v4988
        %v5097 = vadd.f32 %v4908, %v5002
        %v5098 = vadd.f32 %v4909, %v5016
        %v5099 = vadd.f32 %v4910, %v5030
        %v5100 = vadd.f32 %v4911, %v5044
        %v5101 = vadd.f32 %v4912, %v5058
        %v5102 = vadd.f32 %v4913, %v5072
        %v5103 = vadd.f32 %v4914, %v5086
        %s5104 = scalar_lea.vmem %s3, 160
        %v5105 = vld [vmem:[%s5104] sm:$0xf]
        %v5106 = vld [vmem:[%s5104 + $0x4] sm:$0xf]
        %v5107 = vld [vmem:[#allocation4 + $0x8] sm:$0x77]
        %v5108 = vld [vmem:[#allocation4 + $0x10] sm:$0x77]
        %v5109 = vld [vmem:[#allocation4 + $0x18] sm:$0x77]
        %v5110 = vld [vmem:[#allocation4 + $0x20] sm:$0x77]
        %v5113 = vunpack.c.l.b16 %v5105
        %v5114 = vunpack.c.l.b16 %v5106
        %v5115 = vpack.c.b16 %v5114, %v5113
        %v5120 = vunpack.c.l.b16 %v5107
        %v5121 = vunpack.c.h.b16 %v5107
        %v5122 = vunpack.c.l.b16 %v5108
        %v5123 = vunpack.c.h.b16 %v5108
        %v5124 = vunpack.c.l.b16 %v5109
        %v5125 = vunpack.c.h.b16 %v5109
        %v5126 = vunpack.c.l.b16 %v5110
        %v5127 = vunpack.c.h.b16 %v5110
        %v5128 = vpack.c.b16 %v5120, %v5120
        %v5129 = vpack.c.b16 %v5121, %v5121
        %v5130 = vpack.c.b16 %v5122, %v5122
        %v5131 = vpack.c.b16 %v5123, %v5123
        %v5132 = vpack.c.b16 %v5124, %v5124
        %v5133 = vpack.c.b16 %v5125, %v5125
        %v5134 = vpack.c.b16 %v5126, %v5126
        %v5135 = vpack.c.b16 %v5127, %v5127
        %v5137 = vsel %vm1383, %v5115, 0
        %v5140 = vsel %vm1387, %v5128, 0
        %v5143 = vsel %vm1387, %v5129, 0
        %v5146 = vsel %vm1387, %v5130, 0
        %v5149 = vsel %vm1387, %v5131, 0
        %v5152 = vsel %vm1387, %v5132, 0
        %v5155 = vsel %vm1387, %v5133, 0
        %v5158 = vsel %vm1387, %v5134, 0
        %v5161 = vsel %vm1387, %v5135, 0
        %5163 = vmatpush.bf16.msra.mxu0 0
        %5164 = vmatpush.bf16.msra.mxu0 0
        %5165 = vmatpush.bf16.msra.mxu0 0
        %5166 = vmatpush.bf16.msra.mxu0 0
        %5167 = vmatpush.bf16.msra.mxu0 0
        %5168 = vmatpush.bf16.msra.mxu0 0
        %5169 = vmatpush.bf16.msra.mxu0 0
        %5170 = vmatpush.bf16.msra.mxu0 %v5140
        %5171 = vmatmul.bf16.gmra.mxu0 %v5137
        %v5172 = vpop.f32.mrf.mxu0
        %v5173 = vadd.f32 0.0, %v5172
        %v5174 = vpop.f32.mrf.mxu0
        %v5175 = vadd.f32 0.0, %v5174
        %5176 = vdwg.mxu0
        %5177 = vmatpush.bf16.msra.mxu0 0
        %5178 = vmatpush.bf16.msra.mxu0 0
        %5179 = vmatpush.bf16.msra.mxu0 0
        %5180 = vmatpush.bf16.msra.mxu0 0
        %5181 = vmatpush.bf16.msra.mxu0 0
        %5182 = vmatpush.bf16.msra.mxu0 0
        %5183 = vmatpush.bf16.msra.mxu0 0
        %5184 = vmatpush.bf16.msra.mxu0 %v5143
        %5185 = vmatmul.bf16.gmra.mxu0 %v5137
        %v5186 = vpop.f32.mrf.mxu0
        %v5187 = vadd.f32 0.0, %v5186
        %v5188 = vpop.f32.mrf.mxu0
        %v5189 = vadd.f32 0.0, %v5188
        %5190 = vdwg.mxu0
        %5191 = vmatpush.bf16.msra.mxu0 0
        %5192 = vmatpush.bf16.msra.mxu0 0
        %5193 = vmatpush.bf16.msra.mxu0 0
        %5194 = vmatpush.bf16.msra.mxu0 0
        %5195 = vmatpush.bf16.msra.mxu0 0
        %5196 = vmatpush.bf16.msra.mxu0 0
        %5197 = vmatpush.bf16.msra.mxu0 0
        %5198 = vmatpush.bf16.msra.mxu0 %v5146
        %5199 = vmatmul.bf16.gmra.mxu0 %v5137
        %v5200 = vpop.f32.mrf.mxu0
        %v5201 = vadd.f32 0.0, %v5200
        %v5202 = vpop.f32.mrf.mxu0
        %v5203 = vadd.f32 0.0, %v5202
        %5204 = vdwg.mxu0
        %5205 = vmatpush.bf16.msra.mxu0 0
        %5206 = vmatpush.bf16.msra.mxu0 0
        %5207 = vmatpush.bf16.msra.mxu0 0
        %5208 = vmatpush.bf16.msra.mxu0 0
        %5209 = vmatpush.bf16.msra.mxu0 0
        %5210 = vmatpush.bf16.msra.mxu0 0
        %5211 = vmatpush.bf16.msra.mxu0 0
        %5212 = vmatpush.bf16.msra.mxu0 %v5149
        %5213 = vmatmul.bf16.gmra.mxu0 %v5137
        %v5214 = vpop.f32.mrf.mxu0
        %v5215 = vadd.f32 0.0, %v5214
        %v5216 = vpop.f32.mrf.mxu0
        %v5217 = vadd.f32 0.0, %v5216
        %5218 = vdwg.mxu0
        %5219 = vmatpush.bf16.msra.mxu0 0
        %5220 = vmatpush.bf16.msra.mxu0 0
        %5221 = vmatpush.bf16.msra.mxu0 0
        %5222 = vmatpush.bf16.msra.mxu0 0
        %5223 = vmatpush.bf16.msra.mxu0 0
        %5224 = vmatpush.bf16.msra.mxu0 0
        %5225 = vmatpush.bf16.msra.mxu0 0
        %5226 = vmatpush.bf16.msra.mxu0 %v5152
        %5227 = vmatmul.bf16.gmra.mxu0 %v5137
        %v5228 = vpop.f32.mrf.mxu0
        %v5229 = vadd.f32 0.0, %v5228
        %v5230 = vpop.f32.mrf.mxu0
        %v5231 = vadd.f32 0.0, %v5230
        %5232 = vdwg.mxu0
        %5233 = vmatpush.bf16.msra.mxu0 0
        %5234 = vmatpush.bf16.msra.mxu0 0
        %5235 = vmatpush.bf16.msra.mxu0 0
        %5236 = vmatpush.bf16.msra.mxu0 0
        %5237 = vmatpush.bf16.msra.mxu0 0
        %5238 = vmatpush.bf16.msra.mxu0 0
        %5239 = vmatpush.bf16.msra.mxu0 0
        %5240 = vmatpush.bf16.msra.mxu0 %v5155
        %5241 = vmatmul.bf16.gmra.mxu0 %v5137
        %v5242 = vpop.f32.mrf.mxu0
        %v5243 = vadd.f32 0.0, %v5242
        %v5244 = vpop.f32.mrf.mxu0
        %v5245 = vadd.f32 0.0, %v5244
        %5246 = vdwg.mxu0
        %5247 = vmatpush.bf16.msra.mxu0 0
        %5248 = vmatpush.bf16.msra.mxu0 0
        %5249 = vmatpush.bf16.msra.mxu0 0
        %5250 = vmatpush.bf16.msra.mxu0 0
        %5251 = vmatpush.bf16.msra.mxu0 0
        %5252 = vmatpush.bf16.msra.mxu0 0
        %5253 = vmatpush.bf16.msra.mxu0 0
        %5254 = vmatpush.bf16.msra.mxu0 %v5158
        %5255 = vmatmul.bf16.gmra.mxu0 %v5137
        %v5256 = vpop.f32.mrf.mxu0
        %v5257 = vadd.f32 0.0, %v5256
        %v5258 = vpop.f32.mrf.mxu0
        %v5259 = vadd.f32 0.0, %v5258
        %5260 = vdwg.mxu0
        %5261 = vmatpush.bf16.msra.mxu0 0
        %5262 = vmatpush.bf16.msra.mxu0 0
        %5263 = vmatpush.bf16.msra.mxu0 0
        %5264 = vmatpush.bf16.msra.mxu0 0
        %5265 = vmatpush.bf16.msra.mxu0 0
        %5266 = vmatpush.bf16.msra.mxu0 0
        %5267 = vmatpush.bf16.msra.mxu0 0
        %5268 = vmatpush.bf16.msra.mxu0 %v5161
        %5269 = vmatmul.bf16.gmra.mxu0 %v5137
        %v5270 = vpop.f32.mrf.mxu0
        %v5271 = vadd.f32 0.0, %v5270
        %v5272 = vpop.f32.mrf.mxu0
        %v5273 = vadd.f32 0.0, %v5272
        %5274 = vdwg.mxu0
        %v5275 = vadd.f32 %v5088, %v5173
        %v5276 = vadd.f32 %v5089, %v5187
        %v5277 = vadd.f32 %v5090, %v5201
        %v5278 = vadd.f32 %v5091, %v5215
        %v5279 = vadd.f32 %v5092, %v5229
        %v5280 = vadd.f32 %v5093, %v5243
        %v5281 = vadd.f32 %v5094, %v5257
        %v5282 = vadd.f32 %v5095, %v5271
        %v5283 = vadd.f32 %v5096, %v5175
        %v5284 = vadd.f32 %v5097, %v5189
        %v5285 = vadd.f32 %v5098, %v5203
        %v5286 = vadd.f32 %v5099, %v5217
        %v5287 = vadd.f32 %v5100, %v5231
        %v5288 = vadd.f32 %v5101, %v5245
        %v5289 = vadd.f32 %v5102, %v5259
        %v5290 = vadd.f32 %v5103, %v5273
        %s5291 = scalar_lea.vmem %s3, 168
        %v5292 = vld [vmem:[%s5291] sm:$0xf]
        %v5293 = vld [vmem:[%s5291 + $0x4] sm:$0xf]
        %v5294 = vld [vmem:[#allocation4 + $0x8] sm:$0x77]
        %v5295 = vld [vmem:[#allocation4 + $0x10] sm:$0x77]
        %v5296 = vld [vmem:[#allocation4 + $0x18] sm:$0x77]
        %v5297 = vld [vmem:[#allocation4 + $0x20] sm:$0x77]
        %v5298 = vld [vmem:[#allocation4 + $0x28] sm:$0x7]
        %v5301 = vunpack.c.l.b16 %v5292
        %v5302 = vunpack.c.l.b16 %v5293
        %v5303 = vpack.c.b16 %v5302, %v5301
        %v5309 = vunpack.c.l.b16 %v5294
        %v5310 = vunpack.c.h.b16 %v5294
        %v5311 = vunpack.c.l.b16 %v5295
        %v5312 = vunpack.c.h.b16 %v5295
        %v5313 = vunpack.c.l.b16 %v5296
        %v5314 = vunpack.c.h.b16 %v5296
        %v5315 = vunpack.c.l.b16 %v5297
        %v5316 = vunpack.c.h.b16 %v5297
        %v5317 = vunpack.c.l.b16 %v5298
        %v5318 = vpack.c.b16 %v5309, %v5309
        %v5319 = vpack.c.b16 %v5310, %v5310
        %v5320 = vpack.c.b16 %v5311, %v5311
        %v5321 = vpack.c.b16 %v5312, %v5312
        %v5322 = vpack.c.b16 %v5313, %v5313
        %v5323 = vpack.c.b16 %v5314, %v5314
        %v5324 = vpack.c.b16 %v5315, %v5315
        %v5325 = vpack.c.b16 %v5316, %v5316
        %v5326 = vpack.c.b16 %v5317, %v5317
        %5327 = vrot.lane.b32.xlu0 %v5318, 126
        %v5328 = vpop.permute.xlu0 %5327
        %5329 = vrot.lane.b32.xlu0 %v5319, 126
        %v5330 = vpop.permute.xlu0 %5329
        %5331 = vrot.lane.b32.xlu0 %v5320, 126
        %v5332 = vpop.permute.xlu0 %5331
        %5333 = vrot.lane.b32.xlu0 %v5321, 126
        %v5334 = vpop.permute.xlu0 %5333
        %5335 = vrot.lane.b32.xlu0 %v5322, 126
        %v5336 = vpop.permute.xlu0 %5335
        %5337 = vrot.lane.b32.xlu0 %v5323, 126
        %v5338 = vpop.permute.xlu0 %5337
        %5339 = vrot.lane.b32.xlu0 %v5324, 126
        %v5340 = vpop.permute.xlu0 %5339
        %5341 = vrot.lane.b32.xlu0 %v5325, 126
        %v5342 = vpop.permute.xlu0 %5341
        %5343 = vrot.lane.b32.xlu0 %v5326, 126
        %v5344 = vpop.permute.xlu0 %5343
        %v5345 = vsel %vm1374, %v5328, %v5330
        %v5346 = vsel %vm1374, %v5330, %v5332
        %v5347 = vsel %vm1374, %v5332, %v5334
        %v5348 = vsel %vm1374, %v5334, %v5336
        %v5349 = vsel %vm1374, %v5336, %v5338
        %v5350 = vsel %vm1374, %v5338, %v5340
        %v5351 = vsel %vm1374, %v5340, %v5342
        %v5352 = vsel %vm1374, %v5342, %v5344
        %v5354 = vsel %vm1383, %v5303, 0
        %v5357 = vsel %vm1387, %v5345, 0
        %v5360 = vsel %vm1387, %v5346, 0
        %v5363 = vsel %vm1387, %v5347, 0
        %v5366 = vsel %vm1387, %v5348, 0
        %v5369 = vsel %vm1387, %v5349, 0
        %v5372 = vsel %vm1387, %v5350, 0
        %v5375 = vsel %vm1387, %v5351, 0
        %v5378 = vsel %vm1387, %v5352, 0
        %5380 = vmatpush.bf16.msra.mxu0 0
        %5381 = vmatpush.bf16.msra.mxu0 0
        %5382 = vmatpush.bf16.msra.mxu0 0
        %5383 = vmatpush.bf16.msra.mxu0 0
        %5384 = vmatpush.bf16.msra.mxu0 0
        %5385 = vmatpush.bf16.msra.mxu0 0
        %5386 = vmatpush.bf16.msra.mxu0 0
        %5387 = vmatpush.bf16.msra.mxu0 %v5357
        %5388 = vmatmul.bf16.gmra.mxu0 %v5354
        %v5389 = vpop.f32.mrf.mxu0
        %v5390 = vadd.f32 0.0, %v5389
        %v5391 = vpop.f32.mrf.mxu0
        %v5392 = vadd.f32 0.0, %v5391
        %5393 = vdwg.mxu0
        %5394 = vmatpush.bf16.msra.mxu0 0
        %5395 = vmatpush.bf16.msra.mxu0 0
        %5396 = vmatpush.bf16.msra.mxu0 0
        %5397 = vmatpush.bf16.msra.mxu0 0
        %5398 = vmatpush.bf16.msra.mxu0 0
        %5399 = vmatpush.bf16.msra.mxu0 0
        %5400 = vmatpush.bf16.msra.mxu0 0
        %5401 = vmatpush.bf16.msra.mxu0 %v5360
        %5402 = vmatmul.bf16.gmra.mxu0 %v5354
        %v5403 = vpop.f32.mrf.mxu0
        %v5404 = vadd.f32 0.0, %v5403
        %v5405 = vpop.f32.mrf.mxu0
        %v5406 = vadd.f32 0.0, %v5405
        %5407 = vdwg.mxu0
        %5408 = vmatpush.bf16.msra.mxu0 0
        %5409 = vmatpush.bf16.msra.mxu0 0
        %5410 = vmatpush.bf16.msra.mxu0 0
        %5411 = vmatpush.bf16.msra.mxu0 0
        %5412 = vmatpush.bf16.msra.mxu0 0
        %5413 = vmatpush.bf16.msra.mxu0 0
        %5414 = vmatpush.bf16.msra.mxu0 0
        %5415 = vmatpush.bf16.msra.mxu0 %v5363
        %5416 = vmatmul.bf16.gmra.mxu0 %v5354
        %v5417 = vpop.f32.mrf.mxu0
        %v5418 = vadd.f32 0.0, %v5417
        %v5419 = vpop.f32.mrf.mxu0
        %v5420 = vadd.f32 0.0, %v5419
        %5421 = vdwg.mxu0
        %5422 = vmatpush.bf16.msra.mxu0 0
        %5423 = vmatpush.bf16.msra.mxu0 0
        %5424 = vmatpush.bf16.msra.mxu0 0
        %5425 = vmatpush.bf16.msra.mxu0 0
        %5426 = vmatpush.bf16.msra.mxu0 0
        %5427 = vmatpush.bf16.msra.mxu0 0
        %5428 = vmatpush.bf16.msra.mxu0 0
        %5429 = vmatpush.bf16.msra.mxu0 %v5366
        %5430 = vmatmul.bf16.gmra.mxu0 %v5354
        %v5431 = vpop.f32.mrf.mxu0
        %v5432 = vadd.f32 0.0, %v5431
        %v5433 = vpop.f32.mrf.mxu0
        %v5434 = vadd.f32 0.0, %v5433
        %5435 = vdwg.mxu0
        %5436 = vmatpush.bf16.msra.mxu0 0
        %5437 = vmatpush.bf16.msra.mxu0 0
        %5438 = vmatpush.bf16.msra.mxu0 0
        %5439 = vmatpush.bf16.msra.mxu0 0
        %5440 = vmatpush.bf16.msra.mxu0 0
        %5441 = vmatpush.bf16.msra.mxu0 0
        %5442 = vmatpush.bf16.msra.mxu0 0
        %5443 = vmatpush.bf16.msra.mxu0 %v5369
        %5444 = vmatmul.bf16.gmra.mxu0 %v5354
        %v5445 = vpop.f32.mrf.mxu0
        %v5446 = vadd.f32 0.0, %v5445
        %v5447 = vpop.f32.mrf.mxu0
        %v5448 = vadd.f32 0.0, %v5447
        %5449 = vdwg.mxu0
        %5450 = vmatpush.bf16.msra.mxu0 0
        %5451 = vmatpush.bf16.msra.mxu0 0
        %5452 = vmatpush.bf16.msra.mxu0 0
        %5453 = vmatpush.bf16.msra.mxu0 0
        %5454 = vmatpush.bf16.msra.mxu0 0
        %5455 = vmatpush.bf16.msra.mxu0 0
        %5456 = vmatpush.bf16.msra.mxu0 0
        %5457 = vmatpush.bf16.msra.mxu0 %v5372
        %5458 = vmatmul.bf16.gmra.mxu0 %v5354
        %v5459 = vpop.f32.mrf.mxu0
        %v5460 = vadd.f32 0.0, %v5459
        %v5461 = vpop.f32.mrf.mxu0
        %v5462 = vadd.f32 0.0, %v5461
        %5463 = vdwg.mxu0
        %5464 = vmatpush.bf16.msra.mxu0 0
        %5465 = vmatpush.bf16.msra.mxu0 0
        %5466 = vmatpush.bf16.msra.mxu0 0
        %5467 = vmatpush.bf16.msra.mxu0 0
        %5468 = vmatpush.bf16.msra.mxu0 0
        %5469 = vmatpush.bf16.msra.mxu0 0
        %5470 = vmatpush.bf16.msra.mxu0 0
        %5471 = vmatpush.bf16.msra.mxu0 %v5375
        %5472 = vmatmul.bf16.gmra.mxu0 %v5354
        %v5473 = vpop.f32.mrf.mxu0
        %v5474 = vadd.f32 0.0, %v5473
        %v5475 = vpop.f32.mrf.mxu0
        %v5476 = vadd.f32 0.0, %v5475
        %5477 = vdwg.mxu0
        %5478 = vmatpush.bf16.msra.mxu0 0
        %5479 = vmatpush.bf16.msra.mxu0 0
        %5480 = vmatpush.bf16.msra.mxu0 0
        %5481 = vmatpush.bf16.msra.mxu0 0
        %5482 = vmatpush.bf16.msra.mxu0 0
        %5483 = vmatpush.bf16.msra.mxu0 0
        %5484 = vmatpush.bf16.msra.mxu0 0
        %5485 = vmatpush.bf16.msra.mxu0 %v5378
        %5486 = vmatmul.bf16.gmra.mxu0 %v5354
        %v5487 = vpop.f32.mrf.mxu0
        %v5488 = vadd.f32 0.0, %v5487
        %v5489 = vpop.f32.mrf.mxu0
        %v5490 = vadd.f32 0.0, %v5489
        %5491 = vdwg.mxu0
        %v5492 = vadd.f32 %v5275, %v5390
        %v5493 = vadd.f32 %v5276, %v5404
        %v5494 = vadd.f32 %v5277, %v5418
        %v5495 = vadd.f32 %v5278, %v5432
        %v5496 = vadd.f32 %v5279, %v5446
        %v5497 = vadd.f32 %v5280, %v5460
        %v5498 = vadd.f32 %v5281, %v5474
        %v5499 = vadd.f32 %v5282, %v5488
        %v5500 = vadd.f32 %v5283, %v5392
        %v5501 = vadd.f32 %v5284, %v5406
        %v5502 = vadd.f32 %v5285, %v5420
        %v5503 = vadd.f32 %v5286, %v5434
        %v5504 = vadd.f32 %v5287, %v5448
        %v5505 = vadd.f32 %v5288, %v5462
        %v5506 = vadd.f32 %v5289, %v5476
        %v5507 = vadd.f32 %v5290, %v5490
        %s5508 = scalar_lea.vmem %s3, 176
        %v5509 = vld [vmem:[%s5508] sm:$0xf]
        %v5510 = vld [vmem:[%s5508 + $0x4] sm:$0xf]
        %v5513 = vunpack.c.l.b16 %v5509
        %v5514 = vunpack.c.l.b16 %v5510
        %v5515 = vpack.c.b16 %v5514, %v5513
        %5516 = vrot.lane.b32.xlu0 %v5318, 124
        %v5517 = vpop.permute.xlu0 %5516
        %5518 = vrot.lane.b32.xlu0 %v5319, 124
        %v5519 = vpop.permute.xlu0 %5518
        %5520 = vrot.lane.b32.xlu0 %v5320, 124
        %v5521 = vpop.permute.xlu0 %5520
        %5522 = vrot.lane.b32.xlu0 %v5321, 124
        %v5523 = vpop.permute.xlu0 %5522
        %5524 = vrot.lane.b32.xlu0 %v5322, 124
        %v5525 = vpop.permute.xlu0 %5524
        %5526 = vrot.lane.b32.xlu0 %v5323, 124
        %v5527 = vpop.permute.xlu0 %5526
        %5528 = vrot.lane.b32.xlu0 %v5324, 124
        %v5529 = vpop.permute.xlu0 %5528
        %5530 = vrot.lane.b32.xlu0 %v5325, 124
        %v5531 = vpop.permute.xlu0 %5530
        %5532 = vrot.lane.b32.xlu0 %v5326, 124
        %v5533 = vpop.permute.xlu0 %5532
        %v5534 = vsel %vm1694, %v5517, %v5519
        %v5535 = vsel %vm1694, %v5519, %v5521
        %v5536 = vsel %vm1694, %v5521, %v5523
        %v5537 = vsel %vm1694, %v5523, %v5525
        %v5538 = vsel %vm1694, %v5525, %v5527
        %v5539 = vsel %vm1694, %v5527, %v5529
        %v5540 = vsel %vm1694, %v5529, %v5531
        %v5541 = vsel %vm1694, %v5531, %v5533
        %v5543 = vsel %vm1383, %v5515, 0
        %v5546 = vsel %vm1387, %v5534, 0
        %v5549 = vsel %vm1387, %v5535, 0
        %v5552 = vsel %vm1387, %v5536, 0
        %v5555 = vsel %vm1387, %v5537, 0
        %v5558 = vsel %vm1387, %v5538, 0
        %v5561 = vsel %vm1387, %v5539, 0
        %v5564 = vsel %vm1387, %v5540, 0
        %v5567 = vsel %vm1387, %v5541, 0
        %5569 = vmatpush.bf16.msra.mxu0 0
        %5570 = vmatpush.bf16.msra.mxu0 0
        %5571 = vmatpush.bf16.msra.mxu0 0
        %5572 = vmatpush.bf16.msra.mxu0 0
        %5573 = vmatpush.bf16.msra.mxu0 0
        %5574 = vmatpush.bf16.msra.mxu0 0
        %5575 = vmatpush.bf16.msra.mxu0 0
        %5576 = vmatpush.bf16.msra.mxu0 %v5546
        %5577 = vmatmul.bf16.gmra.mxu0 %v5543
        %v5578 = vpop.f32.mrf.mxu0
        %v5579 = vadd.f32 0.0, %v5578
        %v5580 = vpop.f32.mrf.mxu0
        %v5581 = vadd.f32 0.0, %v5580
        %5582 = vdwg.mxu0
        %5583 = vmatpush.bf16.msra.mxu0 0
        %5584 = vmatpush.bf16.msra.mxu0 0
        %5585 = vmatpush.bf16.msra.mxu0 0
        %5586 = vmatpush.bf16.msra.mxu0 0
        %5587 = vmatpush.bf16.msra.mxu0 0
        %5588 = vmatpush.bf16.msra.mxu0 0
        %5589 = vmatpush.bf16.msra.mxu0 0
        %5590 = vmatpush.bf16.msra.mxu0 %v5549
        %5591 = vmatmul.bf16.gmra.mxu0 %v5543
        %v5592 = vpop.f32.mrf.mxu0
        %v5593 = vadd.f32 0.0, %v5592
        %v5594 = vpop.f32.mrf.mxu0
        %v5595 = vadd.f32 0.0, %v5594
        %5596 = vdwg.mxu0
        %5597 = vmatpush.bf16.msra.mxu0 0
        %5598 = vmatpush.bf16.msra.mxu0 0
        %5599 = vmatpush.bf16.msra.mxu0 0
        %5600 = vmatpush.bf16.msra.mxu0 0
        %5601 = vmatpush.bf16.msra.mxu0 0
        %5602 = vmatpush.bf16.msra.mxu0 0
        %5603 = vmatpush.bf16.msra.mxu0 0
        %5604 = vmatpush.bf16.msra.mxu0 %v5552
        %5605 = vmatmul.bf16.gmra.mxu0 %v5543
        %v5606 = vpop.f32.mrf.mxu0
        %v5607 = vadd.f32 0.0, %v5606
        %v5608 = vpop.f32.mrf.mxu0
        %v5609 = vadd.f32 0.0, %v5608
        %5610 = vdwg.mxu0
        %5611 = vmatpush.bf16.msra.mxu0 0
        %5612 = vmatpush.bf16.msra.mxu0 0
        %5613 = vmatpush.bf16.msra.mxu0 0
        %5614 = vmatpush.bf16.msra.mxu0 0
        %5615 = vmatpush.bf16.msra.mxu0 0
        %5616 = vmatpush.bf16.msra.mxu0 0
        %5617 = vmatpush.bf16.msra.mxu0 0
        %5618 = vmatpush.bf16.msra.mxu0 %v5555
        %5619 = vmatmul.bf16.gmra.mxu0 %v5543
        %v5620 = vpop.f32.mrf.mxu0
        %v5621 = vadd.f32 0.0, %v5620
        %v5622 = vpop.f32.mrf.mxu0
        %v5623 = vadd.f32 0.0, %v5622
        %5624 = vdwg.mxu0
        %5625 = vmatpush.bf16.msra.mxu0 0
        %5626 = vmatpush.bf16.msra.mxu0 0
        %5627 = vmatpush.bf16.msra.mxu0 0
        %5628 = vmatpush.bf16.msra.mxu0 0
        %5629 = vmatpush.bf16.msra.mxu0 0
        %5630 = vmatpush.bf16.msra.mxu0 0
        %5631 = vmatpush.bf16.msra.mxu0 0
        %5632 = vmatpush.bf16.msra.mxu0 %v5558
        %5633 = vmatmul.bf16.gmra.mxu0 %v5543
        %v5634 = vpop.f32.mrf.mxu0
        %v5635 = vadd.f32 0.0, %v5634
        %v5636 = vpop.f32.mrf.mxu0
        %v5637 = vadd.f32 0.0, %v5636
        %5638 = vdwg.mxu0
        %5639 = vmatpush.bf16.msra.mxu0 0
        %5640 = vmatpush.bf16.msra.mxu0 0
        %5641 = vmatpush.bf16.msra.mxu0 0
        %5642 = vmatpush.bf16.msra.mxu0 0
        %5643 = vmatpush.bf16.msra.mxu0 0
        %5644 = vmatpush.bf16.msra.mxu0 0
        %5645 = vmatpush.bf16.msra.mxu0 0
        %5646 = vmatpush.bf16.msra.mxu0 %v5561
        %5647 = vmatmul.bf16.gmra.mxu0 %v5543
        %v5648 = vpop.f32.mrf.mxu0
        %v5649 = vadd.f32 0.0, %v5648
        %v5650 = vpop.f32.mrf.mxu0
        %v5651 = vadd.f32 0.0, %v5650
        %5652 = vdwg.mxu0
        %5653 = vmatpush.bf16.msra.mxu0 0
        %5654 = vmatpush.bf16.msra.mxu0 0
        %5655 = vmatpush.bf16.msra.mxu0 0
        %5656 = vmatpush.bf16.msra.mxu0 0
        %5657 = vmatpush.bf16.msra.mxu0 0
        %5658 = vmatpush.bf16.msra.mxu0 0
        %5659 = vmatpush.bf16.msra.mxu0 0
        %5660 = vmatpush.bf16.msra.mxu0 %v5564
        %5661 = vmatmul.bf16.gmra.mxu0 %v5543
        %v5662 = vpop.f32.mrf.mxu0
        %v5663 = vadd.f32 0.0, %v5662
        %v5664 = vpop.f32.mrf.mxu0
        %v5665 = vadd.f32 0.0, %v5664
        %5666 = vdwg.mxu0
        %5667 = vmatpush.bf16.msra.mxu0 0
        %5668 = vmatpush.bf16.msra.mxu0 0
        %5669 = vmatpush.bf16.msra.mxu0 0
        %5670 = vmatpush.bf16.msra.mxu0 0
        %5671 = vmatpush.bf16.msra.mxu0 0
        %5672 = vmatpush.bf16.msra.mxu0 0
        %5673 = vmatpush.bf16.msra.mxu0 0
        %5674 = vmatpush.bf16.msra.mxu0 %v5567
        %5675 = vmatmul.bf16.gmra.mxu0 %v5543
        %v5676 = vpop.f32.mrf.mxu0
        %v5677 = vadd.f32 0.0, %v5676
        %v5678 = vpop.f32.mrf.mxu0
        %v5679 = vadd.f32 0.0, %v5678
        %5680 = vdwg.mxu0
        %v5681 = vadd.f32 %v5492, %v5579
        %v5682 = vadd.f32 %v5493, %v5593
        %v5683 = vadd.f32 %v5494, %v5607
        %v5684 = vadd.f32 %v5495, %v5621
        %v5685 = vadd.f32 %v5496, %v5635
        %v5686 = vadd.f32 %v5497, %v5649
        %v5687 = vadd.f32 %v5498, %v5663
        %v5688 = vadd.f32 %v5499, %v5677
        %v5689 = vadd.f32 %v5500, %v5581
        %v5690 = vadd.f32 %v5501, %v5595
        %v5691 = vadd.f32 %v5502, %v5609
        %v5692 = vadd.f32 %v5503, %v5623
        %v5693 = vadd.f32 %v5504, %v5637
        %v5694 = vadd.f32 %v5505, %v5651
        %v5695 = vadd.f32 %v5506, %v5665
        %v5696 = vadd.f32 %v5507, %v5679
        %s5697 = scalar_lea.vmem %s3, 184
        %v5698 = vld [vmem:[%s5697] sm:$0xf]
        %v5699 = vld [vmem:[%s5697 + $0x4] sm:$0xf]
        %v5702 = vunpack.c.l.b16 %v5698
        %v5703 = vunpack.c.l.b16 %v5699
        %v5704 = vpack.c.b16 %v5703, %v5702
        %5705 = vrot.lane.b32.xlu0 %v5318, 122
        %v5706 = vpop.permute.xlu0 %5705
        %5707 = vrot.lane.b32.xlu0 %v5319, 122
        %v5708 = vpop.permute.xlu0 %5707
        %5709 = vrot.lane.b32.xlu0 %v5320, 122
        %v5710 = vpop.permute.xlu0 %5709
        %5711 = vrot.lane.b32.xlu0 %v5321, 122
        %v5712 = vpop.permute.xlu0 %5711
        %5713 = vrot.lane.b32.xlu0 %v5322, 122
        %v5714 = vpop.permute.xlu0 %5713
        %5715 = vrot.lane.b32.xlu0 %v5323, 122
        %v5716 = vpop.permute.xlu0 %5715
        %5717 = vrot.lane.b32.xlu0 %v5324, 122
        %v5718 = vpop.permute.xlu0 %5717
        %5719 = vrot.lane.b32.xlu0 %v5325, 122
        %v5720 = vpop.permute.xlu0 %5719
        %5721 = vrot.lane.b32.xlu0 %v5326, 122
        %v5722 = vpop.permute.xlu0 %5721
        %v5723 = vsel %vm1884, %v5706, %v5708
        %v5724 = vsel %vm1884, %v5708, %v5710
        %v5725 = vsel %vm1884, %v5710, %v5712
        %v5726 = vsel %vm1884, %v5712, %v5714
        %v5727 = vsel %vm1884, %v5714, %v5716
        %v5728 = vsel %vm1884, %v5716, %v5718
        %v5729 = vsel %vm1884, %v5718, %v5720
        %v5730 = vsel %vm1884, %v5720, %v5722
        %v5732 = vsel %vm1383, %v5704, 0
        %v5735 = vsel %vm1387, %v5723, 0
        %v5738 = vsel %vm1387, %v5724, 0
        %v5741 = vsel %vm1387, %v5725, 0
        %v5744 = vsel %vm1387, %v5726, 0
        %v5747 = vsel %vm1387, %v5727, 0
        %v5750 = vsel %vm1387, %v5728, 0
        %v5753 = vsel %vm1387, %v5729, 0
        %v5756 = vsel %vm1387, %v5730, 0
        %5758 = vmatpush.bf16.msra.mxu0 0
        %5759 = vmatpush.bf16.msra.mxu0 0
        %5760 = vmatpush.bf16.msra.mxu0 0
        %5761 = vmatpush.bf16.msra.mxu0 0
        %5762 = vmatpush.bf16.msra.mxu0 0
        %5763 = vmatpush.bf16.msra.mxu0 0
        %5764 = vmatpush.bf16.msra.mxu0 0
        %5765 = vmatpush.bf16.msra.mxu0 %v5735
        %5766 = vmatmul.bf16.gmra.mxu0 %v5732
        %v5767 = vpop.f32.mrf.mxu0
        %v5768 = vadd.f32 0.0, %v5767
        %v5769 = vpop.f32.mrf.mxu0
        %v5770 = vadd.f32 0.0, %v5769
        %5771 = vdwg.mxu0
        %5772 = vmatpush.bf16.msra.mxu0 0
        %5773 = vmatpush.bf16.msra.mxu0 0
        %5774 = vmatpush.bf16.msra.mxu0 0
        %5775 = vmatpush.bf16.msra.mxu0 0
        %5776 = vmatpush.bf16.msra.mxu0 0
        %5777 = vmatpush.bf16.msra.mxu0 0
        %5778 = vmatpush.bf16.msra.mxu0 0
        %5779 = vmatpush.bf16.msra.mxu0 %v5738
        %5780 = vmatmul.bf16.gmra.mxu0 %v5732
        %v5781 = vpop.f32.mrf.mxu0
        %v5782 = vadd.f32 0.0, %v5781
        %v5783 = vpop.f32.mrf.mxu0
        %v5784 = vadd.f32 0.0, %v5783
        %5785 = vdwg.mxu0
        %5786 = vmatpush.bf16.msra.mxu0 0
        %5787 = vmatpush.bf16.msra.mxu0 0
        %5788 = vmatpush.bf16.msra.mxu0 0
        %5789 = vmatpush.bf16.msra.mxu0 0
        %5790 = vmatpush.bf16.msra.mxu0 0
        %5791 = vmatpush.bf16.msra.mxu0 0
        %5792 = vmatpush.bf16.msra.mxu0 0
        %5793 = vmatpush.bf16.msra.mxu0 %v5741
        %5794 = vmatmul.bf16.gmra.mxu0 %v5732
        %v5795 = vpop.f32.mrf.mxu0
        %v5796 = vadd.f32 0.0, %v5795
        %v5797 = vpop.f32.mrf.mxu0
        %v5798 = vadd.f32 0.0, %v5797
        %5799 = vdwg.mxu0
        %5800 = vmatpush.bf16.msra.mxu0 0
        %5801 = vmatpush.bf16.msra.mxu0 0
        %5802 = vmatpush.bf16.msra.mxu0 0
        %5803 = vmatpush.bf16.msra.mxu0 0
        %5804 = vmatpush.bf16.msra.mxu0 0
        %5805 = vmatpush.bf16.msra.mxu0 0
        %5806 = vmatpush.bf16.msra.mxu0 0
        %5807 = vmatpush.bf16.msra.mxu0 %v5744
        %5808 = vmatmul.bf16.gmra.mxu0 %v5732
        %v5809 = vpop.f32.mrf.mxu0
        %v5810 = vadd.f32 0.0, %v5809
        %v5811 = vpop.f32.mrf.mxu0
        %v5812 = vadd.f32 0.0, %v5811
        %5813 = vdwg.mxu0
        %5814 = vmatpush.bf16.msra.mxu0 0
        %5815 = vmatpush.bf16.msra.mxu0 0
        %5816 = vmatpush.bf16.msra.mxu0 0
        %5817 = vmatpush.bf16.msra.mxu0 0
        %5818 = vmatpush.bf16.msra.mxu0 0
        %5819 = vmatpush.bf16.msra.mxu0 0
        %5820 = vmatpush.bf16.msra.mxu0 0
        %5821 = vmatpush.bf16.msra.mxu0 %v5747
        %5822 = vmatmul.bf16.gmra.mxu0 %v5732
        %v5823 = vpop.f32.mrf.mxu0
        %v5824 = vadd.f32 0.0, %v5823
        %v5825 = vpop.f32.mrf.mxu0
        %v5826 = vadd.f32 0.0, %v5825
        %5827 = vdwg.mxu0
        %5828 = vmatpush.bf16.msra.mxu0 0
        %5829 = vmatpush.bf16.msra.mxu0 0
        %5830 = vmatpush.bf16.msra.mxu0 0
        %5831 = vmatpush.bf16.msra.mxu0 0
        %5832 = vmatpush.bf16.msra.mxu0 0
        %5833 = vmatpush.bf16.msra.mxu0 0
        %5834 = vmatpush.bf16.msra.mxu0 0
        %5835 = vmatpush.bf16.msra.mxu0 %v5750
        %5836 = vmatmul.bf16.gmra.mxu0 %v5732
        %v5837 = vpop.f32.mrf.mxu0
        %v5838 = vadd.f32 0.0, %v5837
        %v5839 = vpop.f32.mrf.mxu0
        %v5840 = vadd.f32 0.0, %v5839
        %5841 = vdwg.mxu0
        %5842 = vmatpush.bf16.msra.mxu0 0
        %5843 = vmatpush.bf16.msra.mxu0 0
        %5844 = vmatpush.bf16.msra.mxu0 0
        %5845 = vmatpush.bf16.msra.mxu0 0
        %5846 = vmatpush.bf16.msra.mxu0 0
        %5847 = vmatpush.bf16.msra.mxu0 0
        %5848 = vmatpush.bf16.msra.mxu0 0
        %5849 = vmatpush.bf16.msra.mxu0 %v5753
        %5850 = vmatmul.bf16.gmra.mxu0 %v5732
        %v5851 = vpop.f32.mrf.mxu0
        %v5852 = vadd.f32 0.0, %v5851
        %v5853 = vpop.f32.mrf.mxu0
        %v5854 = vadd.f32 0.0, %v5853
        %5855 = vdwg.mxu0
        %5856 = vmatpush.bf16.msra.mxu0 0
        %5857 = vmatpush.bf16.msra.mxu0 0
        %5858 = vmatpush.bf16.msra.mxu0 0
        %5859 = vmatpush.bf16.msra.mxu0 0
        %5860 = vmatpush.bf16.msra.mxu0 0
        %5861 = vmatpush.bf16.msra.mxu0 0
        %5862 = vmatpush.bf16.msra.mxu0 0
        %5863 = vmatpush.bf16.msra.mxu0 %v5756
        %5864 = vmatmul.bf16.gmra.mxu0 %v5732
        %v5865 = vpop.f32.mrf.mxu0
        %v5866 = vadd.f32 0.0, %v5865
        %v5867 = vpop.f32.mrf.mxu0
        %v5868 = vadd.f32 0.0, %v5867
        %5869 = vdwg.mxu0
        %v5870 = vadd.f32 %v5681, %v5768
        %v5871 = vadd.f32 %v5682, %v5782
        %v5872 = vadd.f32 %v5683, %v5796
        %v5873 = vadd.f32 %v5684, %v5810
        %v5874 = vadd.f32 %v5685, %v5824
        %v5875 = vadd.f32 %v5686, %v5838
        %v5876 = vadd.f32 %v5687, %v5852
        %v5877 = vadd.f32 %v5688, %v5866
        %v5878 = vadd.f32 %v5689, %v5770
        %v5879 = vadd.f32 %v5690, %v5784
        %v5880 = vadd.f32 %v5691, %v5798
        %v5881 = vadd.f32 %v5692, %v5812
        %v5882 = vadd.f32 %v5693, %v5826
        %v5883 = vadd.f32 %v5694, %v5840
        %v5884 = vadd.f32 %v5695, %v5854
        %v5885 = vadd.f32 %v5696, %v5868
        %s5886 = scalar_lea.vmem %s3, 192
        %v5887 = vld [vmem:[%s5886] sm:$0xf]
        %v5888 = vld [vmem:[%s5886 + $0x4] sm:$0xf]
        %v5891 = vunpack.c.l.b16 %v5887
        %v5892 = vunpack.c.l.b16 %v5888
        %v5893 = vpack.c.b16 %v5892, %v5891
        %5894 = vrot.lane.b32.xlu0 %v5318, 120
        %v5895 = vpop.permute.xlu0 %5894
        %5896 = vrot.lane.b32.xlu0 %v5319, 120
        %v5897 = vpop.permute.xlu0 %5896
        %5898 = vrot.lane.b32.xlu0 %v5320, 120
        %v5899 = vpop.permute.xlu0 %5898
        %5900 = vrot.lane.b32.xlu0 %v5321, 120
        %v5901 = vpop.permute.xlu0 %5900
        %5902 = vrot.lane.b32.xlu0 %v5322, 120
        %v5903 = vpop.permute.xlu0 %5902
        %5904 = vrot.lane.b32.xlu0 %v5323, 120
        %v5905 = vpop.permute.xlu0 %5904
        %5906 = vrot.lane.b32.xlu0 %v5324, 120
        %v5907 = vpop.permute.xlu0 %5906
        %5908 = vrot.lane.b32.xlu0 %v5325, 120
        %v5909 = vpop.permute.xlu0 %5908
        %5910 = vrot.lane.b32.xlu0 %v5326, 120
        %v5911 = vpop.permute.xlu0 %5910
        %v5912 = vsel %vm2074, %v5895, %v5897
        %v5913 = vsel %vm2074, %v5897, %v5899
        %v5914 = vsel %vm2074, %v5899, %v5901
        %v5915 = vsel %vm2074, %v5901, %v5903
        %v5916 = vsel %vm2074, %v5903, %v5905
        %v5917 = vsel %vm2074, %v5905, %v5907
        %v5918 = vsel %vm2074, %v5907, %v5909
        %v5919 = vsel %vm2074, %v5909, %v5911
        %v5921 = vsel %vm1383, %v5893, 0
        %v5924 = vsel %vm1387, %v5912, 0
        %v5927 = vsel %vm1387, %v5913, 0
        %v5930 = vsel %vm1387, %v5914, 0
        %v5933 = vsel %vm1387, %v5915, 0
        %v5936 = vsel %vm1387, %v5916, 0
        %v5939 = vsel %vm1387, %v5917, 0
        %v5942 = vsel %vm1387, %v5918, 0
        %v5945 = vsel %vm1387, %v5919, 0
        %5947 = vmatpush.bf16.msra.mxu0 0
        %5948 = vmatpush.bf16.msra.mxu0 0
        %5949 = vmatpush.bf16.msra.mxu0 0
        %5950 = vmatpush.bf16.msra.mxu0 0
        %5951 = vmatpush.bf16.msra.mxu0 0
        %5952 = vmatpush.bf16.msra.mxu0 0
        %5953 = vmatpush.bf16.msra.mxu0 0
        %5954 = vmatpush.bf16.msra.mxu0 %v5924
        %5955 = vmatmul.bf16.gmra.mxu0 %v5921
        %v5956 = vpop.f32.mrf.mxu0
        %v5957 = vadd.f32 0.0, %v5956
        %v5958 = vpop.f32.mrf.mxu0
        %v5959 = vadd.f32 0.0, %v5958
        %5960 = vdwg.mxu0
        %5961 = vmatpush.bf16.msra.mxu0 0
        %5962 = vmatpush.bf16.msra.mxu0 0
        %5963 = vmatpush.bf16.msra.mxu0 0
        %5964 = vmatpush.bf16.msra.mxu0 0
        %5965 = vmatpush.bf16.msra.mxu0 0
        %5966 = vmatpush.bf16.msra.mxu0 0
        %5967 = vmatpush.bf16.msra.mxu0 0
        %5968 = vmatpush.bf16.msra.mxu0 %v5927
        %5969 = vmatmul.bf16.gmra.mxu0 %v5921
        %v5970 = vpop.f32.mrf.mxu0
        %v5971 = vadd.f32 0.0, %v5970
        %v5972 = vpop.f32.mrf.mxu0
        %v5973 = vadd.f32 0.0, %v5972
        %5974 = vdwg.mxu0
        %5975 = vmatpush.bf16.msra.mxu0 0
        %5976 = vmatpush.bf16.msra.mxu0 0
        %5977 = vmatpush.bf16.msra.mxu0 0
        %5978 = vmatpush.bf16.msra.mxu0 0
        %5979 = vmatpush.bf16.msra.mxu0 0
        %5980 = vmatpush.bf16.msra.mxu0 0
        %5981 = vmatpush.bf16.msra.mxu0 0
        %5982 = vmatpush.bf16.msra.mxu0 %v5930
        %5983 = vmatmul.bf16.gmra.mxu0 %v5921
        %v5984 = vpop.f32.mrf.mxu0
        %v5985 = vadd.f32 0.0, %v5984
        %v5986 = vpop.f32.mrf.mxu0
        %v5987 = vadd.f32 0.0, %v5986
        %5988 = vdwg.mxu0
        %5989 = vmatpush.bf16.msra.mxu0 0
        %5990 = vmatpush.bf16.msra.mxu0 0
        %5991 = vmatpush.bf16.msra.mxu0 0
        %5992 = vmatpush.bf16.msra.mxu0 0
        %5993 = vmatpush.bf16.msra.mxu0 0
        %5994 = vmatpush.bf16.msra.mxu0 0
        %5995 = vmatpush.bf16.msra.mxu0 0
        %5996 = vmatpush.bf16.msra.mxu0 %v5933
        %5997 = vmatmul.bf16.gmra.mxu0 %v5921
        %v5998 = vpop.f32.mrf.mxu0
        %v5999 = vadd.f32 0.0, %v5998
        %v6000 = vpop.f32.mrf.mxu0
        %v6001 = vadd.f32 0.0, %v6000
        %6002 = vdwg.mxu0
        %6003 = vmatpush.bf16.msra.mxu0 0
        %6004 = vmatpush.bf16.msra.mxu0 0
        %6005 = vmatpush.bf16.msra.mxu0 0
        %6006 = vmatpush.bf16.msra.mxu0 0
        %6007 = vmatpush.bf16.msra.mxu0 0
        %6008 = vmatpush.bf16.msra.mxu0 0
        %6009 = vmatpush.bf16.msra.mxu0 0
        %6010 = vmatpush.bf16.msra.mxu0 %v5936
        %6011 = vmatmul.bf16.gmra.mxu0 %v5921
        %v6012 = vpop.f32.mrf.mxu0
        %v6013 = vadd.f32 0.0, %v6012
        %v6014 = vpop.f32.mrf.mxu0
        %v6015 = vadd.f32 0.0, %v6014
        %6016 = vdwg.mxu0
        %6017 = vmatpush.bf16.msra.mxu0 0
        %6018 = vmatpush.bf16.msra.mxu0 0
        %6019 = vmatpush.bf16.msra.mxu0 0
        %6020 = vmatpush.bf16.msra.mxu0 0
        %6021 = vmatpush.bf16.msra.mxu0 0
        %6022 = vmatpush.bf16.msra.mxu0 0
        %6023 = vmatpush.bf16.msra.mxu0 0
        %6024 = vmatpush.bf16.msra.mxu0 %v5939
        %6025 = vmatmul.bf16.gmra.mxu0 %v5921
        %v6026 = vpop.f32.mrf.mxu0
        %v6027 = vadd.f32 0.0, %v6026
        %v6028 = vpop.f32.mrf.mxu0
        %v6029 = vadd.f32 0.0, %v6028
        %6030 = vdwg.mxu0
        %6031 = vmatpush.bf16.msra.mxu0 0
        %6032 = vmatpush.bf16.msra.mxu0 0
        %6033 = vmatpush.bf16.msra.mxu0 0
        %6034 = vmatpush.bf16.msra.mxu0 0
        %6035 = vmatpush.bf16.msra.mxu0 0
        %6036 = vmatpush.bf16.msra.mxu0 0
        %6037 = vmatpush.bf16.msra.mxu0 0
        %6038 = vmatpush.bf16.msra.mxu0 %v5942
        %6039 = vmatmul.bf16.gmra.mxu0 %v5921
        %v6040 = vpop.f32.mrf.mxu0
        %v6041 = vadd.f32 0.0, %v6040
        %v6042 = vpop.f32.mrf.mxu0
        %v6043 = vadd.f32 0.0, %v6042
        %6044 = vdwg.mxu0
        %6045 = vmatpush.bf16.msra.mxu0 0
        %6046 = vmatpush.bf16.msra.mxu0 0
        %6047 = vmatpush.bf16.msra.mxu0 0
        %6048 = vmatpush.bf16.msra.mxu0 0
        %6049 = vmatpush.bf16.msra.mxu0 0
        %6050 = vmatpush.bf16.msra.mxu0 0
        %6051 = vmatpush.bf16.msra.mxu0 0
        %6052 = vmatpush.bf16.msra.mxu0 %v5945
        %6053 = vmatmul.bf16.gmra.mxu0 %v5921
        %v6054 = vpop.f32.mrf.mxu0
        %v6055 = vadd.f32 0.0, %v6054
        %v6056 = vpop.f32.mrf.mxu0
        %v6057 = vadd.f32 0.0, %v6056
        %6058 = vdwg.mxu0
        %v6059 = vadd.f32 %v5870, %v5957
        %v6060 = vadd.f32 %v5871, %v5971
        %v6061 = vadd.f32 %v5872, %v5985
        %v6062 = vadd.f32 %v5873, %v5999
        %v6063 = vadd.f32 %v5874, %v6013
        %v6064 = vadd.f32 %v5875, %v6027
        %v6065 = vadd.f32 %v5876, %v6041
        %v6066 = vadd.f32 %v5877, %v6055
        %v6067 = vadd.f32 %v5878, %v5959
        %v6068 = vadd.f32 %v5879, %v5973
        %v6069 = vadd.f32 %v5880, %v5987
        %v6070 = vadd.f32 %v5881, %v6001
        %v6071 = vadd.f32 %v5882, %v6015
        %v6072 = vadd.f32 %v5883, %v6029
        %v6073 = vadd.f32 %v5884, %v6043
        %v6074 = vadd.f32 %v5885, %v6057
        %v6075 = vld [vmem:[%s4] sm:$0xff]
        %v6076 = vld [vmem:[%s4 + $0x8] sm:$0xff]
        %6078 = vset.pattern.permute.xlu0 0
        %6079 = vperm.xlu0 %6078, %v6075
        %v6080 = vpop.permute.xlu0 %6079
        %6083 = vset.pattern.permute.xlu0 0
        %6084 = vperm.xlu0 %6083, %v6076
        %v6085 = vpop.permute.xlu0 %6084
        %v6087 = vadd.f32 %v6059, %v6080
        %v6088 = vadd.f32 %v6060, %v6080
        %v6089 = vadd.f32 %v6061, %v6080
        %v6090 = vadd.f32 %v6062, %v6080
        %v6091 = vadd.f32 %v6063, %v6080
        %v6092 = vadd.f32 %v6064, %v6080
        %v6093 = vadd.f32 %v6065, %v6080
        %v6094 = vadd.f32 %v6066, %v6080
        %v6095 = vadd.f32 %v6067, %v6085
        %v6096 = vadd.f32 %v6068, %v6085
        %v6097 = vadd.f32 %v6069, %v6085
        %v6098 = vadd.f32 %v6070, %v6085
        %v6099 = vadd.f32 %v6071, %v6085
        %v6100 = vadd.f32 %v6072, %v6085
        %v6101 = vadd.f32 %v6073, %v6085
        %v6102 = vadd.f32 %v6074, %v6085
        %v6103 = vxor.u32 %v6087, 2147483648
        %v6104 = vxor.u32 %v6088, 2147483648
        %v6105 = vxor.u32 %v6089, 2147483648
        %v6106 = vxor.u32 %v6090, 2147483648
        %v6107 = vxor.u32 %v6091, 2147483648
        %v6108 = vxor.u32 %v6092, 2147483648
        %v6109 = vxor.u32 %v6093, 2147483648
        %v6110 = vxor.u32 %v6094, 2147483648
        %v6111 = vxor.u32 %v6095, 2147483648
        %v6112 = vxor.u32 %v6096, 2147483648
        %v6113 = vxor.u32 %v6097, 2147483648
        %v6114 = vxor.u32 %v6098, 2147483648
        %v6115 = vxor.u32 %v6099, 2147483648
        %v6116 = vxor.u32 %v6100, 2147483648
        %v6117 = vxor.u32 %v6101, 2147483648
        %v6118 = vxor.u32 %v6102, 2147483648
        %v6119 = vmul.f32 %v6103, 1.442695
        %v6120 = vpow.pop %v6119
        %v6121 = vmul.f32 %v6104, 1.442695
        %v6122 = vpow.pop %v6121
        %v6123 = vmul.f32 %v6105, 1.442695
        %v6124 = vpow.pop %v6123
        %v6125 = vmul.f32 %v6106, 1.442695
        %v6126 = vpow.pop %v6125
        %v6127 = vmul.f32 %v6107, 1.442695
        %v6128 = vpow.pop %v6127
        %v6129 = vmul.f32 %v6108, 1.442695
        %v6130 = vpow.pop %v6129
        %v6131 = vmul.f32 %v6109, 1.442695
        %v6132 = vpow.pop %v6131
        %v6133 = vmul.f32 %v6110, 1.442695
        %v6134 = vpow.pop %v6133
        %v6135 = vmul.f32 %v6111, 1.442695
        %v6136 = vpow.pop %v6135
        %v6137 = vmul.f32 %v6112, 1.442695
        %v6138 = vpow.pop %v6137
        %v6139 = vmul.f32 %v6113, 1.442695
        %v6140 = vpow.pop %v6139
        %v6141 = vmul.f32 %v6114, 1.442695
        %v6142 = vpow.pop %v6141
        %v6143 = vmul.f32 %v6115, 1.442695
        %v6144 = vpow.pop %v6143
        %v6145 = vmul.f32 %v6116, 1.442695
        %v6146 = vpow.pop %v6145
        %v6147 = vmul.f32 %v6117, 1.442695
        %v6148 = vpow.pop %v6147
        %v6149 = vmul.f32 %v6118, 1.442695
        %v6150 = vpow.pop %v6149
        %v6151 = vadd.f32 %v6120, 1.0
        %v6152 = vadd.f32 %v6122, 1.0
        %v6153 = vadd.f32 %v6124, 1.0
        %v6154 = vadd.f32 %v6126, 1.0
        %v6155 = vadd.f32 %v6128, 1.0
        %v6156 = vadd.f32 %v6130, 1.0
        %v6157 = vadd.f32 %v6132, 1.0
        %v6158 = vadd.f32 %v6134, 1.0
        %v6159 = vadd.f32 %v6136, 1.0
        %v6160 = vadd.f32 %v6138, 1.0
        %v6161 = vadd.f32 %v6140, 1.0
        %v6162 = vadd.f32 %v6142, 1.0
        %v6163 = vadd.f32 %v6144, 1.0
        %v6164 = vadd.f32 %v6146, 1.0
        %v6165 = vadd.f32 %v6148, 1.0
        %v6166 = vadd.f32 %v6150, 1.0
        %v6167 = vrcp.pop %v6151
        %v6168 = vmul.f32 %v6151, %v6167
        %v6169 = vsub.f32 1.0, %v6168
        %v6170 = vmul.f32 %v6167, %v6169
        %v6171 = vadd.f32 %v6167, %v6170
        %vm6172 = vweird.f32 %v6151
        %vm6173 = vweird.f32 %v6167
        %vm6174 = vmor %vm6172, %vm6173
        %v6175 = vsel %vm6174, %v6167, %v6171
        %v6176 = vand.u32 2147483647, %v6151
        %vm6177 = vcmp.eq.f32.partialorder %v6176, 8.507059e+37
        %v6178 = vand.u32 %v6151, 2147483648
        %v6179 = vor.u32 1.1754944e-38, %v6178
        %v6180 = vsel %vm6177, %v6179, %v6175
        %v6181 = vmul.f32 1.0, %v6180
        %v6182 = vrcp.pop %v6152
        %v6183 = vmul.f32 %v6152, %v6182
        %v6184 = vsub.f32 1.0, %v6183
        %v6185 = vmul.f32 %v6182, %v6184
        %v6186 = vadd.f32 %v6182, %v6185
        %vm6187 = vweird.f32 %v6152
        %vm6188 = vweird.f32 %v6182
        %vm6189 = vmor %vm6187, %vm6188
        %v6190 = vsel %vm6189, %v6182, %v6186
        %v6191 = vand.u32 2147483647, %v6152
        %vm6192 = vcmp.eq.f32.partialorder %v6191, 8.507059e+37
        %v6193 = vand.u32 %v6152, 2147483648
        %v6194 = vor.u32 1.1754944e-38, %v6193
        %v6195 = vsel %vm6192, %v6194, %v6190
        %v6196 = vmul.f32 1.0, %v6195
        %v6197 = vrcp.pop %v6153
        %v6198 = vmul.f32 %v6153, %v6197
        %v6199 = vsub.f32 1.0, %v6198
        %v6200 = vmul.f32 %v6197, %v6199
        %v6201 = vadd.f32 %v6197, %v6200
        %vm6202 = vweird.f32 %v6153
        %vm6203 = vweird.f32 %v6197
        %vm6204 = vmor %vm6202, %vm6203
        %v6205 = vsel %vm6204, %v6197, %v6201
        %v6206 = vand.u32 2147483647, %v6153
        %vm6207 = vcmp.eq.f32.partialorder %v6206, 8.507059e+37
        %v6208 = vand.u32 %v6153, 2147483648
        %v6209 = vor.u32 1.1754944e-38, %v6208
        %v6210 = vsel %vm6207, %v6209, %v6205
        %v6211 = vmul.f32 1.0, %v6210
        %v6212 = vrcp.pop %v6154
        %v6213 = vmul.f32 %v6154, %v6212
        %v6214 = vsub.f32 1.0, %v6213
        %v6215 = vmul.f32 %v6212, %v6214
        %v6216 = vadd.f32 %v6212, %v6215
        %vm6217 = vweird.f32 %v6154
        %vm6218 = vweird.f32 %v6212
        %vm6219 = vmor %vm6217, %vm6218
        %v6220 = vsel %vm6219, %v6212, %v6216
        %v6221 = vand.u32 2147483647, %v6154
        %vm6222 = vcmp.eq.f32.partialorder %v6221, 8.507059e+37
        %v6223 = vand.u32 %v6154, 2147483648
        %v6224 = vor.u32 1.1754944e-38, %v6223
        %v6225 = vsel %vm6222, %v6224, %v6220
        %v6226 = vmul.f32 1.0, %v6225
        %v6227 = vrcp.pop %v6155
        %v6228 = vmul.f32 %v6155, %v6227
        %v6229 = vsub.f32 1.0, %v6228
        %v6230 = vmul.f32 %v6227, %v6229
        %v6231 = vadd.f32 %v6227, %v6230
        %vm6232 = vweird.f32 %v6155
        %vm6233 = vweird.f32 %v6227
        %vm6234 = vmor %vm6232, %vm6233
        %v6235 = vsel %vm6234, %v6227, %v6231
        %v6236 = vand.u32 2147483647, %v6155
        %vm6237 = vcmp.eq.f32.partialorder %v6236, 8.507059e+37
        %v6238 = vand.u32 %v6155, 2147483648
        %v6239 = vor.u32 1.1754944e-38, %v6238
        %v6240 = vsel %vm6237, %v6239, %v6235
        %v6241 = vmul.f32 1.0, %v6240
        %v6242 = vrcp.pop %v6156
        %v6243 = vmul.f32 %v6156, %v6242
        %v6244 = vsub.f32 1.0, %v6243
        %v6245 = vmul.f32 %v6242, %v6244
        %v6246 = vadd.f32 %v6242, %v6245
        %vm6247 = vweird.f32 %v6156
        %vm6248 = vweird.f32 %v6242
        %vm6249 = vmor %vm6247, %vm6248
        %v6250 = vsel %vm6249, %v6242, %v6246
        %v6251 = vand.u32 2147483647, %v6156
        %vm6252 = vcmp.eq.f32.partialorder %v6251, 8.507059e+37
        %v6253 = vand.u32 %v6156, 2147483648
        %v6254 = vor.u32 1.1754944e-38, %v6253
        %v6255 = vsel %vm6252, %v6254, %v6250
        %v6256 = vmul.f32 1.0, %v6255
        %v6257 = vrcp.pop %v6157
        %v6258 = vmul.f32 %v6157, %v6257
        %v6259 = vsub.f32 1.0, %v6258
        %v6260 = vmul.f32 %v6257, %v6259
        %v6261 = vadd.f32 %v6257, %v6260
        %vm6262 = vweird.f32 %v6157
        %vm6263 = vweird.f32 %v6257
        %vm6264 = vmor %vm6262, %vm6263
        %v6265 = vsel %vm6264, %v6257, %v6261
        %v6266 = vand.u32 2147483647, %v6157
        %vm6267 = vcmp.eq.f32.partialorder %v6266, 8.507059e+37
        %v6268 = vand.u32 %v6157, 2147483648
        %v6269 = vor.u32 1.1754944e-38, %v6268
        %v6270 = vsel %vm6267, %v6269, %v6265
        %v6271 = vmul.f32 1.0, %v6270
        %v6272 = vrcp.pop %v6158
        %v6273 = vmul.f32 %v6158, %v6272
        %v6274 = vsub.f32 1.0, %v6273
        %v6275 = vmul.f32 %v6272, %v6274
        %v6276 = vadd.f32 %v6272, %v6275
        %vm6277 = vweird.f32 %v6158
        %vm6278 = vweird.f32 %v6272
        %vm6279 = vmor %vm6277, %vm6278
        %v6280 = vsel %vm6279, %v6272, %v6276
        %v6281 = vand.u32 2147483647, %v6158
        %vm6282 = vcmp.eq.f32.partialorder %v6281, 8.507059e+37
        %v6283 = vand.u32 %v6158, 2147483648
        %v6284 = vor.u32 1.1754944e-38, %v6283
        %v6285 = vsel %vm6282, %v6284, %v6280
        %v6286 = vmul.f32 1.0, %v6285
        %v6287 = vrcp.pop %v6159
        %v6288 = vmul.f32 %v6159, %v6287
        %v6289 = vsub.f32 1.0, %v6288
        %v6290 = vmul.f32 %v6287, %v6289
        %v6291 = vadd.f32 %v6287, %v6290
        %vm6292 = vweird.f32 %v6159
        %vm6293 = vweird.f32 %v6287
        %vm6294 = vmor %vm6292, %vm6293
        %v6295 = vsel %vm6294, %v6287, %v6291
        %v6296 = vand.u32 2147483647, %v6159
        %vm6297 = vcmp.eq.f32.partialorder %v6296, 8.507059e+37
        %v6298 = vand.u32 %v6159, 2147483648
        %v6299 = vor.u32 1.1754944e-38, %v6298
        %v6300 = vsel %vm6297, %v6299, %v6295
        %v6301 = vmul.f32 1.0, %v6300
        %v6302 = vrcp.pop %v6160
        %v6303 = vmul.f32 %v6160, %v6302
        %v6304 = vsub.f32 1.0, %v6303
        %v6305 = vmul.f32 %v6302, %v6304
        %v6306 = vadd.f32 %v6302, %v6305
        %vm6307 = vweird.f32 %v6160
        %vm6308 = vweird.f32 %v6302
        %vm6309 = vmor %vm6307, %vm6308
        %v6310 = vsel %vm6309, %v6302, %v6306
        %v6311 = vand.u32 2147483647, %v6160
        %vm6312 = vcmp.eq.f32.partialorder %v6311, 8.507059e+37
        %v6313 = vand.u32 %v6160, 2147483648
        %v6314 = vor.u32 1.1754944e-38, %v6313
        %v6315 = vsel %vm6312, %v6314, %v6310
        %v6316 = vmul.f32 1.0, %v6315
        %v6317 = vrcp.pop %v6161
        %v6318 = vmul.f32 %v6161, %v6317
        %v6319 = vsub.f32 1.0, %v6318
        %v6320 = vmul.f32 %v6317, %v6319
        %v6321 = vadd.f32 %v6317, %v6320
        %vm6322 = vweird.f32 %v6161
        %vm6323 = vweird.f32 %v6317
        %vm6324 = vmor %vm6322, %vm6323
        %v6325 = vsel %vm6324, %v6317, %v6321
        %v6326 = vand.u32 2147483647, %v6161
        %vm6327 = vcmp.eq.f32.partialorder %v6326, 8.507059e+37
        %v6328 = vand.u32 %v6161, 2147483648
        %v6329 = vor.u32 1.1754944e-38, %v6328
        %v6330 = vsel %vm6327, %v6329, %v6325
        %v6331 = vmul.f32 1.0, %v6330
        %v6332 = vrcp.pop %v6162
        %v6333 = vmul.f32 %v6162, %v6332
        %v6334 = vsub.f32 1.0, %v6333
        %v6335 = vmul.f32 %v6332, %v6334
        %v6336 = vadd.f32 %v6332, %v6335
        %vm6337 = vweird.f32 %v6162
        %vm6338 = vweird.f32 %v6332
        %vm6339 = vmor %vm6337, %vm6338
        %v6340 = vsel %vm6339, %v6332, %v6336
        %v6341 = vand.u32 2147483647, %v6162
        %vm6342 = vcmp.eq.f32.partialorder %v6341, 8.507059e+37
        %v6343 = vand.u32 %v6162, 2147483648
        %v6344 = vor.u32 1.1754944e-38, %v6343
        %v6345 = vsel %vm6342, %v6344, %v6340
        %v6346 = vmul.f32 1.0, %v6345
        %v6347 = vrcp.pop %v6163
        %v6348 = vmul.f32 %v6163, %v6347
        %v6349 = vsub.f32 1.0, %v6348
        %v6350 = vmul.f32 %v6347, %v6349
        %v6351 = vadd.f32 %v6347, %v6350
        %vm6352 = vweird.f32 %v6163
        %vm6353 = vweird.f32 %v6347
        %vm6354 = vmor %vm6352, %vm6353
        %v6355 = vsel %vm6354, %v6347, %v6351
        %v6356 = vand.u32 2147483647, %v6163
        %vm6357 = vcmp.eq.f32.partialorder %v6356, 8.507059e+37
        %v6358 = vand.u32 %v6163, 2147483648
        %v6359 = vor.u32 1.1754944e-38, %v6358
        %v6360 = vsel %vm6357, %v6359, %v6355
        %v6361 = vmul.f32 1.0, %v6360
        %v6362 = vrcp.pop %v6164
        %v6363 = vmul.f32 %v6164, %v6362
        %v6364 = vsub.f32 1.0, %v6363
        %v6365 = vmul.f32 %v6362, %v6364
        %v6366 = vadd.f32 %v6362, %v6365
        %vm6367 = vweird.f32 %v6164
        %vm6368 = vweird.f32 %v6362
        %vm6369 = vmor %vm6367, %vm6368
        %v6370 = vsel %vm6369, %v6362, %v6366
        %v6371 = vand.u32 2147483647, %v6164
        %vm6372 = vcmp.eq.f32.partialorder %v6371, 8.507059e+37
        %v6373 = vand.u32 %v6164, 2147483648
        %v6374 = vor.u32 1.1754944e-38, %v6373
        %v6375 = vsel %vm6372, %v6374, %v6370
        %v6376 = vmul.f32 1.0, %v6375
        %v6377 = vrcp.pop %v6165
        %v6378 = vmul.f32 %v6165, %v6377
        %v6379 = vsub.f32 1.0, %v6378
        %v6380 = vmul.f32 %v6377, %v6379
        %v6381 = vadd.f32 %v6377, %v6380
        %vm6382 = vweird.f32 %v6165
        %vm6383 = vweird.f32 %v6377
        %vm6384 = vmor %vm6382, %vm6383
        %v6385 = vsel %vm6384, %v6377, %v6381
        %v6386 = vand.u32 2147483647, %v6165
        %vm6387 = vcmp.eq.f32.partialorder %v6386, 8.507059e+37
        %v6388 = vand.u32 %v6165, 2147483648
        %v6389 = vor.u32 1.1754944e-38, %v6388
        %v6390 = vsel %vm6387, %v6389, %v6385
        %v6391 = vmul.f32 1.0, %v6390
        %v6392 = vrcp.pop %v6166
        %v6393 = vmul.f32 %v6166, %v6392
        %v6394 = vsub.f32 1.0, %v6393
        %v6395 = vmul.f32 %v6392, %v6394
        %v6396 = vadd.f32 %v6392, %v6395
        %vm6397 = vweird.f32 %v6166
        %vm6398 = vweird.f32 %v6392
        %vm6399 = vmor %vm6397, %vm6398
        %v6400 = vsel %vm6399, %v6392, %v6396
        %v6401 = vand.u32 2147483647, %v6166
        %vm6402 = vcmp.eq.f32.partialorder %v6401, 8.507059e+37
        %v6403 = vand.u32 %v6166, 2147483648
        %v6404 = vor.u32 1.1754944e-38, %v6403
        %v6405 = vsel %vm6402, %v6404, %v6400
        %v6406 = vmul.f32 1.0, %v6405
        %v6407 = vpack.c.bf16 %v6301, %v6181
        %v6408 = vpack.c.bf16 %v6316, %v6196
        %v6409 = vpack.c.bf16 %v6331, %v6211
        %v6410 = vpack.c.bf16 %v6346, %v6226
        %v6411 = vpack.c.bf16 %v6361, %v6241
        %v6412 = vpack.c.bf16 %v6376, %v6256
        %v6413 = vpack.c.bf16 %v6391, %v6271
        %v6414 = vpack.c.bf16 %v6406, %v6286
        %v6415 = vld [vmem:[%s5] sm:$0xf]
        %v6416 = vld [vmem:[%s5 + $0x4] sm:$0xf]
        %v6417 = vld [vmem:[%s5 + $0x8] sm:$0xf]
        %v6418 = vld [vmem:[%s5 + $0xc] sm:$0xf]
        %v6419 = vld [vmem:[%s5 + $0x10] sm:$0xf]
        %v6420 = vld [vmem:[%s5 + $0x14] sm:$0xf]
        %v6421 = vld [vmem:[%s5 + $0x18] sm:$0xf]
        %v6422 = vld [vmem:[%s5 + $0x1c] sm:$0xf]
        %v6423 = vld [vmem:[%s5 + $0x20] sm:$0xf]
        %v6424 = vld [vmem:[%s5 + $0x24] sm:$0xf]
        %v6425 = vld [vmem:[%s5 + $0x28] sm:$0xf]
        %v6426 = vld [vmem:[%s5 + $0x2c] sm:$0xf]
        %v6427 = vld [vmem:[%s5 + $0x30] sm:$0xf]
        %v6428 = vld [vmem:[%s5 + $0x34] sm:$0xf]
        %v6429 = vld [vmem:[%s5 + $0x38] sm:$0xf]
        %v6430 = vld [vmem:[%s5 + $0x3c] sm:$0xf]
        %v6431 = vld [vmem:[%s5 + $0x40] sm:$0xf]
        %v6432 = vld [vmem:[%s5 + $0x44] sm:$0xf]
        %v6433 = vld [vmem:[%s5 + $0x48] sm:$0xf]
        %v6434 = vld [vmem:[%s5 + $0x4c] sm:$0xf]
        %v6435 = vld [vmem:[%s5 + $0x50] sm:$0xf]
        %v6436 = vld [vmem:[%s5 + $0x54] sm:$0xf]
        %v6437 = vld [vmem:[%s5 + $0x58] sm:$0xf]
        %v6438 = vld [vmem:[%s5 + $0x5c] sm:$0xf]
        %v6439 = vld [vmem:[%s5 + $0x60] sm:$0xf]
        %v6440 = vld [vmem:[%s5 + $0x64] sm:$0xf]
        %v6441 = vld [vmem:[%s5 + $0x68] sm:$0xf]
        %v6442 = vld [vmem:[%s5 + $0x6c] sm:$0xf]
        %v6443 = vld [vmem:[%s5 + $0x70] sm:$0xf]
        %v6444 = vld [vmem:[%s5 + $0x74] sm:$0xf]
        %v6445 = vld [vmem:[%s5 + $0x78] sm:$0xf]
        %v6446 = vld [vmem:[%s5 + $0x7c] sm:$0xf]
        %v6447 = vld [vmem:[%s5 + $0x80] sm:$0xf]
        %v6448 = vld [vmem:[%s5 + $0x84] sm:$0xf]
        %v6449 = vld [vmem:[%s5 + $0x88] sm:$0xf]
        %v6450 = vld [vmem:[%s5 + $0x8c] sm:$0xf]
        %v6451 = vld [vmem:[%s5 + $0x90] sm:$0xf]
        %v6452 = vld [vmem:[%s5 + $0x94] sm:$0xf]
        %v6453 = vld [vmem:[%s5 + $0x98] sm:$0xf]
        %v6454 = vld [vmem:[%s5 + $0x9c] sm:$0xf]
        %v6455 = vld [vmem:[%s5 + $0xa0] sm:$0xf]
        %v6456 = vld [vmem:[%s5 + $0xa4] sm:$0xf]
        %v6457 = vld [vmem:[%s5 + $0xa8] sm:$0xf]
        %v6458 = vld [vmem:[%s5 + $0xac] sm:$0xf]
        %v6459 = vld [vmem:[%s5 + $0xb0] sm:$0xf]
        %v6460 = vld [vmem:[%s5 + $0xb4] sm:$0xf]
        %v6461 = vld [vmem:[%s5 + $0xb8] sm:$0xf]
        %v6462 = vld [vmem:[%s5 + $0xbc] sm:$0xf]
        %v6463 = vld [vmem:[%s5 + $0xc0] sm:$0xf]
        %v6464 = vld [vmem:[%s5 + $0xc4] sm:$0xf]
        %v6465 = vld [vmem:[%s5 + $0xc8] sm:$0xf]
        %v6466 = vld [vmem:[%s5 + $0xcc] sm:$0xf]
        %v6467 = vld [vmem:[%s5 + $0xd0] sm:$0xf]
        %v6468 = vld [vmem:[%s5 + $0xd4] sm:$0xf]
        %v6469 = vld [vmem:[%s5 + $0xd8] sm:$0xf]
        %v6470 = vld [vmem:[%s5 + $0xdc] sm:$0xf]
        %v6471 = vld [vmem:[%s5 + $0xe0] sm:$0xf]
        %v6472 = vld [vmem:[%s5 + $0xe4] sm:$0xf]
        %v6473 = vld [vmem:[%s5 + $0xe8] sm:$0xf]
        %v6474 = vld [vmem:[%s5 + $0xec] sm:$0xf]
        %v6475 = vld [vmem:[%s5 + $0xf0] sm:$0xf]
        %v6476 = vld [vmem:[%s5 + $0xf4] sm:$0xf]
        %v6477 = vld [vmem:[%s5 + $0xf8] sm:$0xf]
        %v6478 = vld [vmem:[%s5 + $0xfc] sm:$0xf]
        %v6479 = vld [vmem:[%s5 + $0x100] sm:$0xf]
        %v6480 = vld [vmem:[%s5 + $0x104] sm:$0xf]
        %v6481 = vld [vmem:[%s5 + $0x108] sm:$0xf]
        %v6482 = vld [vmem:[%s5 + $0x10c] sm:$0xf]
        %v6483 = vld [vmem:[%s5 + $0x110] sm:$0xf]
        %v6484 = vld [vmem:[%s5 + $0x114] sm:$0xf]
        %v6485 = vld [vmem:[%s5 + $0x118] sm:$0xf]
        %v6486 = vld [vmem:[%s5 + $0x11c] sm:$0xf]
        %v6487 = vld [vmem:[%s5 + $0x120] sm:$0xf]
        %v6488 = vld [vmem:[%s5 + $0x124] sm:$0xf]
        %v6489 = vld [vmem:[%s5 + $0x128] sm:$0xf]
        %v6490 = vld [vmem:[%s5 + $0x12c] sm:$0xf]
        %v6491 = vld [vmem:[%s5 + $0x130] sm:$0xf]
        %v6492 = vld [vmem:[%s5 + $0x134] sm:$0xf]
        %v6493 = vld [vmem:[%s5 + $0x138] sm:$0xf]
        %v6494 = vld [vmem:[%s5 + $0x13c] sm:$0xf]
        %v6495 = vld [vmem:[%s5 + $0x140] sm:$0xf]
        %v6496 = vld [vmem:[%s5 + $0x144] sm:$0xf]
        %v6497 = vld [vmem:[%s5 + $0x148] sm:$0xf]
        %v6498 = vld [vmem:[%s5 + $0x14c] sm:$0xf]
        %v6499 = vld [vmem:[%s5 + $0x150] sm:$0xf]
        %v6500 = vld [vmem:[%s5 + $0x154] sm:$0xf]
        %v6501 = vld [vmem:[%s5 + $0x158] sm:$0xf]
        %v6502 = vld [vmem:[%s5 + $0x15c] sm:$0xf]
        %v6503 = vld [vmem:[%s5 + $0x160] sm:$0xf]
        %v6504 = vld [vmem:[%s5 + $0x164] sm:$0xf]
        %v6505 = vld [vmem:[%s5 + $0x168] sm:$0xf]
        %v6506 = vld [vmem:[%s5 + $0x16c] sm:$0xf]
        %v6507 = vld [vmem:[%s5 + $0x170] sm:$0xf]
        %v6508 = vld [vmem:[%s5 + $0x174] sm:$0xf]
        %v6509 = vld [vmem:[%s5 + $0x178] sm:$0xf]
        %v6510 = vld [vmem:[%s5 + $0x17c] sm:$0xf]
        %v6511 = vld [vmem:[%s5 + $0x180] sm:$0xf]
        %v6512 = vld [vmem:[%s5 + $0x184] sm:$0xf]
        %v6513 = vld [vmem:[%s5 + $0x188] sm:$0xf]
        %v6514 = vld [vmem:[%s5 + $0x18c] sm:$0xf]
        %v6515 = vld [vmem:[%s5 + $0x190] sm:$0xf]
        %v6516 = vld [vmem:[%s5 + $0x194] sm:$0xf]
        %v6517 = vld [vmem:[%s5 + $0x198] sm:$0xf]
        %v6518 = vld [vmem:[%s5 + $0x19c] sm:$0xf]
        %v6519 = vld [vmem:[%s5 + $0x1a0] sm:$0xf]
        %v6520 = vld [vmem:[%s5 + $0x1a4] sm:$0xf]
        %v6521 = vld [vmem:[%s5 + $0x1a8] sm:$0xf]
        %v6522 = vld [vmem:[%s5 + $0x1ac] sm:$0xf]
        %v6523 = vld [vmem:[%s5 + $0x1b0] sm:$0xf]
        %v6524 = vld [vmem:[%s5 + $0x1b4] sm:$0xf]
        %v6525 = vld [vmem:[%s5 + $0x1b8] sm:$0xf]
        %v6526 = vld [vmem:[%s5 + $0x1bc] sm:$0xf]
        %v6527 = vld [vmem:[%s5 + $0x1c0] sm:$0xf]
        %v6528 = vld [vmem:[%s5 + $0x1c4] sm:$0xf]
        %v6529 = vld [vmem:[%s5 + $0x1c8] sm:$0xf]
        %v6530 = vld [vmem:[%s5 + $0x1cc] sm:$0xf]
        %v6531 = vld [vmem:[%s5 + $0x1d0] sm:$0xf]
        %v6532 = vld [vmem:[%s5 + $0x1d4] sm:$0xf]
        %v6533 = vld [vmem:[%s5 + $0x1d8] sm:$0xf]
        %v6534 = vld [vmem:[%s5 + $0x1dc] sm:$0xf]
        %v6535 = vld [vmem:[%s5 + $0x1e0] sm:$0xf]
        %v6536 = vld [vmem:[%s5 + $0x1e4] sm:$0xf]
        %v6537 = vld [vmem:[%s5 + $0x1e8] sm:$0xf]
        %v6538 = vld [vmem:[%s5 + $0x1ec] sm:$0xf]
        %v6539 = vld [vmem:[%s5 + $0x1f0] sm:$0xf]
        %v6540 = vld [vmem:[%s5 + $0x1f4] sm:$0xf]
        %v6541 = vld [vmem:[%s5 + $0x1f8] sm:$0xf]
        %v6542 = vld [vmem:[%s5 + $0x1fc] sm:$0xf]
        %v6671 = vunpack.c.l.b16 %v6415
        %v6672 = vunpack.c.l.b16 %v6416
        %v6673 = vunpack.c.l.b16 %v6417
        %v6674 = vunpack.c.l.b16 %v6418
        %v6675 = vunpack.c.l.b16 %v6419
        %v6676 = vunpack.c.l.b16 %v6420
        %v6677 = vunpack.c.l.b16 %v6421
        %v6678 = vunpack.c.l.b16 %v6422
        %v6679 = vunpack.c.l.b16 %v6423
        %v6680 = vunpack.c.l.b16 %v6424
        %v6681 = vunpack.c.l.b16 %v6425
        %v6682 = vunpack.c.l.b16 %v6426
        %v6683 = vunpack.c.l.b16 %v6427
        %v6684 = vunpack.c.l.b16 %v6428
        %v6685 = vunpack.c.l.b16 %v6429
        %v6686 = vunpack.c.l.b16 %v6430
        %v6687 = vunpack.c.l.b16 %v6431
        %v6688 = vunpack.c.l.b16 %v6432
        %v6689 = vunpack.c.l.b16 %v6433
        %v6690 = vunpack.c.l.b16 %v6434
        %v6691 = vunpack.c.l.b16 %v6435
        %v6692 = vunpack.c.l.b16 %v6436
        %v6693 = vunpack.c.l.b16 %v6437
        %v6694 = vunpack.c.l.b16 %v6438
        %v6695 = vunpack.c.l.b16 %v6439
        %v6696 = vunpack.c.l.b16 %v6440
        %v6697 = vunpack.c.l.b16 %v6441
        %v6698 = vunpack.c.l.b16 %v6442
        %v6699 = vunpack.c.l.b16 %v6443
        %v6700 = vunpack.c.l.b16 %v6444
        %v6701 = vunpack.c.l.b16 %v6445
        %v6702 = vunpack.c.l.b16 %v6446
        %v6703 = vunpack.c.l.b16 %v6447
        %v6704 = vunpack.c.l.b16 %v6448
        %v6705 = vunpack.c.l.b16 %v6449
        %v6706 = vunpack.c.l.b16 %v6450
        %v6707 = vunpack.c.l.b16 %v6451
        %v6708 = vunpack.c.l.b16 %v6452
        %v6709 = vunpack.c.l.b16 %v6453
        %v6710 = vunpack.c.l.b16 %v6454
        %v6711 = vunpack.c.l.b16 %v6455
        %v6712 = vunpack.c.l.b16 %v6456
        %v6713 = vunpack.c.l.b16 %v6457
        %v6714 = vunpack.c.l.b16 %v6458
        %v6715 = vunpack.c.l.b16 %v6459
        %v6716 = vunpack.c.l.b16 %v6460
        %v6717 = vunpack.c.l.b16 %v6461
        %v6718 = vunpack.c.l.b16 %v6462
        %v6719 = vunpack.c.l.b16 %v6463
        %v6720 = vunpack.c.l.b16 %v6464
        %v6721 = vunpack.c.l.b16 %v6465
        %v6722 = vunpack.c.l.b16 %v6466
        %v6723 = vunpack.c.l.b16 %v6467
        %v6724 = vunpack.c.l.b16 %v6468
        %v6725 = vunpack.c.l.b16 %v6469
        %v6726 = vunpack.c.l.b16 %v6470
        %v6727 = vunpack.c.l.b16 %v6471
        %v6728 = vunpack.c.l.b16 %v6472
        %v6729 = vunpack.c.l.b16 %v6473
        %v6730 = vunpack.c.l.b16 %v6474
        %v6731 = vunpack.c.l.b16 %v6475
        %v6732 = vunpack.c.l.b16 %v6476
        %v6733 = vunpack.c.l.b16 %v6477
        %v6734 = vunpack.c.l.b16 %v6478
        %v6735 = vunpack.c.l.b16 %v6479
        %v6736 = vunpack.c.l.b16 %v6480
        %v6737 = vunpack.c.l.b16 %v6481
        %v6738 = vunpack.c.l.b16 %v6482
        %v6739 = vunpack.c.l.b16 %v6483
        %v6740 = vunpack.c.l.b16 %v6484
        %v6741 = vunpack.c.l.b16 %v6485
        %v6742 = vunpack.c.l.b16 %v6486
        %v6743 = vunpack.c.l.b16 %v6487
        %v6744 = vunpack.c.l.b16 %v6488
        %v6745 = vunpack.c.l.b16 %v6489
        %v6746 = vunpack.c.l.b16 %v6490
        %v6747 = vunpack.c.l.b16 %v6491
        %v6748 = vunpack.c.l.b16 %v6492
        %v6749 = vunpack.c.l.b16 %v6493
        %v6750 = vunpack.c.l.b16 %v6494
        %v6751 = vunpack.c.l.b16 %v6495
        %v6752 = vunpack.c.l.b16 %v6496
        %v6753 = vunpack.c.l.b16 %v6497
        %v6754 = vunpack.c.l.b16 %v6498
        %v6755 = vunpack.c.l.b16 %v6499
        %v6756 = vunpack.c.l.b16 %v6500
        %v6757 = vunpack.c.l.b16 %v6501
        %v6758 = vunpack.c.l.b16 %v6502
        %v6759 = vunpack.c.l.b16 %v6503
        %v6760 = vunpack.c.l.b16 %v6504
        %v6761 = vunpack.c.l.b16 %v6505
        %v6762 = vunpack.c.l.b16 %v6506
        %v6763 = vunpack.c.l.b16 %v6507
        %v6764 = vunpack.c.l.b16 %v6508
        %v6765 = vunpack.c.l.b16 %v6509
        %v6766 = vunpack.c.l.b16 %v6510
        %v6767 = vunpack.c.l.b16 %v6511
        %v6768 = vunpack.c.l.b16 %v6512
        %v6769 = vunpack.c.l.b16 %v6513
        %v6770 = vunpack.c.l.b16 %v6514
        %v6771 = vunpack.c.l.b16 %v6515
        %v6772 = vunpack.c.l.b16 %v6516
        %v6773 = vunpack.c.l.b16 %v6517
        %v6774 = vunpack.c.l.b16 %v6518
        %v6775 = vunpack.c.l.b16 %v6519
        %v6776 = vunpack.c.l.b16 %v6520
        %v6777 = vunpack.c.l.b16 %v6521
        %v6778 = vunpack.c.l.b16 %v6522
        %v6779 = vunpack.c.l.b16 %v6523
        %v6780 = vunpack.c.l.b16 %v6524
        %v6781 = vunpack.c.l.b16 %v6525
        %v6782 = vunpack.c.l.b16 %v6526
        %v6783 = vunpack.c.l.b16 %v6527
        %v6784 = vunpack.c.l.b16 %v6528
        %v6785 = vunpack.c.l.b16 %v6529
        %v6786 = vunpack.c.l.b16 %v6530
        %v6787 = vunpack.c.l.b16 %v6531
        %v6788 = vunpack.c.l.b16 %v6532
        %v6789 = vunpack.c.l.b16 %v6533
        %v6790 = vunpack.c.l.b16 %v6534
        %v6791 = vunpack.c.l.b16 %v6535
        %v6792 = vunpack.c.l.b16 %v6536
        %v6793 = vunpack.c.l.b16 %v6537
        %v6794 = vunpack.c.l.b16 %v6538
        %v6795 = vunpack.c.l.b16 %v6539
        %v6796 = vunpack.c.l.b16 %v6540
        %v6797 = vunpack.c.l.b16 %v6541
        %v6798 = vunpack.c.l.b16 %v6542
        %v6799 = vpack.c.b16 %v6672, %v6671
        %v6800 = vpack.c.b16 %v6674, %v6673
        %v6801 = vpack.c.b16 %v6676, %v6675
        %v6802 = vpack.c.b16 %v6678, %v6677
        %v6803 = vpack.c.b16 %v6680, %v6679
        %v6804 = vpack.c.b16 %v6682, %v6681
        %v6805 = vpack.c.b16 %v6684, %v6683
        %v6806 = vpack.c.b16 %v6686, %v6685
        %v6807 = vpack.c.b16 %v6688, %v6687
        %v6808 = vpack.c.b16 %v6690, %v6689
        %v6809 = vpack.c.b16 %v6692, %v6691
        %v6810 = vpack.c.b16 %v6694, %v6693
        %v6811 = vpack.c.b16 %v6696, %v6695
        %v6812 = vpack.c.b16 %v6698, %v6697
        %v6813 = vpack.c.b16 %v6700, %v6699
        %v6814 = vpack.c.b16 %v6702, %v6701
        %v6815 = vpack.c.b16 %v6704, %v6703
        %v6816 = vpack.c.b16 %v6706, %v6705
        %v6817 = vpack.c.b16 %v6708, %v6707
        %v6818 = vpack.c.b16 %v6710, %v6709
        %v6819 = vpack.c.b16 %v6712, %v6711
        %v6820 = vpack.c.b16 %v6714, %v6713
        %v6821 = vpack.c.b16 %v6716, %v6715
        %v6822 = vpack.c.b16 %v6718, %v6717
        %v6823 = vpack.c.b16 %v6720, %v6719
        %v6824 = vpack.c.b16 %v6722, %v6721
        %v6825 = vpack.c.b16 %v6724, %v6723
        %v6826 = vpack.c.b16 %v6726, %v6725
        %v6827 = vpack.c.b16 %v6728, %v6727
        %v6828 = vpack.c.b16 %v6730, %v6729
        %v6829 = vpack.c.b16 %v6732, %v6731
        %v6830 = vpack.c.b16 %v6734, %v6733
        %v6831 = vpack.c.b16 %v6736, %v6735
        %v6832 = vpack.c.b16 %v6738, %v6737
        %v6833 = vpack.c.b16 %v6740, %v6739
        %v6834 = vpack.c.b16 %v6742, %v6741
        %v6835 = vpack.c.b16 %v6744, %v6743
        %v6836 = vpack.c.b16 %v6746, %v6745
        %v6837 = vpack.c.b16 %v6748, %v6747
        %v6838 = vpack.c.b16 %v6750, %v6749
        %v6839 = vpack.c.b16 %v6752, %v6751
        %v6840 = vpack.c.b16 %v6754, %v6753
        %v6841 = vpack.c.b16 %v6756, %v6755
        %v6842 = vpack.c.b16 %v6758, %v6757
        %v6843 = vpack.c.b16 %v6760, %v6759
        %v6844 = vpack.c.b16 %v6762, %v6761
        %v6845 = vpack.c.b16 %v6764, %v6763
        %v6846 = vpack.c.b16 %v6766, %v6765
        %v6847 = vpack.c.b16 %v6768, %v6767
        %v6848 = vpack.c.b16 %v6770, %v6769
        %v6849 = vpack.c.b16 %v6772, %v6771
        %v6850 = vpack.c.b16 %v6774, %v6773
        %v6851 = vpack.c.b16 %v6776, %v6775
        %v6852 = vpack.c.b16 %v6778, %v6777
        %v6853 = vpack.c.b16 %v6780, %v6779
        %v6854 = vpack.c.b16 %v6782, %v6781
        %v6855 = vpack.c.b16 %v6784, %v6783
        %v6856 = vpack.c.b16 %v6786, %v6785
        %v6857 = vpack.c.b16 %v6788, %v6787
        %v6858 = vpack.c.b16 %v6790, %v6789
        %v6859 = vpack.c.b16 %v6792, %v6791
        %v6860 = vpack.c.b16 %v6794, %v6793
        %v6861 = vpack.c.b16 %v6796, %v6795
        %v6862 = vpack.c.b16 %v6798, %v6797
        %6927 = vmatpush.bf16.msra.mxu0 %v6806
        %6928 = vmatpush.bf16.msra.mxu0 %v6805
        %6929 = vmatpush.bf16.msra.mxu0 %v6804
        %6930 = vmatpush.bf16.msra.mxu0 %v6803
        %6931 = vmatpush.bf16.msra.mxu0 %v6802
        %6932 = vmatpush.bf16.msra.mxu0 %v6801
        %6933 = vmatpush.bf16.msra.mxu0 %v6800
        %6934 = vmatpush.bf16.msra.mxu0 %v6799
        %6935 = vmatmul.bf16.gmra.mxu0 %v6407
        %v6936 = vpop.f32.mrf.mxu0
        %v6937 = vadd.f32 0.0, %v6936
        %v6938 = vpop.f32.mrf.mxu0
        %v6939 = vadd.f32 0.0, %v6938
        %6940 = vdwg.mxu0
        %6941 = vmatpush.bf16.msra.mxu0 %v6814
        %6942 = vmatpush.bf16.msra.mxu0 %v6813
        %6943 = vmatpush.bf16.msra.mxu0 %v6812
        %6944 = vmatpush.bf16.msra.mxu0 %v6811
        %6945 = vmatpush.bf16.msra.mxu0 %v6810
        %6946 = vmatpush.bf16.msra.mxu0 %v6809
        %6947 = vmatpush.bf16.msra.mxu0 %v6808
        %6948 = vmatpush.bf16.msra.mxu0 %v6807
        %6949 = vmatmul.bf16.gmra.mxu0 %v6408
        %v6950 = vpop.f32.mrf.mxu0
        %v6951 = vadd.f32 %v6937, %v6950
        %v6952 = vpop.f32.mrf.mxu0
        %v6953 = vadd.f32 %v6939, %v6952
        %6954 = vdwg.mxu0
        %6955 = vmatpush.bf16.msra.mxu0 %v6822
        %6956 = vmatpush.bf16.msra.mxu0 %v6821
        %6957 = vmatpush.bf16.msra.mxu0 %v6820
        %6958 = vmatpush.bf16.msra.mxu0 %v6819
        %6959 = vmatpush.bf16.msra.mxu0 %v6818
        %6960 = vmatpush.bf16.msra.mxu0 %v6817
        %6961 = vmatpush.bf16.msra.mxu0 %v6816
        %6962 = vmatpush.bf16.msra.mxu0 %v6815
        %6963 = vmatmul.bf16.gmra.mxu0 %v6409
        %v6964 = vpop.f32.mrf.mxu0
        %v6965 = vadd.f32 %v6951, %v6964
        %v6966 = vpop.f32.mrf.mxu0
        %v6967 = vadd.f32 %v6953, %v6966
        %6968 = vdwg.mxu0
        %6969 = vmatpush.bf16.msra.mxu0 %v6830
        %6970 = vmatpush.bf16.msra.mxu0 %v6829
        %6971 = vmatpush.bf16.msra.mxu0 %v6828
        %6972 = vmatpush.bf16.msra.mxu0 %v6827
        %6973 = vmatpush.bf16.msra.mxu0 %v6826
        %6974 = vmatpush.bf16.msra.mxu0 %v6825
        %6975 = vmatpush.bf16.msra.mxu0 %v6824
        %6976 = vmatpush.bf16.msra.mxu0 %v6823
        %6977 = vmatmul.bf16.gmra.mxu0 %v6410
        %v6978 = vpop.f32.mrf.mxu0
        %v6979 = vadd.f32 %v6965, %v6978
        %v6980 = vpop.f32.mrf.mxu0
        %v6981 = vadd.f32 %v6967, %v6980
        %6982 = vdwg.mxu0
        %6983 = vmatpush.bf16.msra.mxu0 %v6838
        %6984 = vmatpush.bf16.msra.mxu0 %v6837
        %6985 = vmatpush.bf16.msra.mxu0 %v6836
        %6986 = vmatpush.bf16.msra.mxu0 %v6835
        %6987 = vmatpush.bf16.msra.mxu0 %v6834
        %6988 = vmatpush.bf16.msra.mxu0 %v6833
        %6989 = vmatpush.bf16.msra.mxu0 %v6832
        %6990 = vmatpush.bf16.msra.mxu0 %v6831
        %6991 = vmatmul.bf16.gmra.mxu0 %v6411
        %v6992 = vpop.f32.mrf.mxu0
        %v6993 = vadd.f32 %v6979, %v6992
        %v6994 = vpop.f32.mrf.mxu0
        %v6995 = vadd.f32 %v6981, %v6994
        %6996 = vdwg.mxu0
        %6997 = vmatpush.bf16.msra.mxu0 %v6846
        %6998 = vmatpush.bf16.msra.mxu0 %v6845
        %6999 = vmatpush.bf16.msra.mxu0 %v6844
        %7000 = vmatpush.bf16.msra.mxu0 %v6843
        %7001 = vmatpush.bf16.msra.mxu0 %v6842
        %7002 = vmatpush.bf16.msra.mxu0 %v6841
        %7003 = vmatpush.bf16.msra.mxu0 %v6840
        %7004 = vmatpush.bf16.msra.mxu0 %v6839
        %7005 = vmatmul.bf16.gmra.mxu0 %v6412
        %v7006 = vpop.f32.mrf.mxu0
        %v7007 = vadd.f32 %v6993, %v7006
        %v7008 = vpop.f32.mrf.mxu0
        %v7009 = vadd.f32 %v6995, %v7008
        %7010 = vdwg.mxu0
        %7011 = vmatpush.bf16.msra.mxu0 %v6854
        %7012 = vmatpush.bf16.msra.mxu0 %v6853
        %7013 = vmatpush.bf16.msra.mxu0 %v6852
        %7014 = vmatpush.bf16.msra.mxu0 %v6851
        %7015 = vmatpush.bf16.msra.mxu0 %v6850
        %7016 = vmatpush.bf16.msra.mxu0 %v6849
        %7017 = vmatpush.bf16.msra.mxu0 %v6848
        %7018 = vmatpush.bf16.msra.mxu0 %v6847
        %7019 = vmatmul.bf16.gmra.mxu0 %v6413
        %v7020 = vpop.f32.mrf.mxu0
        %v7021 = vadd.f32 %v7007, %v7020
        %v7022 = vpop.f32.mrf.mxu0
        %v7023 = vadd.f32 %v7009, %v7022
        %7024 = vdwg.mxu0
        %7025 = vmatpush.bf16.msra.mxu0 %v6862
        %7026 = vmatpush.bf16.msra.mxu0 %v6861
        %7027 = vmatpush.bf16.msra.mxu0 %v6860
        %7028 = vmatpush.bf16.msra.mxu0 %v6859
        %7029 = vmatpush.bf16.msra.mxu0 %v6858
        %7030 = vmatpush.bf16.msra.mxu0 %v6857
        %7031 = vmatpush.bf16.msra.mxu0 %v6856
        %7032 = vmatpush.bf16.msra.mxu0 %v6855
        %7033 = vmatmul.bf16.gmra.mxu0 %v6414
        %v7034 = vpop.f32.mrf.mxu0
        %v7035 = vadd.f32 %v7021, %v7034
        %v7036 = vpop.f32.mrf.mxu0
        %v7037 = vadd.f32 %v7023, %v7036
        %7038 = vdwg.mxu0
        %v7039 = vpack.c.bf16 %v7035, %v7035
        %v7040 = vpack.c.bf16 %v7037, %v7037
        %v7041 = vld [vmem:[%s7] sm:$0x1]
        %v7042 = vld [vmem:[%s6] sm:$0xf]
        %v7043 = vld [vmem:[%s6 + $0x4] sm:$0xf]
        %v7044 = vld [vmem:[%s6 + $0x8] sm:$0xf]
        %v7045 = vld [vmem:[%s6 + $0xc] sm:$0xf]
        %v7050 = vunpack.c.l.b16 %v7042
        %v7051 = vunpack.c.l.b16 %v7043
        %v7052 = vunpack.c.l.b16 %v7044
        %v7053 = vunpack.c.l.b16 %v7045
        %v7054 = vpack.c.b16 %v7051, %v7050
        %v7055 = vpack.c.b16 %v7053, %v7052
        %v7059 = vsel %vm665, %v7039, 0
        %7061 = vmatpush.bf16.msra.mxu0 0
        %7062 = vmatpush.bf16.msra.mxu0 0
        %7063 = vmatpush.bf16.msra.mxu0 0
        %7064 = vmatpush.bf16.msra.mxu0 0
        %7065 = vmatpush.bf16.msra.mxu0 0
        %7066 = vmatpush.bf16.msra.mxu0 0
        %7067 = vmatpush.bf16.msra.mxu0 %v7055
        %7068 = vmatpush.bf16.msra.mxu0 %v7054
        %7069 = vmatmul.bf16.gmra.mxu0 %v7059
        %v7070 = vpop.f32.mrf.mxu0
        %v7071 = vadd.f32 0.0, %v7070
        %v7072 = vpop.f32.mrf.mxu0
        %7073 = vdwg.mxu0
        %v7074 = vadd.f32 %v7041, %v7071
        %s7075 = scalar_lea.vmem %s6, 16
        %v7076 = vld [vmem:[%s7075] sm:$0xf]
        %v7077 = vld [vmem:[%s7075 + $0x4] sm:$0xf]
        %v7078 = vld [vmem:[%s7075 + $0x8] sm:$0xf]
        %v7079 = vld [vmem:[%s7075 + $0xc] sm:$0xf]
        %v7081 = vunpack.c.l.b16 %v7039
        %v7082 = vpack.c.b16 %v7081, %v7081
        %v7084 = vshrl.u32 %v7082, 16
        %v7090 = vunpack.c.l.b16 %v7076
        %v7091 = vunpack.c.l.b16 %v7077
        %v7092 = vunpack.c.l.b16 %v7078
        %v7093 = vunpack.c.l.b16 %v7079
        %v7094 = vpack.c.b16 %v7091, %v7090
        %v7095 = vpack.c.b16 %v7093, %v7092
        %v7099 = vsel %vm665, %v7084, 0
        %7101 = vmatpush.bf16.msra.mxu0 0
        %7102 = vmatpush.bf16.msra.mxu0 0
        %7103 = vmatpush.bf16.msra.mxu0 0
        %7104 = vmatpush.bf16.msra.mxu0 0
        %7105 = vmatpush.bf16.msra.mxu0 0
        %7106 = vmatpush.bf16.msra.mxu0 0
        %7107 = vmatpush.bf16.msra.mxu0 %v7095
        %7108 = vmatpush.bf16.msra.mxu0 %v7094
        %7109 = vmatmul.bf16.gmra.mxu0 %v7099
        %v7110 = vpop.f32.mrf.mxu0
        %v7111 = vadd.f32 0.0, %v7110
        %v7112 = vpop.f32.mrf.mxu0
        %7113 = vdwg.mxu0
        %v7114 = vadd.f32 %v7074, %v7111
        %s7115 = scalar_lea.vmem %s6, 32
        %v7116 = vld [vmem:[%s7115] sm:$0xf]
        %v7117 = vld [vmem:[%s7115 + $0x4] sm:$0xf]
        %v7118 = vld [vmem:[%s7115 + $0x8] sm:$0xf]
        %v7119 = vld [vmem:[%s7115 + $0xc] sm:$0xf]
        %v7120 = vrot.slane %v7082, 1
        %v7125 = vunpack.c.l.b16 %v7116
        %v7126 = vunpack.c.l.b16 %v7117
        %v7127 = vunpack.c.l.b16 %v7118
        %v7128 = vunpack.c.l.b16 %v7119
        %v7129 = vpack.c.b16 %v7126, %v7125
        %v7130 = vpack.c.b16 %v7128, %v7127
        %v7134 = vsel %vm665, %v7120, 0
        %7136 = vmatpush.bf16.msra.mxu0 0
        %7137 = vmatpush.bf16.msra.mxu0 0
        %7138 = vmatpush.bf16.msra.mxu0 0
        %7139 = vmatpush.bf16.msra.mxu0 0
        %7140 = vmatpush.bf16.msra.mxu0 0
        %7141 = vmatpush.bf16.msra.mxu0 0
        %7142 = vmatpush.bf16.msra.mxu0 %v7130
        %7143 = vmatpush.bf16.msra.mxu0 %v7129
        %7144 = vmatmul.bf16.gmra.mxu0 %v7134
        %v7145 = vpop.f32.mrf.mxu0
        %v7146 = vadd.f32 0.0, %v7145
        %v7147 = vpop.f32.mrf.mxu0
        %7148 = vdwg.mxu0
        %v7149 = vadd.f32 %v7114, %v7146
        %s7150 = scalar_lea.vmem %s6, 48
        %v7151 = vld [vmem:[%s7150] sm:$0xf]
        %v7152 = vld [vmem:[%s7150 + $0x4] sm:$0xf]
        %v7153 = vld [vmem:[%s7150 + $0x8] sm:$0xf]
        %v7154 = vld [vmem:[%s7150 + $0xc] sm:$0xf]
        %v7155 = vrot.slane %v7084, 1
        %v7160 = vunpack.c.l.b16 %v7151
        %v7161 = vunpack.c.l.b16 %v7152
        %v7162 = vunpack.c.l.b16 %v7153
        %v7163 = vunpack.c.l.b16 %v7154
        %v7164 = vpack.c.b16 %v7161, %v7160
        %v7165 = vpack.c.b16 %v7163, %v7162
        %v7169 = vsel %vm665, %v7155, 0
        %7171 = vmatpush.bf16.msra.mxu0 0
        %7172 = vmatpush.bf16.msra.mxu0 0
        %7173 = vmatpush.bf16.msra.mxu0 0
        %7174 = vmatpush.bf16.msra.mxu0 0
        %7175 = vmatpush.bf16.msra.mxu0 0
        %7176 = vmatpush.bf16.msra.mxu0 0
        %7177 = vmatpush.bf16.msra.mxu0 %v7165
        %7178 = vmatpush.bf16.msra.mxu0 %v7164
        %7179 = vmatmul.bf16.gmra.mxu0 %v7169
        %v7180 = vpop.f32.mrf.mxu0
        %v7181 = vadd.f32 0.0, %v7180
        %v7182 = vpop.f32.mrf.mxu0
        %7183 = vdwg.mxu0
        %v7184 = vadd.f32 %v7149, %v7181
        %s7185 = scalar_lea.vmem %s6, 64
        %v7186 = vld [vmem:[%s7185] sm:$0xf]
        %v7187 = vld [vmem:[%s7185 + $0x4] sm:$0xf]
        %v7188 = vld [vmem:[%s7185 + $0x8] sm:$0xf]
        %v7189 = vld [vmem:[%s7185 + $0xc] sm:$0xf]
        %v7190 = vrot.slane %v7082, 2
        %v7195 = vunpack.c.l.b16 %v7186
        %v7196 = vunpack.c.l.b16 %v7187
        %v7197 = vunpack.c.l.b16 %v7188
        %v7198 = vunpack.c.l.b16 %v7189
        %v7199 = vpack.c.b16 %v7196, %v7195
        %v7200 = vpack.c.b16 %v7198, %v7197
        %v7204 = vsel %vm665, %v7190, 0
        %7206 = vmatpush.bf16.msra.mxu0 0
        %7207 = vmatpush.bf16.msra.mxu0 0
        %7208 = vmatpush.bf16.msra.mxu0 0
        %7209 = vmatpush.bf16.msra.mxu0 0
        %7210 = vmatpush.bf16.msra.mxu0 0
        %7211 = vmatpush.bf16.msra.mxu0 0
        %7212 = vmatpush.bf16.msra.mxu0 %v7200
        %7213 = vmatpush.bf16.msra.mxu0 %v7199
        %7214 = vmatmul.bf16.gmra.mxu0 %v7204
        %v7215 = vpop.f32.mrf.mxu0
        %v7216 = vadd.f32 0.0, %v7215
        %v7217 = vpop.f32.mrf.mxu0
        %7218 = vdwg.mxu0
        %v7219 = vadd.f32 %v7184, %v7216
        %s7220 = scalar_lea.vmem %s6, 80
        %v7221 = vld [vmem:[%s7220] sm:$0xf]
        %v7222 = vld [vmem:[%s7220 + $0x4] sm:$0xf]
        %v7223 = vld [vmem:[%s7220 + $0x8] sm:$0xf]
        %v7224 = vld [vmem:[%s7220 + $0xc] sm:$0xf]
        %v7225 = vrot.slane %v7084, 2
        %v7230 = vunpack.c.l.b16 %v7221
        %v7231 = vunpack.c.l.b16 %v7222
        %v7232 = vunpack.c.l.b16 %v7223
        %v7233 = vunpack.c.l.b16 %v7224
        %v7234 = vpack.c.b16 %v7231, %v7230
        %v7235 = vpack.c.b16 %v7233, %v7232
        %v7239 = vsel %vm665, %v7225, 0
        %7241 = vmatpush.bf16.msra.mxu0 0
        %7242 = vmatpush.bf16.msra.mxu0 0
        %7243 = vmatpush.bf16.msra.mxu0 0
        %7244 = vmatpush.bf16.msra.mxu0 0
        %7245 = vmatpush.bf16.msra.mxu0 0
        %7246 = vmatpush.bf16.msra.mxu0 0
        %7247 = vmatpush.bf16.msra.mxu0 %v7235
        %7248 = vmatpush.bf16.msra.mxu0 %v7234
        %7249 = vmatmul.bf16.gmra.mxu0 %v7239
        %v7250 = vpop.f32.mrf.mxu0
        %v7251 = vadd.f32 0.0, %v7250
        %v7252 = vpop.f32.mrf.mxu0
        %7253 = vdwg.mxu0
        %v7254 = vadd.f32 %v7219, %v7251
        %s7255 = scalar_lea.vmem %s6, 96
        %v7256 = vld [vmem:[%s7255] sm:$0xf]
        %v7257 = vld [vmem:[%s7255 + $0x4] sm:$0xf]
        %v7258 = vld [vmem:[%s7255 + $0x8] sm:$0xf]
        %v7259 = vld [vmem:[%s7255 + $0xc] sm:$0xf]
        %v7260 = vrot.slane %v7082, 3
        %v7265 = vunpack.c.l.b16 %v7256
        %v7266 = vunpack.c.l.b16 %v7257
        %v7267 = vunpack.c.l.b16 %v7258
        %v7268 = vunpack.c.l.b16 %v7259
        %v7269 = vpack.c.b16 %v7266, %v7265
        %v7270 = vpack.c.b16 %v7268, %v7267
        %v7274 = vsel %vm665, %v7260, 0
        %7276 = vmatpush.bf16.msra.mxu0 0
        %7277 = vmatpush.bf16.msra.mxu0 0
        %7278 = vmatpush.bf16.msra.mxu0 0
        %7279 = vmatpush.bf16.msra.mxu0 0
        %7280 = vmatpush.bf16.msra.mxu0 0
        %7281 = vmatpush.bf16.msra.mxu0 0
        %7282 = vmatpush.bf16.msra.mxu0 %v7270
        %7283 = vmatpush.bf16.msra.mxu0 %v7269
        %7284 = vmatmul.bf16.gmra.mxu0 %v7274
        %v7285 = vpop.f32.mrf.mxu0
        %v7286 = vadd.f32 0.0, %v7285
        %v7287 = vpop.f32.mrf.mxu0
        %7288 = vdwg.mxu0
        %v7289 = vadd.f32 %v7254, %v7286
        %s7290 = scalar_lea.vmem %s6, 112
        %v7291 = vld [vmem:[%s7290] sm:$0xf]
        %v7292 = vld [vmem:[%s7290 + $0x4] sm:$0xf]
        %v7293 = vld [vmem:[%s7290 + $0x8] sm:$0xf]
        %v7294 = vld [vmem:[%s7290 + $0xc] sm:$0xf]
        %v7295 = vrot.slane %v7084, 3
        %v7300 = vunpack.c.l.b16 %v7291
        %v7301 = vunpack.c.l.b16 %v7292
        %v7302 = vunpack.c.l.b16 %v7293
        %v7303 = vunpack.c.l.b16 %v7294
        %v7304 = vpack.c.b16 %v7301, %v7300
        %v7305 = vpack.c.b16 %v7303, %v7302
        %v7309 = vsel %vm665, %v7295, 0
        %7311 = vmatpush.bf16.msra.mxu0 0
        %7312 = vmatpush.bf16.msra.mxu0 0
        %7313 = vmatpush.bf16.msra.mxu0 0
        %7314 = vmatpush.bf16.msra.mxu0 0
        %7315 = vmatpush.bf16.msra.mxu0 0
        %7316 = vmatpush.bf16.msra.mxu0 0
        %7317 = vmatpush.bf16.msra.mxu0 %v7305
        %7318 = vmatpush.bf16.msra.mxu0 %v7304
        %7319 = vmatmul.bf16.gmra.mxu0 %v7309
        %v7320 = vpop.f32.mrf.mxu0
        %v7321 = vadd.f32 0.0, %v7320
        %v7322 = vpop.f32.mrf.mxu0
        %7323 = vdwg.mxu0
        %v7324 = vadd.f32 %v7289, %v7321
        %s7325 = scalar_lea.vmem %s6, 128
        %v7326 = vld [vmem:[%s7325] sm:$0xf]
        %v7327 = vld [vmem:[%s7325 + $0x4] sm:$0xf]
        %v7328 = vld [vmem:[%s7325 + $0x8] sm:$0xf]
        %v7329 = vld [vmem:[%s7325 + $0xc] sm:$0xf]
        %v7334 = vunpack.c.l.b16 %v7326
        %v7335 = vunpack.c.l.b16 %v7327
        %v7336 = vunpack.c.l.b16 %v7328
        %v7337 = vunpack.c.l.b16 %v7329
        %v7338 = vpack.c.b16 %v7335, %v7334
        %v7339 = vpack.c.b16 %v7337, %v7336
        %v7343 = vsel %vm665, %v7040, 0
        %7345 = vmatpush.bf16.msra.mxu0 0
        %7346 = vmatpush.bf16.msra.mxu0 0
        %7347 = vmatpush.bf16.msra.mxu0 0
        %7348 = vmatpush.bf16.msra.mxu0 0
        %7349 = vmatpush.bf16.msra.mxu0 0
        %7350 = vmatpush.bf16.msra.mxu0 0
        %7351 = vmatpush.bf16.msra.mxu0 %v7339
        %7352 = vmatpush.bf16.msra.mxu0 %v7338
        %7353 = vmatmul.bf16.gmra.mxu0 %v7343
        %v7354 = vpop.f32.mrf.mxu0
        %v7355 = vadd.f32 0.0, %v7354
        %v7356 = vpop.f32.mrf.mxu0
        %7357 = vdwg.mxu0
        %v7358 = vadd.f32 %v7324, %v7355
        %s7359 = scalar_lea.vmem %s6, 144
        %v7360 = vld [vmem:[%s7359] sm:$0xf]
        %v7361 = vld [vmem:[%s7359 + $0x4] sm:$0xf]
        %v7362 = vld [vmem:[%s7359 + $0x8] sm:$0xf]
        %v7363 = vld [vmem:[%s7359 + $0xc] sm:$0xf]
        %v7365 = vunpack.c.l.b16 %v7040
        %v7366 = vpack.c.b16 %v7365, %v7365
        %v7368 = vshrl.u32 %v7366, 16
        %v7374 = vunpack.c.l.b16 %v7360
        %v7375 = vunpack.c.l.b16 %v7361
        %v7376 = vunpack.c.l.b16 %v7362
        %v7377 = vunpack.c.l.b16 %v7363
        %v7378 = vpack.c.b16 %v7375, %v7374
        %v7379 = vpack.c.b16 %v7377, %v7376
        %v7383 = vsel %vm665, %v7368, 0
        %7385 = vmatpush.bf16.msra.mxu0 0
        %7386 = vmatpush.bf16.msra.mxu0 0
        %7387 = vmatpush.bf16.msra.mxu0 0
        %7388 = vmatpush.bf16.msra.mxu0 0
        %7389 = vmatpush.bf16.msra.mxu0 0
        %7390 = vmatpush.bf16.msra.mxu0 0
        %7391 = vmatpush.bf16.msra.mxu0 %v7379
        %7392 = vmatpush.bf16.msra.mxu0 %v7378
        %7393 = vmatmul.bf16.gmra.mxu0 %v7383
        %v7394 = vpop.f32.mrf.mxu0
        %v7395 = vadd.f32 0.0, %v7394
        %v7396 = vpop.f32.mrf.mxu0
        %7397 = vdwg.mxu0
        %v7398 = vadd.f32 %v7358, %v7395
        %s7399 = scalar_lea.vmem %s6, 160
        %v7400 = vld [vmem:[%s7399] sm:$0xf]
        %v7401 = vld [vmem:[%s7399 + $0x4] sm:$0xf]
        %v7402 = vld [vmem:[%s7399 + $0x8] sm:$0xf]
        %v7403 = vld [vmem:[%s7399 + $0xc] sm:$0xf]
        %v7404 = vrot.slane %v7366, 1
        %v7409 = vunpack.c.l.b16 %v7400
        %v7410 = vunpack.c.l.b16 %v7401
        %v7411 = vunpack.c.l.b16 %v7402
        %v7412 = vunpack.c.l.b16 %v7403
        %v7413 = vpack.c.b16 %v7410, %v7409
        %v7414 = vpack.c.b16 %v7412, %v7411
        %v7418 = vsel %vm665, %v7404, 0
        %7420 = vmatpush.bf16.msra.mxu0 0
        %7421 = vmatpush.bf16.msra.mxu0 0
        %7422 = vmatpush.bf16.msra.mxu0 0
        %7423 = vmatpush.bf16.msra.mxu0 0
        %7424 = vmatpush.bf16.msra.mxu0 0
        %7425 = vmatpush.bf16.msra.mxu0 0
        %7426 = vmatpush.bf16.msra.mxu0 %v7414
        %7427 = vmatpush.bf16.msra.mxu0 %v7413
        %7428 = vmatmul.bf16.gmra.mxu0 %v7418
        %v7429 = vpop.f32.mrf.mxu0
        %v7430 = vadd.f32 0.0, %v7429
        %v7431 = vpop.f32.mrf.mxu0
        %7432 = vdwg.mxu0
        %v7433 = vadd.f32 %v7398, %v7430
        %s7434 = scalar_lea.vmem %s6, 176
        %v7435 = vld [vmem:[%s7434] sm:$0xf]
        %v7436 = vld [vmem:[%s7434 + $0x4] sm:$0xf]
        %v7437 = vld [vmem:[%s7434 + $0x8] sm:$0xf]
        %v7438 = vld [vmem:[%s7434 + $0xc] sm:$0xf]
        %v7439 = vrot.slane %v7368, 1
        %v7444 = vunpack.c.l.b16 %v7435
        %v7445 = vunpack.c.l.b16 %v7436
        %v7446 = vunpack.c.l.b16 %v7437
        %v7447 = vunpack.c.l.b16 %v7438
        %v7448 = vpack.c.b16 %v7445, %v7444
        %v7449 = vpack.c.b16 %v7447, %v7446
        %v7453 = vsel %vm665, %v7439, 0
        %7455 = vmatpush.bf16.msra.mxu0 0
        %7456 = vmatpush.bf16.msra.mxu0 0
        %7457 = vmatpush.bf16.msra.mxu0 0
        %7458 = vmatpush.bf16.msra.mxu0 0
        %7459 = vmatpush.bf16.msra.mxu0 0
        %7460 = vmatpush.bf16.msra.mxu0 0
        %7461 = vmatpush.bf16.msra.mxu0 %v7449
        %7462 = vmatpush.bf16.msra.mxu0 %v7448
        %7463 = vmatmul.bf16.gmra.mxu0 %v7453
        %v7464 = vpop.f32.mrf.mxu0
        %v7465 = vadd.f32 0.0, %v7464
        %v7466 = vpop.f32.mrf.mxu0
        %7467 = vdwg.mxu0
        %v7468 = vadd.f32 %v7433, %v7465
        %s7469 = scalar_lea.vmem %s6, 192
        %v7470 = vld [vmem:[%s7469] sm:$0xf]
        %v7471 = vld [vmem:[%s7469 + $0x4] sm:$0xf]
        %v7472 = vld [vmem:[%s7469 + $0x8] sm:$0xf]
        %v7473 = vld [vmem:[%s7469 + $0xc] sm:$0xf]
        %v7474 = vrot.slane %v7366, 2
        %v7479 = vunpack.c.l.b16 %v7470
        %v7480 = vunpack.c.l.b16 %v7471
        %v7481 = vunpack.c.l.b16 %v7472
        %v7482 = vunpack.c.l.b16 %v7473
        %v7483 = vpack.c.b16 %v7480, %v7479
        %v7484 = vpack.c.b16 %v7482, %v7481
        %v7488 = vsel %vm665, %v7474, 0
        %7490 = vmatpush.bf16.msra.mxu0 0
        %7491 = vmatpush.bf16.msra.mxu0 0
        %7492 = vmatpush.bf16.msra.mxu0 0
        %7493 = vmatpush.bf16.msra.mxu0 0
        %7494 = vmatpush.bf16.msra.mxu0 0
        %7495 = vmatpush.bf16.msra.mxu0 0
        %7496 = vmatpush.bf16.msra.mxu0 %v7484
        %7497 = vmatpush.bf16.msra.mxu0 %v7483
        %7498 = vmatmul.bf16.gmra.mxu0 %v7488
        %v7499 = vpop.f32.mrf.mxu0
        %v7500 = vadd.f32 0.0, %v7499
        %v7501 = vpop.f32.mrf.mxu0
        %7502 = vdwg.mxu0
        %v7503 = vadd.f32 %v7468, %v7500
        %s7504 = scalar_lea.vmem %s6, 208
        %v7505 = vld [vmem:[%s7504] sm:$0xf]
        %v7506 = vld [vmem:[%s7504 + $0x4] sm:$0xf]
        %v7507 = vld [vmem:[%s7504 + $0x8] sm:$0xf]
        %v7508 = vld [vmem:[%s7504 + $0xc] sm:$0xf]
        %v7509 = vrot.slane %v7368, 2
        %v7514 = vunpack.c.l.b16 %v7505
        %v7515 = vunpack.c.l.b16 %v7506
        %v7516 = vunpack.c.l.b16 %v7507
        %v7517 = vunpack.c.l.b16 %v7508
        %v7518 = vpack.c.b16 %v7515, %v7514
        %v7519 = vpack.c.b16 %v7517, %v7516
        %v7523 = vsel %vm665, %v7509, 0
        %7525 = vmatpush.bf16.msra.mxu0 0
        %7526 = vmatpush.bf16.msra.mxu0 0
        %7527 = vmatpush.bf16.msra.mxu0 0
        %7528 = vmatpush.bf16.msra.mxu0 0
        %7529 = vmatpush.bf16.msra.mxu0 0
        %7530 = vmatpush.bf16.msra.mxu0 0
        %7531 = vmatpush.bf16.msra.mxu0 %v7519
        %7532 = vmatpush.bf16.msra.mxu0 %v7518
        %7533 = vmatmul.bf16.gmra.mxu0 %v7523
        %v7534 = vpop.f32.mrf.mxu0
        %v7535 = vadd.f32 0.0, %v7534
        %v7536 = vpop.f32.mrf.mxu0
        %7537 = vdwg.mxu0
        %v7538 = vadd.f32 %v7503, %v7535
        %s7539 = scalar_lea.vmem %s6, 224
        %v7540 = vld [vmem:[%s7539] sm:$0xf]
        %v7541 = vld [vmem:[%s7539 + $0x4] sm:$0xf]
        %v7542 = vld [vmem:[%s7539 + $0x8] sm:$0xf]
        %v7543 = vld [vmem:[%s7539 + $0xc] sm:$0xf]
        %v7544 = vrot.slane %v7366, 3
        %v7549 = vunpack.c.l.b16 %v7540
        %v7550 = vunpack.c.l.b16 %v7541
        %v7551 = vunpack.c.l.b16 %v7542
        %v7552 = vunpack.c.l.b16 %v7543
        %v7553 = vpack.c.b16 %v7550, %v7549
        %v7554 = vpack.c.b16 %v7552, %v7551
        %v7558 = vsel %vm665, %v7544, 0
        %7560 = vmatpush.bf16.msra.mxu0 0
        %7561 = vmatpush.bf16.msra.mxu0 0
        %7562 = vmatpush.bf16.msra.mxu0 0
        %7563 = vmatpush.bf16.msra.mxu0 0
        %7564 = vmatpush.bf16.msra.mxu0 0
        %7565 = vmatpush.bf16.msra.mxu0 0
        %7566 = vmatpush.bf16.msra.mxu0 %v7554
        %7567 = vmatpush.bf16.msra.mxu0 %v7553
        %7568 = vmatmul.bf16.gmra.mxu0 %v7558
        %v7569 = vpop.f32.mrf.mxu0
        %v7570 = vadd.f32 0.0, %v7569
        %v7571 = vpop.f32.mrf.mxu0
        %7572 = vdwg.mxu0
        %v7573 = vadd.f32 %v7538, %v7570
        %s7574 = scalar_lea.vmem %s6, 240
        %v7575 = vld [vmem:[%s7574] sm:$0xf]
        %v7576 = vld [vmem:[%s7574 + $0x4] sm:$0xf]
        %v7577 = vld [vmem:[%s7574 + $0x8] sm:$0xf]
        %v7578 = vld [vmem:[%s7574 + $0xc] sm:$0xf]
        %v7579 = vrot.slane %v7368, 3
        %v7584 = vunpack.c.l.b16 %v7575
        %v7585 = vunpack.c.l.b16 %v7576
        %v7586 = vunpack.c.l.b16 %v7577
        %v7587 = vunpack.c.l.b16 %v7578
        %v7588 = vpack.c.b16 %v7585, %v7584
        %v7589 = vpack.c.b16 %v7587, %v7586
        %v7593 = vsel %vm665, %v7579, 0
        %7595 = vmatpush.bf16.msra.mxu0 0
        %7596 = vmatpush.bf16.msra.mxu0 0
        %7597 = vmatpush.bf16.msra.mxu0 0
        %7598 = vmatpush.bf16.msra.mxu0 0
        %7599 = vmatpush.bf16.msra.mxu0 0
        %7600 = vmatpush.bf16.msra.mxu0 0
        %7601 = vmatpush.bf16.msra.mxu0 %v7589
        %7602 = vmatpush.bf16.msra.mxu0 %v7588
        %7603 = vmatmul.bf16.gmra.mxu0 %v7593
        %v7604 = vpop.f32.mrf.mxu0
        %v7605 = vadd.f32 0.0, %v7604
        %v7606 = vpop.f32.mrf.mxu0
        %7607 = vdwg.mxu0
        %v7608 = vadd.f32 %v7573, %v7605
        %v7609 = vpack.c.bf16 %v7608, %v7608
        %v7610 = vld [vmem:[%s8] sm:$0xf]
        %v7611 = vld [vmem:[%s8 + $0x4] sm:$0xf]
        %v7612 = vld [vmem:[%s8 + $0x8] sm:$0xf]
        %v7613 = vld [vmem:[%s8 + $0xc] sm:$0xf]
        %v7614 = vld [vmem:[%s8 + $0x10] sm:$0xf]
        %v7615 = vld [vmem:[%s8 + $0x14] sm:$0xf]
        %v7616 = vld [vmem:[%s8 + $0x18] sm:$0xf]
        %v7617 = vld [vmem:[%s8 + $0x1c] sm:$0xf]
        %v7618 = vld [vmem:[%s8 + $0x20] sm:$0xf]
        %v7619 = vld [vmem:[%s8 + $0x24] sm:$0xf]
        %v7620 = vld [vmem:[%s8 + $0x28] sm:$0xf]
        %v7621 = vld [vmem:[%s8 + $0x2c] sm:$0xf]
        %v7622 = vld [vmem:[%s8 + $0x30] sm:$0xf]
        %v7623 = vld [vmem:[%s8 + $0x34] sm:$0xf]
        %v7624 = vld [vmem:[%s8 + $0x38] sm:$0xf]
        %v7625 = vld [vmem:[%s9] sm:$0x1]
        %v7641 = vunpack.c.l.b16 %v7610
        %v7642 = vunpack.c.l.b16 %v7611
        %v7643 = vunpack.c.l.b16 %v7612
        %v7644 = vunpack.c.l.b16 %v7613
        %v7645 = vunpack.c.l.b16 %v7614
        %v7646 = vunpack.c.l.b16 %v7615
        %v7647 = vunpack.c.l.b16 %v7616
        %v7648 = vunpack.c.l.b16 %v7617
        %v7649 = vunpack.c.l.b16 %v7618
        %v7650 = vunpack.c.l.b16 %v7619
        %v7651 = vunpack.c.l.b16 %v7620
        %v7652 = vunpack.c.l.b16 %v7621
        %v7653 = vunpack.c.l.b16 %v7622
        %v7654 = vunpack.c.l.b16 %v7623
        %v7655 = vunpack.c.l.b16 %v7624
        %v7656 = vpack.c.b16 %v7642, %v7641
        %v7657 = vpack.c.b16 %v7644, %v7643
        %v7658 = vpack.c.b16 %v7646, %v7645
        %v7659 = vpack.c.b16 %v7648, %v7647
        %v7660 = vpack.c.b16 %v7650, %v7649
        %v7661 = vpack.c.b16 %v7652, %v7651
        %v7662 = vpack.c.b16 %v7654, %v7653
        %v7663 = vpack.c.b16 %v7655, %v7655
        %vm7671 = vcmask 982016
        %v7673 = vsel %vm7671, %v7609, 0
        %v7676 = vsel %vm866, %v7663, 0
        %7678 = vmatpush.bf16.msra.mxu0 %v7676
        %7679 = vmatpush.bf16.msra.mxu0 %v7662
        %7680 = vmatpush.bf16.msra.mxu0 %v7661
        %7681 = vmatpush.bf16.msra.mxu0 %v7660
        %7682 = vmatpush.bf16.msra.mxu0 %v7659
        %7683 = vmatpush.bf16.msra.mxu0 %v7658
        %7684 = vmatpush.bf16.msra.mxu0 %v7657
        %7685 = vmatpush.bf16.msra.mxu0 %v7656
        %7686 = vmatmul.bf16.gmra.mxu0 %v7673
        %v7687 = vpop.f32.mrf.mxu0
        %v7688 = vadd.f32 %v7625, %v7687
        %v7689 = vpop.f32.mrf.mxu0
        %7690 = vdwg.mxu0
        %v7691 = vpack.c.bf16 %v7688, %v7688
        %v7692 = vld [vmem:[%s10] sm:$0xf]
        %v7693 = vld [vmem:[%s10 + $0x4] sm:$0xf]
        %v7694 = vld [vmem:[%s10 + $0x8] sm:$0xf]
        %v7695 = vld [vmem:[%s10 + $0xc] sm:$0xf]
        %v7696 = vld [vmem:[%s10 + $0x10] sm:$0xf]
        %v7697 = vld [vmem:[%s10 + $0x14] sm:$0xf]
        %v7698 = vld [vmem:[%s10 + $0x18] sm:$0xf]
        %v7699 = vld [vmem:[%s10 + $0x1c] sm:$0xf]
        %v7700 = vld [vmem:[%s10 + $0x20] sm:$0xf]
        %v7701 = vld [vmem:[%s10 + $0x24] sm:$0xf]
        %v7702 = vld [vmem:[%s10 + $0x28] sm:$0x3]
        %v7703 = vld [vmem:[%s11] sm:$0x1]
        %v7715 = vunpack.c.l.b16 %v7692
        %v7716 = vunpack.c.l.b16 %v7693
        %v7717 = vunpack.c.l.b16 %v7694
        %v7718 = vunpack.c.l.b16 %v7695
        %v7719 = vunpack.c.l.b16 %v7696
        %v7720 = vunpack.c.l.b16 %v7697
        %v7721 = vunpack.c.l.b16 %v7698
        %v7722 = vunpack.c.l.b16 %v7699
        %v7723 = vunpack.c.l.b16 %v7700
        %v7724 = vunpack.c.l.b16 %v7701
        %v7725 = vunpack.c.l.b16 %v7702
        %v7726 = vpack.c.b16 %v7716, %v7715
        %v7727 = vpack.c.b16 %v7718, %v7717
        %v7728 = vpack.c.b16 %v7720, %v7719
        %v7729 = vpack.c.b16 %v7722, %v7721
        %v7730 = vpack.c.b16 %v7724, %v7723
        %v7731 = vpack.c.b16 %v7725, %v7725
        %vm7737 = vcmask 687104
        %v7739 = vsel %vm7737, %v7691, 0
        %vm7741 = vcmask 1041408
        %v7743 = vsel %vm7741, %v7731, 0
        %7745 = vmatpush.bf16.msra.mxu0 0
        %7746 = vmatpush.bf16.msra.mxu0 0
        %7747 = vmatpush.bf16.msra.mxu0 %v7743
        %7748 = vmatpush.bf16.msra.mxu0 %v7730
        %7749 = vmatpush.bf16.msra.mxu0 %v7729
        %7750 = vmatpush.bf16.msra.mxu0 %v7728
        %7751 = vmatpush.bf16.msra.mxu0 %v7727
        %7752 = vmatpush.bf16.msra.mxu0 %v7726
        %7753 = vmatmul.bf16.gmra.mxu0 %v7739
        %v7754 = vpop.f32.mrf.mxu0
        %v7755 = vadd.f32 %v7703, %v7754
        %v7756 = vpop.f32.mrf.mxu0
        %7757 = vdwg.mxu0
        %7758 = vst [vmem:[%s403] sm:$0x1] %v7755
        %s7759 = sand.u32 %s291, 1
        %s7760 = scalar_lea.sflag [#allocation6], %s7759
        %s7761 = sand.u32 %s291, 1
        %s7762 = scalar_lea.vmem [#allocation5], %s7761
        // Predicated region
        $region69: #{lenet_forward.1} parent=67 // pred_check
          %p7763 = pneg %p301
        $region70: #{lenet_forward.1} parent=67 // pred_check_branch
          %7765 = sbr.rel (%p7763) target = $region72
        $region71: #{lenet_forward.1} parent=67 // pred_region
          %7767 = vsyncadd %s7760, 0
          %s7768 = scalar_lea.hbm %s12, %s26
          %s7770 = sshll.u32 %s7762, 4
          %s7771 = int_to_ptr.vmem [resolvable:$true] %s7770
          %s7772 = sshll.u32 %s7768, 4
          %s7773 = int_to_ptr.hbm [resolvable:$true] %s7772
          %7775 = dma.vmem_to_hbm [thread:$0]  %s7771, 16, %s7773, %s7760
        $region72: #{lenet_forward.1} parent=67 // pred_fallthru
          _
      $region68: #{lenet_forward.1} parent=5 // pred_fallthru
        _
      %p7776 = scmp.le.s32.totalorder 2, %s21
      // Predicated region
      $region73: #{lenet_forward.1} parent=5 // pred_check
        %p7777 = pneg %p7776
      $region74: #{lenet_forward.1} parent=5 // pred_check_branch
        %7779 = sbr.rel (%p7777) target = $region76
      $region75: #{lenet_forward.1} parent=5 // pred_region
        %s7780 = ssub.s32 %s21, 2
        // Predicated region
        $region77: #{lenet_forward.1} parent=75 // pred_check
          %p7781 = pneg %p307
        $region78: #{lenet_forward.1} parent=75 // pred_check_branch
          %7783 = sbr.rel (%p7781) target = $region80
        $region79: #{lenet_forward.1} parent=75 // pred_region
          %s7784 = sand.u32 %s292, 1
          %s7785 = scalar_lea.sflag [#allocation6], %s7784
          %s7786 = sand.u32 %s292, 1
          %s7787 = scalar_lea.vmem [#allocation5], %s7786
          %7789 = dma.done %s7785, 16
        $region80: #{lenet_forward.1} parent=75 // pred_fallthru
          _
      $region76: #{lenet_forward.1} parent=5 // pred_fallthru
        _
    $region6: #{lenet_forward.1} parent=1 // loop_footer
      %s25 = sadd.s32 1, %s21
    $region7: #{lenet_forward.1} parent=1 // loop_footer_branch
      %20 = sbr.rel target = $region3
    $region8: #{lenet_forward.1} parent=1 // loop_exit
      _
    %7790 = vsyncpa [#allocation6], 1
    %s7791 = scalar_lea.sflag [#allocation6], 1
    %7792 = vsyncpa %s7791, 1

</llo_original>
